<compile_context>
chip_gen: v6e
topology: v6e:2x2x1
jax: 0.10.0
libtpu: 0.0.40
codegen_flags: <defaults>
</compile_context>

<pallas_src>
import jax
import jax.numpy as jnp
import numpy as np
from jax.experimental import pallas as pl
from jax.experimental.pallas import tpu as pltpu


def _round_up(x, m):
    return (x + m - 1) // m * m


def _head_kernel(img_ref, txt_ref,
                 wv_ref, bv_ref, wt_ref, bt_ref,
                 w1a_ref, w1b_ref, b1_ref,
                 w2_ref, b2_ref,
                 w3_ref, b3_ref,
                 wp_ref, bp_ref,
                 wf1_ref, bf1_ref,
                 wf2_ref, bf2_ref,
                 out_ref):
    f32 = jnp.float32
    bf16 = jnp.bfloat16
    relu = lambda z: jnp.maximum(z, 0.0)

    # visual / text projections (bf16 MXU operands, f32 accumulation)
    v = relu(jnp.dot(img_ref[...], wv_ref[...], preferred_element_type=f32)
             + bv_ref[...])
    t = relu(jnp.dot(txt_ref[...], wt_ref[...], preferred_element_type=f32)
             + bt_ref[...])

    v16 = v.astype(bf16)
    t16 = t.astype(bf16)

    # pvd_fc1 on concat(v, t): weight split into the two 512-row halves (exact)
    pvd = relu(jnp.dot(v16, w1a_ref[...], preferred_element_type=f32)
               + jnp.dot(t16, w1b_ref[...], preferred_element_type=f32)
               + b1_ref[...])
    pvd = relu(jnp.dot(pvd.astype(bf16), w2_ref[...], preferred_element_type=f32)
               + b2_ref[...])
    pvd = relu(jnp.dot(pvd.astype(bf16), w3_ref[...], preferred_element_type=f32)
               + b3_ref[...])
    pvd = relu(jnp.dot(pvd.astype(bf16), wp_ref[...], preferred_element_type=f32)
               + bp_ref[...])

    combined = v + t + pvd

    x = relu(jnp.dot(combined.astype(bf16), wf1_ref[...],
                     preferred_element_type=f32) + bf1_ref[...])
    # dropout (p=0.4): identity in eval mode
    out_ref[...] = (jnp.dot(x.astype(bf16), wf2_ref[...],
                            preferred_element_type=f32)
                    + bf2_ref[...]).astype(out_ref.dtype)


def multimodal_clip_head(img_feat, txt_feat, params, *, batch_tile=None,
                         compute_dtype=jnp.bfloat16):
    """params: dict of f32 weights ([in,out]) and biases ([1,out]).

    Weights are zero-padded to lane/MXU-friendly shapes (exact) and cast to
    `compute_dtype`; all matmuls accumulate in f32.
    """
    B, _ = img_feat.shape
    num_classes = params["wf2"].shape[1]

    LANE = 128
    c_pad = _round_up(max(num_classes, LANE), LANE)   # lane-dense output store
    h_pad = _round_up(params["w3"].shape[1], LANE)    # pad 64-wide PVD dim -> 128

    if batch_tile is None:
        # fill the MXU M dimension; bf16 sublane packing wants multiples of 16
        batch_tile = min(256, _round_up(B, 16))
    b_pad = _round_up(B, batch_tile)

    # --- zero-padded (numerically exact) + bf16-cast weights -------------
    def pad2(a, rows, cols):
        return jnp.pad(a, ((0, rows - a.shape[0]), (0, cols - a.shape[1])))

    w3 = pad2(params["w3"], params["w3"].shape[0], h_pad)   # zero cols -> relu(0)=0
    b3 = pad2(params["b3"], 1, h_pad)
    wp = pad2(params["wp"], h_pad, params["wp"].shape[1])   # zero rows contribute 0
    wf2 = pad2(params["wf2"], params["wf2"].shape[0], c_pad)
    bf2 = pad2(params["bf2"], 1, c_pad)

    weights = {
        "wv": params["wv"], "wt": params["wt"],
        "w1a": params["w1a"], "w1b": params["w1b"],
        "w2": params["w2"], "w3": w3, "wp": wp,
        "wf1": params["wf1"], "wf2": wf2,
    }
    biases = {
        "bv": params["bv"], "bt": params["bt"], "b1": params["b1"],
        "b2": params["b2"], "b3": b3, "bp": params["bp"],
        "bf1": params["bf1"], "bf2": bf2,
    }
    weights = {k: v.astype(compute_dtype) for k, v in weights.items()}
    biases = {k: v.astype(jnp.float32) for k, v in biases.items()}
    merged = {**weights, **biases}

    order = ["wv", "bv", "wt", "bt", "w1a", "w1b", "b1", "w2", "b2",
             "w3", "b3", "wp", "bp", "wf1", "bf1", "wf2", "bf2"]
    weight_args = [merged[k] for k in order]

    # --- pad + cast activations ------------------------------------------
    img = jnp.pad(img_feat, ((0, b_pad - B), (0, 0))).astype(compute_dtype)
    txt = jnp.pad(txt_feat, ((0, b_pad - B), (0, 0))).astype(compute_dtype)

    def batch_spec(feat):
        return pl.BlockSpec((batch_tile, feat), lambda i: (i, 0))

    def resident_spec(arr):
        # Grid-invariant weight/bias block: single-buffer it (index never moves).
        return pl.BlockSpec(arr.shape, lambda i: (0, 0),
                            pipeline_mode=pl.Buffered(1))

    weight_specs = [resident_spec(a) for a in weight_args]

    # advisory cost estimate for the XLA scheduler
    flops = 2 * b_pad * sum(int(w.shape[0]) * int(w.shape[1])
                            for w in weights.values())
    bytes_accessed = (img.size * img.dtype.itemsize
                      + txt.size * txt.dtype.itemsize
                      + sum(int(a.size) * a.dtype.itemsize for a in weight_args)
                      + b_pad * c_pad * 4)
    cost = pl.CostEstimate(flops=flops, transcendentals=0,
                           bytes_accessed=bytes_accessed)

    grid = (b_pad // batch_tile,)
    out = pl.pallas_call(
        _head_kernel,
        out_shape=jax.ShapeDtypeStruct((b_pad, c_pad), jnp.float32),
        grid_spec=pltpu.PrefetchScalarGridSpec(
            num_scalar_prefetch=0,
            grid=grid,
            in_specs=[batch_spec(img.shape[1]), batch_spec(txt.shape[1])]
                     + weight_specs,
            out_specs=pl.BlockSpec((batch_tile, c_pad), lambda i: (i, 0)),
        ),
        compiler_params=pltpu.CompilerParams(
            dimension_semantics=("parallel",),
            vmem_limit_bytes=48 << 20,   # headroom on v7x's 64 MiB VMEM
        ),
        cost_estimate=cost,
    )(img, txt, *weight_args)

    return out[:B, :num_classes]


def _init_params(key, num_classes,
                 image_feature_size=768, text_feature_size=768):
    """Deterministic synthetic weights. Stored as [in, out]; biases [1, out]."""
    dims = {
        "wv":  (image_feature_size, 512),
        "wt":  (text_feature_size, 512),
        "w1a": (512, 256),   # first half of pvd_fc1 (acts on visual part)
        "w1b": (512, 256),   # second half of pvd_fc1 (acts on text part)
        "w2":  (256, 128),
        "w3":  (128, 64),
        "wp":  (64, 512),
        "wf1": (512, 1024),
        "wf2": (1024, num_classes),
    }
    biases = {
        "bv": 512, "bt": 512, "b1": 256, "b2": 128, "b3": 64,
        "bp": 512, "bf1": 1024, "bf2": num_classes,
    }
    params = {}
    keys = jax.random.split(key, len(dims) + len(biases))
    ki = 0
    for name, (fin, fout) in dims.items():
        scale = 1.0 / np.sqrt(fin)
        params[name] = jax.random.uniform(keys[ki], (fin, fout), jnp.float32,
                                          minval=-scale, maxval=scale)
        ki += 1
    for name, fout in biases.items():
        params[name] = jax.random.uniform(keys[ki], (1, fout), jnp.float32,
                                          minval=-0.05, maxval=0.05)
        ki += 1
    return params


def _reference(img_feat, txt_feat, p):
    relu = lambda z: jnp.maximum(z, 0.0)
    v = relu(img_feat @ p["wv"] + p["bv"])
    t = relu(txt_feat @ p["wt"] + p["bt"])
    pvd_in = jnp.concatenate([v, t], axis=1)
    w1 = jnp.concatenate([p["w1a"], p["w1b"]], axis=0)
    pvd = relu(pvd_in @ w1 + p["b1"])
    pvd = relu(pvd @ p["w2"] + p["b2"])
    pvd = relu(pvd @ p["w3"] + p["b3"])
    pvd = relu(pvd @ p["wp"] + p["bp"])
    comb = v + t + pvd
    x = relu(comb @ p["wf1"] + p["bf1"])
    return x @ p["wf2"] + p["bf2"]


if __name__ == "__main__":
    NUM_CLASSES = 16
    BATCH = 32

    key = jax.random.PRNGKey(0)
    k_img, k_txt, k_par = jax.random.split(key, 3)

    # Synthetic CLIP encoder outputs (the frozen encoders are not translated).
    image_features = jax.random.normal(k_img, (BATCH, 768), jnp.float32)
    text_features = jax.random.normal(k_txt, (BATCH, 768), jnp.float32)

    params = _init_params(k_par, NUM_CLASSES)

    logits = multimodal_clip_head(image_features, text_features, params)
    logits = jax.block_until_ready(logits)
    assert logits.shape == (BATCH, NUM_CLASSES)

    ref = _reference(image_features, text_features, params)
    # bf16 weights/activations (f32 accumulation) vs. pure-f32 reference:
    # allow small mixed-precision drift.
    np.testing.assert_allclose(np.asarray(logits), np.asarray(ref),
                               rtol=5e-2, atol=3e-2)

    print("KERNEL_OK")
</pallas_src>

<mosaic_0001>
module attributes {stable_mosaic.version = 11 : i64} {
  func.func @_head_kernel(%arg0: i32, %arg1: memref<32x768xbf16, #tpu.memory_space<vmem>>, %arg2: memref<32x768xbf16, #tpu.memory_space<vmem>>, %arg3: memref<768x512xbf16, #tpu.memory_space<vmem>>, %arg4: memref<1x512xf32, #tpu.memory_space<vmem>>, %arg5: memref<768x512xbf16, #tpu.memory_space<vmem>>, %arg6: memref<1x512xf32, #tpu.memory_space<vmem>>, %arg7: memref<512x256xbf16, #tpu.memory_space<vmem>>, %arg8: memref<512x256xbf16, #tpu.memory_space<vmem>>, %arg9: memref<1x256xf32, #tpu.memory_space<vmem>>, %arg10: memref<256x128xbf16, #tpu.memory_space<vmem>>, %arg11: memref<1x128xf32, #tpu.memory_space<vmem>>, %arg12: memref<128x128xbf16, #tpu.memory_space<vmem>>, %arg13: memref<1x128xf32, #tpu.memory_space<vmem>>, %arg14: memref<128x512xbf16, #tpu.memory_space<vmem>>, %arg15: memref<1x512xf32, #tpu.memory_space<vmem>>, %arg16: memref<512x1024xbf16, #tpu.memory_space<vmem>>, %arg17: memref<1x1024xf32, #tpu.memory_space<vmem>>, %arg18: memref<1024x128xbf16, #tpu.memory_space<vmem>>, %arg19: memref<1x128xf32, #tpu.memory_space<vmem>>, %arg20: memref<32x128xf32, #tpu.memory_space<vmem>>) attributes {dimension_semantics = [#tpu.dimension_semantics<parallel>], iteration_bounds = array<i64: 1>, scalar_prefetch = 0 : i64, scratch_operands = 0 : i64, tpu.core_type = #tpu.core_type<tc>, window_params = [{transform_indices = @transform_0, window_bounds = array<i64: 32, 768>}, {transform_indices = @transform_1, window_bounds = array<i64: 32, 768>}, {pipeline_mode = #tpu.pipeline_mode<synchronous>, transform_indices = @transform_2, window_bounds = array<i64: 768, 512>}, {pipeline_mode = #tpu.pipeline_mode<synchronous>, transform_indices = @transform_3, window_bounds = array<i64: 1, 512>}, {pipeline_mode = #tpu.pipeline_mode<synchronous>, transform_indices = @transform_4, window_bounds = array<i64: 768, 512>}, {pipeline_mode = #tpu.pipeline_mode<synchronous>, transform_indices = @transform_5, window_bounds = array<i64: 1, 512>}, {pipeline_mode = #tpu.pipeline_mode<synchronous>, transform_indices = @transform_6, window_bounds = array<i64: 512, 256>}, {pipeline_mode = #tpu.pipeline_mode<synchronous>, transform_indices = @transform_7, window_bounds = array<i64: 512, 256>}, {pipeline_mode = #tpu.pipeline_mode<synchronous>, transform_indices = @transform_8, window_bounds = array<i64: 1, 256>}, {pipeline_mode = #tpu.pipeline_mode<synchronous>, transform_indices = @transform_9, window_bounds = array<i64: 256, 128>}, {pipeline_mode = #tpu.pipeline_mode<synchronous>, transform_indices = @transform_10, window_bounds = array<i64: 1, 128>}, {pipeline_mode = #tpu.pipeline_mode<synchronous>, transform_indices = @transform_11, window_bounds = array<i64: 128, 128>}, {pipeline_mode = #tpu.pipeline_mode<synchronous>, transform_indices = @transform_12, window_bounds = array<i64: 1, 128>}, {pipeline_mode = #tpu.pipeline_mode<synchronous>, transform_indices = @transform_13, window_bounds = array<i64: 128, 512>}, {pipeline_mode = #tpu.pipeline_mode<synchronous>, transform_indices = @transform_14, window_bounds = array<i64: 1, 512>}, {pipeline_mode = #tpu.pipeline_mode<synchronous>, transform_indices = @transform_15, window_bounds = array<i64: 512, 1024>}, {pipeline_mode = #tpu.pipeline_mode<synchronous>, transform_indices = @transform_16, window_bounds = array<i64: 1, 1024>}, {pipeline_mode = #tpu.pipeline_mode<synchronous>, transform_indices = @transform_17, window_bounds = array<i64: 1024, 128>}, {pipeline_mode = #tpu.pipeline_mode<synchronous>, transform_indices = @transform_18, window_bounds = array<i64: 1, 128>}, {transform_indices = @transform_19, window_bounds = array<i64: 32, 128>}]} {
    %c0 = arith.constant 0 : index
    %c0_0 = arith.constant 0 : index
    %0 = vector.load %arg1[%c0, %c0_0] : memref<32x768xbf16, #tpu.memory_space<vmem>>, vector<32x768xbf16>
    %c0_1 = arith.constant 0 : index
    %c0_2 = arith.constant 0 : index
    %1 = vector.load %arg3[%c0_1, %c0_2] : memref<768x512xbf16, #tpu.memory_space<vmem>>, vector<768x512xbf16>
    %cst = arith.constant dense<0.000000e+00> : vector<32x512xf32>
    %2 = tpu.matmul %0, %1, %cst {dimension_numbers = #tpu.dot_dimension_numbers<[1], [0], [0], [1], [0, 0, 1, 1], [], []>} : vector<32x768xbf16>, vector<768x512xbf16>, vector<32x512xf32> -> vector<32x512xf32>
    %c0_3 = arith.constant 0 : index
    %c0_4 = arith.constant 0 : index
    %3 = vector.load %arg4[%c0_3, %c0_4] : memref<1x512xf32, #tpu.memory_space<vmem>>, vector<1x512xf32>
    %4 = vector.broadcast %3 : vector<1x512xf32> to vector<32x512xf32>
    %5 = arith.addf %2, %4 : vector<32x512xf32>
    %cst_5 = arith.constant 0.000000e+00 : f32
    %6 = vector.broadcast %cst_5 : f32 to vector<32x512xf32>
    %7 = arith.maximumf %5, %6 : vector<32x512xf32>
    %c0_6 = arith.constant 0 : index
    %c0_7 = arith.constant 0 : index
    %8 = vector.load %arg2[%c0_6, %c0_7] : memref<32x768xbf16, #tpu.memory_space<vmem>>, vector<32x768xbf16>
    %c0_8 = arith.constant 0 : index
    %c0_9 = arith.constant 0 : index
    %9 = vector.load %arg5[%c0_8, %c0_9] : memref<768x512xbf16, #tpu.memory_space<vmem>>, vector<768x512xbf16>
    %cst_10 = arith.constant dense<0.000000e+00> : vector<32x512xf32>
    %10 = tpu.matmul %8, %9, %cst_10 {dimension_numbers = #tpu.dot_dimension_numbers<[1], [0], [0], [1], [0, 0, 1, 1], [], []>} : vector<32x768xbf16>, vector<768x512xbf16>, vector<32x512xf32> -> vector<32x512xf32>
    %c0_11 = arith.constant 0 : index
    %c0_12 = arith.constant 0 : index
    %11 = vector.load %arg6[%c0_11, %c0_12] : memref<1x512xf32, #tpu.memory_space<vmem>>, vector<1x512xf32>
    %12 = vector.broadcast %11 : vector<1x512xf32> to vector<32x512xf32>
    %13 = arith.addf %10, %12 : vector<32x512xf32>
    %cst_13 = arith.constant 0.000000e+00 : f32
    %14 = vector.broadcast %cst_13 : f32 to vector<32x512xf32>
    %15 = arith.maximumf %13, %14 : vector<32x512xf32>
    %16 = arith.truncf %7 : vector<32x512xf32> to vector<32x512xbf16>
    %17 = arith.truncf %15 : vector<32x512xf32> to vector<32x512xbf16>
    %c0_14 = arith.constant 0 : index
    %c0_15 = arith.constant 0 : index
    %18 = vector.load %arg7[%c0_14, %c0_15] : memref<512x256xbf16, #tpu.memory_space<vmem>>, vector<512x256xbf16>
    %cst_16 = arith.constant dense<0.000000e+00> : vector<32x256xf32>
    %19 = tpu.matmul %16, %18, %cst_16 {dimension_numbers = #tpu.dot_dimension_numbers<[1], [0], [0], [1], [0, 0, 1, 1], [], []>} : vector<32x512xbf16>, vector<512x256xbf16>, vector<32x256xf32> -> vector<32x256xf32>
    %c0_17 = arith.constant 0 : index
    %c0_18 = arith.constant 0 : index
    %20 = vector.load %arg8[%c0_17, %c0_18] : memref<512x256xbf16, #tpu.memory_space<vmem>>, vector<512x256xbf16>
    %cst_19 = arith.constant dense<0.000000e+00> : vector<32x256xf32>
    %21 = tpu.matmul %17, %20, %cst_19 {dimension_numbers = #tpu.dot_dimension_numbers<[1], [0], [0], [1], [0, 0, 1, 1], [], []>} : vector<32x512xbf16>, vector<512x256xbf16>, vector<32x256xf32> -> vector<32x256xf32>
    %22 = arith.addf %19, %21 : vector<32x256xf32>
    %c0_20 = arith.constant 0 : index
    %c0_21 = arith.constant 0 : index
    %23 = vector.load %arg9[%c0_20, %c0_21] : memref<1x256xf32, #tpu.memory_space<vmem>>, vector<1x256xf32>
    %24 = vector.broadcast %23 : vector<1x256xf32> to vector<32x256xf32>
    %25 = arith.addf %22, %24 : vector<32x256xf32>
    %cst_22 = arith.constant 0.000000e+00 : f32
    %26 = vector.broadcast %cst_22 : f32 to vector<32x256xf32>
    %27 = arith.maximumf %25, %26 : vector<32x256xf32>
    %28 = arith.truncf %27 : vector<32x256xf32> to vector<32x256xbf16>
    %c0_23 = arith.constant 0 : index
    %c0_24 = arith.constant 0 : index
    %29 = vector.load %arg10[%c0_23, %c0_24] : memref<256x128xbf16, #tpu.memory_space<vmem>>, vector<256x128xbf16>
    %cst_25 = arith.constant dense<0.000000e+00> : vector<32x128xf32>
    %30 = tpu.matmul %28, %29, %cst_25 {dimension_numbers = #tpu.dot_dimension_numbers<[1], [0], [0], [1], [0, 0, 1, 1], [], []>} : vector<32x256xbf16>, vector<256x128xbf16>, vector<32x128xf32> -> vector<32x128xf32>
    %c0_26 = arith.constant 0 : index
    %c0_27 = arith.constant 0 : index
    %31 = vector.load %arg11[%c0_26, %c0_27] : memref<1x128xf32, #tpu.memory_space<vmem>>, vector<1x128xf32>
    %32 = vector.broadcast %31 : vector<1x128xf32> to vector<32x128xf32>
    %33 = arith.addf %30, %32 : vector<32x128xf32>
    %cst_28 = arith.constant 0.000000e+00 : f32
    %34 = vector.broadcast %cst_28 : f32 to vector<32x128xf32>
    %35 = arith.maximumf %33, %34 : vector<32x128xf32>
    %36 = arith.truncf %35 : vector<32x128xf32> to vector<32x128xbf16>
    %c0_29 = arith.constant 0 : index
    %c0_30 = arith.constant 0 : index
    %37 = vector.load %arg12[%c0_29, %c0_30] : memref<128x128xbf16, #tpu.memory_space<vmem>>, vector<128x128xbf16>
    %cst_31 = arith.constant dense<0.000000e+00> : vector<32x128xf32>
    %38 = tpu.matmul %36, %37, %cst_31 {dimension_numbers = #tpu.dot_dimension_numbers<[1], [0], [0], [1], [0, 0, 1, 1], [], []>} : vector<32x128xbf16>, vector<128x128xbf16>, vector<32x128xf32> -> vector<32x128xf32>
    %c0_32 = arith.constant 0 : index
    %c0_33 = arith.constant 0 : index
    %39 = vector.load %arg13[%c0_32, %c0_33] : memref<1x128xf32, #tpu.memory_space<vmem>>, vector<1x128xf32>
    %40 = vector.broadcast %39 : vector<1x128xf32> to vector<32x128xf32>
    %41 = arith.addf %38, %40 : vector<32x128xf32>
    %cst_34 = arith.constant 0.000000e+00 : f32
    %42 = vector.broadcast %cst_34 : f32 to vector<32x128xf32>
    %43 = arith.maximumf %41, %42 : vector<32x128xf32>
    %44 = arith.truncf %43 : vector<32x128xf32> to vector<32x128xbf16>
    %c0_35 = arith.constant 0 : index
    %c0_36 = arith.constant 0 : index
    %45 = vector.load %arg14[%c0_35, %c0_36] : memref<128x512xbf16, #tpu.memory_space<vmem>>, vector<128x512xbf16>
    %cst_37 = arith.constant dense<0.000000e+00> : vector<32x512xf32>
    %46 = tpu.matmul %44, %45, %cst_37 {dimension_numbers = #tpu.dot_dimension_numbers<[1], [0], [0], [1], [0, 0, 1, 1], [], []>} : vector<32x128xbf16>, vector<128x512xbf16>, vector<32x512xf32> -> vector<32x512xf32>
    %c0_38 = arith.constant 0 : index
    %c0_39 = arith.constant 0 : index
    %47 = vector.load %arg15[%c0_38, %c0_39] : memref<1x512xf32, #tpu.memory_space<vmem>>, vector<1x512xf32>
    %48 = vector.broadcast %47 : vector<1x512xf32> to vector<32x512xf32>
    %49 = arith.addf %46, %48 : vector<32x512xf32>
    %cst_40 = arith.constant 0.000000e+00 : f32
    %50 = vector.broadcast %cst_40 : f32 to vector<32x512xf32>
    %51 = arith.maximumf %49, %50 : vector<32x512xf32>
    %52 = arith.addf %7, %15 : vector<32x512xf32>
    %53 = arith.addf %52, %51 : vector<32x512xf32>
    %54 = arith.truncf %53 : vector<32x512xf32> to vector<32x512xbf16>
    %c0_41 = arith.constant 0 : index
    %c0_42 = arith.constant 0 : index
    %55 = vector.load %arg16[%c0_41, %c0_42] : memref<512x1024xbf16, #tpu.memory_space<vmem>>, vector<512x1024xbf16>
    %cst_43 = arith.constant dense<0.000000e+00> : vector<32x1024xf32>
    %56 = tpu.matmul %54, %55, %cst_43 {dimension_numbers = #tpu.dot_dimension_numbers<[1], [0], [0], [1], [0, 0, 1, 1], [], []>} : vector<32x512xbf16>, vector<512x1024xbf16>, vector<32x1024xf32> -> vector<32x1024xf32>
    %c0_44 = arith.constant 0 : index
    %c0_45 = arith.constant 0 : index
    %57 = vector.load %arg17[%c0_44, %c0_45] : memref<1x1024xf32, #tpu.memory_space<vmem>>, vector<1x1024xf32>
    %58 = vector.broadcast %57 : vector<1x1024xf32> to vector<32x1024xf32>
    %59 = arith.addf %56, %58 : vector<32x1024xf32>
    %cst_46 = arith.constant 0.000000e+00 : f32
    %60 = vector.broadcast %cst_46 : f32 to vector<32x1024xf32>
    %61 = arith.maximumf %59, %60 : vector<32x1024xf32>
    %62 = arith.truncf %61 : vector<32x1024xf32> to vector<32x1024xbf16>
    %c0_47 = arith.constant 0 : index
    %c0_48 = arith.constant 0 : index
    %63 = vector.load %arg18[%c0_47, %c0_48] : memref<1024x128xbf16, #tpu.memory_space<vmem>>, vector<1024x128xbf16>
    %cst_49 = arith.constant dense<0.000000e+00> : vector<32x128xf32>
    %64 = tpu.matmul %62, %63, %cst_49 {dimension_numbers = #tpu.dot_dimension_numbers<[1], [0], [0], [1], [0, 0, 1, 1], [], []>} : vector<32x1024xbf16>, vector<1024x128xbf16>, vector<32x128xf32> -> vector<32x128xf32>
    %c0_50 = arith.constant 0 : index
    %c0_51 = arith.constant 0 : index
    %65 = vector.load %arg19[%c0_50, %c0_51] : memref<1x128xf32, #tpu.memory_space<vmem>>, vector<1x128xf32>
    %66 = vector.broadcast %65 : vector<1x128xf32> to vector<32x128xf32>
    %67 = arith.addf %64, %66 : vector<32x128xf32>
    %c0_52 = arith.constant 0 : index
    %c0_53 = arith.constant 0 : index
    %68 = vector.load %arg20[%c0_52, %c0_53] : memref<32x128xf32, #tpu.memory_space<vmem>>, vector<32x128xf32>
    tpu.vector_store %arg20[%c0_52, %c0_53], %67 {strides = array<i32>} : memref<32x128xf32, #tpu.memory_space<vmem>>, vector<32x128xf32>,
    return
  }
  func.func @transform_0(%arg0: i32) -> (i32, i32) {
    %c0_i32 = arith.constant 0 : i32
    %c0_i32_0 = arith.constant 0 : i32
    return %arg0, %c0_i32 : i32, i32
  }
  func.func @transform_1(%arg0: i32) -> (i32, i32) {
    %c0_i32 = arith.constant 0 : i32
    %c0_i32_0 = arith.constant 0 : i32
    return %arg0, %c0_i32 : i32, i32
  }
  func.func @transform_2(%arg0: i32) -> (i32, i32) {
    %c0_i32 = arith.constant 0 : i32
    %c0_i32_0 = arith.constant 0 : i32
    %c0_i32_1 = arith.constant 0 : i32
    return %c0_i32, %c0_i32_0 : i32, i32
  }
  func.func @transform_3(%arg0: i32) -> (i32, i32) {
    %c0_i32 = arith.constant 0 : i32
    %c0_i32_0 = arith.constant 0 : i32
    %c0_i32_1 = arith.constant 0 : i32
    return %c0_i32, %c0_i32_0 : i32, i32
  }
  func.func @transform_4(%arg0: i32) -> (i32, i32) {
    %c0_i32 = arith.constant 0 : i32
    %c0_i32_0 = arith.constant 0 : i32
    %c0_i32_1 = arith.constant 0 : i32
    return %c0_i32, %c0_i32_0 : i32, i32
  }
  func.func @transform_5(%arg0: i32) -> (i32, i32) {
    %c0_i32 = arith.constant 0 : i32
    %c0_i32_0 = arith.constant 0 : i32
    %c0_i32_1 = arith.constant 0 : i32
    return %c0_i32, %c0_i32_0 : i32, i32
  }
  func.func @transform_6(%arg0: i32) -> (i32, i32) {
    %c0_i32 = arith.constant 0 : i32
    %c0_i32_0 = arith.constant 0 : i32
    %c0_i32_1 = arith.constant 0 : i32
    return %c0_i32, %c0_i32_0 : i32, i32
  }
  func.func @transform_7(%arg0: i32) -> (i32, i32) {
    %c0_i32 = arith.constant 0 : i32
    %c0_i32_0 = arith.constant 0 : i32
    %c0_i32_1 = arith.constant 0 : i32
    return %c0_i32, %c0_i32_0 : i32, i32
  }
  func.func @transform_8(%arg0: i32) -> (i32, i32) {
    %c0_i32 = arith.constant 0 : i32
    %c0_i32_0 = arith.constant 0 : i32
    %c0_i32_1 = arith.constant 0 : i32
    return %c0_i32, %c0_i32_0 : i32, i32
  }
  func.func @transform_9(%arg0: i32) -> (i32, i32) {
    %c0_i32 = arith.constant 0 : i32
    %c0_i32_0 = arith.constant 0 : i32
    %c0_i32_1 = arith.constant 0 : i32
    return %c0_i32, %c0_i32_0 : i32, i32
  }
  func.func @transform_10(%arg0: i32) -> (i32, i32) {
    %c0_i32 = arith.constant 0 : i32
    %c0_i32_0 = arith.constant 0 : i32
    %c0_i32_1 = arith.constant 0 : i32
    return %c0_i32, %c0_i32_0 : i32, i32
  }
  func.func @transform_11(%arg0: i32) -> (i32, i32) {
    %c0_i32 = arith.constant 0 : i32
    %c0_i32_0 = arith.constant 0 : i32
    %c0_i32_1 = arith.constant 0 : i32
    return %c0_i32, %c0_i32_0 : i32, i32
  }
  func.func @transform_12(%arg0: i32) -> (i32, i32) {
    %c0_i32 = arith.constant 0 : i32
    %c0_i32_0 = arith.constant 0 : i32
    %c0_i32_1 = arith.constant 0 : i32
    return %c0_i32, %c0_i32_0 : i32, i32
  }
  func.func @transform_13(%arg0: i32) -> (i32, i32) {
    %c0_i32 = arith.constant 0 : i32
    %c0_i32_0 = arith.constant 0 : i32
    %c0_i32_1 = arith.constant 0 : i32
    return %c0_i32, %c0_i32_0 : i32, i32
  }
  func.func @transform_14(%arg0: i32) -> (i32, i32) {
    %c0_i32 = arith.constant 0 : i32
    %c0_i32_0 = arith.constant 0 : i32
    %c0_i32_1 = arith.constant 0 : i32
    return %c0_i32, %c0_i32_0 : i32, i32
  }
  func.func @transform_15(%arg0: i32) -> (i32, i32) {
    %c0_i32 = arith.constant 0 : i32
    %c0_i32_0 = arith.constant 0 : i32
    %c0_i32_1 = arith.constant 0 : i32
    return %c0_i32, %c0_i32_0 : i32, i32
  }
  func.func @transform_16(%arg0: i32) -> (i32, i32) {
    %c0_i32 = arith.constant 0 : i32
    %c0_i32_0 = arith.constant 0 : i32
    %c0_i32_1 = arith.constant 0 : i32
    return %c0_i32, %c0_i32_0 : i32, i32
  }
  func.func @transform_17(%arg0: i32) -> (i32, i32) {
    %c0_i32 = arith.constant 0 : i32
    %c0_i32_0 = arith.constant 0 : i32
    %c0_i32_1 = arith.constant 0 : i32
    return %c0_i32, %c0_i32_0 : i32, i32
  }
  func.func @transform_18(%arg0: i32) -> (i32, i32) {
    %c0_i32 = arith.constant 0 : i32
    %c0_i32_0 = arith.constant 0 : i32
    %c0_i32_1 = arith.constant 0 : i32
    return %c0_i32, %c0_i32_0 : i32, i32
  }
  func.func @transform_19(%arg0: i32) -> (i32, i32) {
    %c0_i32 = arith.constant 0 : i32
    %c0_i32_0 = arith.constant 0 : i32
    return %arg0, %c0_i32 : i32, i32
  }
}

</mosaic_0001>

<llo_original>
// kernel: tpu_custom_call.1
$region0: #{tpu_custom_call.1}
  #allocation0 [shape = 'u32[]', space=smem, size = 0x4, offset = 0x4, fixed_abs, tag = 'smem constant byte address 0x4 - core index']
  #allocation1 [shape = 'u32[144,128]{1,0:T(1,128)}', space=vmem, size = 0x12000, scoped, tag = 'internal scratch']
  %s0 = inlined_call_operand.hbm [shape: bf16[32,768], index: 0, kind: input, shape index: {}]
  %s1 = inlined_call_operand.hbm [shape: bf16[32,768], index: 1, kind: input, shape index: {}]
  %s2 = inlined_call_operand.hbm [shape: bf16[768,512], index: 2, kind: input, shape index: {}]
  %s3 = inlined_call_operand.vmem [shape: f32[1,512], index: 3, kind: input, shape index: {}]
  %s4 = inlined_call_operand.hbm [shape: bf16[768,512], index: 4, kind: input, shape index: {}]
  %s5 = inlined_call_operand.vmem [shape: f32[1,512], index: 5, kind: input, shape index: {}]
  %s6 = inlined_call_operand.hbm [shape: bf16[512,256], index: 6, kind: input, shape index: {}]
  %s7 = inlined_call_operand.hbm [shape: bf16[512,256], index: 7, kind: input, shape index: {}]
  %s8 = inlined_call_operand.hbm [shape: f32[1,256], index: 8, kind: input, shape index: {}]
  %s9 = inlined_call_operand.hbm [shape: bf16[256,128], index: 9, kind: input, shape index: {}]
  %s10 = inlined_call_operand.hbm [shape: f32[1,128], index: 10, kind: input, shape index: {}]
  %s11 = inlined_call_operand.hbm [shape: bf16[128,128], index: 11, kind: input, shape index: {}]
  %s12 = inlined_call_operand.vmem [shape: f32[1,128], index: 12, kind: input, shape index: {}]
  %s13 = inlined_call_operand.hbm [shape: bf16[128,512], index: 13, kind: input, shape index: {}]
  %s14 = inlined_call_operand.vmem [shape: f32[1,512], index: 14, kind: input, shape index: {}]
  %s15 = inlined_call_operand.hbm [shape: bf16[512,1024], index: 15, kind: input, shape index: {}]
  %s16 = inlined_call_operand.vmem [shape: f32[1,1024], index: 16, kind: input, shape index: {}]
  %s17 = inlined_call_operand.hbm [shape: bf16[1024,128], index: 17, kind: input, shape index: {}]
  %s18 = inlined_call_operand.vmem [shape: f32[1,128], index: 18, kind: input, shape index: {}]
  %s19 = inlined_call_operand.hbm [shape: f32[32,128], index: 19, kind: output, shape index: {}]
  %s20 = sld [smem:[#allocation0]]
  $region138: #{tpu_custom_call.1} parent=0
    _
  %s22 = ssub.s32 1, %s20
  %s23 = scalar_select 0, %s22, %s20
  $region1: #{tpu_custom_call.1} parent=0
    #allocation2 [shape = 'u8[49152]{0}', space=vmem, size = 0xc000, scoped, tag = 'input window, operand 0, single buffered']
    #allocation3 [shape = 's32[1]{0}', space=sflag, size = 0x4, scoped, tag = 'scoped memory for tpu_custom_call.1']
    #allocation4 [shape = 's32[1]{0}', space=sflag, size = 0x4, scoped, tag = 'scoped memory for tpu_custom_call.1']
    #allocation5 [shape = 'u8[49152]{0}', space=vmem, size = 0xc000, scoped, tag = 'input window, operand 1, single buffered']
    #allocation6 [shape = 's32[1]{0}', space=sflag, size = 0x4, scoped, tag = 'scoped memory for tpu_custom_call.1']
    #allocation7 [shape = 'u8[786432]{0}', space=vmem, size = 0xc0000, scoped, tag = 'input window, operand 2, single buffered']
    #allocation8 [shape = 'u8[786432]{0}', space=vmem, size = 0xc0000, scoped, tag = 'input window, operand 4, single buffered']
    #allocation9 [shape = 's32[1]{0}', space=sflag, size = 0x4, scoped, tag = 'scoped memory for tpu_custom_call.1']
    #allocation10 [shape = 'u8[262144]{0}', space=vmem, size = 0x40000, scoped, tag = 'input window, operand 6, single buffered']
    #allocation11 [shape = 'u8[262144]{0}', space=vmem, size = 0x40000, scoped, tag = 'input window, operand 7, single buffered']
    #allocation12 [shape = 's32[1]{0}', space=sflag, size = 0x4, scoped, tag = 'scoped memory for tpu_custom_call.1']
    #allocation13 [shape = 'u8[1024]{0}', space=vmem, size = 0x400, scoped, tag = 'input window, operand 8, single buffered']
    #allocation14 [shape = 'u8[65536]{0}', space=vmem, size = 0x10000, scoped, tag = 'input window, operand 9, single buffered']
    #allocation15 [shape = 's32[1]{0}', space=sflag, size = 0x4, scoped, tag = 'scoped memory for tpu_custom_call.1']
    #allocation16 [shape = 'u8[512]{0}', space=vmem, size = 0x400, scoped, tag = 'input window, operand 10, single buffered']
    #allocation17 [shape = 'u8[32768]{0}', space=vmem, size = 0x8000, scoped, tag = 'input window, operand 11, single buffered']
    #allocation18 [shape = 's32[1]{0}', space=sflag, size = 0x4, scoped, tag = 'scoped memory for tpu_custom_call.1']
    #allocation19 [shape = 'u8[131072]{0}', space=vmem, size = 0x20000, scoped, tag = 'input window, operand 13, single buffered']
    #allocation20 [shape = 'u8[1048576]{0}', space=vmem, size = 0x100000, scoped, tag = 'input window, operand 15, single buffered']
    #allocation21 [shape = 's32[1]{0}', space=sflag, size = 0x4, scoped, tag = 'scoped memory for tpu_custom_call.1']
    #allocation22 [shape = 'u8[262144]{0}', space=vmem, size = 0x40000, scoped, tag = 'input window, operand 17, single buffered']
    #allocation23 [shape = 'u8[16384]{0}', space=vmem, size = 0x4000, scoped, tag = 'output window, operand 0, single buffered']
    %24 = vsyncpa [#allocation3], 0
    %25 = vsyncpa [#allocation6], 0
    %26 = vsyncpa [#allocation9], 0
    %27 = vsyncpa [#allocation12], 0
    %28 = vsyncpa [#allocation15], 0
    %29 = vsyncpa [#allocation18], 0
    %30 = vsyncpa [#allocation21], 0
    %31 = vsyncpa [#allocation4], 0
    // Predicated region
    $region2: #{tpu_custom_call.1} parent=1 // pred_check
      _
    $region3: #{tpu_custom_call.1} parent=1 // pred_check_branch
      %33 = sbr.rel (0) target = $region5
    $region4: #{tpu_custom_call.1} parent=1 // pred_region
      %s35 = ssub.s32 1536, 1536
      %36 = vsyncadd [#allocation3], %s35
      %s37 = sshll.u32 [#allocation2], 4
      %s38 = int_to_ptr.vmem [resolvable:$true] %s37
      %43 = dma.hbm_to_vmem [thread:$0]  %s0, 1536, %s38, [#allocation3], 384, 384, 24
    $region5: #{tpu_custom_call.1} parent=1 // pred_fallthru
      _
    // Predicated region
    $region6: #{tpu_custom_call.1} parent=1 // pred_check
      _
    $region7: #{tpu_custom_call.1} parent=1 // pred_check_branch
      %45 = sbr.rel (0) target = $region9
    $region8: #{tpu_custom_call.1} parent=1 // pred_region
      %s47 = ssub.s32 1536, 1536
      %48 = vsyncadd [#allocation6], %s47
      %s49 = sshll.u32 [#allocation5], 4
      %s50 = int_to_ptr.vmem [resolvable:$true] %s49
      %55 = dma.hbm_to_vmem [thread:$0]  %s1, 1536, %s50, [#allocation6], 384, 384, 24
    $region9: #{tpu_custom_call.1} parent=1 // pred_fallthru
      _
    // Predicated region
    $region10: #{tpu_custom_call.1} parent=1 // pred_check
      _
    $region11: #{tpu_custom_call.1} parent=1 // pred_check_branch
      %57 = sbr.rel (0) target = $region13
    $region12: #{tpu_custom_call.1} parent=1 // pred_region
      %s59 = ssub.s32 24576, 24576
      %60 = vsyncadd [#allocation6], %s59
      %s61 = sshll.u32 [#allocation7], 4
      %s62 = int_to_ptr.vmem [resolvable:$true] %s61
      %67 = dma.hbm_to_vmem [thread:$0]  %s2, 24576, %s62, [#allocation6], 256, 256, 16
    $region13: #{tpu_custom_call.1} parent=1 // pred_fallthru
      _
    // Predicated region
    $region14: #{tpu_custom_call.1} parent=1 // pred_check
      _
    $region15: #{tpu_custom_call.1} parent=1 // pred_check_branch
      %69 = sbr.rel (0) target = $region17
    $region16: #{tpu_custom_call.1} parent=1 // pred_region
      _
    $region17: #{tpu_custom_call.1} parent=1 // pred_fallthru
      _
    // Predicated region
    $region18: #{tpu_custom_call.1} parent=1 // pred_check
      _
    $region19: #{tpu_custom_call.1} parent=1 // pred_check_branch
      %71 = sbr.rel (0) target = $region21
    $region20: #{tpu_custom_call.1} parent=1 // pred_region
      %s73 = ssub.s32 24576, 24576
      %74 = vsyncadd [#allocation9], %s73
      %s75 = sshll.u32 [#allocation8], 4
      %s76 = int_to_ptr.vmem [resolvable:$true] %s75
      %81 = dma.hbm_to_vmem [thread:$0]  %s4, 24576, %s76, [#allocation9], 256, 256, 16
    $region21: #{tpu_custom_call.1} parent=1 // pred_fallthru
      _
    // Predicated region
    $region22: #{tpu_custom_call.1} parent=1 // pred_check
      _
    $region23: #{tpu_custom_call.1} parent=1 // pred_check_branch
      %83 = sbr.rel (0) target = $region25
    $region24: #{tpu_custom_call.1} parent=1 // pred_region
      _
    $region25: #{tpu_custom_call.1} parent=1 // pred_fallthru
      _
    // Predicated region
    $region26: #{tpu_custom_call.1} parent=1 // pred_check
      _
    $region27: #{tpu_custom_call.1} parent=1 // pred_check_branch
      %85 = sbr.rel (0) target = $region29
    $region28: #{tpu_custom_call.1} parent=1 // pred_region
      %s87 = ssub.s32 8192, 8192
      %88 = vsyncadd [#allocation9], %s87
      %s89 = sshll.u32 [#allocation10], 4
      %s90 = int_to_ptr.vmem [resolvable:$true] %s89
      %95 = dma.hbm_to_vmem [thread:$0]  %s6, 8192, %s90, [#allocation9], 128, 128, 8
    $region29: #{tpu_custom_call.1} parent=1 // pred_fallthru
      _
    // Predicated region
    $region30: #{tpu_custom_call.1} parent=1 // pred_check
      _
    $region31: #{tpu_custom_call.1} parent=1 // pred_check_branch
      %97 = sbr.rel (0) target = $region33
    $region32: #{tpu_custom_call.1} parent=1 // pred_region
      %s99 = ssub.s32 8192, 8192
      %100 = vsyncadd [#allocation12], %s99
      %s101 = sshll.u32 [#allocation11], 4
      %s102 = int_to_ptr.vmem [resolvable:$true] %s101
      %107 = dma.hbm_to_vmem [thread:$0]  %s7, 8192, %s102, [#allocation12], 128, 128, 8
    $region33: #{tpu_custom_call.1} parent=1 // pred_fallthru
      _
    // Predicated region
    $region34: #{tpu_custom_call.1} parent=1 // pred_check
      _
    $region35: #{tpu_custom_call.1} parent=1 // pred_check_branch
      %109 = sbr.rel (0) target = $region37
    $region36: #{tpu_custom_call.1} parent=1 // pred_region
      %s111 = ssub.s32 32, 32
      %112 = vsyncadd [#allocation12], %s111
      %s114 = sshll.u32 [#allocation13], 4
      %s115 = int_to_ptr.vmem [resolvable:$true] %s114
      %117 = dma.hbm_to_vmem [thread:$0]  %s8, 32, %s115, [#allocation12]
    $region37: #{tpu_custom_call.1} parent=1 // pred_fallthru
      _
    // Predicated region
    $region38: #{tpu_custom_call.1} parent=1 // pred_check
      _
    $region39: #{tpu_custom_call.1} parent=1 // pred_check_branch
      %119 = sbr.rel (0) target = $region41
    $region40: #{tpu_custom_call.1} parent=1 // pred_region
      %s121 = ssub.s32 2048, 2048
      %122 = vsyncadd [#allocation15], %s121
      %s123 = sshll.u32 [#allocation14], 4
      %s124 = int_to_ptr.vmem [resolvable:$true] %s123
      %129 = dma.hbm_to_vmem [thread:$0]  %s9, 2048, %s124, [#allocation15], 64, 64, 4
    $region41: #{tpu_custom_call.1} parent=1 // pred_fallthru
      _
    // Predicated region
    $region42: #{tpu_custom_call.1} parent=1 // pred_check
      _
    $region43: #{tpu_custom_call.1} parent=1 // pred_check_branch
      %131 = sbr.rel (0) target = $region45
    $region44: #{tpu_custom_call.1} parent=1 // pred_region
      %s133 = ssub.s32 16, 16
      %134 = vsyncadd [#allocation15], %s133
      %s136 = sshll.u32 [#allocation16], 4
      %s137 = int_to_ptr.vmem [resolvable:$true] %s136
      %139 = dma.hbm_to_vmem [thread:$0]  %s10, 16, %s137, [#allocation15]
    $region45: #{tpu_custom_call.1} parent=1 // pred_fallthru
      _
    // Predicated region
    $region46: #{tpu_custom_call.1} parent=1 // pred_check
      _
    $region47: #{tpu_custom_call.1} parent=1 // pred_check_branch
      %141 = sbr.rel (0) target = $region49
    $region48: #{tpu_custom_call.1} parent=1 // pred_region
      %s143 = ssub.s32 1024, 1024
      %144 = vsyncadd [#allocation18], %s143
      %s145 = sshll.u32 [#allocation17], 4
      %s146 = int_to_ptr.vmem [resolvable:$true] %s145
      %151 = dma.hbm_to_vmem [thread:$0]  %s11, 1024, %s146, [#allocation18], 64, 64, 4
    $region49: #{tpu_custom_call.1} parent=1 // pred_fallthru
      _
    // Predicated region
    $region50: #{tpu_custom_call.1} parent=1 // pred_check
      _
    $region51: #{tpu_custom_call.1} parent=1 // pred_check_branch
      %153 = sbr.rel (0) target = $region53
    $region52: #{tpu_custom_call.1} parent=1 // pred_region
      _
    $region53: #{tpu_custom_call.1} parent=1 // pred_fallthru
      _
    // Predicated region
    $region54: #{tpu_custom_call.1} parent=1 // pred_check
      _
    $region55: #{tpu_custom_call.1} parent=1 // pred_check_branch
      %155 = sbr.rel (0) target = $region57
    $region56: #{tpu_custom_call.1} parent=1 // pred_region
      %s157 = ssub.s32 4096, 4096
      %158 = vsyncadd [#allocation18], %s157
      %s159 = sshll.u32 [#allocation19], 4
      %s160 = int_to_ptr.vmem [resolvable:$true] %s159
      %165 = dma.hbm_to_vmem [thread:$0]  %s13, 4096, %s160, [#allocation18], 256, 256, 16
    $region57: #{tpu_custom_call.1} parent=1 // pred_fallthru
      _
    // Predicated region
    $region58: #{tpu_custom_call.1} parent=1 // pred_check
      _
    $region59: #{tpu_custom_call.1} parent=1 // pred_check_branch
      %167 = sbr.rel (0) target = $region61
    $region60: #{tpu_custom_call.1} parent=1 // pred_region
      _
    $region61: #{tpu_custom_call.1} parent=1 // pred_fallthru
      _
    // Predicated region
    $region62: #{tpu_custom_call.1} parent=1 // pred_check
      _
    $region63: #{tpu_custom_call.1} parent=1 // pred_check_branch
      %169 = sbr.rel (0) target = $region65
    $region64: #{tpu_custom_call.1} parent=1 // pred_region
      %s171 = ssub.s32 32768, 32768
      %172 = vsyncadd [#allocation21], %s171
      %s173 = sshll.u32 [#allocation20], 4
      %s174 = int_to_ptr.vmem [resolvable:$true] %s173
      %179 = dma.hbm_to_vmem [thread:$0]  %s15, 32768, %s174, [#allocation21], 512, 512, 32
    $region65: #{tpu_custom_call.1} parent=1 // pred_fallthru
      _
    // Predicated region
    $region66: #{tpu_custom_call.1} parent=1 // pred_check
      _
    $region67: #{tpu_custom_call.1} parent=1 // pred_check_branch
      %181 = sbr.rel (0) target = $region69
    $region68: #{tpu_custom_call.1} parent=1 // pred_region
      _
    $region69: #{tpu_custom_call.1} parent=1 // pred_fallthru
      _
    // Predicated region
    $region70: #{tpu_custom_call.1} parent=1 // pred_check
      _
    $region71: #{tpu_custom_call.1} parent=1 // pred_check_branch
      %183 = sbr.rel (0) target = $region73
    $region72: #{tpu_custom_call.1} parent=1 // pred_region
      %s185 = ssub.s32 8192, 8192
      %186 = vsyncadd [#allocation21], %s185
      %s187 = sshll.u32 [#allocation22], 4
      %s188 = int_to_ptr.vmem [resolvable:$true] %s187
      %193 = dma.hbm_to_vmem [thread:$0]  %s17, 8192, %s188, [#allocation21], 64, 64, 4
    $region73: #{tpu_custom_call.1} parent=1 // pred_fallthru
      _
    // Predicated region
    $region74: #{tpu_custom_call.1} parent=1 // pred_check
      _
    $region75: #{tpu_custom_call.1} parent=1 // pred_check_branch
      %195 = sbr.rel (0) target = $region77
    $region76: #{tpu_custom_call.1} parent=1 // pred_region
      _
    $region77: #{tpu_custom_call.1} parent=1 // pred_fallthru
      _
    // Predicated region
    $region78: #{tpu_custom_call.1} parent=1 // pred_check
      _
    $region79: #{tpu_custom_call.1} parent=1 // pred_check_branch
      %197 = sbr.rel (0) target = $region81
    $region80: #{tpu_custom_call.1} parent=1 // pred_region
      %198 = dma.done [#allocation3], 1536
    $region81: #{tpu_custom_call.1} parent=1 // pred_fallthru
      _
    // Predicated region
    $region82: #{tpu_custom_call.1} parent=1 // pred_check
      _
    $region83: #{tpu_custom_call.1} parent=1 // pred_check_branch
      %200 = sbr.rel (0) target = $region85
    $region84: #{tpu_custom_call.1} parent=1 // pred_region
      %201 = dma.done [#allocation6], 1536
    $region85: #{tpu_custom_call.1} parent=1 // pred_fallthru
      _
    // Predicated region
    $region86: #{tpu_custom_call.1} parent=1 // pred_check
      _
    $region87: #{tpu_custom_call.1} parent=1 // pred_check_branch
      %203 = sbr.rel (0) target = $region89
    $region88: #{tpu_custom_call.1} parent=1 // pred_region
      %204 = dma.done [#allocation6], 24576
    $region89: #{tpu_custom_call.1} parent=1 // pred_fallthru
      _
    // Predicated region
    $region90: #{tpu_custom_call.1} parent=1 // pred_check
      _
    $region91: #{tpu_custom_call.1} parent=1 // pred_check_branch
      %206 = sbr.rel (0) target = $region93
    $region92: #{tpu_custom_call.1} parent=1 // pred_region
      %207 = dma.done [#allocation9], 24576
    $region93: #{tpu_custom_call.1} parent=1 // pred_fallthru
      _
    // Predicated region
    $region94: #{tpu_custom_call.1} parent=1 // pred_check
      _
    $region95: #{tpu_custom_call.1} parent=1 // pred_check_branch
      %209 = sbr.rel (0) target = $region97
    $region96: #{tpu_custom_call.1} parent=1 // pred_region
      %210 = dma.done [#allocation9], 8192
    $region97: #{tpu_custom_call.1} parent=1 // pred_fallthru
      _
    // Predicated region
    $region98: #{tpu_custom_call.1} parent=1 // pred_check
      _
    $region99: #{tpu_custom_call.1} parent=1 // pred_check_branch
      %212 = sbr.rel (0) target = $region101
    $region100: #{tpu_custom_call.1} parent=1 // pred_region
      %213 = dma.done [#allocation12], 8192
    $region101: #{tpu_custom_call.1} parent=1 // pred_fallthru
      _
    // Predicated region
    $region102: #{tpu_custom_call.1} parent=1 // pred_check
      _
    $region103: #{tpu_custom_call.1} parent=1 // pred_check_branch
      %215 = sbr.rel (0) target = $region105
    $region104: #{tpu_custom_call.1} parent=1 // pred_region
      %216 = dma.done [#allocation12], 32
    $region105: #{tpu_custom_call.1} parent=1 // pred_fallthru
      _
    // Predicated region
    $region106: #{tpu_custom_call.1} parent=1 // pred_check
      _
    $region107: #{tpu_custom_call.1} parent=1 // pred_check_branch
      %218 = sbr.rel (0) target = $region109
    $region108: #{tpu_custom_call.1} parent=1 // pred_region
      %219 = dma.done [#allocation15], 2048
    $region109: #{tpu_custom_call.1} parent=1 // pred_fallthru
      _
    // Predicated region
    $region110: #{tpu_custom_call.1} parent=1 // pred_check
      _
    $region111: #{tpu_custom_call.1} parent=1 // pred_check_branch
      %221 = sbr.rel (0) target = $region113
    $region112: #{tpu_custom_call.1} parent=1 // pred_region
      %222 = dma.done [#allocation15], 16
    $region113: #{tpu_custom_call.1} parent=1 // pred_fallthru
      _
    // Predicated region
    $region114: #{tpu_custom_call.1} parent=1 // pred_check
      _
    $region115: #{tpu_custom_call.1} parent=1 // pred_check_branch
      %224 = sbr.rel (0) target = $region117
    $region116: #{tpu_custom_call.1} parent=1 // pred_region
      %225 = dma.done [#allocation18], 1024
    $region117: #{tpu_custom_call.1} parent=1 // pred_fallthru
      _
    // Predicated region
    $region118: #{tpu_custom_call.1} parent=1 // pred_check
      _
    $region119: #{tpu_custom_call.1} parent=1 // pred_check_branch
      %227 = sbr.rel (0) target = $region121
    $region120: #{tpu_custom_call.1} parent=1 // pred_region
      %228 = dma.done [#allocation18], 4096
    $region121: #{tpu_custom_call.1} parent=1 // pred_fallthru
      _
    // Predicated region
    $region122: #{tpu_custom_call.1} parent=1 // pred_check
      _
    $region123: #{tpu_custom_call.1} parent=1 // pred_check_branch
      %230 = sbr.rel (0) target = $region125
    $region124: #{tpu_custom_call.1} parent=1 // pred_region
      %231 = dma.done [#allocation21], 32768
    $region125: #{tpu_custom_call.1} parent=1 // pred_fallthru
      _
    // Predicated region
    $region126: #{tpu_custom_call.1} parent=1 // pred_check
      _
    $region127: #{tpu_custom_call.1} parent=1 // pred_check_branch
      %233 = sbr.rel (0) target = $region129
    $region128: #{tpu_custom_call.1} parent=1 // pred_region
      %234 = dma.done [#allocation21], 8192
    $region129: #{tpu_custom_call.1} parent=1 // pred_fallthru
      _
    %v236 = vld [vmem:[#allocation2] sm:$0xff]
    %v237 = vld [vmem:[#allocation2 + $0x8] sm:$0xff]
    %v238 = vld [vmem:[#allocation2 + $0x10] sm:$0xff]
    %v239 = vld [vmem:[#allocation2 + $0x18] sm:$0xff]
    %v240 = vld [vmem:[#allocation2 + $0x20] sm:$0xff]
    %v241 = vld [vmem:[#allocation2 + $0x28] sm:$0xff]
    %v242 = vld [vmem:[#allocation2 + $0x30] sm:$0xff]
    %v243 = vld [vmem:[#allocation2 + $0x38] sm:$0xff]
    %v244 = vld [vmem:[#allocation2 + $0x40] sm:$0xff]
    %v245 = vld [vmem:[#allocation2 + $0x48] sm:$0xff]
    %v246 = vld [vmem:[#allocation2 + $0x50] sm:$0xff]
    %v247 = vld [vmem:[#allocation2 + $0x58] sm:$0xff]
    %v248 = vld [vmem:[#allocation7] sm:$0xff]
    %v249 = vld [vmem:[#allocation7 + $0x8] sm:$0xff]
    %v250 = vld [vmem:[#allocation7 + $0x10] sm:$0xff]
    %v251 = vld [vmem:[#allocation7 + $0x18] sm:$0xff]
    %v252 = vld [vmem:[#allocation7 + $0x20] sm:$0xff]
    %v253 = vld [vmem:[#allocation7 + $0x28] sm:$0xff]
    %v254 = vld [vmem:[#allocation7 + $0x30] sm:$0xff]
    %v255 = vld [vmem:[#allocation7 + $0x38] sm:$0xff]
    %v256 = vld [vmem:[#allocation7 + $0x40] sm:$0xff]
    %v257 = vld [vmem:[#allocation7 + $0x48] sm:$0xff]
    %v258 = vld [vmem:[#allocation7 + $0x50] sm:$0xff]
    %v259 = vld [vmem:[#allocation7 + $0x58] sm:$0xff]
    %v260 = vld [vmem:[#allocation7 + $0x60] sm:$0xff]
    %v261 = vld [vmem:[#allocation7 + $0x68] sm:$0xff]
    %v262 = vld [vmem:[#allocation7 + $0x70] sm:$0xff]
    %v263 = vld [vmem:[#allocation7 + $0x78] sm:$0xff]
    %v264 = vld [vmem:[#allocation7 + $0x80] sm:$0xff]
    %v265 = vld [vmem:[#allocation7 + $0x88] sm:$0xff]
    %v266 = vld [vmem:[#allocation7 + $0x90] sm:$0xff]
    %v267 = vld [vmem:[#allocation7 + $0x98] sm:$0xff]
    %v268 = vld [vmem:[#allocation7 + $0xa0] sm:$0xff]
    %v269 = vld [vmem:[#allocation7 + $0xa8] sm:$0xff]
    %v270 = vld [vmem:[#allocation7 + $0xb0] sm:$0xff]
    %v271 = vld [vmem:[#allocation7 + $0xb8] sm:$0xff]
    %v272 = vld [vmem:[#allocation7 + $0xc0] sm:$0xff]
    %v273 = vld [vmem:[#allocation7 + $0xc8] sm:$0xff]
    %v274 = vld [vmem:[#allocation7 + $0xd0] sm:$0xff]
    %v275 = vld [vmem:[#allocation7 + $0xd8] sm:$0xff]
    %v276 = vld [vmem:[#allocation7 + $0xe0] sm:$0xff]
    %v277 = vld [vmem:[#allocation7 + $0xe8] sm:$0xff]
    %v278 = vld [vmem:[#allocation7 + $0xf0] sm:$0xff]
    %v279 = vld [vmem:[#allocation7 + $0xf8] sm:$0xff]
    %v280 = vld [vmem:[#allocation7 + $0x100] sm:$0xff]
    %v281 = vld [vmem:[#allocation7 + $0x108] sm:$0xff]
    %v282 = vld [vmem:[#allocation7 + $0x110] sm:$0xff]
    %v283 = vld [vmem:[#allocation7 + $0x118] sm:$0xff]
    %v284 = vld [vmem:[#allocation7 + $0x120] sm:$0xff]
    %v285 = vld [vmem:[#allocation7 + $0x128] sm:$0xff]
    %v286 = vld [vmem:[#allocation7 + $0x130] sm:$0xff]
    %v287 = vld [vmem:[#allocation7 + $0x138] sm:$0xff]
    %v288 = vld [vmem:[#allocation7 + $0x140] sm:$0xff]
    %v289 = vld [vmem:[#allocation7 + $0x148] sm:$0xff]
    %v290 = vld [vmem:[#allocation7 + $0x150] sm:$0xff]
    %v291 = vld [vmem:[#allocation7 + $0x158] sm:$0xff]
    %v292 = vld [vmem:[#allocation7 + $0x160] sm:$0xff]
    %v293 = vld [vmem:[#allocation7 + $0x168] sm:$0xff]
    %v294 = vld [vmem:[#allocation7 + $0x170] sm:$0xff]
    %v295 = vld [vmem:[#allocation7 + $0x178] sm:$0xff]
    %v296 = vld [vmem:[#allocation7 + $0x180] sm:$0xff]
    %v297 = vld [vmem:[#allocation7 + $0x188] sm:$0xff]
    %v298 = vld [vmem:[#allocation7 + $0x190] sm:$0xff]
    %v299 = vld [vmem:[#allocation7 + $0x198] sm:$0xff]
    %v300 = vld [vmem:[#allocation7 + $0x1a0] sm:$0xff]
    %v301 = vld [vmem:[#allocation7 + $0x1a8] sm:$0xff]
    %v302 = vld [vmem:[#allocation7 + $0x1b0] sm:$0xff]
    %v303 = vld [vmem:[#allocation7 + $0x1b8] sm:$0xff]
    %v304 = vld [vmem:[#allocation7 + $0x1c0] sm:$0xff]
    %v305 = vld [vmem:[#allocation7 + $0x1c8] sm:$0xff]
    %v306 = vld [vmem:[#allocation7 + $0x1d0] sm:$0xff]
    %v307 = vld [vmem:[#allocation7 + $0x1d8] sm:$0xff]
    %v308 = vld [vmem:[#allocation7 + $0x1e0] sm:$0xff]
    %v309 = vld [vmem:[#allocation7 + $0x1e8] sm:$0xff]
    %v310 = vld [vmem:[#allocation7 + $0x1f0] sm:$0xff]
    %v311 = vld [vmem:[#allocation7 + $0x1f8] sm:$0xff]
    %v312 = vld [vmem:[#allocation7 + $0x200] sm:$0xff]
    %v313 = vld [vmem:[#allocation7 + $0x208] sm:$0xff]
    %v314 = vld [vmem:[#allocation7 + $0x210] sm:$0xff]
    %v315 = vld [vmem:[#allocation7 + $0x218] sm:$0xff]
    %v316 = vld [vmem:[#allocation7 + $0x220] sm:$0xff]
    %v317 = vld [vmem:[#allocation7 + $0x228] sm:$0xff]
    %v318 = vld [vmem:[#allocation7 + $0x230] sm:$0xff]
    %v319 = vld [vmem:[#allocation7 + $0x238] sm:$0xff]
    %v320 = vld [vmem:[#allocation7 + $0x240] sm:$0xff]
    %v321 = vld [vmem:[#allocation7 + $0x248] sm:$0xff]
    %v322 = vld [vmem:[#allocation7 + $0x250] sm:$0xff]
    %v323 = vld [vmem:[#allocation7 + $0x258] sm:$0xff]
    %v324 = vld [vmem:[#allocation7 + $0x260] sm:$0xff]
    %v325 = vld [vmem:[#allocation7 + $0x268] sm:$0xff]
    %v326 = vld [vmem:[#allocation7 + $0x270] sm:$0xff]
    %v327 = vld [vmem:[#allocation7 + $0x278] sm:$0xff]
    %v328 = vld [vmem:[#allocation7 + $0x280] sm:$0xff]
    %v329 = vld [vmem:[#allocation7 + $0x288] sm:$0xff]
    %v330 = vld [vmem:[#allocation7 + $0x290] sm:$0xff]
    %v331 = vld [vmem:[#allocation7 + $0x298] sm:$0xff]
    %v332 = vld [vmem:[#allocation7 + $0x2a0] sm:$0xff]
    %v333 = vld [vmem:[#allocation7 + $0x2a8] sm:$0xff]
    %v334 = vld [vmem:[#allocation7 + $0x2b0] sm:$0xff]
    %v335 = vld [vmem:[#allocation7 + $0x2b8] sm:$0xff]
    %v336 = vld [vmem:[#allocation7 + $0x2c0] sm:$0xff]
    %v337 = vld [vmem:[#allocation7 + $0x2c8] sm:$0xff]
    %v338 = vld [vmem:[#allocation7 + $0x2d0] sm:$0xff]
    %v339 = vld [vmem:[#allocation7 + $0x2d8] sm:$0xff]
    %v340 = vld [vmem:[#allocation7 + $0x2e0] sm:$0xff]
    %v341 = vld [vmem:[#allocation7 + $0x2e8] sm:$0xff]
    %v342 = vld [vmem:[#allocation7 + $0x2f0] sm:$0xff]
    %v343 = vld [vmem:[#allocation7 + $0x2f8] sm:$0xff]
    %v344 = vld [vmem:[#allocation7 + $0x300] sm:$0xff]
    %v345 = vld [vmem:[#allocation7 + $0x308] sm:$0xff]
    %v346 = vld [vmem:[#allocation7 + $0x310] sm:$0xff]
    %v347 = vld [vmem:[#allocation7 + $0x318] sm:$0xff]
    %v348 = vld [vmem:[#allocation7 + $0x320] sm:$0xff]
    %v349 = vld [vmem:[#allocation7 + $0x328] sm:$0xff]
    %v350 = vld [vmem:[#allocation7 + $0x330] sm:$0xff]
    %v351 = vld [vmem:[#allocation7 + $0x338] sm:$0xff]
    %v352 = vld [vmem:[#allocation7 + $0x340] sm:$0xff]
    %v353 = vld [vmem:[#allocation7 + $0x348] sm:$0xff]
    %v354 = vld [vmem:[#allocation7 + $0x350] sm:$0xff]
    %v355 = vld [vmem:[#allocation7 + $0x358] sm:$0xff]
    %v356 = vld [vmem:[#allocation7 + $0x360] sm:$0xff]
    %v357 = vld [vmem:[#allocation7 + $0x368] sm:$0xff]
    %v358 = vld [vmem:[#allocation7 + $0x370] sm:$0xff]
    %v359 = vld [vmem:[#allocation7 + $0x378] sm:$0xff]
    %v360 = vld [vmem:[#allocation7 + $0x380] sm:$0xff]
    %v361 = vld [vmem:[#allocation7 + $0x388] sm:$0xff]
    %v362 = vld [vmem:[#allocation7 + $0x390] sm:$0xff]
    %v363 = vld [vmem:[#allocation7 + $0x398] sm:$0xff]
    %v364 = vld [vmem:[#allocation7 + $0x3a0] sm:$0xff]
    %v365 = vld [vmem:[#allocation7 + $0x3a8] sm:$0xff]
    %v366 = vld [vmem:[#allocation7 + $0x3b0] sm:$0xff]
    %v367 = vld [vmem:[#allocation7 + $0x3b8] sm:$0xff]
    %v368 = vld [vmem:[#allocation7 + $0x3c0] sm:$0xff]
    %v369 = vld [vmem:[#allocation7 + $0x3c8] sm:$0xff]
    %v370 = vld [vmem:[#allocation7 + $0x3d0] sm:$0xff]
    %v371 = vld [vmem:[#allocation7 + $0x3d8] sm:$0xff]
    %v372 = vld [vmem:[#allocation7 + $0x3e0] sm:$0xff]
    %v373 = vld [vmem:[#allocation7 + $0x3e8] sm:$0xff]
    %v374 = vld [vmem:[#allocation7 + $0x3f0] sm:$0xff]
    %v375 = vld [vmem:[#allocation7 + $0x3f8] sm:$0xff]
    %v376 = vld [vmem:[#allocation7 + $0x400] sm:$0xff]
    %v377 = vld [vmem:[#allocation7 + $0x408] sm:$0xff]
    %v378 = vld [vmem:[#allocation7 + $0x410] sm:$0xff]
    %v379 = vld [vmem:[#allocation7 + $0x418] sm:$0xff]
    %v380 = vld [vmem:[#allocation7 + $0x420] sm:$0xff]
    %v381 = vld [vmem:[#allocation7 + $0x428] sm:$0xff]
    %v382 = vld [vmem:[#allocation7 + $0x430] sm:$0xff]
    %v383 = vld [vmem:[#allocation7 + $0x438] sm:$0xff]
    %v384 = vld [vmem:[#allocation7 + $0x440] sm:$0xff]
    %v385 = vld [vmem:[#allocation7 + $0x448] sm:$0xff]
    %v386 = vld [vmem:[#allocation7 + $0x450] sm:$0xff]
    %v387 = vld [vmem:[#allocation7 + $0x458] sm:$0xff]
    %v388 = vld [vmem:[#allocation7 + $0x460] sm:$0xff]
    %v389 = vld [vmem:[#allocation7 + $0x468] sm:$0xff]
    %v390 = vld [vmem:[#allocation7 + $0x470] sm:$0xff]
    %v391 = vld [vmem:[#allocation7 + $0x478] sm:$0xff]
    %v392 = vld [vmem:[#allocation7 + $0x480] sm:$0xff]
    %v393 = vld [vmem:[#allocation7 + $0x488] sm:$0xff]
    %v394 = vld [vmem:[#allocation7 + $0x490] sm:$0xff]
    %v395 = vld [vmem:[#allocation7 + $0x498] sm:$0xff]
    %v396 = vld [vmem:[#allocation7 + $0x4a0] sm:$0xff]
    %v397 = vld [vmem:[#allocation7 + $0x4a8] sm:$0xff]
    %v398 = vld [vmem:[#allocation7 + $0x4b0] sm:$0xff]
    %v399 = vld [vmem:[#allocation7 + $0x4b8] sm:$0xff]
    %v400 = vld [vmem:[#allocation7 + $0x4c0] sm:$0xff]
    %v401 = vld [vmem:[#allocation7 + $0x4c8] sm:$0xff]
    %v402 = vld [vmem:[#allocation7 + $0x4d0] sm:$0xff]
    %v403 = vld [vmem:[#allocation7 + $0x4d8] sm:$0xff]
    %v404 = vld [vmem:[#allocation7 + $0x4e0] sm:$0xff]
    %v405 = vld [vmem:[#allocation7 + $0x4e8] sm:$0xff]
    %v406 = vld [vmem:[#allocation7 + $0x4f0] sm:$0xff]
    %v407 = vld [vmem:[#allocation7 + $0x4f8] sm:$0xff]
    %v408 = vld [vmem:[#allocation7 + $0x500] sm:$0xff]
    %v409 = vld [vmem:[#allocation7 + $0x508] sm:$0xff]
    %v410 = vld [vmem:[#allocation7 + $0x510] sm:$0xff]
    %v411 = vld [vmem:[#allocation7 + $0x518] sm:$0xff]
    %v412 = vld [vmem:[#allocation7 + $0x520] sm:$0xff]
    %v413 = vld [vmem:[#allocation7 + $0x528] sm:$0xff]
    %v414 = vld [vmem:[#allocation7 + $0x530] sm:$0xff]
    %v415 = vld [vmem:[#allocation7 + $0x538] sm:$0xff]
    %v416 = vld [vmem:[#allocation7 + $0x540] sm:$0xff]
    %v417 = vld [vmem:[#allocation7 + $0x548] sm:$0xff]
    %v418 = vld [vmem:[#allocation7 + $0x550] sm:$0xff]
    %v419 = vld [vmem:[#allocation7 + $0x558] sm:$0xff]
    %v420 = vld [vmem:[#allocation7 + $0x560] sm:$0xff]
    %v421 = vld [vmem:[#allocation7 + $0x568] sm:$0xff]
    %v422 = vld [vmem:[#allocation7 + $0x570] sm:$0xff]
    %v423 = vld [vmem:[#allocation7 + $0x578] sm:$0xff]
    %v424 = vld [vmem:[#allocation7 + $0x580] sm:$0xff]
    %v425 = vld [vmem:[#allocation7 + $0x588] sm:$0xff]
    %v426 = vld [vmem:[#allocation7 + $0x590] sm:$0xff]
    %v427 = vld [vmem:[#allocation7 + $0x598] sm:$0xff]
    %v428 = vld [vmem:[#allocation7 + $0x5a0] sm:$0xff]
    %v429 = vld [vmem:[#allocation7 + $0x5a8] sm:$0xff]
    %v430 = vld [vmem:[#allocation7 + $0x5b0] sm:$0xff]
    %v431 = vld [vmem:[#allocation7 + $0x5b8] sm:$0xff]
    %v432 = vld [vmem:[#allocation7 + $0x5c0] sm:$0xff]
    %v433 = vld [vmem:[#allocation7 + $0x5c8] sm:$0xff]
    %v434 = vld [vmem:[#allocation7 + $0x5d0] sm:$0xff]
    %v435 = vld [vmem:[#allocation7 + $0x5d8] sm:$0xff]
    %v436 = vld [vmem:[#allocation7 + $0x5e0] sm:$0xff]
    %v437 = vld [vmem:[#allocation7 + $0x5e8] sm:$0xff]
    %v438 = vld [vmem:[#allocation7 + $0x5f0] sm:$0xff]
    %v439 = vld [vmem:[#allocation7 + $0x5f8] sm:$0xff]
    %v440 = vld [vmem:[%s3] sm:$0xf]
    %v442 = vlaneseq
    %v443 = vshrl.u32 %v442, 7
    %v444 = vsub.s32 0, %v443
    %v445 = vrot.slane %v440, %v444
    %v446 = vlaneseq
    %v447 = vshrl.u32 %v446, 7
    %v448 = vsub.s32 1, %v447
    %v449 = vrot.slane %v440, %v448
    %v450 = vlaneseq
    %v451 = vshrl.u32 %v450, 7
    %v452 = vsub.s32 2, %v451
    %v453 = vrot.slane %v440, %v452
    %v454 = vlaneseq
    %v455 = vshrl.u32 %v454, 7
    %v456 = vsub.s32 3, %v455
    %v457 = vrot.slane %v440, %v456
    %v474 = vunpack.c.l.b16 %v236
    %v475 = vunpack.c.h.b16 %v236
    %v476 = vunpack.c.l.b16 %v237
    %v477 = vunpack.c.h.b16 %v237
    %v478 = vunpack.c.l.b16 %v238
    %v479 = vunpack.c.h.b16 %v238
    %v480 = vunpack.c.l.b16 %v239
    %v481 = vunpack.c.h.b16 %v239
    %v482 = vunpack.c.l.b16 %v240
    %v483 = vunpack.c.h.b16 %v240
    %v484 = vunpack.c.l.b16 %v241
    %v485 = vunpack.c.h.b16 %v241
    %v486 = vunpack.c.l.b16 %v242
    %v487 = vunpack.c.h.b16 %v242
    %v488 = vunpack.c.l.b16 %v243
    %v489 = vunpack.c.h.b16 %v243
    %v490 = vunpack.c.l.b16 %v244
    %v491 = vunpack.c.h.b16 %v244
    %v492 = vunpack.c.l.b16 %v245
    %v493 = vunpack.c.h.b16 %v245
    %v494 = vunpack.c.l.b16 %v246
    %v495 = vunpack.c.h.b16 %v246
    %v496 = vunpack.c.l.b16 %v247
    %v497 = vunpack.c.h.b16 %v247
    %v498 = vpack.c.b16 %v480, %v474
    %v499 = vpack.c.b16 %v481, %v475
    %v500 = vpack.c.b16 %v482, %v476
    %v501 = vpack.c.b16 %v483, %v477
    %v502 = vpack.c.b16 %v484, %v478
    %v503 = vpack.c.b16 %v485, %v479
    %v504 = vpack.c.b16 %v492, %v486
    %v505 = vpack.c.b16 %v493, %v487
    %v506 = vpack.c.b16 %v494, %v488
    %v507 = vpack.c.b16 %v495, %v489
    %v508 = vpack.c.b16 %v496, %v490
    %v509 = vpack.c.b16 %v497, %v491
    %v714 = vunpack.c.l.b16 %v248
    %v715 = vunpack.c.h.b16 %v248
    %v716 = vunpack.c.l.b16 %v249
    %v717 = vunpack.c.h.b16 %v249
    %v718 = vunpack.c.l.b16 %v250
    %v719 = vunpack.c.h.b16 %v250
    %v720 = vunpack.c.l.b16 %v251
    %v721 = vunpack.c.h.b16 %v251
    %v722 = vunpack.c.l.b16 %v252
    %v723 = vunpack.c.h.b16 %v252
    %v724 = vunpack.c.l.b16 %v253
    %v725 = vunpack.c.h.b16 %v253
    %v726 = vunpack.c.l.b16 %v254
    %v727 = vunpack.c.h.b16 %v254
    %v728 = vunpack.c.l.b16 %v255
    %v729 = vunpack.c.h.b16 %v255
    %v730 = vunpack.c.l.b16 %v256
    %v731 = vunpack.c.h.b16 %v256
    %v732 = vunpack.c.l.b16 %v257
    %v733 = vunpack.c.h.b16 %v257
    %v734 = vunpack.c.l.b16 %v258
    %v735 = vunpack.c.h.b16 %v258
    %v736 = vunpack.c.l.b16 %v259
    %v737 = vunpack.c.h.b16 %v259
    %v738 = vunpack.c.l.b16 %v260
    %v739 = vunpack.c.h.b16 %v260
    %v740 = vunpack.c.l.b16 %v261
    %v741 = vunpack.c.h.b16 %v261
    %v742 = vunpack.c.l.b16 %v262
    %v743 = vunpack.c.h.b16 %v262
    %v744 = vunpack.c.l.b16 %v263
    %v745 = vunpack.c.h.b16 %v263
    %v746 = vunpack.c.l.b16 %v264
    %v747 = vunpack.c.h.b16 %v264
    %v748 = vunpack.c.l.b16 %v265
    %v749 = vunpack.c.h.b16 %v265
    %v750 = vunpack.c.l.b16 %v266
    %v751 = vunpack.c.h.b16 %v266
    %v752 = vunpack.c.l.b16 %v267
    %v753 = vunpack.c.h.b16 %v267
    %v754 = vunpack.c.l.b16 %v268
    %v755 = vunpack.c.h.b16 %v268
    %v756 = vunpack.c.l.b16 %v269
    %v757 = vunpack.c.h.b16 %v269
    %v758 = vunpack.c.l.b16 %v270
    %v759 = vunpack.c.h.b16 %v270
    %v760 = vunpack.c.l.b16 %v271
    %v761 = vunpack.c.h.b16 %v271
    %v762 = vunpack.c.l.b16 %v272
    %v763 = vunpack.c.h.b16 %v272
    %v764 = vunpack.c.l.b16 %v273
    %v765 = vunpack.c.h.b16 %v273
    %v766 = vunpack.c.l.b16 %v274
    %v767 = vunpack.c.h.b16 %v274
    %v768 = vunpack.c.l.b16 %v275
    %v769 = vunpack.c.h.b16 %v275
    %v770 = vunpack.c.l.b16 %v276
    %v771 = vunpack.c.h.b16 %v276
    %v772 = vunpack.c.l.b16 %v277
    %v773 = vunpack.c.h.b16 %v277
    %v774 = vunpack.c.l.b16 %v278
    %v775 = vunpack.c.h.b16 %v278
    %v776 = vunpack.c.l.b16 %v279
    %v777 = vunpack.c.h.b16 %v279
    %v778 = vunpack.c.l.b16 %v280
    %v779 = vunpack.c.h.b16 %v280
    %v780 = vunpack.c.l.b16 %v281
    %v781 = vunpack.c.h.b16 %v281
    %v782 = vunpack.c.l.b16 %v282
    %v783 = vunpack.c.h.b16 %v282
    %v784 = vunpack.c.l.b16 %v283
    %v785 = vunpack.c.h.b16 %v283
    %v786 = vunpack.c.l.b16 %v284
    %v787 = vunpack.c.h.b16 %v284
    %v788 = vunpack.c.l.b16 %v285
    %v789 = vunpack.c.h.b16 %v285
    %v790 = vunpack.c.l.b16 %v286
    %v791 = vunpack.c.h.b16 %v286
    %v792 = vunpack.c.l.b16 %v287
    %v793 = vunpack.c.h.b16 %v287
    %v794 = vunpack.c.l.b16 %v288
    %v795 = vunpack.c.h.b16 %v288
    %v796 = vunpack.c.l.b16 %v289
    %v797 = vunpack.c.h.b16 %v289
    %v798 = vunpack.c.l.b16 %v290
    %v799 = vunpack.c.h.b16 %v290
    %v800 = vunpack.c.l.b16 %v291
    %v801 = vunpack.c.h.b16 %v291
    %v802 = vunpack.c.l.b16 %v292
    %v803 = vunpack.c.h.b16 %v292
    %v804 = vunpack.c.l.b16 %v293
    %v805 = vunpack.c.h.b16 %v293
    %v806 = vunpack.c.l.b16 %v294
    %v807 = vunpack.c.h.b16 %v294
    %v808 = vunpack.c.l.b16 %v295
    %v809 = vunpack.c.h.b16 %v295
    %v810 = vunpack.c.l.b16 %v296
    %v811 = vunpack.c.h.b16 %v296
    %v812 = vunpack.c.l.b16 %v297
    %v813 = vunpack.c.h.b16 %v297
    %v814 = vunpack.c.l.b16 %v298
    %v815 = vunpack.c.h.b16 %v298
    %v816 = vunpack.c.l.b16 %v299
    %v817 = vunpack.c.h.b16 %v299
    %v818 = vunpack.c.l.b16 %v300
    %v819 = vunpack.c.h.b16 %v300
    %v820 = vunpack.c.l.b16 %v301
    %v821 = vunpack.c.h.b16 %v301
    %v822 = vunpack.c.l.b16 %v302
    %v823 = vunpack.c.h.b16 %v302
    %v824 = vunpack.c.l.b16 %v303
    %v825 = vunpack.c.h.b16 %v303
    %v826 = vunpack.c.l.b16 %v304
    %v827 = vunpack.c.h.b16 %v304
    %v828 = vunpack.c.l.b16 %v305
    %v829 = vunpack.c.h.b16 %v305
    %v830 = vunpack.c.l.b16 %v306
    %v831 = vunpack.c.h.b16 %v306
    %v832 = vunpack.c.l.b16 %v307
    %v833 = vunpack.c.h.b16 %v307
    %v834 = vunpack.c.l.b16 %v308
    %v835 = vunpack.c.h.b16 %v308
    %v836 = vunpack.c.l.b16 %v309
    %v837 = vunpack.c.h.b16 %v309
    %v838 = vunpack.c.l.b16 %v310
    %v839 = vunpack.c.h.b16 %v310
    %v840 = vunpack.c.l.b16 %v311
    %v841 = vunpack.c.h.b16 %v311
    %v842 = vunpack.c.l.b16 %v312
    %v843 = vunpack.c.h.b16 %v312
    %v844 = vunpack.c.l.b16 %v313
    %v845 = vunpack.c.h.b16 %v313
    %v846 = vunpack.c.l.b16 %v314
    %v847 = vunpack.c.h.b16 %v314
    %v848 = vunpack.c.l.b16 %v315
    %v849 = vunpack.c.h.b16 %v315
    %v850 = vunpack.c.l.b16 %v316
    %v851 = vunpack.c.h.b16 %v316
    %v852 = vunpack.c.l.b16 %v317
    %v853 = vunpack.c.h.b16 %v317
    %v854 = vunpack.c.l.b16 %v318
    %v855 = vunpack.c.h.b16 %v318
    %v856 = vunpack.c.l.b16 %v319
    %v857 = vunpack.c.h.b16 %v319
    %v858 = vunpack.c.l.b16 %v320
    %v859 = vunpack.c.h.b16 %v320
    %v860 = vunpack.c.l.b16 %v321
    %v861 = vunpack.c.h.b16 %v321
    %v862 = vunpack.c.l.b16 %v322
    %v863 = vunpack.c.h.b16 %v322
    %v864 = vunpack.c.l.b16 %v323
    %v865 = vunpack.c.h.b16 %v323
    %v866 = vunpack.c.l.b16 %v324
    %v867 = vunpack.c.h.b16 %v324
    %v868 = vunpack.c.l.b16 %v325
    %v869 = vunpack.c.h.b16 %v325
    %v870 = vunpack.c.l.b16 %v326
    %v871 = vunpack.c.h.b16 %v326
    %v872 = vunpack.c.l.b16 %v327
    %v873 = vunpack.c.h.b16 %v327
    %v874 = vunpack.c.l.b16 %v328
    %v875 = vunpack.c.h.b16 %v328
    %v876 = vunpack.c.l.b16 %v329
    %v877 = vunpack.c.h.b16 %v329
    %v878 = vunpack.c.l.b16 %v330
    %v879 = vunpack.c.h.b16 %v330
    %v880 = vunpack.c.l.b16 %v331
    %v881 = vunpack.c.h.b16 %v331
    %v882 = vunpack.c.l.b16 %v332
    %v883 = vunpack.c.h.b16 %v332
    %v884 = vunpack.c.l.b16 %v333
    %v885 = vunpack.c.h.b16 %v333
    %v886 = vunpack.c.l.b16 %v334
    %v887 = vunpack.c.h.b16 %v334
    %v888 = vunpack.c.l.b16 %v335
    %v889 = vunpack.c.h.b16 %v335
    %v890 = vunpack.c.l.b16 %v336
    %v891 = vunpack.c.h.b16 %v336
    %v892 = vunpack.c.l.b16 %v337
    %v893 = vunpack.c.h.b16 %v337
    %v894 = vunpack.c.l.b16 %v338
    %v895 = vunpack.c.h.b16 %v338
    %v896 = vunpack.c.l.b16 %v339
    %v897 = vunpack.c.h.b16 %v339
    %v898 = vunpack.c.l.b16 %v340
    %v899 = vunpack.c.h.b16 %v340
    %v900 = vunpack.c.l.b16 %v341
    %v901 = vunpack.c.h.b16 %v341
    %v902 = vunpack.c.l.b16 %v342
    %v903 = vunpack.c.h.b16 %v342
    %v904 = vunpack.c.l.b16 %v343
    %v905 = vunpack.c.h.b16 %v343
    %v906 = vunpack.c.l.b16 %v344
    %v907 = vunpack.c.h.b16 %v344
    %v908 = vunpack.c.l.b16 %v345
    %v909 = vunpack.c.h.b16 %v345
    %v910 = vunpack.c.l.b16 %v346
    %v911 = vunpack.c.h.b16 %v346
    %v912 = vunpack.c.l.b16 %v347
    %v913 = vunpack.c.h.b16 %v347
    %v914 = vunpack.c.l.b16 %v348
    %v915 = vunpack.c.h.b16 %v348
    %v916 = vunpack.c.l.b16 %v349
    %v917 = vunpack.c.h.b16 %v349
    %v918 = vunpack.c.l.b16 %v350
    %v919 = vunpack.c.h.b16 %v350
    %v920 = vunpack.c.l.b16 %v351
    %v921 = vunpack.c.h.b16 %v351
    %v922 = vunpack.c.l.b16 %v352
    %v923 = vunpack.c.h.b16 %v352
    %v924 = vunpack.c.l.b16 %v353
    %v925 = vunpack.c.h.b16 %v353
    %v926 = vunpack.c.l.b16 %v354
    %v927 = vunpack.c.h.b16 %v354
    %v928 = vunpack.c.l.b16 %v355
    %v929 = vunpack.c.h.b16 %v355
    %v930 = vunpack.c.l.b16 %v356
    %v931 = vunpack.c.h.b16 %v356
    %v932 = vunpack.c.l.b16 %v357
    %v933 = vunpack.c.h.b16 %v357
    %v934 = vunpack.c.l.b16 %v358
    %v935 = vunpack.c.h.b16 %v358
    %v936 = vunpack.c.l.b16 %v359
    %v937 = vunpack.c.h.b16 %v359
    %v938 = vunpack.c.l.b16 %v360
    %v939 = vunpack.c.h.b16 %v360
    %v940 = vunpack.c.l.b16 %v361
    %v941 = vunpack.c.h.b16 %v361
    %v942 = vunpack.c.l.b16 %v362
    %v943 = vunpack.c.h.b16 %v362
    %v944 = vunpack.c.l.b16 %v363
    %v945 = vunpack.c.h.b16 %v363
    %v946 = vunpack.c.l.b16 %v364
    %v947 = vunpack.c.h.b16 %v364
    %v948 = vunpack.c.l.b16 %v365
    %v949 = vunpack.c.h.b16 %v365
    %v950 = vunpack.c.l.b16 %v366
    %v951 = vunpack.c.h.b16 %v366
    %v952 = vunpack.c.l.b16 %v367
    %v953 = vunpack.c.h.b16 %v367
    %v954 = vunpack.c.l.b16 %v368
    %v955 = vunpack.c.h.b16 %v368
    %v956 = vunpack.c.l.b16 %v369
    %v957 = vunpack.c.h.b16 %v369
    %v958 = vunpack.c.l.b16 %v370
    %v959 = vunpack.c.h.b16 %v370
    %v960 = vunpack.c.l.b16 %v371
    %v961 = vunpack.c.h.b16 %v371
    %v962 = vunpack.c.l.b16 %v372
    %v963 = vunpack.c.h.b16 %v372
    %v964 = vunpack.c.l.b16 %v373
    %v965 = vunpack.c.h.b16 %v373
    %v966 = vunpack.c.l.b16 %v374
    %v967 = vunpack.c.h.b16 %v374
    %v968 = vunpack.c.l.b16 %v375
    %v969 = vunpack.c.h.b16 %v375
    %v970 = vunpack.c.l.b16 %v376
    %v971 = vunpack.c.h.b16 %v376
    %v972 = vunpack.c.l.b16 %v377
    %v973 = vunpack.c.h.b16 %v377
    %v974 = vunpack.c.l.b16 %v378
    %v975 = vunpack.c.h.b16 %v378
    %v976 = vunpack.c.l.b16 %v379
    %v977 = vunpack.c.h.b16 %v379
    %v978 = vunpack.c.l.b16 %v380
    %v979 = vunpack.c.h.b16 %v380
    %v980 = vunpack.c.l.b16 %v381
    %v981 = vunpack.c.h.b16 %v381
    %v982 = vunpack.c.l.b16 %v382
    %v983 = vunpack.c.h.b16 %v382
    %v984 = vunpack.c.l.b16 %v383
    %v985 = vunpack.c.h.b16 %v383
    %v986 = vunpack.c.l.b16 %v384
    %v987 = vunpack.c.h.b16 %v384
    %v988 = vunpack.c.l.b16 %v385
    %v989 = vunpack.c.h.b16 %v385
    %v990 = vunpack.c.l.b16 %v386
    %v991 = vunpack.c.h.b16 %v386
    %v992 = vunpack.c.l.b16 %v387
    %v993 = vunpack.c.h.b16 %v387
    %v994 = vunpack.c.l.b16 %v388
    %v995 = vunpack.c.h.b16 %v388
    %v996 = vunpack.c.l.b16 %v389
    %v997 = vunpack.c.h.b16 %v389
    %v998 = vunpack.c.l.b16 %v390
    %v999 = vunpack.c.h.b16 %v390
    %v1000 = vunpack.c.l.b16 %v391
    %v1001 = vunpack.c.h.b16 %v391
    %v1002 = vunpack.c.l.b16 %v392
    %v1003 = vunpack.c.h.b16 %v392
    %v1004 = vunpack.c.l.b16 %v393
    %v1005 = vunpack.c.h.b16 %v393
    %v1006 = vunpack.c.l.b16 %v394
    %v1007 = vunpack.c.h.b16 %v394
    %v1008 = vunpack.c.l.b16 %v395
    %v1009 = vunpack.c.h.b16 %v395
    %v1010 = vunpack.c.l.b16 %v396
    %v1011 = vunpack.c.h.b16 %v396
    %v1012 = vunpack.c.l.b16 %v397
    %v1013 = vunpack.c.h.b16 %v397
    %v1014 = vunpack.c.l.b16 %v398
    %v1015 = vunpack.c.h.b16 %v398
    %v1016 = vunpack.c.l.b16 %v399
    %v1017 = vunpack.c.h.b16 %v399
    %v1018 = vunpack.c.l.b16 %v400
    %v1019 = vunpack.c.h.b16 %v400
    %v1020 = vunpack.c.l.b16 %v401
    %v1021 = vunpack.c.h.b16 %v401
    %v1022 = vunpack.c.l.b16 %v402
    %v1023 = vunpack.c.h.b16 %v402
    %v1024 = vunpack.c.l.b16 %v403
    %v1025 = vunpack.c.h.b16 %v403
    %v1026 = vunpack.c.l.b16 %v404
    %v1027 = vunpack.c.h.b16 %v404
    %v1028 = vunpack.c.l.b16 %v405
    %v1029 = vunpack.c.h.b16 %v405
    %v1030 = vunpack.c.l.b16 %v406
    %v1031 = vunpack.c.h.b16 %v406
    %v1032 = vunpack.c.l.b16 %v407
    %v1033 = vunpack.c.h.b16 %v407
    %v1034 = vunpack.c.l.b16 %v408
    %v1035 = vunpack.c.h.b16 %v408
    %v1036 = vunpack.c.l.b16 %v409
    %v1037 = vunpack.c.h.b16 %v409
    %v1038 = vunpack.c.l.b16 %v410
    %v1039 = vunpack.c.h.b16 %v410
    %v1040 = vunpack.c.l.b16 %v411
    %v1041 = vunpack.c.h.b16 %v411
    %v1042 = vunpack.c.l.b16 %v412
    %v1043 = vunpack.c.h.b16 %v412
    %v1044 = vunpack.c.l.b16 %v413
    %v1045 = vunpack.c.h.b16 %v413
    %v1046 = vunpack.c.l.b16 %v414
    %v1047 = vunpack.c.h.b16 %v414
    %v1048 = vunpack.c.l.b16 %v415
    %v1049 = vunpack.c.h.b16 %v415
    %v1050 = vunpack.c.l.b16 %v416
    %v1051 = vunpack.c.h.b16 %v416
    %v1052 = vunpack.c.l.b16 %v417
    %v1053 = vunpack.c.h.b16 %v417
    %v1054 = vunpack.c.l.b16 %v418
    %v1055 = vunpack.c.h.b16 %v418
    %v1056 = vunpack.c.l.b16 %v419
    %v1057 = vunpack.c.h.b16 %v419
    %v1058 = vunpack.c.l.b16 %v420
    %v1059 = vunpack.c.h.b16 %v420
    %v1060 = vunpack.c.l.b16 %v421
    %v1061 = vunpack.c.h.b16 %v421
    %v1062 = vunpack.c.l.b16 %v422
    %v1063 = vunpack.c.h.b16 %v422
    %v1064 = vunpack.c.l.b16 %v423
    %v1065 = vunpack.c.h.b16 %v423
    %v1066 = vunpack.c.l.b16 %v424
    %v1067 = vunpack.c.h.b16 %v424
    %v1068 = vunpack.c.l.b16 %v425
    %v1069 = vunpack.c.h.b16 %v425
    %v1070 = vunpack.c.l.b16 %v426
    %v1071 = vunpack.c.h.b16 %v426
    %v1072 = vunpack.c.l.b16 %v427
    %v1073 = vunpack.c.h.b16 %v427
    %v1074 = vunpack.c.l.b16 %v428
    %v1075 = vunpack.c.h.b16 %v428
    %v1076 = vunpack.c.l.b16 %v429
    %v1077 = vunpack.c.h.b16 %v429
    %v1078 = vunpack.c.l.b16 %v430
    %v1079 = vunpack.c.h.b16 %v430
    %v1080 = vunpack.c.l.b16 %v431
    %v1081 = vunpack.c.h.b16 %v431
    %v1082 = vunpack.c.l.b16 %v432
    %v1083 = vunpack.c.h.b16 %v432
    %v1084 = vunpack.c.l.b16 %v433
    %v1085 = vunpack.c.h.b16 %v433
    %v1086 = vunpack.c.l.b16 %v434
    %v1087 = vunpack.c.h.b16 %v434
    %v1088 = vunpack.c.l.b16 %v435
    %v1089 = vunpack.c.h.b16 %v435
    %v1090 = vunpack.c.l.b16 %v436
    %v1091 = vunpack.c.h.b16 %v436
    %v1092 = vunpack.c.l.b16 %v437
    %v1093 = vunpack.c.h.b16 %v437
    %v1094 = vunpack.c.l.b16 %v438
    %v1095 = vunpack.c.h.b16 %v438
    %v1096 = vunpack.c.l.b16 %v439
    %v1097 = vunpack.c.h.b16 %v439
    %v1098 = vpack.c.b16 %v718, %v714
    %v1099 = vpack.c.b16 %v719, %v715
    %v1100 = vpack.c.b16 %v720, %v716
    %v1101 = vpack.c.b16 %v721, %v717
    %v1102 = vpack.c.b16 %v726, %v722
    %v1103 = vpack.c.b16 %v727, %v723
    %v1104 = vpack.c.b16 %v728, %v724
    %v1105 = vpack.c.b16 %v729, %v725
    %v1106 = vpack.c.b16 %v734, %v730
    %v1107 = vpack.c.b16 %v735, %v731
    %v1108 = vpack.c.b16 %v736, %v732
    %v1109 = vpack.c.b16 %v737, %v733
    %v1110 = vpack.c.b16 %v742, %v738
    %v1111 = vpack.c.b16 %v743, %v739
    %v1112 = vpack.c.b16 %v744, %v740
    %v1113 = vpack.c.b16 %v745, %v741
    %v1114 = vpack.c.b16 %v750, %v746
    %v1115 = vpack.c.b16 %v751, %v747
    %v1116 = vpack.c.b16 %v752, %v748
    %v1117 = vpack.c.b16 %v753, %v749
    %v1118 = vpack.c.b16 %v758, %v754
    %v1119 = vpack.c.b16 %v759, %v755
    %v1120 = vpack.c.b16 %v760, %v756
    %v1121 = vpack.c.b16 %v761, %v757
    %v1122 = vpack.c.b16 %v766, %v762
    %v1123 = vpack.c.b16 %v767, %v763
    %v1124 = vpack.c.b16 %v768, %v764
    %v1125 = vpack.c.b16 %v769, %v765
    %v1126 = vpack.c.b16 %v774, %v770
    %v1127 = vpack.c.b16 %v775, %v771
    %v1128 = vpack.c.b16 %v776, %v772
    %v1129 = vpack.c.b16 %v777, %v773
    %v1130 = vpack.c.b16 %v782, %v778
    %v1131 = vpack.c.b16 %v783, %v779
    %v1132 = vpack.c.b16 %v784, %v780
    %v1133 = vpack.c.b16 %v785, %v781
    %v1134 = vpack.c.b16 %v790, %v786
    %v1135 = vpack.c.b16 %v791, %v787
    %v1136 = vpack.c.b16 %v792, %v788
    %v1137 = vpack.c.b16 %v793, %v789
    %v1138 = vpack.c.b16 %v798, %v794
    %v1139 = vpack.c.b16 %v799, %v795
    %v1140 = vpack.c.b16 %v800, %v796
    %v1141 = vpack.c.b16 %v801, %v797
    %v1142 = vpack.c.b16 %v806, %v802
    %v1143 = vpack.c.b16 %v807, %v803
    %v1144 = vpack.c.b16 %v808, %v804
    %v1145 = vpack.c.b16 %v809, %v805
    %v1146 = vpack.c.b16 %v814, %v810
    %v1147 = vpack.c.b16 %v815, %v811
    %v1148 = vpack.c.b16 %v816, %v812
    %v1149 = vpack.c.b16 %v817, %v813
    %v1150 = vpack.c.b16 %v822, %v818
    %v1151 = vpack.c.b16 %v823, %v819
    %v1152 = vpack.c.b16 %v824, %v820
    %v1153 = vpack.c.b16 %v825, %v821
    %v1154 = vpack.c.b16 %v830, %v826
    %v1155 = vpack.c.b16 %v831, %v827
    %v1156 = vpack.c.b16 %v832, %v828
    %v1157 = vpack.c.b16 %v833, %v829
    %v1158 = vpack.c.b16 %v838, %v834
    %v1159 = vpack.c.b16 %v839, %v835
    %v1160 = vpack.c.b16 %v840, %v836
    %v1161 = vpack.c.b16 %v841, %v837
    %v1162 = vpack.c.b16 %v846, %v842
    %v1163 = vpack.c.b16 %v847, %v843
    %v1164 = vpack.c.b16 %v848, %v844
    %v1165 = vpack.c.b16 %v849, %v845
    %v1166 = vpack.c.b16 %v854, %v850
    %v1167 = vpack.c.b16 %v855, %v851
    %v1168 = vpack.c.b16 %v856, %v852
    %v1169 = vpack.c.b16 %v857, %v853
    %v1170 = vpack.c.b16 %v862, %v858
    %v1171 = vpack.c.b16 %v863, %v859
    %v1172 = vpack.c.b16 %v864, %v860
    %v1173 = vpack.c.b16 %v865, %v861
    %v1174 = vpack.c.b16 %v870, %v866
    %v1175 = vpack.c.b16 %v871, %v867
    %v1176 = vpack.c.b16 %v872, %v868
    %v1177 = vpack.c.b16 %v873, %v869
    %v1178 = vpack.c.b16 %v878, %v874
    %v1179 = vpack.c.b16 %v879, %v875
    %v1180 = vpack.c.b16 %v880, %v876
    %v1181 = vpack.c.b16 %v881, %v877
    %v1182 = vpack.c.b16 %v886, %v882
    %v1183 = vpack.c.b16 %v887, %v883
    %v1184 = vpack.c.b16 %v888, %v884
    %v1185 = vpack.c.b16 %v889, %v885
    %v1186 = vpack.c.b16 %v894, %v890
    %v1187 = vpack.c.b16 %v895, %v891
    %v1188 = vpack.c.b16 %v896, %v892
    %v1189 = vpack.c.b16 %v897, %v893
    %v1190 = vpack.c.b16 %v902, %v898
    %v1191 = vpack.c.b16 %v903, %v899
    %v1192 = vpack.c.b16 %v904, %v900
    %v1193 = vpack.c.b16 %v905, %v901
    %v1194 = vpack.c.b16 %v910, %v906
    %v1195 = vpack.c.b16 %v911, %v907
    %v1196 = vpack.c.b16 %v912, %v908
    %v1197 = vpack.c.b16 %v913, %v909
    %v1198 = vpack.c.b16 %v918, %v914
    %v1199 = vpack.c.b16 %v919, %v915
    %v1200 = vpack.c.b16 %v920, %v916
    %v1201 = vpack.c.b16 %v921, %v917
    %v1202 = vpack.c.b16 %v926, %v922
    %v1203 = vpack.c.b16 %v927, %v923
    %v1204 = vpack.c.b16 %v928, %v924
    %v1205 = vpack.c.b16 %v929, %v925
    %v1206 = vpack.c.b16 %v934, %v930
    %v1207 = vpack.c.b16 %v935, %v931
    %v1208 = vpack.c.b16 %v936, %v932
    %v1209 = vpack.c.b16 %v937, %v933
    %v1210 = vpack.c.b16 %v942, %v938
    %v1211 = vpack.c.b16 %v943, %v939
    %v1212 = vpack.c.b16 %v944, %v940
    %v1213 = vpack.c.b16 %v945, %v941
    %v1214 = vpack.c.b16 %v950, %v946
    %v1215 = vpack.c.b16 %v951, %v947
    %v1216 = vpack.c.b16 %v952, %v948
    %v1217 = vpack.c.b16 %v953, %v949
    %v1218 = vpack.c.b16 %v958, %v954
    %v1219 = vpack.c.b16 %v959, %v955
    %v1220 = vpack.c.b16 %v960, %v956
    %v1221 = vpack.c.b16 %v961, %v957
    %v1222 = vpack.c.b16 %v966, %v962
    %v1223 = vpack.c.b16 %v967, %v963
    %v1224 = vpack.c.b16 %v968, %v964
    %v1225 = vpack.c.b16 %v969, %v965
    %v1226 = vpack.c.b16 %v974, %v970
    %v1227 = vpack.c.b16 %v975, %v971
    %v1228 = vpack.c.b16 %v976, %v972
    %v1229 = vpack.c.b16 %v977, %v973
    %v1230 = vpack.c.b16 %v982, %v978
    %v1231 = vpack.c.b16 %v983, %v979
    %v1232 = vpack.c.b16 %v984, %v980
    %v1233 = vpack.c.b16 %v985, %v981
    %v1234 = vpack.c.b16 %v990, %v986
    %v1235 = vpack.c.b16 %v991, %v987
    %v1236 = vpack.c.b16 %v992, %v988
    %v1237 = vpack.c.b16 %v993, %v989
    %v1238 = vpack.c.b16 %v998, %v994
    %v1239 = vpack.c.b16 %v999, %v995
    %v1240 = vpack.c.b16 %v1000, %v996
    %v1241 = vpack.c.b16 %v1001, %v997
    %v1242 = vpack.c.b16 %v1006, %v1002
    %v1243 = vpack.c.b16 %v1007, %v1003
    %v1244 = vpack.c.b16 %v1008, %v1004
    %v1245 = vpack.c.b16 %v1009, %v1005
    %v1246 = vpack.c.b16 %v1014, %v1010
    %v1247 = vpack.c.b16 %v1015, %v1011
    %v1248 = vpack.c.b16 %v1016, %v1012
    %v1249 = vpack.c.b16 %v1017, %v1013
    %v1250 = vpack.c.b16 %v1022, %v1018
    %v1251 = vpack.c.b16 %v1023, %v1019
    %v1252 = vpack.c.b16 %v1024, %v1020
    %v1253 = vpack.c.b16 %v1025, %v1021
    %v1254 = vpack.c.b16 %v1030, %v1026
    %v1255 = vpack.c.b16 %v1031, %v1027
    %v1256 = vpack.c.b16 %v1032, %v1028
    %v1257 = vpack.c.b16 %v1033, %v1029
    %v1258 = vpack.c.b16 %v1038, %v1034
    %v1259 = vpack.c.b16 %v1039, %v1035
    %v1260 = vpack.c.b16 %v1040, %v1036
    %v1261 = vpack.c.b16 %v1041, %v1037
    %v1262 = vpack.c.b16 %v1046, %v1042
    %v1263 = vpack.c.b16 %v1047, %v1043
    %v1264 = vpack.c.b16 %v1048, %v1044
    %v1265 = vpack.c.b16 %v1049, %v1045
    %v1266 = vpack.c.b16 %v1054, %v1050
    %v1267 = vpack.c.b16 %v1055, %v1051
    %v1268 = vpack.c.b16 %v1056, %v1052
    %v1269 = vpack.c.b16 %v1057, %v1053
    %v1270 = vpack.c.b16 %v1062, %v1058
    %v1271 = vpack.c.b16 %v1063, %v1059
    %v1272 = vpack.c.b16 %v1064, %v1060
    %v1273 = vpack.c.b16 %v1065, %v1061
    %v1274 = vpack.c.b16 %v1070, %v1066
    %v1275 = vpack.c.b16 %v1071, %v1067
    %v1276 = vpack.c.b16 %v1072, %v1068
    %v1277 = vpack.c.b16 %v1073, %v1069
    %v1278 = vpack.c.b16 %v1078, %v1074
    %v1279 = vpack.c.b16 %v1079, %v1075
    %v1280 = vpack.c.b16 %v1080, %v1076
    %v1281 = vpack.c.b16 %v1081, %v1077
    %v1282 = vpack.c.b16 %v1086, %v1082
    %v1283 = vpack.c.b16 %v1087, %v1083
    %v1284 = vpack.c.b16 %v1088, %v1084
    %v1285 = vpack.c.b16 %v1089, %v1085
    %v1286 = vpack.c.b16 %v1094, %v1090
    %v1287 = vpack.c.b16 %v1095, %v1091
    %v1288 = vpack.c.b16 %v1096, %v1092
    %v1289 = vpack.c.b16 %v1097, %v1093
    %1482 = vmatprep.subr.bf16.mxu0 %v1127
    %1483 = vmatpush1.bf16.msra.mxu0 %v1126
    %1484 = vmatprep.subr.bf16.mxu0 %v1123
    %1485 = vmatpush1.bf16.msra.mxu0 %v1122
    %1486 = vmatprep.subr.bf16.mxu0 %v1119
    %1487 = vmatpush1.bf16.msra.mxu0 %v1118
    %1488 = vmatprep.subr.bf16.mxu0 %v1115
    %1489 = vmatpush1.bf16.msra.mxu0 %v1114
    %1490 = vmatprep.subr.bf16.mxu0 %v1111
    %1491 = vmatpush1.bf16.msra.mxu0 %v1110
    %1492 = vmatprep.subr.bf16.mxu0 %v1107
    %1493 = vmatpush1.bf16.msra.mxu0 %v1106
    %1494 = vmatprep.subr.bf16.mxu0 %v1103
    %1495 = vmatpush1.bf16.msra.mxu0 %v1102
    %1496 = vmatprep.subr.bf16.mxu0 %v1099
    %1497 = vmatpush1.bf16.msra.mxu0 %v1098
    %1498 = vmatprep.subr.bf16.mxu0 %v1159
    %1499 = vmatpush2.bf16.msra.mxu0 %v1158
    %1500 = vmatprep.subr.bf16.mxu0 %v1155
    %1501 = vmatpush2.bf16.msra.mxu0 %v1154
    %1502 = vmatprep.subr.bf16.mxu0 %v1151
    %1503 = vmatpush2.bf16.msra.mxu0 %v1150
    %1504 = vmatprep.subr.bf16.mxu0 %v1147
    %1505 = vmatpush2.bf16.msra.mxu0 %v1146
    %1506 = vmatprep.subr.bf16.mxu0 %v1143
    %1507 = vmatpush2.bf16.msra.mxu0 %v1142
    %1508 = vmatprep.subr.bf16.mxu0 %v1139
    %1509 = vmatpush2.bf16.msra.mxu0 %v1138
    %1510 = vmatprep.subr.bf16.mxu0 %v1135
    %1511 = vmatpush2.bf16.msra.mxu0 %v1134
    %1512 = vmatprep.subr.bf16.mxu0 %v1131
    %1513 = vmatpush2.bf16.msra.mxu0 %v1130
    %1514 = vmatprep.mubr.bf16.mxu0 %v499
    %1515 = vmatmul.mubr.bf16.gmra.mxu0 %v498
    %v1516 = vpop.f32.mrf.mxu0
    %v1517 = vadd.f32 %v445, %v1516
    %v1518 = vpop.f32.mrf.mxu0
    %v1519 = vadd.f32 %v449, %v1518
    %v1520 = vpop.f32.mrf.mxu0
    %v1521 = vadd.f32 %v445, %v1520
    %v1522 = vpop.f32.mrf.mxu0
    %v1523 = vadd.f32 %v449, %v1522
    %1524 = vmatprep.mubr.bf16.mxu0 %v505
    %1525 = vmatmul.mubr.bf16.gmra.mxu0 %v504
    %v1526 = vpop.f32.mrf.mxu0
    %v1527 = vadd.f32 %v445, %v1526
    %v1528 = vpop.f32.mrf.mxu0
    %v1529 = vadd.f32 %v449, %v1528
    %v1530 = vpop.f32.mrf.mxu0
    %v1531 = vadd.f32 %v445, %v1530
    %v1532 = vpop.f32.mrf.mxu0
    %v1533 = vadd.f32 %v449, %v1532
    %1534 = vdwg.mxu0
    %1535 = vmatprep.subr.bf16.mxu0 %v1191
    %1536 = vmatpush1.bf16.msra.mxu0 %v1190
    %1537 = vmatprep.subr.bf16.mxu0 %v1187
    %1538 = vmatpush1.bf16.msra.mxu0 %v1186
    %1539 = vmatprep.subr.bf16.mxu0 %v1183
    %1540 = vmatpush1.bf16.msra.mxu0 %v1182
    %1541 = vmatprep.subr.bf16.mxu0 %v1179
    %1542 = vmatpush1.bf16.msra.mxu0 %v1178
    %1543 = vmatprep.subr.bf16.mxu0 %v1175
    %1544 = vmatpush1.bf16.msra.mxu0 %v1174
    %1545 = vmatprep.subr.bf16.mxu0 %v1171
    %1546 = vmatpush1.bf16.msra.mxu0 %v1170
    %1547 = vmatprep.subr.bf16.mxu0 %v1167
    %1548 = vmatpush1.bf16.msra.mxu0 %v1166
    %1549 = vmatprep.subr.bf16.mxu0 %v1163
    %1550 = vmatpush1.bf16.msra.mxu0 %v1162
    %1551 = vmatprep.subr.bf16.mxu0 %v1223
    %1552 = vmatpush2.bf16.msra.mxu0 %v1222
    %1553 = vmatprep.subr.bf16.mxu0 %v1219
    %1554 = vmatpush2.bf16.msra.mxu0 %v1218
    %1555 = vmatprep.subr.bf16.mxu0 %v1215
    %1556 = vmatpush2.bf16.msra.mxu0 %v1214
    %1557 = vmatprep.subr.bf16.mxu0 %v1211
    %1558 = vmatpush2.bf16.msra.mxu0 %v1210
    %1559 = vmatprep.subr.bf16.mxu0 %v1207
    %1560 = vmatpush2.bf16.msra.mxu0 %v1206
    %1561 = vmatprep.subr.bf16.mxu0 %v1203
    %1562 = vmatpush2.bf16.msra.mxu0 %v1202
    %1563 = vmatprep.subr.bf16.mxu0 %v1199
    %1564 = vmatpush2.bf16.msra.mxu0 %v1198
    %1565 = vmatprep.subr.bf16.mxu0 %v1195
    %1566 = vmatpush2.bf16.msra.mxu0 %v1194
    %1567 = vmatprep.mubr.bf16.mxu0 %v501
    %1568 = vmatmul.mubr.bf16.gmra.mxu0 %v500
    %v1569 = vpop.f32.mrf.mxu0
    %v1570 = vadd.f32 %v1517, %v1569
    %v1571 = vpop.f32.mrf.mxu0
    %v1572 = vadd.f32 %v1519, %v1571
    %v1573 = vpop.f32.mrf.mxu0
    %v1574 = vadd.f32 %v1521, %v1573
    %v1575 = vpop.f32.mrf.mxu0
    %v1576 = vadd.f32 %v1523, %v1575
    %1577 = vmatprep.mubr.bf16.mxu0 %v507
    %1578 = vmatmul.mubr.bf16.gmra.mxu0 %v506
    %v1579 = vpop.f32.mrf.mxu0
    %v1580 = vadd.f32 %v1527, %v1579
    %v1581 = vpop.f32.mrf.mxu0
    %v1582 = vadd.f32 %v1529, %v1581
    %v1583 = vpop.f32.mrf.mxu0
    %v1584 = vadd.f32 %v1531, %v1583
    %v1585 = vpop.f32.mrf.mxu0
    %v1586 = vadd.f32 %v1533, %v1585
    %1587 = vdwg.mxu0
    %1588 = vmatprep.subr.bf16.mxu0 %v1255
    %1589 = vmatpush1.bf16.msra.mxu0 %v1254
    %1590 = vmatprep.subr.bf16.mxu0 %v1251
    %1591 = vmatpush1.bf16.msra.mxu0 %v1250
    %1592 = vmatprep.subr.bf16.mxu0 %v1247
    %1593 = vmatpush1.bf16.msra.mxu0 %v1246
    %1594 = vmatprep.subr.bf16.mxu0 %v1243
    %1595 = vmatpush1.bf16.msra.mxu0 %v1242
    %1596 = vmatprep.subr.bf16.mxu0 %v1239
    %1597 = vmatpush1.bf16.msra.mxu0 %v1238
    %1598 = vmatprep.subr.bf16.mxu0 %v1235
    %1599 = vmatpush1.bf16.msra.mxu0 %v1234
    %1600 = vmatprep.subr.bf16.mxu0 %v1231
    %1601 = vmatpush1.bf16.msra.mxu0 %v1230
    %1602 = vmatprep.subr.bf16.mxu0 %v1227
    %1603 = vmatpush1.bf16.msra.mxu0 %v1226
    %1604 = vmatprep.subr.bf16.mxu0 %v1287
    %1605 = vmatpush2.bf16.msra.mxu0 %v1286
    %1606 = vmatprep.subr.bf16.mxu0 %v1283
    %1607 = vmatpush2.bf16.msra.mxu0 %v1282
    %1608 = vmatprep.subr.bf16.mxu0 %v1279
    %1609 = vmatpush2.bf16.msra.mxu0 %v1278
    %1610 = vmatprep.subr.bf16.mxu0 %v1275
    %1611 = vmatpush2.bf16.msra.mxu0 %v1274
    %1612 = vmatprep.subr.bf16.mxu0 %v1271
    %1613 = vmatpush2.bf16.msra.mxu0 %v1270
    %1614 = vmatprep.subr.bf16.mxu0 %v1267
    %1615 = vmatpush2.bf16.msra.mxu0 %v1266
    %1616 = vmatprep.subr.bf16.mxu0 %v1263
    %1617 = vmatpush2.bf16.msra.mxu0 %v1262
    %1618 = vmatprep.subr.bf16.mxu0 %v1259
    %1619 = vmatpush2.bf16.msra.mxu0 %v1258
    %1620 = vmatprep.mubr.bf16.mxu0 %v503
    %1621 = vmatmul.mubr.bf16.gmra.mxu0 %v502
    %v1622 = vpop.f32.mrf.mxu0
    %v1623 = vadd.f32 %v1570, %v1622
    %v1624 = vpop.f32.mrf.mxu0
    %v1625 = vadd.f32 %v1572, %v1624
    %v1626 = vpop.f32.mrf.mxu0
    %v1627 = vadd.f32 %v1574, %v1626
    %v1628 = vpop.f32.mrf.mxu0
    %v1629 = vadd.f32 %v1576, %v1628
    %1630 = vmatprep.mubr.bf16.mxu0 %v509
    %1631 = vmatmul.mubr.bf16.gmra.mxu0 %v508
    %v1632 = vpop.f32.mrf.mxu0
    %v1633 = vadd.f32 %v1580, %v1632
    %v1634 = vpop.f32.mrf.mxu0
    %v1635 = vadd.f32 %v1582, %v1634
    %v1636 = vpop.f32.mrf.mxu0
    %v1637 = vadd.f32 %v1584, %v1636
    %v1638 = vpop.f32.mrf.mxu0
    %v1639 = vadd.f32 %v1586, %v1638
    %1640 = vdwg.mxu0
    %1641 = vmatprep.subr.bf16.mxu0 %v1129
    %1642 = vmatpush1.bf16.msra.mxu0 %v1128
    %1643 = vmatprep.subr.bf16.mxu0 %v1125
    %1644 = vmatpush1.bf16.msra.mxu0 %v1124
    %1645 = vmatprep.subr.bf16.mxu0 %v1121
    %1646 = vmatpush1.bf16.msra.mxu0 %v1120
    %1647 = vmatprep.subr.bf16.mxu0 %v1117
    %1648 = vmatpush1.bf16.msra.mxu0 %v1116
    %1649 = vmatprep.subr.bf16.mxu0 %v1113
    %1650 = vmatpush1.bf16.msra.mxu0 %v1112
    %1651 = vmatprep.subr.bf16.mxu0 %v1109
    %1652 = vmatpush1.bf16.msra.mxu0 %v1108
    %1653 = vmatprep.subr.bf16.mxu0 %v1105
    %1654 = vmatpush1.bf16.msra.mxu0 %v1104
    %1655 = vmatprep.subr.bf16.mxu0 %v1101
    %1656 = vmatpush1.bf16.msra.mxu0 %v1100
    %1657 = vmatprep.subr.bf16.mxu0 %v1161
    %1658 = vmatpush2.bf16.msra.mxu0 %v1160
    %1659 = vmatprep.subr.bf16.mxu0 %v1157
    %1660 = vmatpush2.bf16.msra.mxu0 %v1156
    %1661 = vmatprep.subr.bf16.mxu0 %v1153
    %1662 = vmatpush2.bf16.msra.mxu0 %v1152
    %1663 = vmatprep.subr.bf16.mxu0 %v1149
    %1664 = vmatpush2.bf16.msra.mxu0 %v1148
    %1665 = vmatprep.subr.bf16.mxu0 %v1145
    %1666 = vmatpush2.bf16.msra.mxu0 %v1144
    %1667 = vmatprep.subr.bf16.mxu0 %v1141
    %1668 = vmatpush2.bf16.msra.mxu0 %v1140
    %1669 = vmatprep.subr.bf16.mxu0 %v1137
    %1670 = vmatpush2.bf16.msra.mxu0 %v1136
    %1671 = vmatprep.subr.bf16.mxu0 %v1133
    %1672 = vmatpush2.bf16.msra.mxu0 %v1132
    %1673 = vmatprep.mubr.bf16.mxu0 %v499
    %1674 = vmatmul.mubr.bf16.gmra.mxu0 %v498
    %v1675 = vpop.f32.mrf.mxu0
    %v1676 = vadd.f32 %v453, %v1675
    %v1677 = vpop.f32.mrf.mxu0
    %v1678 = vadd.f32 %v457, %v1677
    %v1679 = vpop.f32.mrf.mxu0
    %v1680 = vadd.f32 %v453, %v1679
    %v1681 = vpop.f32.mrf.mxu0
    %v1682 = vadd.f32 %v457, %v1681
    %1683 = vmatprep.mubr.bf16.mxu0 %v505
    %1684 = vmatmul.mubr.bf16.gmra.mxu0 %v504
    %v1685 = vpop.f32.mrf.mxu0
    %v1686 = vadd.f32 %v453, %v1685
    %v1687 = vpop.f32.mrf.mxu0
    %v1688 = vadd.f32 %v457, %v1687
    %v1689 = vpop.f32.mrf.mxu0
    %v1690 = vadd.f32 %v453, %v1689
    %v1691 = vpop.f32.mrf.mxu0
    %v1692 = vadd.f32 %v457, %v1691
    %1693 = vdwg.mxu0
    %1694 = vmatprep.subr.bf16.mxu0 %v1193
    %1695 = vmatpush1.bf16.msra.mxu0 %v1192
    %1696 = vmatprep.subr.bf16.mxu0 %v1189
    %1697 = vmatpush1.bf16.msra.mxu0 %v1188
    %1698 = vmatprep.subr.bf16.mxu0 %v1185
    %1699 = vmatpush1.bf16.msra.mxu0 %v1184
    %1700 = vmatprep.subr.bf16.mxu0 %v1181
    %1701 = vmatpush1.bf16.msra.mxu0 %v1180
    %1702 = vmatprep.subr.bf16.mxu0 %v1177
    %1703 = vmatpush1.bf16.msra.mxu0 %v1176
    %1704 = vmatprep.subr.bf16.mxu0 %v1173
    %1705 = vmatpush1.bf16.msra.mxu0 %v1172
    %1706 = vmatprep.subr.bf16.mxu0 %v1169
    %1707 = vmatpush1.bf16.msra.mxu0 %v1168
    %1708 = vmatprep.subr.bf16.mxu0 %v1165
    %1709 = vmatpush1.bf16.msra.mxu0 %v1164
    %1710 = vmatprep.subr.bf16.mxu0 %v1225
    %1711 = vmatpush2.bf16.msra.mxu0 %v1224
    %1712 = vmatprep.subr.bf16.mxu0 %v1221
    %1713 = vmatpush2.bf16.msra.mxu0 %v1220
    %1714 = vmatprep.subr.bf16.mxu0 %v1217
    %1715 = vmatpush2.bf16.msra.mxu0 %v1216
    %1716 = vmatprep.subr.bf16.mxu0 %v1213
    %1717 = vmatpush2.bf16.msra.mxu0 %v1212
    %1718 = vmatprep.subr.bf16.mxu0 %v1209
    %1719 = vmatpush2.bf16.msra.mxu0 %v1208
    %1720 = vmatprep.subr.bf16.mxu0 %v1205
    %1721 = vmatpush2.bf16.msra.mxu0 %v1204
    %1722 = vmatprep.subr.bf16.mxu0 %v1201
    %1723 = vmatpush2.bf16.msra.mxu0 %v1200
    %1724 = vmatprep.subr.bf16.mxu0 %v1197
    %1725 = vmatpush2.bf16.msra.mxu0 %v1196
    %1726 = vmatprep.mubr.bf16.mxu0 %v501
    %1727 = vmatmul.mubr.bf16.gmra.mxu0 %v500
    %v1728 = vpop.f32.mrf.mxu0
    %v1729 = vadd.f32 %v1676, %v1728
    %v1730 = vpop.f32.mrf.mxu0
    %v1731 = vadd.f32 %v1678, %v1730
    %v1732 = vpop.f32.mrf.mxu0
    %v1733 = vadd.f32 %v1680, %v1732
    %v1734 = vpop.f32.mrf.mxu0
    %v1735 = vadd.f32 %v1682, %v1734
    %1736 = vmatprep.mubr.bf16.mxu0 %v507
    %1737 = vmatmul.mubr.bf16.gmra.mxu0 %v506
    %v1738 = vpop.f32.mrf.mxu0
    %v1739 = vadd.f32 %v1686, %v1738
    %v1740 = vpop.f32.mrf.mxu0
    %v1741 = vadd.f32 %v1688, %v1740
    %v1742 = vpop.f32.mrf.mxu0
    %v1743 = vadd.f32 %v1690, %v1742
    %v1744 = vpop.f32.mrf.mxu0
    %v1745 = vadd.f32 %v1692, %v1744
    %1746 = vdwg.mxu0
    %1747 = vmatprep.subr.bf16.mxu0 %v1257
    %1748 = vmatpush1.bf16.msra.mxu0 %v1256
    %1749 = vmatprep.subr.bf16.mxu0 %v1253
    %1750 = vmatpush1.bf16.msra.mxu0 %v1252
    %1751 = vmatprep.subr.bf16.mxu0 %v1249
    %1752 = vmatpush1.bf16.msra.mxu0 %v1248
    %1753 = vmatprep.subr.bf16.mxu0 %v1245
    %1754 = vmatpush1.bf16.msra.mxu0 %v1244
    %1755 = vmatprep.subr.bf16.mxu0 %v1241
    %1756 = vmatpush1.bf16.msra.mxu0 %v1240
    %1757 = vmatprep.subr.bf16.mxu0 %v1237
    %1758 = vmatpush1.bf16.msra.mxu0 %v1236
    %1759 = vmatprep.subr.bf16.mxu0 %v1233
    %1760 = vmatpush1.bf16.msra.mxu0 %v1232
    %1761 = vmatprep.subr.bf16.mxu0 %v1229
    %1762 = vmatpush1.bf16.msra.mxu0 %v1228
    %1763 = vmatprep.subr.bf16.mxu0 %v1289
    %1764 = vmatpush2.bf16.msra.mxu0 %v1288
    %1765 = vmatprep.subr.bf16.mxu0 %v1285
    %1766 = vmatpush2.bf16.msra.mxu0 %v1284
    %1767 = vmatprep.subr.bf16.mxu0 %v1281
    %1768 = vmatpush2.bf16.msra.mxu0 %v1280
    %1769 = vmatprep.subr.bf16.mxu0 %v1277
    %1770 = vmatpush2.bf16.msra.mxu0 %v1276
    %1771 = vmatprep.subr.bf16.mxu0 %v1273
    %1772 = vmatpush2.bf16.msra.mxu0 %v1272
    %1773 = vmatprep.subr.bf16.mxu0 %v1269
    %1774 = vmatpush2.bf16.msra.mxu0 %v1268
    %1775 = vmatprep.subr.bf16.mxu0 %v1265
    %1776 = vmatpush2.bf16.msra.mxu0 %v1264
    %1777 = vmatprep.subr.bf16.mxu0 %v1261
    %1778 = vmatpush2.bf16.msra.mxu0 %v1260
    %1779 = vmatprep.mubr.bf16.mxu0 %v503
    %1780 = vmatmul.mubr.bf16.gmra.mxu0 %v502
    %v1781 = vpop.f32.mrf.mxu0
    %v1782 = vadd.f32 %v1729, %v1781
    %v1783 = vpop.f32.mrf.mxu0
    %v1784 = vadd.f32 %v1731, %v1783
    %v1785 = vpop.f32.mrf.mxu0
    %v1786 = vadd.f32 %v1733, %v1785
    %v1787 = vpop.f32.mrf.mxu0
    %v1788 = vadd.f32 %v1735, %v1787
    %1789 = vmatprep.mubr.bf16.mxu0 %v509
    %1790 = vmatmul.mubr.bf16.gmra.mxu0 %v508
    %v1791 = vpop.f32.mrf.mxu0
    %v1792 = vadd.f32 %v1739, %v1791
    %v1793 = vpop.f32.mrf.mxu0
    %v1794 = vadd.f32 %v1741, %v1793
    %v1795 = vpop.f32.mrf.mxu0
    %v1796 = vadd.f32 %v1743, %v1795
    %v1797 = vpop.f32.mrf.mxu0
    %v1798 = vadd.f32 %v1745, %v1797
    %1799 = vdwg.mxu0
    %v1800 = vmax.f32 %v1623, 0.0
    %v1801 = vmax.f32 %v1625, 0.0
    %v1802 = vmax.f32 %v1782, 0.0
    %v1803 = vmax.f32 %v1784, 0.0
    %v1804 = vmax.f32 %v1627, 0.0
    %v1805 = vmax.f32 %v1629, 0.0
    %v1806 = vmax.f32 %v1786, 0.0
    %v1807 = vmax.f32 %v1788, 0.0
    %v1808 = vmax.f32 %v1633, 0.0
    %v1809 = vmax.f32 %v1635, 0.0
    %v1810 = vmax.f32 %v1792, 0.0
    %v1811 = vmax.f32 %v1794, 0.0
    %v1812 = vmax.f32 %v1637, 0.0
    %v1813 = vmax.f32 %v1639, 0.0
    %v1814 = vmax.f32 %v1796, 0.0
    %v1815 = vmax.f32 %v1798, 0.0
    %v1816 = vld [vmem:[#allocation5] sm:$0xff]
    %v1817 = vld [vmem:[#allocation5 + $0x8] sm:$0xff]
    %v1818 = vld [vmem:[#allocation5 + $0x10] sm:$0xff]
    %v1819 = vld [vmem:[#allocation5 + $0x18] sm:$0xff]
    %v1820 = vld [vmem:[#allocation5 + $0x20] sm:$0xff]
    %v1821 = vld [vmem:[#allocation5 + $0x28] sm:$0xff]
    %v1822 = vld [vmem:[#allocation5 + $0x30] sm:$0xff]
    %v1823 = vld [vmem:[#allocation5 + $0x38] sm:$0xff]
    %v1824 = vld [vmem:[#allocation5 + $0x40] sm:$0xff]
    %v1825 = vld [vmem:[#allocation5 + $0x48] sm:$0xff]
    %v1826 = vld [vmem:[#allocation5 + $0x50] sm:$0xff]
    %v1827 = vld [vmem:[#allocation5 + $0x58] sm:$0xff]
    %v1828 = vld [vmem:[#allocation8] sm:$0xff]
    %v1829 = vld [vmem:[#allocation8 + $0x8] sm:$0xff]
    %v1830 = vld [vmem:[#allocation8 + $0x10] sm:$0xff]
    %v1831 = vld [vmem:[#allocation8 + $0x18] sm:$0xff]
    %v1832 = vld [vmem:[#allocation8 + $0x20] sm:$0xff]
    %v1833 = vld [vmem:[#allocation8 + $0x28] sm:$0xff]
    %v1834 = vld [vmem:[#allocation8 + $0x30] sm:$0xff]
    %v1835 = vld [vmem:[#allocation8 + $0x38] sm:$0xff]
    %v1836 = vld [vmem:[#allocation8 + $0x40] sm:$0xff]
    %v1837 = vld [vmem:[#allocation8 + $0x48] sm:$0xff]
    %v1838 = vld [vmem:[#allocation8 + $0x50] sm:$0xff]
    %v1839 = vld [vmem:[#allocation8 + $0x58] sm:$0xff]
    %v1840 = vld [vmem:[#allocation8 + $0x60] sm:$0xff]
    %v1841 = vld [vmem:[#allocation8 + $0x68] sm:$0xff]
    %v1842 = vld [vmem:[#allocation8 + $0x70] sm:$0xff]
    %v1843 = vld [vmem:[#allocation8 + $0x78] sm:$0xff]
    %v1844 = vld [vmem:[#allocation8 + $0x80] sm:$0xff]
    %v1845 = vld [vmem:[#allocation8 + $0x88] sm:$0xff]
    %v1846 = vld [vmem:[#allocation8 + $0x90] sm:$0xff]
    %v1847 = vld [vmem:[#allocation8 + $0x98] sm:$0xff]
    %v1848 = vld [vmem:[#allocation8 + $0xa0] sm:$0xff]
    %v1849 = vld [vmem:[#allocation8 + $0xa8] sm:$0xff]
    %v1850 = vld [vmem:[#allocation8 + $0xb0] sm:$0xff]
    %v1851 = vld [vmem:[#allocation8 + $0xb8] sm:$0xff]
    %v1852 = vld [vmem:[#allocation8 + $0xc0] sm:$0xff]
    %v1853 = vld [vmem:[#allocation8 + $0xc8] sm:$0xff]
    %v1854 = vld [vmem:[#allocation8 + $0xd0] sm:$0xff]
    %v1855 = vld [vmem:[#allocation8 + $0xd8] sm:$0xff]
    %v1856 = vld [vmem:[#allocation8 + $0xe0] sm:$0xff]
    %v1857 = vld [vmem:[#allocation8 + $0xe8] sm:$0xff]
    %v1858 = vld [vmem:[#allocation8 + $0xf0] sm:$0xff]
    %v1859 = vld [vmem:[#allocation8 + $0xf8] sm:$0xff]
    %v1860 = vld [vmem:[#allocation8 + $0x100] sm:$0xff]
    %v1861 = vld [vmem:[#allocation8 + $0x108] sm:$0xff]
    %v1862 = vld [vmem:[#allocation8 + $0x110] sm:$0xff]
    %v1863 = vld [vmem:[#allocation8 + $0x118] sm:$0xff]
    %v1864 = vld [vmem:[#allocation8 + $0x120] sm:$0xff]
    %v1865 = vld [vmem:[#allocation8 + $0x128] sm:$0xff]
    %v1866 = vld [vmem:[#allocation8 + $0x130] sm:$0xff]
    %v1867 = vld [vmem:[#allocation8 + $0x138] sm:$0xff]
    %v1868 = vld [vmem:[#allocation8 + $0x140] sm:$0xff]
    %v1869 = vld [vmem:[#allocation8 + $0x148] sm:$0xff]
    %v1870 = vld [vmem:[#allocation8 + $0x150] sm:$0xff]
    %v1871 = vld [vmem:[#allocation8 + $0x158] sm:$0xff]
    %v1872 = vld [vmem:[#allocation8 + $0x160] sm:$0xff]
    %v1873 = vld [vmem:[#allocation8 + $0x168] sm:$0xff]
    %v1874 = vld [vmem:[#allocation8 + $0x170] sm:$0xff]
    %v1875 = vld [vmem:[#allocation8 + $0x178] sm:$0xff]
    %v1876 = vld [vmem:[#allocation8 + $0x180] sm:$0xff]
    %v1877 = vld [vmem:[#allocation8 + $0x188] sm:$0xff]
    %v1878 = vld [vmem:[#allocation8 + $0x190] sm:$0xff]
    %v1879 = vld [vmem:[#allocation8 + $0x198] sm:$0xff]
    %v1880 = vld [vmem:[#allocation8 + $0x1a0] sm:$0xff]
    %v1881 = vld [vmem:[#allocation8 + $0x1a8] sm:$0xff]
    %v1882 = vld [vmem:[#allocation8 + $0x1b0] sm:$0xff]
    %v1883 = vld [vmem:[#allocation8 + $0x1b8] sm:$0xff]
    %v1884 = vld [vmem:[#allocation8 + $0x1c0] sm:$0xff]
    %v1885 = vld [vmem:[#allocation8 + $0x1c8] sm:$0xff]
    %v1886 = vld [vmem:[#allocation8 + $0x1d0] sm:$0xff]
    %v1887 = vld [vmem:[#allocation8 + $0x1d8] sm:$0xff]
    %v1888 = vld [vmem:[#allocation8 + $0x1e0] sm:$0xff]
    %v1889 = vld [vmem:[#allocation8 + $0x1e8] sm:$0xff]
    %v1890 = vld [vmem:[#allocation8 + $0x1f0] sm:$0xff]
    %v1891 = vld [vmem:[#allocation8 + $0x1f8] sm:$0xff]
    %v1892 = vld [vmem:[#allocation8 + $0x200] sm:$0xff]
    %v1893 = vld [vmem:[#allocation8 + $0x208] sm:$0xff]
    %v1894 = vld [vmem:[#allocation8 + $0x210] sm:$0xff]
    %v1895 = vld [vmem:[#allocation8 + $0x218] sm:$0xff]
    %v1896 = vld [vmem:[#allocation8 + $0x220] sm:$0xff]
    %v1897 = vld [vmem:[#allocation8 + $0x228] sm:$0xff]
    %v1898 = vld [vmem:[#allocation8 + $0x230] sm:$0xff]
    %v1899 = vld [vmem:[#allocation8 + $0x238] sm:$0xff]
    %v1900 = vld [vmem:[#allocation8 + $0x240] sm:$0xff]
    %v1901 = vld [vmem:[#allocation8 + $0x248] sm:$0xff]
    %v1902 = vld [vmem:[#allocation8 + $0x250] sm:$0xff]
    %v1903 = vld [vmem:[#allocation8 + $0x258] sm:$0xff]
    %v1904 = vld [vmem:[#allocation8 + $0x260] sm:$0xff]
    %v1905 = vld [vmem:[#allocation8 + $0x268] sm:$0xff]
    %v1906 = vld [vmem:[#allocation8 + $0x270] sm:$0xff]
    %v1907 = vld [vmem:[#allocation8 + $0x278] sm:$0xff]
    %v1908 = vld [vmem:[#allocation8 + $0x280] sm:$0xff]
    %v1909 = vld [vmem:[#allocation8 + $0x288] sm:$0xff]
    %v1910 = vld [vmem:[#allocation8 + $0x290] sm:$0xff]
    %v1911 = vld [vmem:[#allocation8 + $0x298] sm:$0xff]
    %v1912 = vld [vmem:[#allocation8 + $0x2a0] sm:$0xff]
    %v1913 = vld [vmem:[#allocation8 + $0x2a8] sm:$0xff]
    %v1914 = vld [vmem:[#allocation8 + $0x2b0] sm:$0xff]
    %v1915 = vld [vmem:[#allocation8 + $0x2b8] sm:$0xff]
    %v1916 = vld [vmem:[#allocation8 + $0x2c0] sm:$0xff]
    %v1917 = vld [vmem:[#allocation8 + $0x2c8] sm:$0xff]
    %v1918 = vld [vmem:[#allocation8 + $0x2d0] sm:$0xff]
    %v1919 = vld [vmem:[#allocation8 + $0x2d8] sm:$0xff]
    %v1920 = vld [vmem:[#allocation8 + $0x2e0] sm:$0xff]
    %v1921 = vld [vmem:[#allocation8 + $0x2e8] sm:$0xff]
    %v1922 = vld [vmem:[#allocation8 + $0x2f0] sm:$0xff]
    %v1923 = vld [vmem:[#allocation8 + $0x2f8] sm:$0xff]
    %v1924 = vld [vmem:[#allocation8 + $0x300] sm:$0xff]
    %v1925 = vld [vmem:[#allocation8 + $0x308] sm:$0xff]
    %v1926 = vld [vmem:[#allocation8 + $0x310] sm:$0xff]
    %v1927 = vld [vmem:[#allocation8 + $0x318] sm:$0xff]
    %v1928 = vld [vmem:[#allocation8 + $0x320] sm:$0xff]
    %v1929 = vld [vmem:[#allocation8 + $0x328] sm:$0xff]
    %v1930 = vld [vmem:[#allocation8 + $0x330] sm:$0xff]
    %v1931 = vld [vmem:[#allocation8 + $0x338] sm:$0xff]
    %v1932 = vld [vmem:[#allocation8 + $0x340] sm:$0xff]
    %v1933 = vld [vmem:[#allocation8 + $0x348] sm:$0xff]
    %v1934 = vld [vmem:[#allocation8 + $0x350] sm:$0xff]
    %v1935 = vld [vmem:[#allocation8 + $0x358] sm:$0xff]
    %v1936 = vld [vmem:[#allocation8 + $0x360] sm:$0xff]
    %v1937 = vld [vmem:[#allocation8 + $0x368] sm:$0xff]
    %v1938 = vld [vmem:[#allocation8 + $0x370] sm:$0xff]
    %v1939 = vld [vmem:[#allocation8 + $0x378] sm:$0xff]
    %v1940 = vld [vmem:[#allocation8 + $0x380] sm:$0xff]
    %v1941 = vld [vmem:[#allocation8 + $0x388] sm:$0xff]
    %v1942 = vld [vmem:[#allocation8 + $0x390] sm:$0xff]
    %v1943 = vld [vmem:[#allocation8 + $0x398] sm:$0xff]
    %v1944 = vld [vmem:[#allocation8 + $0x3a0] sm:$0xff]
    %v1945 = vld [vmem:[#allocation8 + $0x3a8] sm:$0xff]
    %v1946 = vld [vmem:[#allocation8 + $0x3b0] sm:$0xff]
    %v1947 = vld [vmem:[#allocation8 + $0x3b8] sm:$0xff]
    %v1948 = vld [vmem:[#allocation8 + $0x3c0] sm:$0xff]
    %v1949 = vld [vmem:[#allocation8 + $0x3c8] sm:$0xff]
    %v1950 = vld [vmem:[#allocation8 + $0x3d0] sm:$0xff]
    %v1951 = vld [vmem:[#allocation8 + $0x3d8] sm:$0xff]
    %v1952 = vld [vmem:[#allocation8 + $0x3e0] sm:$0xff]
    %v1953 = vld [vmem:[#allocation8 + $0x3e8] sm:$0xff]
    %v1954 = vld [vmem:[#allocation8 + $0x3f0] sm:$0xff]
    %v1955 = vld [vmem:[#allocation8 + $0x3f8] sm:$0xff]
    %v1956 = vld [vmem:[#allocation8 + $0x400] sm:$0xff]
    %v1957 = vld [vmem:[#allocation8 + $0x408] sm:$0xff]
    %v1958 = vld [vmem:[#allocation8 + $0x410] sm:$0xff]
    %v1959 = vld [vmem:[#allocation8 + $0x418] sm:$0xff]
    %v1960 = vld [vmem:[#allocation8 + $0x420] sm:$0xff]
    %v1961 = vld [vmem:[#allocation8 + $0x428] sm:$0xff]
    %v1962 = vld [vmem:[#allocation8 + $0x430] sm:$0xff]
    %v1963 = vld [vmem:[#allocation8 + $0x438] sm:$0xff]
    %v1964 = vld [vmem:[#allocation8 + $0x440] sm:$0xff]
    %v1965 = vld [vmem:[#allocation8 + $0x448] sm:$0xff]
    %v1966 = vld [vmem:[#allocation8 + $0x450] sm:$0xff]
    %v1967 = vld [vmem:[#allocation8 + $0x458] sm:$0xff]
    %v1968 = vld [vmem:[#allocation8 + $0x460] sm:$0xff]
    %v1969 = vld [vmem:[#allocation8 + $0x468] sm:$0xff]
    %v1970 = vld [vmem:[#allocation8 + $0x470] sm:$0xff]
    %v1971 = vld [vmem:[#allocation8 + $0x478] sm:$0xff]
    %v1972 = vld [vmem:[#allocation8 + $0x480] sm:$0xff]
    %v1973 = vld [vmem:[#allocation8 + $0x488] sm:$0xff]
    %v1974 = vld [vmem:[#allocation8 + $0x490] sm:$0xff]
    %v1975 = vld [vmem:[#allocation8 + $0x498] sm:$0xff]
    %v1976 = vld [vmem:[#allocation8 + $0x4a0] sm:$0xff]
    %v1977 = vld [vmem:[#allocation8 + $0x4a8] sm:$0xff]
    %v1978 = vld [vmem:[#allocation8 + $0x4b0] sm:$0xff]
    %v1979 = vld [vmem:[#allocation8 + $0x4b8] sm:$0xff]
    %v1980 = vld [vmem:[#allocation8 + $0x4c0] sm:$0xff]
    %v1981 = vld [vmem:[#allocation8 + $0x4c8] sm:$0xff]
    %v1982 = vld [vmem:[#allocation8 + $0x4d0] sm:$0xff]
    %v1983 = vld [vmem:[#allocation8 + $0x4d8] sm:$0xff]
    %v1984 = vld [vmem:[#allocation8 + $0x4e0] sm:$0xff]
    %v1985 = vld [vmem:[#allocation8 + $0x4e8] sm:$0xff]
    %v1986 = vld [vmem:[#allocation8 + $0x4f0] sm:$0xff]
    %v1987 = vld [vmem:[#allocation8 + $0x4f8] sm:$0xff]
    %v1988 = vld [vmem:[#allocation8 + $0x500] sm:$0xff]
    %v1989 = vld [vmem:[#allocation8 + $0x508] sm:$0xff]
    %v1990 = vld [vmem:[#allocation8 + $0x510] sm:$0xff]
    %v1991 = vld [vmem:[#allocation8 + $0x518] sm:$0xff]
    %v1992 = vld [vmem:[#allocation8 + $0x520] sm:$0xff]
    %v1993 = vld [vmem:[#allocation8 + $0x528] sm:$0xff]
    %v1994 = vld [vmem:[#allocation8 + $0x530] sm:$0xff]
    %v1995 = vld [vmem:[#allocation8 + $0x538] sm:$0xff]
    %v1996 = vld [vmem:[#allocation8 + $0x540] sm:$0xff]
    %v1997 = vld [vmem:[#allocation8 + $0x548] sm:$0xff]
    %v1998 = vld [vmem:[#allocation8 + $0x550] sm:$0xff]
    %v1999 = vld [vmem:[#allocation8 + $0x558] sm:$0xff]
    %v2000 = vld [vmem:[#allocation8 + $0x560] sm:$0xff]
    %v2001 = vld [vmem:[#allocation8 + $0x568] sm:$0xff]
    %v2002 = vld [vmem:[#allocation8 + $0x570] sm:$0xff]
    %v2003 = vld [vmem:[#allocation8 + $0x578] sm:$0xff]
    %v2004 = vld [vmem:[#allocation8 + $0x580] sm:$0xff]
    %v2005 = vld [vmem:[#allocation8 + $0x588] sm:$0xff]
    %v2006 = vld [vmem:[#allocation8 + $0x590] sm:$0xff]
    %v2007 = vld [vmem:[#allocation8 + $0x598] sm:$0xff]
    %v2008 = vld [vmem:[#allocation8 + $0x5a0] sm:$0xff]
    %v2009 = vld [vmem:[#allocation8 + $0x5a8] sm:$0xff]
    %v2010 = vld [vmem:[#allocation8 + $0x5b0] sm:$0xff]
    %v2011 = vld [vmem:[#allocation8 + $0x5b8] sm:$0xff]
    %v2012 = vld [vmem:[#allocation8 + $0x5c0] sm:$0xff]
    %v2013 = vld [vmem:[#allocation8 + $0x5c8] sm:$0xff]
    %v2014 = vld [vmem:[#allocation8 + $0x5d0] sm:$0xff]
    %v2015 = vld [vmem:[#allocation8 + $0x5d8] sm:$0xff]
    %v2016 = vld [vmem:[#allocation8 + $0x5e0] sm:$0xff]
    %v2017 = vld [vmem:[#allocation8 + $0x5e8] sm:$0xff]
    %v2018 = vld [vmem:[#allocation8 + $0x5f0] sm:$0xff]
    %v2019 = vld [vmem:[#allocation8 + $0x5f8] sm:$0xff]
    %v2020 = vld [vmem:[%s5] sm:$0xf]
    %v2022 = vlaneseq
    %v2023 = vshrl.u32 %v2022, 7
    %v2024 = vsub.s32 0, %v2023
    %v2025 = vrot.slane %v2020, %v2024
    %v2026 = vlaneseq
    %v2027 = vshrl.u32 %v2026, 7
    %v2028 = vsub.s32 1, %v2027
    %v2029 = vrot.slane %v2020, %v2028
    %v2030 = vlaneseq
    %v2031 = vshrl.u32 %v2030, 7
    %v2032 = vsub.s32 2, %v2031
    %v2033 = vrot.slane %v2020, %v2032
    %v2034 = vlaneseq
    %v2035 = vshrl.u32 %v2034, 7
    %v2036 = vsub.s32 3, %v2035
    %v2037 = vrot.slane %v2020, %v2036
    %v2054 = vunpack.c.l.b16 %v1816
    %v2055 = vunpack.c.h.b16 %v1816
    %v2056 = vunpack.c.l.b16 %v1817
    %v2057 = vunpack.c.h.b16 %v1817
    %v2058 = vunpack.c.l.b16 %v1818
    %v2059 = vunpack.c.h.b16 %v1818
    %v2060 = vunpack.c.l.b16 %v1819
    %v2061 = vunpack.c.h.b16 %v1819
    %v2062 = vunpack.c.l.b16 %v1820
    %v2063 = vunpack.c.h.b16 %v1820
    %v2064 = vunpack.c.l.b16 %v1821
    %v2065 = vunpack.c.h.b16 %v1821
    %v2066 = vunpack.c.l.b16 %v1822
    %v2067 = vunpack.c.h.b16 %v1822
    %v2068 = vunpack.c.l.b16 %v1823
    %v2069 = vunpack.c.h.b16 %v1823
    %v2070 = vunpack.c.l.b16 %v1824
    %v2071 = vunpack.c.h.b16 %v1824
    %v2072 = vunpack.c.l.b16 %v1825
    %v2073 = vunpack.c.h.b16 %v1825
    %v2074 = vunpack.c.l.b16 %v1826
    %v2075 = vunpack.c.h.b16 %v1826
    %v2076 = vunpack.c.l.b16 %v1827
    %v2077 = vunpack.c.h.b16 %v1827
    %v2078 = vpack.c.b16 %v2060, %v2054
    %v2079 = vpack.c.b16 %v2061, %v2055
    %v2080 = vpack.c.b16 %v2062, %v2056
    %v2081 = vpack.c.b16 %v2063, %v2057
    %v2082 = vpack.c.b16 %v2064, %v2058
    %v2083 = vpack.c.b16 %v2065, %v2059
    %v2084 = vpack.c.b16 %v2072, %v2066
    %v2085 = vpack.c.b16 %v2073, %v2067
    %v2086 = vpack.c.b16 %v2074, %v2068
    %v2087 = vpack.c.b16 %v2075, %v2069
    %v2088 = vpack.c.b16 %v2076, %v2070
    %v2089 = vpack.c.b16 %v2077, %v2071
    %v2294 = vunpack.c.l.b16 %v1828
    %v2295 = vunpack.c.h.b16 %v1828
    %v2296 = vunpack.c.l.b16 %v1829
    %v2297 = vunpack.c.h.b16 %v1829
    %v2298 = vunpack.c.l.b16 %v1830
    %v2299 = vunpack.c.h.b16 %v1830
    %v2300 = vunpack.c.l.b16 %v1831
    %v2301 = vunpack.c.h.b16 %v1831
    %v2302 = vunpack.c.l.b16 %v1832
    %v2303 = vunpack.c.h.b16 %v1832
    %v2304 = vunpack.c.l.b16 %v1833
    %v2305 = vunpack.c.h.b16 %v1833
    %v2306 = vunpack.c.l.b16 %v1834
    %v2307 = vunpack.c.h.b16 %v1834
    %v2308 = vunpack.c.l.b16 %v1835
    %v2309 = vunpack.c.h.b16 %v1835
    %v2310 = vunpack.c.l.b16 %v1836
    %v2311 = vunpack.c.h.b16 %v1836
    %v2312 = vunpack.c.l.b16 %v1837
    %v2313 = vunpack.c.h.b16 %v1837
    %v2314 = vunpack.c.l.b16 %v1838
    %v2315 = vunpack.c.h.b16 %v1838
    %v2316 = vunpack.c.l.b16 %v1839
    %v2317 = vunpack.c.h.b16 %v1839
    %v2318 = vunpack.c.l.b16 %v1840
    %v2319 = vunpack.c.h.b16 %v1840
    %v2320 = vunpack.c.l.b16 %v1841
    %v2321 = vunpack.c.h.b16 %v1841
    %v2322 = vunpack.c.l.b16 %v1842
    %v2323 = vunpack.c.h.b16 %v1842
    %v2324 = vunpack.c.l.b16 %v1843
    %v2325 = vunpack.c.h.b16 %v1843
    %v2326 = vunpack.c.l.b16 %v1844
    %v2327 = vunpack.c.h.b16 %v1844
    %v2328 = vunpack.c.l.b16 %v1845
    %v2329 = vunpack.c.h.b16 %v1845
    %v2330 = vunpack.c.l.b16 %v1846
    %v2331 = vunpack.c.h.b16 %v1846
    %v2332 = vunpack.c.l.b16 %v1847
    %v2333 = vunpack.c.h.b16 %v1847
    %v2334 = vunpack.c.l.b16 %v1848
    %v2335 = vunpack.c.h.b16 %v1848
    %v2336 = vunpack.c.l.b16 %v1849
    %v2337 = vunpack.c.h.b16 %v1849
    %v2338 = vunpack.c.l.b16 %v1850
    %v2339 = vunpack.c.h.b16 %v1850
    %v2340 = vunpack.c.l.b16 %v1851
    %v2341 = vunpack.c.h.b16 %v1851
    %v2342 = vunpack.c.l.b16 %v1852
    %v2343 = vunpack.c.h.b16 %v1852
    %v2344 = vunpack.c.l.b16 %v1853
    %v2345 = vunpack.c.h.b16 %v1853
    %v2346 = vunpack.c.l.b16 %v1854
    %v2347 = vunpack.c.h.b16 %v1854
    %v2348 = vunpack.c.l.b16 %v1855
    %v2349 = vunpack.c.h.b16 %v1855
    %v2350 = vunpack.c.l.b16 %v1856
    %v2351 = vunpack.c.h.b16 %v1856
    %v2352 = vunpack.c.l.b16 %v1857
    %v2353 = vunpack.c.h.b16 %v1857
    %v2354 = vunpack.c.l.b16 %v1858
    %v2355 = vunpack.c.h.b16 %v1858
    %v2356 = vunpack.c.l.b16 %v1859
    %v2357 = vunpack.c.h.b16 %v1859
    %v2358 = vunpack.c.l.b16 %v1860
    %v2359 = vunpack.c.h.b16 %v1860
    %v2360 = vunpack.c.l.b16 %v1861
    %v2361 = vunpack.c.h.b16 %v1861
    %v2362 = vunpack.c.l.b16 %v1862
    %v2363 = vunpack.c.h.b16 %v1862
    %v2364 = vunpack.c.l.b16 %v1863
    %v2365 = vunpack.c.h.b16 %v1863
    %v2366 = vunpack.c.l.b16 %v1864
    %v2367 = vunpack.c.h.b16 %v1864
    %v2368 = vunpack.c.l.b16 %v1865
    %v2369 = vunpack.c.h.b16 %v1865
    %v2370 = vunpack.c.l.b16 %v1866
    %v2371 = vunpack.c.h.b16 %v1866
    %v2372 = vunpack.c.l.b16 %v1867
    %v2373 = vunpack.c.h.b16 %v1867
    %v2374 = vunpack.c.l.b16 %v1868
    %v2375 = vunpack.c.h.b16 %v1868
    %v2376 = vunpack.c.l.b16 %v1869
    %v2377 = vunpack.c.h.b16 %v1869
    %v2378 = vunpack.c.l.b16 %v1870
    %v2379 = vunpack.c.h.b16 %v1870
    %v2380 = vunpack.c.l.b16 %v1871
    %v2381 = vunpack.c.h.b16 %v1871
    %v2382 = vunpack.c.l.b16 %v1872
    %v2383 = vunpack.c.h.b16 %v1872
    %v2384 = vunpack.c.l.b16 %v1873
    %v2385 = vunpack.c.h.b16 %v1873
    %v2386 = vunpack.c.l.b16 %v1874
    %v2387 = vunpack.c.h.b16 %v1874
    %v2388 = vunpack.c.l.b16 %v1875
    %v2389 = vunpack.c.h.b16 %v1875
    %v2390 = vunpack.c.l.b16 %v1876
    %v2391 = vunpack.c.h.b16 %v1876
    %v2392 = vunpack.c.l.b16 %v1877
    %v2393 = vunpack.c.h.b16 %v1877
    %v2394 = vunpack.c.l.b16 %v1878
    %v2395 = vunpack.c.h.b16 %v1878
    %v2396 = vunpack.c.l.b16 %v1879
    %v2397 = vunpack.c.h.b16 %v1879
    %v2398 = vunpack.c.l.b16 %v1880
    %v2399 = vunpack.c.h.b16 %v1880
    %v2400 = vunpack.c.l.b16 %v1881
    %v2401 = vunpack.c.h.b16 %v1881
    %v2402 = vunpack.c.l.b16 %v1882
    %v2403 = vunpack.c.h.b16 %v1882
    %v2404 = vunpack.c.l.b16 %v1883
    %v2405 = vunpack.c.h.b16 %v1883
    %v2406 = vunpack.c.l.b16 %v1884
    %v2407 = vunpack.c.h.b16 %v1884
    %v2408 = vunpack.c.l.b16 %v1885
    %v2409 = vunpack.c.h.b16 %v1885
    %v2410 = vunpack.c.l.b16 %v1886
    %v2411 = vunpack.c.h.b16 %v1886
    %v2412 = vunpack.c.l.b16 %v1887
    %v2413 = vunpack.c.h.b16 %v1887
    %v2414 = vunpack.c.l.b16 %v1888
    %v2415 = vunpack.c.h.b16 %v1888
    %v2416 = vunpack.c.l.b16 %v1889
    %v2417 = vunpack.c.h.b16 %v1889
    %v2418 = vunpack.c.l.b16 %v1890
    %v2419 = vunpack.c.h.b16 %v1890
    %v2420 = vunpack.c.l.b16 %v1891
    %v2421 = vunpack.c.h.b16 %v1891
    %v2422 = vunpack.c.l.b16 %v1892
    %v2423 = vunpack.c.h.b16 %v1892
    %v2424 = vunpack.c.l.b16 %v1893
    %v2425 = vunpack.c.h.b16 %v1893
    %v2426 = vunpack.c.l.b16 %v1894
    %v2427 = vunpack.c.h.b16 %v1894
    %v2428 = vunpack.c.l.b16 %v1895
    %v2429 = vunpack.c.h.b16 %v1895
    %v2430 = vunpack.c.l.b16 %v1896
    %v2431 = vunpack.c.h.b16 %v1896
    %v2432 = vunpack.c.l.b16 %v1897
    %v2433 = vunpack.c.h.b16 %v1897
    %v2434 = vunpack.c.l.b16 %v1898
    %v2435 = vunpack.c.h.b16 %v1898
    %v2436 = vunpack.c.l.b16 %v1899
    %v2437 = vunpack.c.h.b16 %v1899
    %v2438 = vunpack.c.l.b16 %v1900
    %v2439 = vunpack.c.h.b16 %v1900
    %v2440 = vunpack.c.l.b16 %v1901
    %v2441 = vunpack.c.h.b16 %v1901
    %v2442 = vunpack.c.l.b16 %v1902
    %v2443 = vunpack.c.h.b16 %v1902
    %v2444 = vunpack.c.l.b16 %v1903
    %v2445 = vunpack.c.h.b16 %v1903
    %v2446 = vunpack.c.l.b16 %v1904
    %v2447 = vunpack.c.h.b16 %v1904
    %v2448 = vunpack.c.l.b16 %v1905
    %v2449 = vunpack.c.h.b16 %v1905
    %v2450 = vunpack.c.l.b16 %v1906
    %v2451 = vunpack.c.h.b16 %v1906
    %v2452 = vunpack.c.l.b16 %v1907
    %v2453 = vunpack.c.h.b16 %v1907
    %v2454 = vunpack.c.l.b16 %v1908
    %v2455 = vunpack.c.h.b16 %v1908
    %v2456 = vunpack.c.l.b16 %v1909
    %v2457 = vunpack.c.h.b16 %v1909
    %v2458 = vunpack.c.l.b16 %v1910
    %v2459 = vunpack.c.h.b16 %v1910
    %v2460 = vunpack.c.l.b16 %v1911
    %v2461 = vunpack.c.h.b16 %v1911
    %v2462 = vunpack.c.l.b16 %v1912
    %v2463 = vunpack.c.h.b16 %v1912
    %v2464 = vunpack.c.l.b16 %v1913
    %v2465 = vunpack.c.h.b16 %v1913
    %v2466 = vunpack.c.l.b16 %v1914
    %v2467 = vunpack.c.h.b16 %v1914
    %v2468 = vunpack.c.l.b16 %v1915
    %v2469 = vunpack.c.h.b16 %v1915
    %v2470 = vunpack.c.l.b16 %v1916
    %v2471 = vunpack.c.h.b16 %v1916
    %v2472 = vunpack.c.l.b16 %v1917
    %v2473 = vunpack.c.h.b16 %v1917
    %v2474 = vunpack.c.l.b16 %v1918
    %v2475 = vunpack.c.h.b16 %v1918
    %v2476 = vunpack.c.l.b16 %v1919
    %v2477 = vunpack.c.h.b16 %v1919
    %v2478 = vunpack.c.l.b16 %v1920
    %v2479 = vunpack.c.h.b16 %v1920
    %v2480 = vunpack.c.l.b16 %v1921
    %v2481 = vunpack.c.h.b16 %v1921
    %v2482 = vunpack.c.l.b16 %v1922
    %v2483 = vunpack.c.h.b16 %v1922
    %v2484 = vunpack.c.l.b16 %v1923
    %v2485 = vunpack.c.h.b16 %v1923
    %v2486 = vunpack.c.l.b16 %v1924
    %v2487 = vunpack.c.h.b16 %v1924
    %v2488 = vunpack.c.l.b16 %v1925
    %v2489 = vunpack.c.h.b16 %v1925
    %v2490 = vunpack.c.l.b16 %v1926
    %v2491 = vunpack.c.h.b16 %v1926
    %v2492 = vunpack.c.l.b16 %v1927
    %v2493 = vunpack.c.h.b16 %v1927
    %v2494 = vunpack.c.l.b16 %v1928
    %v2495 = vunpack.c.h.b16 %v1928
    %v2496 = vunpack.c.l.b16 %v1929
    %v2497 = vunpack.c.h.b16 %v1929
    %v2498 = vunpack.c.l.b16 %v1930
    %v2499 = vunpack.c.h.b16 %v1930
    %v2500 = vunpack.c.l.b16 %v1931
    %v2501 = vunpack.c.h.b16 %v1931
    %v2502 = vunpack.c.l.b16 %v1932
    %v2503 = vunpack.c.h.b16 %v1932
    %v2504 = vunpack.c.l.b16 %v1933
    %v2505 = vunpack.c.h.b16 %v1933
    %v2506 = vunpack.c.l.b16 %v1934
    %v2507 = vunpack.c.h.b16 %v1934
    %v2508 = vunpack.c.l.b16 %v1935
    %v2509 = vunpack.c.h.b16 %v1935
    %v2510 = vunpack.c.l.b16 %v1936
    %v2511 = vunpack.c.h.b16 %v1936
    %v2512 = vunpack.c.l.b16 %v1937
    %v2513 = vunpack.c.h.b16 %v1937
    %v2514 = vunpack.c.l.b16 %v1938
    %v2515 = vunpack.c.h.b16 %v1938
    %v2516 = vunpack.c.l.b16 %v1939
    %v2517 = vunpack.c.h.b16 %v1939
    %v2518 = vunpack.c.l.b16 %v1940
    %v2519 = vunpack.c.h.b16 %v1940
    %v2520 = vunpack.c.l.b16 %v1941
    %v2521 = vunpack.c.h.b16 %v1941
    %v2522 = vunpack.c.l.b16 %v1942
    %v2523 = vunpack.c.h.b16 %v1942
    %v2524 = vunpack.c.l.b16 %v1943
    %v2525 = vunpack.c.h.b16 %v1943
    %v2526 = vunpack.c.l.b16 %v1944
    %v2527 = vunpack.c.h.b16 %v1944
    %v2528 = vunpack.c.l.b16 %v1945
    %v2529 = vunpack.c.h.b16 %v1945
    %v2530 = vunpack.c.l.b16 %v1946
    %v2531 = vunpack.c.h.b16 %v1946
    %v2532 = vunpack.c.l.b16 %v1947
    %v2533 = vunpack.c.h.b16 %v1947
    %v2534 = vunpack.c.l.b16 %v1948
    %v2535 = vunpack.c.h.b16 %v1948
    %v2536 = vunpack.c.l.b16 %v1949
    %v2537 = vunpack.c.h.b16 %v1949
    %v2538 = vunpack.c.l.b16 %v1950
    %v2539 = vunpack.c.h.b16 %v1950
    %v2540 = vunpack.c.l.b16 %v1951
    %v2541 = vunpack.c.h.b16 %v1951
    %v2542 = vunpack.c.l.b16 %v1952
    %v2543 = vunpack.c.h.b16 %v1952
    %v2544 = vunpack.c.l.b16 %v1953
    %v2545 = vunpack.c.h.b16 %v1953
    %v2546 = vunpack.c.l.b16 %v1954
    %v2547 = vunpack.c.h.b16 %v1954
    %v2548 = vunpack.c.l.b16 %v1955
    %v2549 = vunpack.c.h.b16 %v1955
    %v2550 = vunpack.c.l.b16 %v1956
    %v2551 = vunpack.c.h.b16 %v1956
    %v2552 = vunpack.c.l.b16 %v1957
    %v2553 = vunpack.c.h.b16 %v1957
    %v2554 = vunpack.c.l.b16 %v1958
    %v2555 = vunpack.c.h.b16 %v1958
    %v2556 = vunpack.c.l.b16 %v1959
    %v2557 = vunpack.c.h.b16 %v1959
    %v2558 = vunpack.c.l.b16 %v1960
    %v2559 = vunpack.c.h.b16 %v1960
    %v2560 = vunpack.c.l.b16 %v1961
    %v2561 = vunpack.c.h.b16 %v1961
    %v2562 = vunpack.c.l.b16 %v1962
    %v2563 = vunpack.c.h.b16 %v1962
    %v2564 = vunpack.c.l.b16 %v1963
    %v2565 = vunpack.c.h.b16 %v1963
    %v2566 = vunpack.c.l.b16 %v1964
    %v2567 = vunpack.c.h.b16 %v1964
    %v2568 = vunpack.c.l.b16 %v1965
    %v2569 = vunpack.c.h.b16 %v1965
    %v2570 = vunpack.c.l.b16 %v1966
    %v2571 = vunpack.c.h.b16 %v1966
    %v2572 = vunpack.c.l.b16 %v1967
    %v2573 = vunpack.c.h.b16 %v1967
    %v2574 = vunpack.c.l.b16 %v1968
    %v2575 = vunpack.c.h.b16 %v1968
    %v2576 = vunpack.c.l.b16 %v1969
    %v2577 = vunpack.c.h.b16 %v1969
    %v2578 = vunpack.c.l.b16 %v1970
    %v2579 = vunpack.c.h.b16 %v1970
    %v2580 = vunpack.c.l.b16 %v1971
    %v2581 = vunpack.c.h.b16 %v1971
    %v2582 = vunpack.c.l.b16 %v1972
    %v2583 = vunpack.c.h.b16 %v1972
    %v2584 = vunpack.c.l.b16 %v1973
    %v2585 = vunpack.c.h.b16 %v1973
    %v2586 = vunpack.c.l.b16 %v1974
    %v2587 = vunpack.c.h.b16 %v1974
    %v2588 = vunpack.c.l.b16 %v1975
    %v2589 = vunpack.c.h.b16 %v1975
    %v2590 = vunpack.c.l.b16 %v1976
    %v2591 = vunpack.c.h.b16 %v1976
    %v2592 = vunpack.c.l.b16 %v1977
    %v2593 = vunpack.c.h.b16 %v1977
    %v2594 = vunpack.c.l.b16 %v1978
    %v2595 = vunpack.c.h.b16 %v1978
    %v2596 = vunpack.c.l.b16 %v1979
    %v2597 = vunpack.c.h.b16 %v1979
    %v2598 = vunpack.c.l.b16 %v1980
    %v2599 = vunpack.c.h.b16 %v1980
    %v2600 = vunpack.c.l.b16 %v1981
    %v2601 = vunpack.c.h.b16 %v1981
    %v2602 = vunpack.c.l.b16 %v1982
    %v2603 = vunpack.c.h.b16 %v1982
    %v2604 = vunpack.c.l.b16 %v1983
    %v2605 = vunpack.c.h.b16 %v1983
    %v2606 = vunpack.c.l.b16 %v1984
    %v2607 = vunpack.c.h.b16 %v1984
    %v2608 = vunpack.c.l.b16 %v1985
    %v2609 = vunpack.c.h.b16 %v1985
    %v2610 = vunpack.c.l.b16 %v1986
    %v2611 = vunpack.c.h.b16 %v1986
    %v2612 = vunpack.c.l.b16 %v1987
    %v2613 = vunpack.c.h.b16 %v1987
    %v2614 = vunpack.c.l.b16 %v1988
    %v2615 = vunpack.c.h.b16 %v1988
    %v2616 = vunpack.c.l.b16 %v1989
    %v2617 = vunpack.c.h.b16 %v1989
    %v2618 = vunpack.c.l.b16 %v1990
    %v2619 = vunpack.c.h.b16 %v1990
    %v2620 = vunpack.c.l.b16 %v1991
    %v2621 = vunpack.c.h.b16 %v1991
    %v2622 = vunpack.c.l.b16 %v1992
    %v2623 = vunpack.c.h.b16 %v1992
    %v2624 = vunpack.c.l.b16 %v1993
    %v2625 = vunpack.c.h.b16 %v1993
    %v2626 = vunpack.c.l.b16 %v1994
    %v2627 = vunpack.c.h.b16 %v1994
    %v2628 = vunpack.c.l.b16 %v1995
    %v2629 = vunpack.c.h.b16 %v1995
    %v2630 = vunpack.c.l.b16 %v1996
    %v2631 = vunpack.c.h.b16 %v1996
    %v2632 = vunpack.c.l.b16 %v1997
    %v2633 = vunpack.c.h.b16 %v1997
    %v2634 = vunpack.c.l.b16 %v1998
    %v2635 = vunpack.c.h.b16 %v1998
    %v2636 = vunpack.c.l.b16 %v1999
    %v2637 = vunpack.c.h.b16 %v1999
    %v2638 = vunpack.c.l.b16 %v2000
    %v2639 = vunpack.c.h.b16 %v2000
    %v2640 = vunpack.c.l.b16 %v2001
    %v2641 = vunpack.c.h.b16 %v2001
    %v2642 = vunpack.c.l.b16 %v2002
    %v2643 = vunpack.c.h.b16 %v2002
    %v2644 = vunpack.c.l.b16 %v2003
    %v2645 = vunpack.c.h.b16 %v2003
    %v2646 = vunpack.c.l.b16 %v2004
    %v2647 = vunpack.c.h.b16 %v2004
    %v2648 = vunpack.c.l.b16 %v2005
    %v2649 = vunpack.c.h.b16 %v2005
    %v2650 = vunpack.c.l.b16 %v2006
    %v2651 = vunpack.c.h.b16 %v2006
    %v2652 = vunpack.c.l.b16 %v2007
    %v2653 = vunpack.c.h.b16 %v2007
    %v2654 = vunpack.c.l.b16 %v2008
    %v2655 = vunpack.c.h.b16 %v2008
    %v2656 = vunpack.c.l.b16 %v2009
    %v2657 = vunpack.c.h.b16 %v2009
    %v2658 = vunpack.c.l.b16 %v2010
    %v2659 = vunpack.c.h.b16 %v2010
    %v2660 = vunpack.c.l.b16 %v2011
    %v2661 = vunpack.c.h.b16 %v2011
    %v2662 = vunpack.c.l.b16 %v2012
    %v2663 = vunpack.c.h.b16 %v2012
    %v2664 = vunpack.c.l.b16 %v2013
    %v2665 = vunpack.c.h.b16 %v2013
    %v2666 = vunpack.c.l.b16 %v2014
    %v2667 = vunpack.c.h.b16 %v2014
    %v2668 = vunpack.c.l.b16 %v2015
    %v2669 = vunpack.c.h.b16 %v2015
    %v2670 = vunpack.c.l.b16 %v2016
    %v2671 = vunpack.c.h.b16 %v2016
    %v2672 = vunpack.c.l.b16 %v2017
    %v2673 = vunpack.c.h.b16 %v2017
    %v2674 = vunpack.c.l.b16 %v2018
    %v2675 = vunpack.c.h.b16 %v2018
    %v2676 = vunpack.c.l.b16 %v2019
    %v2677 = vunpack.c.h.b16 %v2019
    %v2678 = vpack.c.b16 %v2298, %v2294
    %v2679 = vpack.c.b16 %v2299, %v2295
    %v2680 = vpack.c.b16 %v2300, %v2296
    %v2681 = vpack.c.b16 %v2301, %v2297
    %v2682 = vpack.c.b16 %v2306, %v2302
    %v2683 = vpack.c.b16 %v2307, %v2303
    %v2684 = vpack.c.b16 %v2308, %v2304
    %v2685 = vpack.c.b16 %v2309, %v2305
    %v2686 = vpack.c.b16 %v2314, %v2310
    %v2687 = vpack.c.b16 %v2315, %v2311
    %v2688 = vpack.c.b16 %v2316, %v2312
    %v2689 = vpack.c.b16 %v2317, %v2313
    %v2690 = vpack.c.b16 %v2322, %v2318
    %v2691 = vpack.c.b16 %v2323, %v2319
    %v2692 = vpack.c.b16 %v2324, %v2320
    %v2693 = vpack.c.b16 %v2325, %v2321
    %v2694 = vpack.c.b16 %v2330, %v2326
    %v2695 = vpack.c.b16 %v2331, %v2327
    %v2696 = vpack.c.b16 %v2332, %v2328
    %v2697 = vpack.c.b16 %v2333, %v2329
    %v2698 = vpack.c.b16 %v2338, %v2334
    %v2699 = vpack.c.b16 %v2339, %v2335
    %v2700 = vpack.c.b16 %v2340, %v2336
    %v2701 = vpack.c.b16 %v2341, %v2337
    %v2702 = vpack.c.b16 %v2346, %v2342
    %v2703 = vpack.c.b16 %v2347, %v2343
    %v2704 = vpack.c.b16 %v2348, %v2344
    %v2705 = vpack.c.b16 %v2349, %v2345
    %v2706 = vpack.c.b16 %v2354, %v2350
    %v2707 = vpack.c.b16 %v2355, %v2351
    %v2708 = vpack.c.b16 %v2356, %v2352
    %v2709 = vpack.c.b16 %v2357, %v2353
    %v2710 = vpack.c.b16 %v2362, %v2358
    %v2711 = vpack.c.b16 %v2363, %v2359
    %v2712 = vpack.c.b16 %v2364, %v2360
    %v2713 = vpack.c.b16 %v2365, %v2361
    %v2714 = vpack.c.b16 %v2370, %v2366
    %v2715 = vpack.c.b16 %v2371, %v2367
    %v2716 = vpack.c.b16 %v2372, %v2368
    %v2717 = vpack.c.b16 %v2373, %v2369
    %v2718 = vpack.c.b16 %v2378, %v2374
    %v2719 = vpack.c.b16 %v2379, %v2375
    %v2720 = vpack.c.b16 %v2380, %v2376
    %v2721 = vpack.c.b16 %v2381, %v2377
    %v2722 = vpack.c.b16 %v2386, %v2382
    %v2723 = vpack.c.b16 %v2387, %v2383
    %v2724 = vpack.c.b16 %v2388, %v2384
    %v2725 = vpack.c.b16 %v2389, %v2385
    %v2726 = vpack.c.b16 %v2394, %v2390
    %v2727 = vpack.c.b16 %v2395, %v2391
    %v2728 = vpack.c.b16 %v2396, %v2392
    %v2729 = vpack.c.b16 %v2397, %v2393
    %v2730 = vpack.c.b16 %v2402, %v2398
    %v2731 = vpack.c.b16 %v2403, %v2399
    %v2732 = vpack.c.b16 %v2404, %v2400
    %v2733 = vpack.c.b16 %v2405, %v2401
    %v2734 = vpack.c.b16 %v2410, %v2406
    %v2735 = vpack.c.b16 %v2411, %v2407
    %v2736 = vpack.c.b16 %v2412, %v2408
    %v2737 = vpack.c.b16 %v2413, %v2409
    %v2738 = vpack.c.b16 %v2418, %v2414
    %v2739 = vpack.c.b16 %v2419, %v2415
    %v2740 = vpack.c.b16 %v2420, %v2416
    %v2741 = vpack.c.b16 %v2421, %v2417
    %v2742 = vpack.c.b16 %v2426, %v2422
    %v2743 = vpack.c.b16 %v2427, %v2423
    %v2744 = vpack.c.b16 %v2428, %v2424
    %v2745 = vpack.c.b16 %v2429, %v2425
    %v2746 = vpack.c.b16 %v2434, %v2430
    %v2747 = vpack.c.b16 %v2435, %v2431
    %v2748 = vpack.c.b16 %v2436, %v2432
    %v2749 = vpack.c.b16 %v2437, %v2433
    %v2750 = vpack.c.b16 %v2442, %v2438
    %v2751 = vpack.c.b16 %v2443, %v2439
    %v2752 = vpack.c.b16 %v2444, %v2440
    %v2753 = vpack.c.b16 %v2445, %v2441
    %v2754 = vpack.c.b16 %v2450, %v2446
    %v2755 = vpack.c.b16 %v2451, %v2447
    %v2756 = vpack.c.b16 %v2452, %v2448
    %v2757 = vpack.c.b16 %v2453, %v2449
    %v2758 = vpack.c.b16 %v2458, %v2454
    %v2759 = vpack.c.b16 %v2459, %v2455
    %v2760 = vpack.c.b16 %v2460, %v2456
    %v2761 = vpack.c.b16 %v2461, %v2457
    %v2762 = vpack.c.b16 %v2466, %v2462
    %v2763 = vpack.c.b16 %v2467, %v2463
    %v2764 = vpack.c.b16 %v2468, %v2464
    %v2765 = vpack.c.b16 %v2469, %v2465
    %v2766 = vpack.c.b16 %v2474, %v2470
    %v2767 = vpack.c.b16 %v2475, %v2471
    %v2768 = vpack.c.b16 %v2476, %v2472
    %v2769 = vpack.c.b16 %v2477, %v2473
    %v2770 = vpack.c.b16 %v2482, %v2478
    %v2771 = vpack.c.b16 %v2483, %v2479
    %v2772 = vpack.c.b16 %v2484, %v2480
    %v2773 = vpack.c.b16 %v2485, %v2481
    %v2774 = vpack.c.b16 %v2490, %v2486
    %v2775 = vpack.c.b16 %v2491, %v2487
    %v2776 = vpack.c.b16 %v2492, %v2488
    %v2777 = vpack.c.b16 %v2493, %v2489
    %v2778 = vpack.c.b16 %v2498, %v2494
    %v2779 = vpack.c.b16 %v2499, %v2495
    %v2780 = vpack.c.b16 %v2500, %v2496
    %v2781 = vpack.c.b16 %v2501, %v2497
    %v2782 = vpack.c.b16 %v2506, %v2502
    %v2783 = vpack.c.b16 %v2507, %v2503
    %v2784 = vpack.c.b16 %v2508, %v2504
    %v2785 = vpack.c.b16 %v2509, %v2505
    %v2786 = vpack.c.b16 %v2514, %v2510
    %v2787 = vpack.c.b16 %v2515, %v2511
    %v2788 = vpack.c.b16 %v2516, %v2512
    %v2789 = vpack.c.b16 %v2517, %v2513
    %v2790 = vpack.c.b16 %v2522, %v2518
    %v2791 = vpack.c.b16 %v2523, %v2519
    %v2792 = vpack.c.b16 %v2524, %v2520
    %v2793 = vpack.c.b16 %v2525, %v2521
    %v2794 = vpack.c.b16 %v2530, %v2526
    %v2795 = vpack.c.b16 %v2531, %v2527
    %v2796 = vpack.c.b16 %v2532, %v2528
    %v2797 = vpack.c.b16 %v2533, %v2529
    %v2798 = vpack.c.b16 %v2538, %v2534
    %v2799 = vpack.c.b16 %v2539, %v2535
    %v2800 = vpack.c.b16 %v2540, %v2536
    %v2801 = vpack.c.b16 %v2541, %v2537
    %v2802 = vpack.c.b16 %v2546, %v2542
    %v2803 = vpack.c.b16 %v2547, %v2543
    %v2804 = vpack.c.b16 %v2548, %v2544
    %v2805 = vpack.c.b16 %v2549, %v2545
    %v2806 = vpack.c.b16 %v2554, %v2550
    %v2807 = vpack.c.b16 %v2555, %v2551
    %v2808 = vpack.c.b16 %v2556, %v2552
    %v2809 = vpack.c.b16 %v2557, %v2553
    %v2810 = vpack.c.b16 %v2562, %v2558
    %v2811 = vpack.c.b16 %v2563, %v2559
    %v2812 = vpack.c.b16 %v2564, %v2560
    %v2813 = vpack.c.b16 %v2565, %v2561
    %v2814 = vpack.c.b16 %v2570, %v2566
    %v2815 = vpack.c.b16 %v2571, %v2567
    %v2816 = vpack.c.b16 %v2572, %v2568
    %v2817 = vpack.c.b16 %v2573, %v2569
    %v2818 = vpack.c.b16 %v2578, %v2574
    %v2819 = vpack.c.b16 %v2579, %v2575
    %v2820 = vpack.c.b16 %v2580, %v2576
    %v2821 = vpack.c.b16 %v2581, %v2577
    %v2822 = vpack.c.b16 %v2586, %v2582
    %v2823 = vpack.c.b16 %v2587, %v2583
    %v2824 = vpack.c.b16 %v2588, %v2584
    %v2825 = vpack.c.b16 %v2589, %v2585
    %v2826 = vpack.c.b16 %v2594, %v2590
    %v2827 = vpack.c.b16 %v2595, %v2591
    %v2828 = vpack.c.b16 %v2596, %v2592
    %v2829 = vpack.c.b16 %v2597, %v2593
    %v2830 = vpack.c.b16 %v2602, %v2598
    %v2831 = vpack.c.b16 %v2603, %v2599
    %v2832 = vpack.c.b16 %v2604, %v2600
    %v2833 = vpack.c.b16 %v2605, %v2601
    %v2834 = vpack.c.b16 %v2610, %v2606
    %v2835 = vpack.c.b16 %v2611, %v2607
    %v2836 = vpack.c.b16 %v2612, %v2608
    %v2837 = vpack.c.b16 %v2613, %v2609
    %v2838 = vpack.c.b16 %v2618, %v2614
    %v2839 = vpack.c.b16 %v2619, %v2615
    %v2840 = vpack.c.b16 %v2620, %v2616
    %v2841 = vpack.c.b16 %v2621, %v2617
    %v2842 = vpack.c.b16 %v2626, %v2622
    %v2843 = vpack.c.b16 %v2627, %v2623
    %v2844 = vpack.c.b16 %v2628, %v2624
    %v2845 = vpack.c.b16 %v2629, %v2625
    %v2846 = vpack.c.b16 %v2634, %v2630
    %v2847 = vpack.c.b16 %v2635, %v2631
    %v2848 = vpack.c.b16 %v2636, %v2632
    %v2849 = vpack.c.b16 %v2637, %v2633
    %v2850 = vpack.c.b16 %v2642, %v2638
    %v2851 = vpack.c.b16 %v2643, %v2639
    %v2852 = vpack.c.b16 %v2644, %v2640
    %v2853 = vpack.c.b16 %v2645, %v2641
    %v2854 = vpack.c.b16 %v2650, %v2646
    %v2855 = vpack.c.b16 %v2651, %v2647
    %v2856 = vpack.c.b16 %v2652, %v2648
    %v2857 = vpack.c.b16 %v2653, %v2649
    %v2858 = vpack.c.b16 %v2658, %v2654
    %v2859 = vpack.c.b16 %v2659, %v2655
    %v2860 = vpack.c.b16 %v2660, %v2656
    %v2861 = vpack.c.b16 %v2661, %v2657
    %v2862 = vpack.c.b16 %v2666, %v2662
    %v2863 = vpack.c.b16 %v2667, %v2663
    %v2864 = vpack.c.b16 %v2668, %v2664
    %v2865 = vpack.c.b16 %v2669, %v2665
    %v2866 = vpack.c.b16 %v2674, %v2670
    %v2867 = vpack.c.b16 %v2675, %v2671
    %v2868 = vpack.c.b16 %v2676, %v2672
    %v2869 = vpack.c.b16 %v2677, %v2673
    %3062 = vmatprep.subr.bf16.mxu0 %v2707
    %3063 = vmatpush1.bf16.msra.mxu0 %v2706
    %3064 = vmatprep.subr.bf16.mxu0 %v2703
    %3065 = vmatpush1.bf16.msra.mxu0 %v2702
    %3066 = vmatprep.subr.bf16.mxu0 %v2699
    %3067 = vmatpush1.bf16.msra.mxu0 %v2698
    %3068 = vmatprep.subr.bf16.mxu0 %v2695
    %3069 = vmatpush1.bf16.msra.mxu0 %v2694
    %3070 = vmatprep.subr.bf16.mxu0 %v2691
    %3071 = vmatpush1.bf16.msra.mxu0 %v2690
    %3072 = vmatprep.subr.bf16.mxu0 %v2687
    %3073 = vmatpush1.bf16.msra.mxu0 %v2686
    %3074 = vmatprep.subr.bf16.mxu0 %v2683
    %3075 = vmatpush1.bf16.msra.mxu0 %v2682
    %3076 = vmatprep.subr.bf16.mxu0 %v2679
    %3077 = vmatpush1.bf16.msra.mxu0 %v2678
    %3078 = vmatprep.subr.bf16.mxu0 %v2739
    %3079 = vmatpush2.bf16.msra.mxu0 %v2738
    %3080 = vmatprep.subr.bf16.mxu0 %v2735
    %3081 = vmatpush2.bf16.msra.mxu0 %v2734
    %3082 = vmatprep.subr.bf16.mxu0 %v2731
    %3083 = vmatpush2.bf16.msra.mxu0 %v2730
    %3084 = vmatprep.subr.bf16.mxu0 %v2727
    %3085 = vmatpush2.bf16.msra.mxu0 %v2726
    %3086 = vmatprep.subr.bf16.mxu0 %v2723
    %3087 = vmatpush2.bf16.msra.mxu0 %v2722
    %3088 = vmatprep.subr.bf16.mxu0 %v2719
    %3089 = vmatpush2.bf16.msra.mxu0 %v2718
    %3090 = vmatprep.subr.bf16.mxu0 %v2715
    %3091 = vmatpush2.bf16.msra.mxu0 %v2714
    %3092 = vmatprep.subr.bf16.mxu0 %v2711
    %3093 = vmatpush2.bf16.msra.mxu0 %v2710
    %3094 = vmatprep.mubr.bf16.mxu0 %v2079
    %3095 = vmatmul.mubr.bf16.gmra.mxu0 %v2078
    %v3096 = vpop.f32.mrf.mxu0
    %v3097 = vadd.f32 %v2025, %v3096
    %v3098 = vpop.f32.mrf.mxu0
    %v3099 = vadd.f32 %v2029, %v3098
    %v3100 = vpop.f32.mrf.mxu0
    %v3101 = vadd.f32 %v2025, %v3100
    %v3102 = vpop.f32.mrf.mxu0
    %v3103 = vadd.f32 %v2029, %v3102
    %3104 = vmatprep.mubr.bf16.mxu0 %v2085
    %3105 = vmatmul.mubr.bf16.gmra.mxu0 %v2084
    %v3106 = vpop.f32.mrf.mxu0
    %v3107 = vadd.f32 %v2025, %v3106
    %v3108 = vpop.f32.mrf.mxu0
    %v3109 = vadd.f32 %v2029, %v3108
    %v3110 = vpop.f32.mrf.mxu0
    %v3111 = vadd.f32 %v2025, %v3110
    %v3112 = vpop.f32.mrf.mxu0
    %v3113 = vadd.f32 %v2029, %v3112
    %3114 = vdwg.mxu0
    %3115 = vmatprep.subr.bf16.mxu0 %v2771
    %3116 = vmatpush1.bf16.msra.mxu0 %v2770
    %3117 = vmatprep.subr.bf16.mxu0 %v2767
    %3118 = vmatpush1.bf16.msra.mxu0 %v2766
    %3119 = vmatprep.subr.bf16.mxu0 %v2763
    %3120 = vmatpush1.bf16.msra.mxu0 %v2762
    %3121 = vmatprep.subr.bf16.mxu0 %v2759
    %3122 = vmatpush1.bf16.msra.mxu0 %v2758
    %3123 = vmatprep.subr.bf16.mxu0 %v2755
    %3124 = vmatpush1.bf16.msra.mxu0 %v2754
    %3125 = vmatprep.subr.bf16.mxu0 %v2751
    %3126 = vmatpush1.bf16.msra.mxu0 %v2750
    %3127 = vmatprep.subr.bf16.mxu0 %v2747
    %3128 = vmatpush1.bf16.msra.mxu0 %v2746
    %3129 = vmatprep.subr.bf16.mxu0 %v2743
    %3130 = vmatpush1.bf16.msra.mxu0 %v2742
    %3131 = vmatprep.subr.bf16.mxu0 %v2803
    %3132 = vmatpush2.bf16.msra.mxu0 %v2802
    %3133 = vmatprep.subr.bf16.mxu0 %v2799
    %3134 = vmatpush2.bf16.msra.mxu0 %v2798
    %3135 = vmatprep.subr.bf16.mxu0 %v2795
    %3136 = vmatpush2.bf16.msra.mxu0 %v2794
    %3137 = vmatprep.subr.bf16.mxu0 %v2791
    %3138 = vmatpush2.bf16.msra.mxu0 %v2790
    %3139 = vmatprep.subr.bf16.mxu0 %v2787
    %3140 = vmatpush2.bf16.msra.mxu0 %v2786
    %3141 = vmatprep.subr.bf16.mxu0 %v2783
    %3142 = vmatpush2.bf16.msra.mxu0 %v2782
    %3143 = vmatprep.subr.bf16.mxu0 %v2779
    %3144 = vmatpush2.bf16.msra.mxu0 %v2778
    %3145 = vmatprep.subr.bf16.mxu0 %v2775
    %3146 = vmatpush2.bf16.msra.mxu0 %v2774
    %3147 = vmatprep.mubr.bf16.mxu0 %v2081
    %3148 = vmatmul.mubr.bf16.gmra.mxu0 %v2080
    %v3149 = vpop.f32.mrf.mxu0
    %v3150 = vadd.f32 %v3097, %v3149
    %v3151 = vpop.f32.mrf.mxu0
    %v3152 = vadd.f32 %v3099, %v3151
    %v3153 = vpop.f32.mrf.mxu0
    %v3154 = vadd.f32 %v3101, %v3153
    %v3155 = vpop.f32.mrf.mxu0
    %v3156 = vadd.f32 %v3103, %v3155
    %3157 = vmatprep.mubr.bf16.mxu0 %v2087
    %3158 = vmatmul.mubr.bf16.gmra.mxu0 %v2086
    %v3159 = vpop.f32.mrf.mxu0
    %v3160 = vadd.f32 %v3107, %v3159
    %v3161 = vpop.f32.mrf.mxu0
    %v3162 = vadd.f32 %v3109, %v3161
    %v3163 = vpop.f32.mrf.mxu0
    %v3164 = vadd.f32 %v3111, %v3163
    %v3165 = vpop.f32.mrf.mxu0
    %v3166 = vadd.f32 %v3113, %v3165
    %3167 = vdwg.mxu0
    %3168 = vmatprep.subr.bf16.mxu0 %v2835
    %3169 = vmatpush1.bf16.msra.mxu0 %v2834
    %3170 = vmatprep.subr.bf16.mxu0 %v2831
    %3171 = vmatpush1.bf16.msra.mxu0 %v2830
    %3172 = vmatprep.subr.bf16.mxu0 %v2827
    %3173 = vmatpush1.bf16.msra.mxu0 %v2826
    %3174 = vmatprep.subr.bf16.mxu0 %v2823
    %3175 = vmatpush1.bf16.msra.mxu0 %v2822
    %3176 = vmatprep.subr.bf16.mxu0 %v2819
    %3177 = vmatpush1.bf16.msra.mxu0 %v2818
    %3178 = vmatprep.subr.bf16.mxu0 %v2815
    %3179 = vmatpush1.bf16.msra.mxu0 %v2814
    %3180 = vmatprep.subr.bf16.mxu0 %v2811
    %3181 = vmatpush1.bf16.msra.mxu0 %v2810
    %3182 = vmatprep.subr.bf16.mxu0 %v2807
    %3183 = vmatpush1.bf16.msra.mxu0 %v2806
    %3184 = vmatprep.subr.bf16.mxu0 %v2867
    %3185 = vmatpush2.bf16.msra.mxu0 %v2866
    %3186 = vmatprep.subr.bf16.mxu0 %v2863
    %3187 = vmatpush2.bf16.msra.mxu0 %v2862
    %3188 = vmatprep.subr.bf16.mxu0 %v2859
    %3189 = vmatpush2.bf16.msra.mxu0 %v2858
    %3190 = vmatprep.subr.bf16.mxu0 %v2855
    %3191 = vmatpush2.bf16.msra.mxu0 %v2854
    %3192 = vmatprep.subr.bf16.mxu0 %v2851
    %3193 = vmatpush2.bf16.msra.mxu0 %v2850
    %3194 = vmatprep.subr.bf16.mxu0 %v2847
    %3195 = vmatpush2.bf16.msra.mxu0 %v2846
    %3196 = vmatprep.subr.bf16.mxu0 %v2843
    %3197 = vmatpush2.bf16.msra.mxu0 %v2842
    %3198 = vmatprep.subr.bf16.mxu0 %v2839
    %3199 = vmatpush2.bf16.msra.mxu0 %v2838
    %3200 = vmatprep.mubr.bf16.mxu0 %v2083
    %3201 = vmatmul.mubr.bf16.gmra.mxu0 %v2082
    %v3202 = vpop.f32.mrf.mxu0
    %v3203 = vadd.f32 %v3150, %v3202
    %v3204 = vpop.f32.mrf.mxu0
    %v3205 = vadd.f32 %v3152, %v3204
    %v3206 = vpop.f32.mrf.mxu0
    %v3207 = vadd.f32 %v3154, %v3206
    %v3208 = vpop.f32.mrf.mxu0
    %v3209 = vadd.f32 %v3156, %v3208
    %3210 = vmatprep.mubr.bf16.mxu0 %v2089
    %3211 = vmatmul.mubr.bf16.gmra.mxu0 %v2088
    %v3212 = vpop.f32.mrf.mxu0
    %v3213 = vadd.f32 %v3160, %v3212
    %v3214 = vpop.f32.mrf.mxu0
    %v3215 = vadd.f32 %v3162, %v3214
    %v3216 = vpop.f32.mrf.mxu0
    %v3217 = vadd.f32 %v3164, %v3216
    %v3218 = vpop.f32.mrf.mxu0
    %v3219 = vadd.f32 %v3166, %v3218
    %3220 = vdwg.mxu0
    %3221 = vmatprep.subr.bf16.mxu0 %v2709
    %3222 = vmatpush1.bf16.msra.mxu0 %v2708
    %3223 = vmatprep.subr.bf16.mxu0 %v2705
    %3224 = vmatpush1.bf16.msra.mxu0 %v2704
    %3225 = vmatprep.subr.bf16.mxu0 %v2701
    %3226 = vmatpush1.bf16.msra.mxu0 %v2700
    %3227 = vmatprep.subr.bf16.mxu0 %v2697
    %3228 = vmatpush1.bf16.msra.mxu0 %v2696
    %3229 = vmatprep.subr.bf16.mxu0 %v2693
    %3230 = vmatpush1.bf16.msra.mxu0 %v2692
    %3231 = vmatprep.subr.bf16.mxu0 %v2689
    %3232 = vmatpush1.bf16.msra.mxu0 %v2688
    %3233 = vmatprep.subr.bf16.mxu0 %v2685
    %3234 = vmatpush1.bf16.msra.mxu0 %v2684
    %3235 = vmatprep.subr.bf16.mxu0 %v2681
    %3236 = vmatpush1.bf16.msra.mxu0 %v2680
    %3237 = vmatprep.subr.bf16.mxu0 %v2741
    %3238 = vmatpush2.bf16.msra.mxu0 %v2740
    %3239 = vmatprep.subr.bf16.mxu0 %v2737
    %3240 = vmatpush2.bf16.msra.mxu0 %v2736
    %3241 = vmatprep.subr.bf16.mxu0 %v2733
    %3242 = vmatpush2.bf16.msra.mxu0 %v2732
    %3243 = vmatprep.subr.bf16.mxu0 %v2729
    %3244 = vmatpush2.bf16.msra.mxu0 %v2728
    %3245 = vmatprep.subr.bf16.mxu0 %v2725
    %3246 = vmatpush2.bf16.msra.mxu0 %v2724
    %3247 = vmatprep.subr.bf16.mxu0 %v2721
    %3248 = vmatpush2.bf16.msra.mxu0 %v2720
    %3249 = vmatprep.subr.bf16.mxu0 %v2717
    %3250 = vmatpush2.bf16.msra.mxu0 %v2716
    %3251 = vmatprep.subr.bf16.mxu0 %v2713
    %3252 = vmatpush2.bf16.msra.mxu0 %v2712
    %3253 = vmatprep.mubr.bf16.mxu0 %v2079
    %3254 = vmatmul.mubr.bf16.gmra.mxu0 %v2078
    %v3255 = vpop.f32.mrf.mxu0
    %v3256 = vadd.f32 %v2033, %v3255
    %v3257 = vpop.f32.mrf.mxu0
    %v3258 = vadd.f32 %v2037, %v3257
    %v3259 = vpop.f32.mrf.mxu0
    %v3260 = vadd.f32 %v2033, %v3259
    %v3261 = vpop.f32.mrf.mxu0
    %v3262 = vadd.f32 %v2037, %v3261
    %3263 = vmatprep.mubr.bf16.mxu0 %v2085
    %3264 = vmatmul.mubr.bf16.gmra.mxu0 %v2084
    %v3265 = vpop.f32.mrf.mxu0
    %v3266 = vadd.f32 %v2033, %v3265
    %v3267 = vpop.f32.mrf.mxu0
    %v3268 = vadd.f32 %v2037, %v3267
    %v3269 = vpop.f32.mrf.mxu0
    %v3270 = vadd.f32 %v2033, %v3269
    %v3271 = vpop.f32.mrf.mxu0
    %v3272 = vadd.f32 %v2037, %v3271
    %3273 = vdwg.mxu0
    %3274 = vmatprep.subr.bf16.mxu0 %v2773
    %3275 = vmatpush1.bf16.msra.mxu0 %v2772
    %3276 = vmatprep.subr.bf16.mxu0 %v2769
    %3277 = vmatpush1.bf16.msra.mxu0 %v2768
    %3278 = vmatprep.subr.bf16.mxu0 %v2765
    %3279 = vmatpush1.bf16.msra.mxu0 %v2764
    %3280 = vmatprep.subr.bf16.mxu0 %v2761
    %3281 = vmatpush1.bf16.msra.mxu0 %v2760
    %3282 = vmatprep.subr.bf16.mxu0 %v2757
    %3283 = vmatpush1.bf16.msra.mxu0 %v2756
    %3284 = vmatprep.subr.bf16.mxu0 %v2753
    %3285 = vmatpush1.bf16.msra.mxu0 %v2752
    %3286 = vmatprep.subr.bf16.mxu0 %v2749
    %3287 = vmatpush1.bf16.msra.mxu0 %v2748
    %3288 = vmatprep.subr.bf16.mxu0 %v2745
    %3289 = vmatpush1.bf16.msra.mxu0 %v2744
    %3290 = vmatprep.subr.bf16.mxu0 %v2805
    %3291 = vmatpush2.bf16.msra.mxu0 %v2804
    %3292 = vmatprep.subr.bf16.mxu0 %v2801
    %3293 = vmatpush2.bf16.msra.mxu0 %v2800
    %3294 = vmatprep.subr.bf16.mxu0 %v2797
    %3295 = vmatpush2.bf16.msra.mxu0 %v2796
    %3296 = vmatprep.subr.bf16.mxu0 %v2793
    %3297 = vmatpush2.bf16.msra.mxu0 %v2792
    %3298 = vmatprep.subr.bf16.mxu0 %v2789
    %3299 = vmatpush2.bf16.msra.mxu0 %v2788
    %3300 = vmatprep.subr.bf16.mxu0 %v2785
    %3301 = vmatpush2.bf16.msra.mxu0 %v2784
    %3302 = vmatprep.subr.bf16.mxu0 %v2781
    %3303 = vmatpush2.bf16.msra.mxu0 %v2780
    %3304 = vmatprep.subr.bf16.mxu0 %v2777
    %3305 = vmatpush2.bf16.msra.mxu0 %v2776
    %3306 = vmatprep.mubr.bf16.mxu0 %v2081
    %3307 = vmatmul.mubr.bf16.gmra.mxu0 %v2080
    %v3308 = vpop.f32.mrf.mxu0
    %v3309 = vadd.f32 %v3256, %v3308
    %v3310 = vpop.f32.mrf.mxu0
    %v3311 = vadd.f32 %v3258, %v3310
    %v3312 = vpop.f32.mrf.mxu0
    %v3313 = vadd.f32 %v3260, %v3312
    %v3314 = vpop.f32.mrf.mxu0
    %v3315 = vadd.f32 %v3262, %v3314
    %3316 = vmatprep.mubr.bf16.mxu0 %v2087
    %3317 = vmatmul.mubr.bf16.gmra.mxu0 %v2086
    %v3318 = vpop.f32.mrf.mxu0
    %v3319 = vadd.f32 %v3266, %v3318
    %v3320 = vpop.f32.mrf.mxu0
    %v3321 = vadd.f32 %v3268, %v3320
    %v3322 = vpop.f32.mrf.mxu0
    %v3323 = vadd.f32 %v3270, %v3322
    %v3324 = vpop.f32.mrf.mxu0
    %v3325 = vadd.f32 %v3272, %v3324
    %3326 = vdwg.mxu0
    %3327 = vmatprep.subr.bf16.mxu0 %v2837
    %3328 = vmatpush1.bf16.msra.mxu0 %v2836
    %3329 = vmatprep.subr.bf16.mxu0 %v2833
    %3330 = vmatpush1.bf16.msra.mxu0 %v2832
    %3331 = vmatprep.subr.bf16.mxu0 %v2829
    %3332 = vmatpush1.bf16.msra.mxu0 %v2828
    %3333 = vmatprep.subr.bf16.mxu0 %v2825
    %3334 = vmatpush1.bf16.msra.mxu0 %v2824
    %3335 = vmatprep.subr.bf16.mxu0 %v2821
    %3336 = vmatpush1.bf16.msra.mxu0 %v2820
    %3337 = vmatprep.subr.bf16.mxu0 %v2817
    %3338 = vmatpush1.bf16.msra.mxu0 %v2816
    %3339 = vmatprep.subr.bf16.mxu0 %v2813
    %3340 = vmatpush1.bf16.msra.mxu0 %v2812
    %3341 = vmatprep.subr.bf16.mxu0 %v2809
    %3342 = vmatpush1.bf16.msra.mxu0 %v2808
    %3343 = vmatprep.subr.bf16.mxu0 %v2869
    %3344 = vmatpush2.bf16.msra.mxu0 %v2868
    %3345 = vmatprep.subr.bf16.mxu0 %v2865
    %3346 = vmatpush2.bf16.msra.mxu0 %v2864
    %3347 = vmatprep.subr.bf16.mxu0 %v2861
    %3348 = vmatpush2.bf16.msra.mxu0 %v2860
    %3349 = vmatprep.subr.bf16.mxu0 %v2857
    %3350 = vmatpush2.bf16.msra.mxu0 %v2856
    %3351 = vmatprep.subr.bf16.mxu0 %v2853
    %3352 = vmatpush2.bf16.msra.mxu0 %v2852
    %3353 = vmatprep.subr.bf16.mxu0 %v2849
    %3354 = vmatpush2.bf16.msra.mxu0 %v2848
    %3355 = vmatprep.subr.bf16.mxu0 %v2845
    %3356 = vmatpush2.bf16.msra.mxu0 %v2844
    %3357 = vmatprep.subr.bf16.mxu0 %v2841
    %3358 = vmatpush2.bf16.msra.mxu0 %v2840
    %3359 = vmatprep.mubr.bf16.mxu0 %v2083
    %3360 = vmatmul.mubr.bf16.gmra.mxu0 %v2082
    %v3361 = vpop.f32.mrf.mxu0
    %v3362 = vadd.f32 %v3309, %v3361
    %v3363 = vpop.f32.mrf.mxu0
    %v3364 = vadd.f32 %v3311, %v3363
    %v3365 = vpop.f32.mrf.mxu0
    %v3366 = vadd.f32 %v3313, %v3365
    %v3367 = vpop.f32.mrf.mxu0
    %v3368 = vadd.f32 %v3315, %v3367
    %3369 = vmatprep.mubr.bf16.mxu0 %v2089
    %3370 = vmatmul.mubr.bf16.gmra.mxu0 %v2088
    %v3371 = vpop.f32.mrf.mxu0
    %v3372 = vadd.f32 %v3319, %v3371
    %v3373 = vpop.f32.mrf.mxu0
    %v3374 = vadd.f32 %v3321, %v3373
    %v3375 = vpop.f32.mrf.mxu0
    %v3376 = vadd.f32 %v3323, %v3375
    %v3377 = vpop.f32.mrf.mxu0
    %v3378 = vadd.f32 %v3325, %v3377
    %3379 = vdwg.mxu0
    %v3380 = vmax.f32 %v3203, 0.0
    %v3381 = vmax.f32 %v3205, 0.0
    %v3382 = vmax.f32 %v3362, 0.0
    %v3383 = vmax.f32 %v3364, 0.0
    %v3384 = vmax.f32 %v3207, 0.0
    %v3385 = vmax.f32 %v3209, 0.0
    %v3386 = vmax.f32 %v3366, 0.0
    %v3387 = vmax.f32 %v3368, 0.0
    %v3388 = vmax.f32 %v3213, 0.0
    %v3389 = vmax.f32 %v3215, 0.0
    %v3390 = vmax.f32 %v3372, 0.0
    %v3391 = vmax.f32 %v3374, 0.0
    %v3392 = vmax.f32 %v3217, 0.0
    %v3393 = vmax.f32 %v3219, 0.0
    %v3394 = vmax.f32 %v3376, 0.0
    %v3395 = vmax.f32 %v3378, 0.0
    %v3396 = vpack.c.bf16 %v1804, %v1800
    %v3397 = vpack.c.bf16 %v1805, %v1801
    %v3398 = vpack.c.bf16 %v1806, %v1802
    %v3399 = vpack.c.bf16 %v1807, %v1803
    %v3400 = vpack.c.bf16 %v1812, %v1808
    %v3401 = vpack.c.bf16 %v1813, %v1809
    %v3402 = vpack.c.bf16 %v1814, %v1810
    %v3403 = vpack.c.bf16 %v1815, %v1811
    %v3404 = vpack.c.bf16 %v3384, %v3380
    %v3405 = vpack.c.bf16 %v3385, %v3381
    %v3406 = vpack.c.bf16 %v3386, %v3382
    %v3407 = vpack.c.bf16 %v3387, %v3383
    %v3408 = vpack.c.bf16 %v3392, %v3388
    %v3409 = vpack.c.bf16 %v3393, %v3389
    %v3410 = vpack.c.bf16 %v3394, %v3390
    %v3411 = vpack.c.bf16 %v3395, %v3391
    %v3412 = vld [vmem:[#allocation10] sm:$0xff]
    %v3413 = vld [vmem:[#allocation10 + $0x8] sm:$0xff]
    %v3414 = vld [vmem:[#allocation10 + $0x10] sm:$0xff]
    %v3415 = vld [vmem:[#allocation10 + $0x18] sm:$0xff]
    %v3416 = vld [vmem:[#allocation10 + $0x20] sm:$0xff]
    %v3417 = vld [vmem:[#allocation10 + $0x28] sm:$0xff]
    %v3418 = vld [vmem:[#allocation10 + $0x30] sm:$0xff]
    %v3419 = vld [vmem:[#allocation10 + $0x38] sm:$0xff]
    %v3420 = vld [vmem:[#allocation10 + $0x40] sm:$0xff]
    %v3421 = vld [vmem:[#allocation10 + $0x48] sm:$0xff]
    %v3422 = vld [vmem:[#allocation10 + $0x50] sm:$0xff]
    %v3423 = vld [vmem:[#allocation10 + $0x58] sm:$0xff]
    %v3424 = vld [vmem:[#allocation10 + $0x60] sm:$0xff]
    %v3425 = vld [vmem:[#allocation10 + $0x68] sm:$0xff]
    %v3426 = vld [vmem:[#allocation10 + $0x70] sm:$0xff]
    %v3427 = vld [vmem:[#allocation10 + $0x78] sm:$0xff]
    %v3428 = vld [vmem:[#allocation10 + $0x80] sm:$0xff]
    %v3429 = vld [vmem:[#allocation10 + $0x88] sm:$0xff]
    %v3430 = vld [vmem:[#allocation10 + $0x90] sm:$0xff]
    %v3431 = vld [vmem:[#allocation10 + $0x98] sm:$0xff]
    %v3432 = vld [vmem:[#allocation10 + $0xa0] sm:$0xff]
    %v3433 = vld [vmem:[#allocation10 + $0xa8] sm:$0xff]
    %v3434 = vld [vmem:[#allocation10 + $0xb0] sm:$0xff]
    %v3435 = vld [vmem:[#allocation10 + $0xb8] sm:$0xff]
    %v3436 = vld [vmem:[#allocation10 + $0xc0] sm:$0xff]
    %v3437 = vld [vmem:[#allocation10 + $0xc8] sm:$0xff]
    %v3438 = vld [vmem:[#allocation10 + $0xd0] sm:$0xff]
    %v3439 = vld [vmem:[#allocation10 + $0xd8] sm:$0xff]
    %v3440 = vld [vmem:[#allocation10 + $0xe0] sm:$0xff]
    %v3441 = vld [vmem:[#allocation10 + $0xe8] sm:$0xff]
    %v3442 = vld [vmem:[#allocation10 + $0xf0] sm:$0xff]
    %v3443 = vld [vmem:[#allocation10 + $0xf8] sm:$0xff]
    %v3444 = vld [vmem:[#allocation10 + $0x100] sm:$0xff]
    %v3445 = vld [vmem:[#allocation10 + $0x108] sm:$0xff]
    %v3446 = vld [vmem:[#allocation10 + $0x110] sm:$0xff]
    %v3447 = vld [vmem:[#allocation10 + $0x118] sm:$0xff]
    %v3448 = vld [vmem:[#allocation10 + $0x120] sm:$0xff]
    %v3449 = vld [vmem:[#allocation10 + $0x128] sm:$0xff]
    %v3450 = vld [vmem:[#allocation10 + $0x130] sm:$0xff]
    %v3451 = vld [vmem:[#allocation10 + $0x138] sm:$0xff]
    %v3452 = vld [vmem:[#allocation10 + $0x140] sm:$0xff]
    %v3453 = vld [vmem:[#allocation10 + $0x148] sm:$0xff]
    %v3454 = vld [vmem:[#allocation10 + $0x150] sm:$0xff]
    %v3455 = vld [vmem:[#allocation10 + $0x158] sm:$0xff]
    %v3456 = vld [vmem:[#allocation10 + $0x160] sm:$0xff]
    %v3457 = vld [vmem:[#allocation10 + $0x168] sm:$0xff]
    %v3458 = vld [vmem:[#allocation10 + $0x170] sm:$0xff]
    %v3459 = vld [vmem:[#allocation10 + $0x178] sm:$0xff]
    %v3460 = vld [vmem:[#allocation10 + $0x180] sm:$0xff]
    %v3461 = vld [vmem:[#allocation10 + $0x188] sm:$0xff]
    %v3462 = vld [vmem:[#allocation10 + $0x190] sm:$0xff]
    %v3463 = vld [vmem:[#allocation10 + $0x198] sm:$0xff]
    %v3464 = vld [vmem:[#allocation10 + $0x1a0] sm:$0xff]
    %v3465 = vld [vmem:[#allocation10 + $0x1a8] sm:$0xff]
    %v3466 = vld [vmem:[#allocation10 + $0x1b0] sm:$0xff]
    %v3467 = vld [vmem:[#allocation10 + $0x1b8] sm:$0xff]
    %v3468 = vld [vmem:[#allocation10 + $0x1c0] sm:$0xff]
    %v3469 = vld [vmem:[#allocation10 + $0x1c8] sm:$0xff]
    %v3470 = vld [vmem:[#allocation10 + $0x1d0] sm:$0xff]
    %v3471 = vld [vmem:[#allocation10 + $0x1d8] sm:$0xff]
    %v3472 = vld [vmem:[#allocation10 + $0x1e0] sm:$0xff]
    %v3473 = vld [vmem:[#allocation10 + $0x1e8] sm:$0xff]
    %v3474 = vld [vmem:[#allocation10 + $0x1f0] sm:$0xff]
    %v3475 = vld [vmem:[#allocation10 + $0x1f8] sm:$0xff]
    %v3476 = vld [vmem:[#allocation11] sm:$0xff]
    %v3477 = vld [vmem:[#allocation11 + $0x8] sm:$0xff]
    %v3478 = vld [vmem:[#allocation11 + $0x10] sm:$0xff]
    %v3479 = vld [vmem:[#allocation11 + $0x18] sm:$0xff]
    %v3480 = vld [vmem:[#allocation11 + $0x20] sm:$0xff]
    %v3481 = vld [vmem:[#allocation11 + $0x28] sm:$0xff]
    %v3482 = vld [vmem:[#allocation11 + $0x30] sm:$0xff]
    %v3483 = vld [vmem:[#allocation11 + $0x38] sm:$0xff]
    %v3484 = vld [vmem:[#allocation11 + $0x40] sm:$0xff]
    %v3485 = vld [vmem:[#allocation11 + $0x48] sm:$0xff]
    %v3486 = vld [vmem:[#allocation11 + $0x50] sm:$0xff]
    %v3487 = vld [vmem:[#allocation11 + $0x58] sm:$0xff]
    %v3488 = vld [vmem:[#allocation11 + $0x60] sm:$0xff]
    %v3489 = vld [vmem:[#allocation11 + $0x68] sm:$0xff]
    %v3490 = vld [vmem:[#allocation11 + $0x70] sm:$0xff]
    %v3491 = vld [vmem:[#allocation11 + $0x78] sm:$0xff]
    %v3492 = vld [vmem:[#allocation11 + $0x80] sm:$0xff]
    %v3493 = vld [vmem:[#allocation11 + $0x88] sm:$0xff]
    %v3494 = vld [vmem:[#allocation11 + $0x90] sm:$0xff]
    %v3495 = vld [vmem:[#allocation11 + $0x98] sm:$0xff]
    %v3496 = vld [vmem:[#allocation11 + $0xa0] sm:$0xff]
    %v3497 = vld [vmem:[#allocation11 + $0xa8] sm:$0xff]
    %v3498 = vld [vmem:[#allocation11 + $0xb0] sm:$0xff]
    %v3499 = vld [vmem:[#allocation11 + $0xb8] sm:$0xff]
    %v3500 = vld [vmem:[#allocation11 + $0xc0] sm:$0xff]
    %v3501 = vld [vmem:[#allocation11 + $0xc8] sm:$0xff]
    %v3502 = vld [vmem:[#allocation11 + $0xd0] sm:$0xff]
    %v3503 = vld [vmem:[#allocation11 + $0xd8] sm:$0xff]
    %v3504 = vld [vmem:[#allocation11 + $0xe0] sm:$0xff]
    %v3505 = vld [vmem:[#allocation11 + $0xe8] sm:$0xff]
    %v3506 = vld [vmem:[#allocation11 + $0xf0] sm:$0xff]
    %v3507 = vld [vmem:[#allocation11 + $0xf8] sm:$0xff]
    %v3508 = vld [vmem:[#allocation11 + $0x100] sm:$0xff]
    %v3509 = vld [vmem:[#allocation11 + $0x108] sm:$0xff]
    %v3510 = vld [vmem:[#allocation11 + $0x110] sm:$0xff]
    %v3511 = vld [vmem:[#allocation11 + $0x118] sm:$0xff]
    %v3512 = vld [vmem:[#allocation11 + $0x120] sm:$0xff]
    %v3513 = vld [vmem:[#allocation11 + $0x128] sm:$0xff]
    %v3514 = vld [vmem:[#allocation11 + $0x130] sm:$0xff]
    %v3515 = vld [vmem:[#allocation11 + $0x138] sm:$0xff]
    %v3516 = vld [vmem:[#allocation11 + $0x140] sm:$0xff]
    %v3517 = vld [vmem:[#allocation11 + $0x148] sm:$0xff]
    %v3518 = vld [vmem:[#allocation11 + $0x150] sm:$0xff]
    %v3519 = vld [vmem:[#allocation11 + $0x158] sm:$0xff]
    %v3520 = vld [vmem:[#allocation11 + $0x160] sm:$0xff]
    %v3521 = vld [vmem:[#allocation11 + $0x168] sm:$0xff]
    %v3522 = vld [vmem:[#allocation11 + $0x170] sm:$0xff]
    %v3523 = vld [vmem:[#allocation11 + $0x178] sm:$0xff]
    %v3524 = vld [vmem:[#allocation11 + $0x180] sm:$0xff]
    %v3525 = vld [vmem:[#allocation11 + $0x188] sm:$0xff]
    %v3526 = vld [vmem:[#allocation11 + $0x190] sm:$0xff]
    %v3527 = vld [vmem:[#allocation11 + $0x198] sm:$0xff]
    %v3528 = vld [vmem:[#allocation11 + $0x1a0] sm:$0xff]
    %v3529 = vld [vmem:[#allocation11 + $0x1a8] sm:$0xff]
    %v3530 = vld [vmem:[#allocation11 + $0x1b0] sm:$0xff]
    %v3531 = vld [vmem:[#allocation11 + $0x1b8] sm:$0xff]
    %v3532 = vld [vmem:[#allocation11 + $0x1c0] sm:$0xff]
    %v3533 = vld [vmem:[#allocation11 + $0x1c8] sm:$0xff]
    %v3534 = vld [vmem:[#allocation11 + $0x1d0] sm:$0xff]
    %v3535 = vld [vmem:[#allocation11 + $0x1d8] sm:$0xff]
    %v3536 = vld [vmem:[#allocation11 + $0x1e0] sm:$0xff]
    %v3537 = vld [vmem:[#allocation11 + $0x1e8] sm:$0xff]
    %v3538 = vld [vmem:[#allocation11 + $0x1f0] sm:$0xff]
    %v3539 = vld [vmem:[#allocation11 + $0x1f8] sm:$0xff]
    %v3604 = vunpack.c.l.b16 %v3476
    %v3605 = vunpack.c.h.b16 %v3476
    %v3606 = vunpack.c.l.b16 %v3477
    %v3607 = vunpack.c.h.b16 %v3477
    %v3608 = vunpack.c.l.b16 %v3478
    %v3609 = vunpack.c.h.b16 %v3478
    %v3610 = vunpack.c.l.b16 %v3479
    %v3611 = vunpack.c.h.b16 %v3479
    %v3612 = vunpack.c.l.b16 %v3480
    %v3613 = vunpack.c.h.b16 %v3480
    %v3614 = vunpack.c.l.b16 %v3481
    %v3615 = vunpack.c.h.b16 %v3481
    %v3616 = vunpack.c.l.b16 %v3482
    %v3617 = vunpack.c.h.b16 %v3482
    %v3618 = vunpack.c.l.b16 %v3483
    %v3619 = vunpack.c.h.b16 %v3483
    %v3620 = vunpack.c.l.b16 %v3484
    %v3621 = vunpack.c.h.b16 %v3484
    %v3622 = vunpack.c.l.b16 %v3485
    %v3623 = vunpack.c.h.b16 %v3485
    %v3624 = vunpack.c.l.b16 %v3486
    %v3625 = vunpack.c.h.b16 %v3486
    %v3626 = vunpack.c.l.b16 %v3487
    %v3627 = vunpack.c.h.b16 %v3487
    %v3628 = vunpack.c.l.b16 %v3488
    %v3629 = vunpack.c.h.b16 %v3488
    %v3630 = vunpack.c.l.b16 %v3489
    %v3631 = vunpack.c.h.b16 %v3489
    %v3632 = vunpack.c.l.b16 %v3490
    %v3633 = vunpack.c.h.b16 %v3490
    %v3634 = vunpack.c.l.b16 %v3491
    %v3635 = vunpack.c.h.b16 %v3491
    %v3636 = vunpack.c.l.b16 %v3492
    %v3637 = vunpack.c.h.b16 %v3492
    %v3638 = vunpack.c.l.b16 %v3493
    %v3639 = vunpack.c.h.b16 %v3493
    %v3640 = vunpack.c.l.b16 %v3494
    %v3641 = vunpack.c.h.b16 %v3494
    %v3642 = vunpack.c.l.b16 %v3495
    %v3643 = vunpack.c.h.b16 %v3495
    %v3644 = vunpack.c.l.b16 %v3496
    %v3645 = vunpack.c.h.b16 %v3496
    %v3646 = vunpack.c.l.b16 %v3497
    %v3647 = vunpack.c.h.b16 %v3497
    %v3648 = vunpack.c.l.b16 %v3498
    %v3649 = vunpack.c.h.b16 %v3498
    %v3650 = vunpack.c.l.b16 %v3499
    %v3651 = vunpack.c.h.b16 %v3499
    %v3652 = vunpack.c.l.b16 %v3500
    %v3653 = vunpack.c.h.b16 %v3500
    %v3654 = vunpack.c.l.b16 %v3501
    %v3655 = vunpack.c.h.b16 %v3501
    %v3656 = vunpack.c.l.b16 %v3502
    %v3657 = vunpack.c.h.b16 %v3502
    %v3658 = vunpack.c.l.b16 %v3503
    %v3659 = vunpack.c.h.b16 %v3503
    %v3660 = vunpack.c.l.b16 %v3504
    %v3661 = vunpack.c.h.b16 %v3504
    %v3662 = vunpack.c.l.b16 %v3505
    %v3663 = vunpack.c.h.b16 %v3505
    %v3664 = vunpack.c.l.b16 %v3506
    %v3665 = vunpack.c.h.b16 %v3506
    %v3666 = vunpack.c.l.b16 %v3507
    %v3667 = vunpack.c.h.b16 %v3507
    %v3668 = vunpack.c.l.b16 %v3508
    %v3669 = vunpack.c.h.b16 %v3508
    %v3670 = vunpack.c.l.b16 %v3509
    %v3671 = vunpack.c.h.b16 %v3509
    %v3672 = vunpack.c.l.b16 %v3510
    %v3673 = vunpack.c.h.b16 %v3510
    %v3674 = vunpack.c.l.b16 %v3511
    %v3675 = vunpack.c.h.b16 %v3511
    %v3676 = vunpack.c.l.b16 %v3512
    %v3677 = vunpack.c.h.b16 %v3512
    %v3678 = vunpack.c.l.b16 %v3513
    %v3679 = vunpack.c.h.b16 %v3513
    %v3680 = vunpack.c.l.b16 %v3514
    %v3681 = vunpack.c.h.b16 %v3514
    %v3682 = vunpack.c.l.b16 %v3515
    %v3683 = vunpack.c.h.b16 %v3515
    %v3684 = vunpack.c.l.b16 %v3516
    %v3685 = vunpack.c.h.b16 %v3516
    %v3686 = vunpack.c.l.b16 %v3517
    %v3687 = vunpack.c.h.b16 %v3517
    %v3688 = vunpack.c.l.b16 %v3518
    %v3689 = vunpack.c.h.b16 %v3518
    %v3690 = vunpack.c.l.b16 %v3519
    %v3691 = vunpack.c.h.b16 %v3519
    %v3692 = vunpack.c.l.b16 %v3520
    %v3693 = vunpack.c.h.b16 %v3520
    %v3694 = vunpack.c.l.b16 %v3521
    %v3695 = vunpack.c.h.b16 %v3521
    %v3696 = vunpack.c.l.b16 %v3522
    %v3697 = vunpack.c.h.b16 %v3522
    %v3698 = vunpack.c.l.b16 %v3523
    %v3699 = vunpack.c.h.b16 %v3523
    %v3700 = vunpack.c.l.b16 %v3524
    %v3701 = vunpack.c.h.b16 %v3524
    %v3702 = vunpack.c.l.b16 %v3525
    %v3703 = vunpack.c.h.b16 %v3525
    %v3704 = vunpack.c.l.b16 %v3526
    %v3705 = vunpack.c.h.b16 %v3526
    %v3706 = vunpack.c.l.b16 %v3527
    %v3707 = vunpack.c.h.b16 %v3527
    %v3708 = vunpack.c.l.b16 %v3528
    %v3709 = vunpack.c.h.b16 %v3528
    %v3710 = vunpack.c.l.b16 %v3529
    %v3711 = vunpack.c.h.b16 %v3529
    %v3712 = vunpack.c.l.b16 %v3530
    %v3713 = vunpack.c.h.b16 %v3530
    %v3714 = vunpack.c.l.b16 %v3531
    %v3715 = vunpack.c.h.b16 %v3531
    %v3716 = vunpack.c.l.b16 %v3532
    %v3717 = vunpack.c.h.b16 %v3532
    %v3718 = vunpack.c.l.b16 %v3533
    %v3719 = vunpack.c.h.b16 %v3533
    %v3720 = vunpack.c.l.b16 %v3534
    %v3721 = vunpack.c.h.b16 %v3534
    %v3722 = vunpack.c.l.b16 %v3535
    %v3723 = vunpack.c.h.b16 %v3535
    %v3724 = vunpack.c.l.b16 %v3536
    %v3725 = vunpack.c.h.b16 %v3536
    %v3726 = vunpack.c.l.b16 %v3537
    %v3727 = vunpack.c.h.b16 %v3537
    %v3728 = vunpack.c.l.b16 %v3538
    %v3729 = vunpack.c.h.b16 %v3538
    %v3730 = vunpack.c.l.b16 %v3539
    %v3731 = vunpack.c.h.b16 %v3539
    %v3732 = vpack.c.b16 %v3606, %v3604
    %v3733 = vpack.c.b16 %v3607, %v3605
    %v3734 = vpack.c.b16 %v3610, %v3608
    %v3735 = vpack.c.b16 %v3611, %v3609
    %v3736 = vpack.c.b16 %v3614, %v3612
    %v3737 = vpack.c.b16 %v3615, %v3613
    %v3738 = vpack.c.b16 %v3618, %v3616
    %v3739 = vpack.c.b16 %v3619, %v3617
    %v3740 = vpack.c.b16 %v3622, %v3620
    %v3741 = vpack.c.b16 %v3623, %v3621
    %v3742 = vpack.c.b16 %v3626, %v3624
    %v3743 = vpack.c.b16 %v3627, %v3625
    %v3744 = vpack.c.b16 %v3630, %v3628
    %v3745 = vpack.c.b16 %v3631, %v3629
    %v3746 = vpack.c.b16 %v3634, %v3632
    %v3747 = vpack.c.b16 %v3635, %v3633
    %v3748 = vpack.c.b16 %v3638, %v3636
    %v3749 = vpack.c.b16 %v3639, %v3637
    %v3750 = vpack.c.b16 %v3642, %v3640
    %v3751 = vpack.c.b16 %v3643, %v3641
    %v3752 = vpack.c.b16 %v3646, %v3644
    %v3753 = vpack.c.b16 %v3647, %v3645
    %v3754 = vpack.c.b16 %v3650, %v3648
    %v3755 = vpack.c.b16 %v3651, %v3649
    %v3756 = vpack.c.b16 %v3654, %v3652
    %v3757 = vpack.c.b16 %v3655, %v3653
    %v3758 = vpack.c.b16 %v3658, %v3656
    %v3759 = vpack.c.b16 %v3659, %v3657
    %v3760 = vpack.c.b16 %v3662, %v3660
    %v3761 = vpack.c.b16 %v3663, %v3661
    %v3762 = vpack.c.b16 %v3666, %v3664
    %v3763 = vpack.c.b16 %v3667, %v3665
    %v3764 = vpack.c.b16 %v3670, %v3668
    %v3765 = vpack.c.b16 %v3671, %v3669
    %v3766 = vpack.c.b16 %v3674, %v3672
    %v3767 = vpack.c.b16 %v3675, %v3673
    %v3768 = vpack.c.b16 %v3678, %v3676
    %v3769 = vpack.c.b16 %v3679, %v3677
    %v3770 = vpack.c.b16 %v3682, %v3680
    %v3771 = vpack.c.b16 %v3683, %v3681
    %v3772 = vpack.c.b16 %v3686, %v3684
    %v3773 = vpack.c.b16 %v3687, %v3685
    %v3774 = vpack.c.b16 %v3690, %v3688
    %v3775 = vpack.c.b16 %v3691, %v3689
    %v3776 = vpack.c.b16 %v3694, %v3692
    %v3777 = vpack.c.b16 %v3695, %v3693
    %v3778 = vpack.c.b16 %v3698, %v3696
    %v3779 = vpack.c.b16 %v3699, %v3697
    %v3780 = vpack.c.b16 %v3702, %v3700
    %v3781 = vpack.c.b16 %v3703, %v3701
    %v3782 = vpack.c.b16 %v3706, %v3704
    %v3783 = vpack.c.b16 %v3707, %v3705
    %v3784 = vpack.c.b16 %v3710, %v3708
    %v3785 = vpack.c.b16 %v3711, %v3709
    %v3786 = vpack.c.b16 %v3714, %v3712
    %v3787 = vpack.c.b16 %v3715, %v3713
    %v3788 = vpack.c.b16 %v3718, %v3716
    %v3789 = vpack.c.b16 %v3719, %v3717
    %v3790 = vpack.c.b16 %v3722, %v3720
    %v3791 = vpack.c.b16 %v3723, %v3721
    %v3792 = vpack.c.b16 %v3726, %v3724
    %v3793 = vpack.c.b16 %v3727, %v3725
    %v3794 = vpack.c.b16 %v3730, %v3728
    %v3795 = vpack.c.b16 %v3731, %v3729
    %3860 = vmatprep.subr.bf16.mxu0 %v3747
    %3861 = vmatpush1.bf16.msra.mxu0 %v3746
    %3862 = vmatprep.subr.bf16.mxu0 %v3745
    %3863 = vmatpush1.bf16.msra.mxu0 %v3744
    %3864 = vmatprep.subr.bf16.mxu0 %v3743
    %3865 = vmatpush1.bf16.msra.mxu0 %v3742
    %3866 = vmatprep.subr.bf16.mxu0 %v3741
    %3867 = vmatpush1.bf16.msra.mxu0 %v3740
    %3868 = vmatprep.subr.bf16.mxu0 %v3739
    %3869 = vmatpush1.bf16.msra.mxu0 %v3738
    %3870 = vmatprep.subr.bf16.mxu0 %v3737
    %3871 = vmatpush1.bf16.msra.mxu0 %v3736
    %3872 = vmatprep.subr.bf16.mxu0 %v3735
    %3873 = vmatpush1.bf16.msra.mxu0 %v3734
    %3874 = vmatprep.subr.bf16.mxu0 %v3733
    %3875 = vmatpush1.bf16.msra.mxu0 %v3732
    %3876 = vmatprep.subr.bf16.mxu0 %v3763
    %3877 = vmatpush2.bf16.msra.mxu0 %v3762
    %3878 = vmatprep.subr.bf16.mxu0 %v3761
    %3879 = vmatpush2.bf16.msra.mxu0 %v3760
    %3880 = vmatprep.subr.bf16.mxu0 %v3759
    %3881 = vmatpush2.bf16.msra.mxu0 %v3758
    %3882 = vmatprep.subr.bf16.mxu0 %v3757
    %3883 = vmatpush2.bf16.msra.mxu0 %v3756
    %3884 = vmatprep.subr.bf16.mxu0 %v3755
    %3885 = vmatpush2.bf16.msra.mxu0 %v3754
    %3886 = vmatprep.subr.bf16.mxu0 %v3753
    %3887 = vmatpush2.bf16.msra.mxu0 %v3752
    %3888 = vmatprep.subr.bf16.mxu0 %v3751
    %3889 = vmatpush2.bf16.msra.mxu0 %v3750
    %3890 = vmatprep.subr.bf16.mxu0 %v3749
    %3891 = vmatpush2.bf16.msra.mxu0 %v3748
    %3892 = vmatprep.mubr.bf16.mxu0 %v3405
    %3893 = vmatmul.mubr.bf16.gmra.mxu0 %v3404
    %v3894 = vpop.f32.mrf.mxu0
    %v3895 = vadd.f32 0.0, %v3894
    %v3896 = vpop.f32.mrf.mxu0
    %v3897 = vadd.f32 0.0, %v3896
    %v3898 = vpop.f32.mrf.mxu0
    %v3899 = vadd.f32 0.0, %v3898
    %v3900 = vpop.f32.mrf.mxu0
    %v3901 = vadd.f32 0.0, %v3900
    %3902 = vmatprep.mubr.bf16.mxu0 %v3409
    %3903 = vmatmul.mubr.bf16.gmra.mxu0 %v3408
    %v3904 = vpop.f32.mrf.mxu0
    %v3905 = vadd.f32 0.0, %v3904
    %v3906 = vpop.f32.mrf.mxu0
    %v3907 = vadd.f32 0.0, %v3906
    %v3908 = vpop.f32.mrf.mxu0
    %v3909 = vadd.f32 0.0, %v3908
    %v3910 = vpop.f32.mrf.mxu0
    %v3911 = vadd.f32 0.0, %v3910
    %3912 = vdwg.mxu0
    %3913 = vmatprep.subr.bf16.mxu0 %v3779
    %3914 = vmatpush1.bf16.msra.mxu0 %v3778
    %3915 = vmatprep.subr.bf16.mxu0 %v3777
    %3916 = vmatpush1.bf16.msra.mxu0 %v3776
    %3917 = vmatprep.subr.bf16.mxu0 %v3775
    %3918 = vmatpush1.bf16.msra.mxu0 %v3774
    %3919 = vmatprep.subr.bf16.mxu0 %v3773
    %3920 = vmatpush1.bf16.msra.mxu0 %v3772
    %3921 = vmatprep.subr.bf16.mxu0 %v3771
    %3922 = vmatpush1.bf16.msra.mxu0 %v3770
    %3923 = vmatprep.subr.bf16.mxu0 %v3769
    %3924 = vmatpush1.bf16.msra.mxu0 %v3768
    %3925 = vmatprep.subr.bf16.mxu0 %v3767
    %3926 = vmatpush1.bf16.msra.mxu0 %v3766
    %3927 = vmatprep.subr.bf16.mxu0 %v3765
    %3928 = vmatpush1.bf16.msra.mxu0 %v3764
    %3929 = vmatprep.subr.bf16.mxu0 %v3795
    %3930 = vmatpush2.bf16.msra.mxu0 %v3794
    %3931 = vmatprep.subr.bf16.mxu0 %v3793
    %3932 = vmatpush2.bf16.msra.mxu0 %v3792
    %3933 = vmatprep.subr.bf16.mxu0 %v3791
    %3934 = vmatpush2.bf16.msra.mxu0 %v3790
    %3935 = vmatprep.subr.bf16.mxu0 %v3789
    %3936 = vmatpush2.bf16.msra.mxu0 %v3788
    %3937 = vmatprep.subr.bf16.mxu0 %v3787
    %3938 = vmatpush2.bf16.msra.mxu0 %v3786
    %3939 = vmatprep.subr.bf16.mxu0 %v3785
    %3940 = vmatpush2.bf16.msra.mxu0 %v3784
    %3941 = vmatprep.subr.bf16.mxu0 %v3783
    %3942 = vmatpush2.bf16.msra.mxu0 %v3782
    %3943 = vmatprep.subr.bf16.mxu0 %v3781
    %3944 = vmatpush2.bf16.msra.mxu0 %v3780
    %3945 = vmatprep.mubr.bf16.mxu0 %v3407
    %3946 = vmatmul.mubr.bf16.gmra.mxu0 %v3406
    %v3947 = vpop.f32.mrf.mxu0
    %v3948 = vadd.f32 %v3895, %v3947
    %v3949 = vpop.f32.mrf.mxu0
    %v3950 = vadd.f32 %v3897, %v3949
    %v3951 = vpop.f32.mrf.mxu0
    %v3952 = vadd.f32 %v3899, %v3951
    %v3953 = vpop.f32.mrf.mxu0
    %v3954 = vadd.f32 %v3901, %v3953
    %3955 = vmatprep.mubr.bf16.mxu0 %v3411
    %3956 = vmatmul.mubr.bf16.gmra.mxu0 %v3410
    %v3957 = vpop.f32.mrf.mxu0
    %v3958 = vadd.f32 %v3905, %v3957
    %v3959 = vpop.f32.mrf.mxu0
    %v3960 = vadd.f32 %v3907, %v3959
    %v3961 = vpop.f32.mrf.mxu0
    %v3962 = vadd.f32 %v3909, %v3961
    %v3963 = vpop.f32.mrf.mxu0
    %v3964 = vadd.f32 %v3911, %v3963
    %3965 = vdwg.mxu0
    %v4030 = vunpack.c.l.b16 %v3412
    %v4031 = vunpack.c.h.b16 %v3412
    %v4032 = vunpack.c.l.b16 %v3413
    %v4033 = vunpack.c.h.b16 %v3413
    %v4034 = vunpack.c.l.b16 %v3414
    %v4035 = vunpack.c.h.b16 %v3414
    %v4036 = vunpack.c.l.b16 %v3415
    %v4037 = vunpack.c.h.b16 %v3415
    %v4038 = vunpack.c.l.b16 %v3416
    %v4039 = vunpack.c.h.b16 %v3416
    %v4040 = vunpack.c.l.b16 %v3417
    %v4041 = vunpack.c.h.b16 %v3417
    %v4042 = vunpack.c.l.b16 %v3418
    %v4043 = vunpack.c.h.b16 %v3418
    %v4044 = vunpack.c.l.b16 %v3419
    %v4045 = vunpack.c.h.b16 %v3419
    %v4046 = vunpack.c.l.b16 %v3420
    %v4047 = vunpack.c.h.b16 %v3420
    %v4048 = vunpack.c.l.b16 %v3421
    %v4049 = vunpack.c.h.b16 %v3421
    %v4050 = vunpack.c.l.b16 %v3422
    %v4051 = vunpack.c.h.b16 %v3422
    %v4052 = vunpack.c.l.b16 %v3423
    %v4053 = vunpack.c.h.b16 %v3423
    %v4054 = vunpack.c.l.b16 %v3424
    %v4055 = vunpack.c.h.b16 %v3424
    %v4056 = vunpack.c.l.b16 %v3425
    %v4057 = vunpack.c.h.b16 %v3425
    %v4058 = vunpack.c.l.b16 %v3426
    %v4059 = vunpack.c.h.b16 %v3426
    %v4060 = vunpack.c.l.b16 %v3427
    %v4061 = vunpack.c.h.b16 %v3427
    %v4062 = vunpack.c.l.b16 %v3428
    %v4063 = vunpack.c.h.b16 %v3428
    %v4064 = vunpack.c.l.b16 %v3429
    %v4065 = vunpack.c.h.b16 %v3429
    %v4066 = vunpack.c.l.b16 %v3430
    %v4067 = vunpack.c.h.b16 %v3430
    %v4068 = vunpack.c.l.b16 %v3431
    %v4069 = vunpack.c.h.b16 %v3431
    %v4070 = vunpack.c.l.b16 %v3432
    %v4071 = vunpack.c.h.b16 %v3432
    %v4072 = vunpack.c.l.b16 %v3433
    %v4073 = vunpack.c.h.b16 %v3433
    %v4074 = vunpack.c.l.b16 %v3434
    %v4075 = vunpack.c.h.b16 %v3434
    %v4076 = vunpack.c.l.b16 %v3435
    %v4077 = vunpack.c.h.b16 %v3435
    %v4078 = vunpack.c.l.b16 %v3436
    %v4079 = vunpack.c.h.b16 %v3436
    %v4080 = vunpack.c.l.b16 %v3437
    %v4081 = vunpack.c.h.b16 %v3437
    %v4082 = vunpack.c.l.b16 %v3438
    %v4083 = vunpack.c.h.b16 %v3438
    %v4084 = vunpack.c.l.b16 %v3439
    %v4085 = vunpack.c.h.b16 %v3439
    %v4086 = vunpack.c.l.b16 %v3440
    %v4087 = vunpack.c.h.b16 %v3440
    %v4088 = vunpack.c.l.b16 %v3441
    %v4089 = vunpack.c.h.b16 %v3441
    %v4090 = vunpack.c.l.b16 %v3442
    %v4091 = vunpack.c.h.b16 %v3442
    %v4092 = vunpack.c.l.b16 %v3443
    %v4093 = vunpack.c.h.b16 %v3443
    %v4094 = vunpack.c.l.b16 %v3444
    %v4095 = vunpack.c.h.b16 %v3444
    %v4096 = vunpack.c.l.b16 %v3445
    %v4097 = vunpack.c.h.b16 %v3445
    %v4098 = vunpack.c.l.b16 %v3446
    %v4099 = vunpack.c.h.b16 %v3446
    %v4100 = vunpack.c.l.b16 %v3447
    %v4101 = vunpack.c.h.b16 %v3447
    %v4102 = vunpack.c.l.b16 %v3448
    %v4103 = vunpack.c.h.b16 %v3448
    %v4104 = vunpack.c.l.b16 %v3449
    %v4105 = vunpack.c.h.b16 %v3449
    %v4106 = vunpack.c.l.b16 %v3450
    %v4107 = vunpack.c.h.b16 %v3450
    %v4108 = vunpack.c.l.b16 %v3451
    %v4109 = vunpack.c.h.b16 %v3451
    %v4110 = vunpack.c.l.b16 %v3452
    %v4111 = vunpack.c.h.b16 %v3452
    %v4112 = vunpack.c.l.b16 %v3453
    %v4113 = vunpack.c.h.b16 %v3453
    %v4114 = vunpack.c.l.b16 %v3454
    %v4115 = vunpack.c.h.b16 %v3454
    %v4116 = vunpack.c.l.b16 %v3455
    %v4117 = vunpack.c.h.b16 %v3455
    %v4118 = vunpack.c.l.b16 %v3456
    %v4119 = vunpack.c.h.b16 %v3456
    %v4120 = vunpack.c.l.b16 %v3457
    %v4121 = vunpack.c.h.b16 %v3457
    %v4122 = vunpack.c.l.b16 %v3458
    %v4123 = vunpack.c.h.b16 %v3458
    %v4124 = vunpack.c.l.b16 %v3459
    %v4125 = vunpack.c.h.b16 %v3459
    %v4126 = vunpack.c.l.b16 %v3460
    %v4127 = vunpack.c.h.b16 %v3460
    %v4128 = vunpack.c.l.b16 %v3461
    %v4129 = vunpack.c.h.b16 %v3461
    %v4130 = vunpack.c.l.b16 %v3462
    %v4131 = vunpack.c.h.b16 %v3462
    %v4132 = vunpack.c.l.b16 %v3463
    %v4133 = vunpack.c.h.b16 %v3463
    %v4134 = vunpack.c.l.b16 %v3464
    %v4135 = vunpack.c.h.b16 %v3464
    %v4136 = vunpack.c.l.b16 %v3465
    %v4137 = vunpack.c.h.b16 %v3465
    %v4138 = vunpack.c.l.b16 %v3466
    %v4139 = vunpack.c.h.b16 %v3466
    %v4140 = vunpack.c.l.b16 %v3467
    %v4141 = vunpack.c.h.b16 %v3467
    %v4142 = vunpack.c.l.b16 %v3468
    %v4143 = vunpack.c.h.b16 %v3468
    %v4144 = vunpack.c.l.b16 %v3469
    %v4145 = vunpack.c.h.b16 %v3469
    %v4146 = vunpack.c.l.b16 %v3470
    %v4147 = vunpack.c.h.b16 %v3470
    %v4148 = vunpack.c.l.b16 %v3471
    %v4149 = vunpack.c.h.b16 %v3471
    %v4150 = vunpack.c.l.b16 %v3472
    %v4151 = vunpack.c.h.b16 %v3472
    %v4152 = vunpack.c.l.b16 %v3473
    %v4153 = vunpack.c.h.b16 %v3473
    %v4154 = vunpack.c.l.b16 %v3474
    %v4155 = vunpack.c.h.b16 %v3474
    %v4156 = vunpack.c.l.b16 %v3475
    %v4157 = vunpack.c.h.b16 %v3475
    %v4158 = vpack.c.b16 %v4032, %v4030
    %v4159 = vpack.c.b16 %v4033, %v4031
    %v4160 = vpack.c.b16 %v4036, %v4034
    %v4161 = vpack.c.b16 %v4037, %v4035
    %v4162 = vpack.c.b16 %v4040, %v4038
    %v4163 = vpack.c.b16 %v4041, %v4039
    %v4164 = vpack.c.b16 %v4044, %v4042
    %v4165 = vpack.c.b16 %v4045, %v4043
    %v4166 = vpack.c.b16 %v4048, %v4046
    %v4167 = vpack.c.b16 %v4049, %v4047
    %v4168 = vpack.c.b16 %v4052, %v4050
    %v4169 = vpack.c.b16 %v4053, %v4051
    %v4170 = vpack.c.b16 %v4056, %v4054
    %v4171 = vpack.c.b16 %v4057, %v4055
    %v4172 = vpack.c.b16 %v4060, %v4058
    %v4173 = vpack.c.b16 %v4061, %v4059
    %v4174 = vpack.c.b16 %v4064, %v4062
    %v4175 = vpack.c.b16 %v4065, %v4063
    %v4176 = vpack.c.b16 %v4068, %v4066
    %v4177 = vpack.c.b16 %v4069, %v4067
    %v4178 = vpack.c.b16 %v4072, %v4070
    %v4179 = vpack.c.b16 %v4073, %v4071
    %v4180 = vpack.c.b16 %v4076, %v4074
    %v4181 = vpack.c.b16 %v4077, %v4075
    %v4182 = vpack.c.b16 %v4080, %v4078
    %v4183 = vpack.c.b16 %v4081, %v4079
    %v4184 = vpack.c.b16 %v4084, %v4082
    %v4185 = vpack.c.b16 %v4085, %v4083
    %v4186 = vpack.c.b16 %v4088, %v4086
    %v4187 = vpack.c.b16 %v4089, %v4087
    %v4188 = vpack.c.b16 %v4092, %v4090
    %v4189 = vpack.c.b16 %v4093, %v4091
    %v4190 = vpack.c.b16 %v4096, %v4094
    %v4191 = vpack.c.b16 %v4097, %v4095
    %v4192 = vpack.c.b16 %v4100, %v4098
    %v4193 = vpack.c.b16 %v4101, %v4099
    %v4194 = vpack.c.b16 %v4104, %v4102
    %v4195 = vpack.c.b16 %v4105, %v4103
    %v4196 = vpack.c.b16 %v4108, %v4106
    %v4197 = vpack.c.b16 %v4109, %v4107
    %v4198 = vpack.c.b16 %v4112, %v4110
    %v4199 = vpack.c.b16 %v4113, %v4111
    %v4200 = vpack.c.b16 %v4116, %v4114
    %v4201 = vpack.c.b16 %v4117, %v4115
    %v4202 = vpack.c.b16 %v4120, %v4118
    %v4203 = vpack.c.b16 %v4121, %v4119
    %v4204 = vpack.c.b16 %v4124, %v4122
    %v4205 = vpack.c.b16 %v4125, %v4123
    %v4206 = vpack.c.b16 %v4128, %v4126
    %v4207 = vpack.c.b16 %v4129, %v4127
    %v4208 = vpack.c.b16 %v4132, %v4130
    %v4209 = vpack.c.b16 %v4133, %v4131
    %v4210 = vpack.c.b16 %v4136, %v4134
    %v4211 = vpack.c.b16 %v4137, %v4135
    %v4212 = vpack.c.b16 %v4140, %v4138
    %v4213 = vpack.c.b16 %v4141, %v4139
    %v4214 = vpack.c.b16 %v4144, %v4142
    %v4215 = vpack.c.b16 %v4145, %v4143
    %v4216 = vpack.c.b16 %v4148, %v4146
    %v4217 = vpack.c.b16 %v4149, %v4147
    %v4218 = vpack.c.b16 %v4152, %v4150
    %v4219 = vpack.c.b16 %v4153, %v4151
    %v4220 = vpack.c.b16 %v4156, %v4154
    %v4221 = vpack.c.b16 %v4157, %v4155
    %4286 = vmatprep.subr.bf16.mxu0 %v4173
    %4287 = vmatpush1.bf16.msra.mxu0 %v4172
    %4288 = vmatprep.subr.bf16.mxu0 %v4171
    %4289 = vmatpush1.bf16.msra.mxu0 %v4170
    %4290 = vmatprep.subr.bf16.mxu0 %v4169
    %4291 = vmatpush1.bf16.msra.mxu0 %v4168
    %4292 = vmatprep.subr.bf16.mxu0 %v4167
    %4293 = vmatpush1.bf16.msra.mxu0 %v4166
    %4294 = vmatprep.subr.bf16.mxu0 %v4165
    %4295 = vmatpush1.bf16.msra.mxu0 %v4164
    %4296 = vmatprep.subr.bf16.mxu0 %v4163
    %4297 = vmatpush1.bf16.msra.mxu0 %v4162
    %4298 = vmatprep.subr.bf16.mxu0 %v4161
    %4299 = vmatpush1.bf16.msra.mxu0 %v4160
    %4300 = vmatprep.subr.bf16.mxu0 %v4159
    %4301 = vmatpush1.bf16.msra.mxu0 %v4158
    %4302 = vmatprep.subr.bf16.mxu0 %v4189
    %4303 = vmatpush2.bf16.msra.mxu0 %v4188
    %4304 = vmatprep.subr.bf16.mxu0 %v4187
    %4305 = vmatpush2.bf16.msra.mxu0 %v4186
    %4306 = vmatprep.subr.bf16.mxu0 %v4185
    %4307 = vmatpush2.bf16.msra.mxu0 %v4184
    %4308 = vmatprep.subr.bf16.mxu0 %v4183
    %4309 = vmatpush2.bf16.msra.mxu0 %v4182
    %4310 = vmatprep.subr.bf16.mxu0 %v4181
    %4311 = vmatpush2.bf16.msra.mxu0 %v4180
    %4312 = vmatprep.subr.bf16.mxu0 %v4179
    %4313 = vmatpush2.bf16.msra.mxu0 %v4178
    %4314 = vmatprep.subr.bf16.mxu0 %v4177
    %4315 = vmatpush2.bf16.msra.mxu0 %v4176
    %4316 = vmatprep.subr.bf16.mxu0 %v4175
    %4317 = vmatpush2.bf16.msra.mxu0 %v4174
    %4318 = vmatprep.mubr.bf16.mxu0 %v3397
    %4319 = vmatmul.mubr.bf16.gmra.mxu0 %v3396
    %v4320 = vpop.f32.mrf.mxu0
    %v4321 = vadd.f32 %v3948, %v4320
    %v4322 = vpop.f32.mrf.mxu0
    %v4323 = vadd.f32 %v3950, %v4322
    %v4324 = vpop.f32.mrf.mxu0
    %v4325 = vadd.f32 %v3952, %v4324
    %v4326 = vpop.f32.mrf.mxu0
    %v4327 = vadd.f32 %v3954, %v4326
    %4328 = vmatprep.mubr.bf16.mxu0 %v3401
    %4329 = vmatmul.mubr.bf16.gmra.mxu0 %v3400
    %v4330 = vpop.f32.mrf.mxu0
    %v4331 = vadd.f32 %v3958, %v4330
    %v4332 = vpop.f32.mrf.mxu0
    %v4333 = vadd.f32 %v3960, %v4332
    %v4334 = vpop.f32.mrf.mxu0
    %v4335 = vadd.f32 %v3962, %v4334
    %v4336 = vpop.f32.mrf.mxu0
    %v4337 = vadd.f32 %v3964, %v4336
    %4338 = vdwg.mxu0
    %4339 = vmatprep.subr.bf16.mxu0 %v4205
    %4340 = vmatpush1.bf16.msra.mxu0 %v4204
    %4341 = vmatprep.subr.bf16.mxu0 %v4203
    %4342 = vmatpush1.bf16.msra.mxu0 %v4202
    %4343 = vmatprep.subr.bf16.mxu0 %v4201
    %4344 = vmatpush1.bf16.msra.mxu0 %v4200
    %4345 = vmatprep.subr.bf16.mxu0 %v4199
    %4346 = vmatpush1.bf16.msra.mxu0 %v4198
    %4347 = vmatprep.subr.bf16.mxu0 %v4197
    %4348 = vmatpush1.bf16.msra.mxu0 %v4196
    %4349 = vmatprep.subr.bf16.mxu0 %v4195
    %4350 = vmatpush1.bf16.msra.mxu0 %v4194
    %4351 = vmatprep.subr.bf16.mxu0 %v4193
    %4352 = vmatpush1.bf16.msra.mxu0 %v4192
    %4353 = vmatprep.subr.bf16.mxu0 %v4191
    %4354 = vmatpush1.bf16.msra.mxu0 %v4190
    %4355 = vmatprep.subr.bf16.mxu0 %v4221
    %4356 = vmatpush2.bf16.msra.mxu0 %v4220
    %4357 = vmatprep.subr.bf16.mxu0 %v4219
    %4358 = vmatpush2.bf16.msra.mxu0 %v4218
    %4359 = vmatprep.subr.bf16.mxu0 %v4217
    %4360 = vmatpush2.bf16.msra.mxu0 %v4216
    %4361 = vmatprep.subr.bf16.mxu0 %v4215
    %4362 = vmatpush2.bf16.msra.mxu0 %v4214
    %4363 = vmatprep.subr.bf16.mxu0 %v4213
    %4364 = vmatpush2.bf16.msra.mxu0 %v4212
    %4365 = vmatprep.subr.bf16.mxu0 %v4211
    %4366 = vmatpush2.bf16.msra.mxu0 %v4210
    %4367 = vmatprep.subr.bf16.mxu0 %v4209
    %4368 = vmatpush2.bf16.msra.mxu0 %v4208
    %4369 = vmatprep.subr.bf16.mxu0 %v4207
    %4370 = vmatpush2.bf16.msra.mxu0 %v4206
    %4371 = vmatprep.mubr.bf16.mxu0 %v3399
    %4372 = vmatmul.mubr.bf16.gmra.mxu0 %v3398
    %v4373 = vpop.f32.mrf.mxu0
    %v4374 = vadd.f32 %v4321, %v4373
    %v4375 = vpop.f32.mrf.mxu0
    %v4376 = vadd.f32 %v4323, %v4375
    %v4377 = vpop.f32.mrf.mxu0
    %v4378 = vadd.f32 %v4325, %v4377
    %v4379 = vpop.f32.mrf.mxu0
    %v4380 = vadd.f32 %v4327, %v4379
    %4381 = vmatprep.mubr.bf16.mxu0 %v3403
    %4382 = vmatmul.mubr.bf16.gmra.mxu0 %v3402
    %v4383 = vpop.f32.mrf.mxu0
    %v4384 = vadd.f32 %v4331, %v4383
    %v4385 = vpop.f32.mrf.mxu0
    %v4386 = vadd.f32 %v4333, %v4385
    %v4387 = vpop.f32.mrf.mxu0
    %v4388 = vadd.f32 %v4335, %v4387
    %v4389 = vpop.f32.mrf.mxu0
    %v4390 = vadd.f32 %v4337, %v4389
    %4391 = vdwg.mxu0
    %v4392 = vld [vmem:[#allocation13] sm:$0x3]
    %v4394 = vlaneseq
    %v4395 = vshrl.u32 %v4394, 7
    %v4396 = vsub.s32 0, %v4395
    %v4397 = vrot.slane %v4392, %v4396
    %v4398 = vlaneseq
    %v4399 = vshrl.u32 %v4398, 7
    %v4400 = vsub.s32 1, %v4399
    %v4401 = vrot.slane %v4392, %v4400
    %v4404 = vadd.f32 %v4374, %v4397
    %v4405 = vadd.f32 %v4376, %v4401
    %v4406 = vadd.f32 %v4378, %v4397
    %v4407 = vadd.f32 %v4380, %v4401
    %v4408 = vadd.f32 %v4384, %v4397
    %v4409 = vadd.f32 %v4386, %v4401
    %v4410 = vadd.f32 %v4388, %v4397
    %v4411 = vadd.f32 %v4390, %v4401
    %v4412 = vmax.f32 %v4404, 0.0
    %v4413 = vmax.f32 %v4405, 0.0
    %v4414 = vmax.f32 %v4406, 0.0
    %v4415 = vmax.f32 %v4407, 0.0
    %v4416 = vmax.f32 %v4408, 0.0
    %v4417 = vmax.f32 %v4409, 0.0
    %v4418 = vmax.f32 %v4410, 0.0
    %v4419 = vmax.f32 %v4411, 0.0
    %v4420 = vpack.c.bf16 %v4414, %v4412
    %v4421 = vpack.c.bf16 %v4415, %v4413
    %v4422 = vpack.c.bf16 %v4418, %v4416
    %v4423 = vpack.c.bf16 %v4419, %v4417
    %v4424 = vld [vmem:[#allocation14] sm:$0xf]
    %v4425 = vld [vmem:[#allocation14 + $0x4] sm:$0xf]
    %v4426 = vld [vmem:[#allocation14 + $0x8] sm:$0xf]
    %v4427 = vld [vmem:[#allocation14 + $0xc] sm:$0xf]
    %v4428 = vld [vmem:[#allocation14 + $0x10] sm:$0xf]
    %v4429 = vld [vmem:[#allocation14 + $0x14] sm:$0xf]
    %v4430 = vld [vmem:[#allocation14 + $0x18] sm:$0xf]
    %v4431 = vld [vmem:[#allocation14 + $0x1c] sm:$0xf]
    %v4432 = vld [vmem:[#allocation14 + $0x20] sm:$0xf]
    %v4433 = vld [vmem:[#allocation14 + $0x24] sm:$0xf]
    %v4434 = vld [vmem:[#allocation14 + $0x28] sm:$0xf]
    %v4435 = vld [vmem:[#allocation14 + $0x2c] sm:$0xf]
    %v4436 = vld [vmem:[#allocation14 + $0x30] sm:$0xf]
    %v4437 = vld [vmem:[#allocation14 + $0x34] sm:$0xf]
    %v4438 = vld [vmem:[#allocation14 + $0x38] sm:$0xf]
    %v4439 = vld [vmem:[#allocation14 + $0x3c] sm:$0xf]
    %v4440 = vld [vmem:[#allocation14 + $0x40] sm:$0xf]
    %v4441 = vld [vmem:[#allocation14 + $0x44] sm:$0xf]
    %v4442 = vld [vmem:[#allocation14 + $0x48] sm:$0xf]
    %v4443 = vld [vmem:[#allocation14 + $0x4c] sm:$0xf]
    %v4444 = vld [vmem:[#allocation14 + $0x50] sm:$0xf]
    %v4445 = vld [vmem:[#allocation14 + $0x54] sm:$0xf]
    %v4446 = vld [vmem:[#allocation14 + $0x58] sm:$0xf]
    %v4447 = vld [vmem:[#allocation14 + $0x5c] sm:$0xf]
    %v4448 = vld [vmem:[#allocation14 + $0x60] sm:$0xf]
    %v4449 = vld [vmem:[#allocation14 + $0x64] sm:$0xf]
    %v4450 = vld [vmem:[#allocation14 + $0x68] sm:$0xf]
    %v4451 = vld [vmem:[#allocation14 + $0x6c] sm:$0xf]
    %v4452 = vld [vmem:[#allocation14 + $0x70] sm:$0xf]
    %v4453 = vld [vmem:[#allocation14 + $0x74] sm:$0xf]
    %v4454 = vld [vmem:[#allocation14 + $0x78] sm:$0xf]
    %v4455 = vld [vmem:[#allocation14 + $0x7c] sm:$0xf]
    %v4456 = vld [vmem:[#allocation16] sm:$0x1]
    %v4458 = vlaneseq
    %v4459 = vshrl.u32 %v4458, 7
    %v4460 = vsub.s32 0, %v4459
    %v4461 = vrot.slane %v4456, %v4460
    %v4495 = vunpack.c.l.b16 %v4424
    %v4496 = vunpack.c.l.b16 %v4425
    %v4497 = vunpack.c.l.b16 %v4426
    %v4498 = vunpack.c.l.b16 %v4427
    %v4499 = vunpack.c.l.b16 %v4428
    %v4500 = vunpack.c.l.b16 %v4429
    %v4501 = vunpack.c.l.b16 %v4430
    %v4502 = vunpack.c.l.b16 %v4431
    %v4503 = vunpack.c.l.b16 %v4432
    %v4504 = vunpack.c.l.b16 %v4433
    %v4505 = vunpack.c.l.b16 %v4434
    %v4506 = vunpack.c.l.b16 %v4435
    %v4507 = vunpack.c.l.b16 %v4436
    %v4508 = vunpack.c.l.b16 %v4437
    %v4509 = vunpack.c.l.b16 %v4438
    %v4510 = vunpack.c.l.b16 %v4439
    %v4511 = vunpack.c.l.b16 %v4440
    %v4512 = vunpack.c.l.b16 %v4441
    %v4513 = vunpack.c.l.b16 %v4442
    %v4514 = vunpack.c.l.b16 %v4443
    %v4515 = vunpack.c.l.b16 %v4444
    %v4516 = vunpack.c.l.b16 %v4445
    %v4517 = vunpack.c.l.b16 %v4446
    %v4518 = vunpack.c.l.b16 %v4447
    %v4519 = vunpack.c.l.b16 %v4448
    %v4520 = vunpack.c.l.b16 %v4449
    %v4521 = vunpack.c.l.b16 %v4450
    %v4522 = vunpack.c.l.b16 %v4451
    %v4523 = vunpack.c.l.b16 %v4452
    %v4524 = vunpack.c.l.b16 %v4453
    %v4525 = vunpack.c.l.b16 %v4454
    %v4526 = vunpack.c.l.b16 %v4455
    %v4527 = vpack.c.b16 %v4496, %v4495
    %v4528 = vpack.c.b16 %v4498, %v4497
    %v4529 = vpack.c.b16 %v4500, %v4499
    %v4530 = vpack.c.b16 %v4502, %v4501
    %v4531 = vpack.c.b16 %v4504, %v4503
    %v4532 = vpack.c.b16 %v4506, %v4505
    %v4533 = vpack.c.b16 %v4508, %v4507
    %v4534 = vpack.c.b16 %v4510, %v4509
    %v4535 = vpack.c.b16 %v4512, %v4511
    %v4536 = vpack.c.b16 %v4514, %v4513
    %v4537 = vpack.c.b16 %v4516, %v4515
    %v4538 = vpack.c.b16 %v4518, %v4517
    %v4539 = vpack.c.b16 %v4520, %v4519
    %v4540 = vpack.c.b16 %v4522, %v4521
    %v4541 = vpack.c.b16 %v4524, %v4523
    %v4542 = vpack.c.b16 %v4526, %v4525
    %4559 = vmatprep.subr.bf16.mxu0 0
    %4560 = vmatpush1.bf16.msra.mxu0 %v4534
    %4561 = vmatprep.subr.bf16.mxu0 0
    %4562 = vmatpush1.bf16.msra.mxu0 %v4533
    %4563 = vmatprep.subr.bf16.mxu0 0
    %4564 = vmatpush1.bf16.msra.mxu0 %v4532
    %4565 = vmatprep.subr.bf16.mxu0 0
    %4566 = vmatpush1.bf16.msra.mxu0 %v4531
    %4567 = vmatprep.subr.bf16.mxu0 0
    %4568 = vmatpush1.bf16.msra.mxu0 %v4530
    %4569 = vmatprep.subr.bf16.mxu0 0
    %4570 = vmatpush1.bf16.msra.mxu0 %v4529
    %4571 = vmatprep.subr.bf16.mxu0 0
    %4572 = vmatpush1.bf16.msra.mxu0 %v4528
    %4573 = vmatprep.subr.bf16.mxu0 0
    %4574 = vmatpush1.bf16.msra.mxu0 %v4527
    %4575 = vmatprep.subr.bf16.mxu0 0
    %4576 = vmatpush2.bf16.msra.mxu0 %v4542
    %4577 = vmatprep.subr.bf16.mxu0 0
    %4578 = vmatpush2.bf16.msra.mxu0 %v4541
    %4579 = vmatprep.subr.bf16.mxu0 0
    %4580 = vmatpush2.bf16.msra.mxu0 %v4540
    %4581 = vmatprep.subr.bf16.mxu0 0
    %4582 = vmatpush2.bf16.msra.mxu0 %v4539
    %4583 = vmatprep.subr.bf16.mxu0 0
    %4584 = vmatpush2.bf16.msra.mxu0 %v4538
    %4585 = vmatprep.subr.bf16.mxu0 0
    %4586 = vmatpush2.bf16.msra.mxu0 %v4537
    %4587 = vmatprep.subr.bf16.mxu0 0
    %4588 = vmatpush2.bf16.msra.mxu0 %v4536
    %4589 = vmatprep.subr.bf16.mxu0 0
    %4590 = vmatpush2.bf16.msra.mxu0 %v4535
    %4591 = vmatprep.mubr.bf16.mxu0 %v4421
    %4592 = vmatmul.mubr.bf16.gmra.mxu0 %v4420
    %v4593 = vpop.f32.mrf.mxu0
    %v4594 = vadd.f32 %v4461, %v4593
    %v4595 = vpop.f32.mrf.mxu0
    %v4596 = vpop.f32.mrf.mxu0
    %v4597 = vadd.f32 %v4461, %v4596
    %v4598 = vpop.f32.mrf.mxu0
    %4599 = vmatprep.mubr.bf16.mxu0 %v4423
    %4600 = vmatmul.mubr.bf16.gmra.mxu0 %v4422
    %v4601 = vpop.f32.mrf.mxu0
    %v4602 = vadd.f32 %v4461, %v4601
    %v4603 = vpop.f32.mrf.mxu0
    %v4604 = vpop.f32.mrf.mxu0
    %v4605 = vadd.f32 %v4461, %v4604
    %v4606 = vpop.f32.mrf.mxu0
    %4607 = vdwg.mxu0
    %v4608 = vmax.f32 %v4594, 0.0
    %v4609 = vmax.f32 %v4597, 0.0
    %v4610 = vmax.f32 %v4602, 0.0
    %v4611 = vmax.f32 %v4605, 0.0
    %v4612 = vpack.c.bf16 %v4609, %v4608
    %v4613 = vpack.c.bf16 %v4611, %v4610
    %v4614 = vld [vmem:[#allocation17] sm:$0xf]
    %v4615 = vld [vmem:[#allocation17 + $0x4] sm:$0xf]
    %v4616 = vld [vmem:[#allocation17 + $0x8] sm:$0xf]
    %v4617 = vld [vmem:[#allocation17 + $0xc] sm:$0xf]
    %v4618 = vld [vmem:[#allocation17 + $0x10] sm:$0xf]
    %v4619 = vld [vmem:[#allocation17 + $0x14] sm:$0xf]
    %v4620 = vld [vmem:[#allocation17 + $0x18] sm:$0xf]
    %v4621 = vld [vmem:[#allocation17 + $0x1c] sm:$0xf]
    %v4622 = vld [vmem:[#allocation17 + $0x20] sm:$0xf]
    %v4623 = vld [vmem:[#allocation17 + $0x24] sm:$0xf]
    %v4624 = vld [vmem:[#allocation17 + $0x28] sm:$0xf]
    %v4625 = vld [vmem:[#allocation17 + $0x2c] sm:$0xf]
    %v4626 = vld [vmem:[#allocation17 + $0x30] sm:$0xf]
    %v4627 = vld [vmem:[#allocation17 + $0x34] sm:$0xf]
    %v4628 = vld [vmem:[#allocation17 + $0x38] sm:$0xf]
    %v4629 = vld [vmem:[#allocation17 + $0x3c] sm:$0xf]
    %v4630 = vld [vmem:[%s12] sm:$0x1]
    %v4632 = vlaneseq
    %v4633 = vshrl.u32 %v4632, 7
    %v4634 = vsub.s32 0, %v4633
    %v4635 = vrot.slane %v4630, %v4634
    %v4653 = vunpack.c.l.b16 %v4614
    %v4654 = vunpack.c.l.b16 %v4615
    %v4655 = vunpack.c.l.b16 %v4616
    %v4656 = vunpack.c.l.b16 %v4617
    %v4657 = vunpack.c.l.b16 %v4618
    %v4658 = vunpack.c.l.b16 %v4619
    %v4659 = vunpack.c.l.b16 %v4620
    %v4660 = vunpack.c.l.b16 %v4621
    %v4661 = vunpack.c.l.b16 %v4622
    %v4662 = vunpack.c.l.b16 %v4623
    %v4663 = vunpack.c.l.b16 %v4624
    %v4664 = vunpack.c.l.b16 %v4625
    %v4665 = vunpack.c.l.b16 %v4626
    %v4666 = vunpack.c.l.b16 %v4627
    %v4667 = vunpack.c.l.b16 %v4628
    %v4668 = vunpack.c.l.b16 %v4629
    %v4669 = vpack.c.b16 %v4654, %v4653
    %v4670 = vpack.c.b16 %v4656, %v4655
    %v4671 = vpack.c.b16 %v4658, %v4657
    %v4672 = vpack.c.b16 %v4660, %v4659
    %v4673 = vpack.c.b16 %v4662, %v4661
    %v4674 = vpack.c.b16 %v4664, %v4663
    %v4675 = vpack.c.b16 %v4666, %v4665
    %v4676 = vpack.c.b16 %v4668, %v4667
    %4685 = vmatprep.subr.bf16.mxu0 0
    %4686 = vmatpush1.bf16.msra.mxu0 %v4676
    %4687 = vmatprep.subr.bf16.mxu0 0
    %4688 = vmatpush1.bf16.msra.mxu0 %v4675
    %4689 = vmatprep.subr.bf16.mxu0 0
    %4690 = vmatpush1.bf16.msra.mxu0 %v4674
    %4691 = vmatprep.subr.bf16.mxu0 0
    %4692 = vmatpush1.bf16.msra.mxu0 %v4673
    %4693 = vmatprep.subr.bf16.mxu0 0
    %4694 = vmatpush1.bf16.msra.mxu0 %v4672
    %4695 = vmatprep.subr.bf16.mxu0 0
    %4696 = vmatpush1.bf16.msra.mxu0 %v4671
    %4697 = vmatprep.subr.bf16.mxu0 0
    %4698 = vmatpush1.bf16.msra.mxu0 %v4670
    %4699 = vmatprep.subr.bf16.mxu0 0
    %4700 = vmatpush1.bf16.msra.mxu0 %v4669
    %4701 = vmatprep.subr.bf16.mxu0 0
    %4702 = vmatpush2.bf16.msra.mxu0 0
    %4703 = vmatprep.subr.bf16.mxu0 0
    %4704 = vmatpush2.bf16.msra.mxu0 0
    %4705 = vmatprep.subr.bf16.mxu0 0
    %4706 = vmatpush2.bf16.msra.mxu0 0
    %4707 = vmatprep.subr.bf16.mxu0 0
    %4708 = vmatpush2.bf16.msra.mxu0 0
    %4709 = vmatprep.subr.bf16.mxu0 0
    %4710 = vmatpush2.bf16.msra.mxu0 0
    %4711 = vmatprep.subr.bf16.mxu0 0
    %4712 = vmatpush2.bf16.msra.mxu0 0
    %4713 = vmatprep.subr.bf16.mxu0 0
    %4714 = vmatpush2.bf16.msra.mxu0 0
    %4715 = vmatprep.subr.bf16.mxu0 0
    %4716 = vmatpush2.bf16.msra.mxu0 0
    %4717 = vmatprep.mubr.bf16.mxu0 0
    %4718 = vmatmul.mubr.bf16.gmra.mxu0 %v4612
    %v4719 = vpop.f32.mrf.mxu0
    %v4720 = vadd.f32 %v4635, %v4719
    %v4721 = vpop.f32.mrf.mxu0
    %v4722 = vpop.f32.mrf.mxu0
    %v4723 = vadd.f32 %v4635, %v4722
    %v4724 = vpop.f32.mrf.mxu0
    %4725 = vmatprep.mubr.bf16.mxu0 0
    %4726 = vmatmul.mubr.bf16.gmra.mxu0 %v4613
    %v4727 = vpop.f32.mrf.mxu0
    %v4728 = vadd.f32 %v4635, %v4727
    %v4729 = vpop.f32.mrf.mxu0
    %v4730 = vpop.f32.mrf.mxu0
    %v4731 = vadd.f32 %v4635, %v4730
    %v4732 = vpop.f32.mrf.mxu0
    %4733 = vdwg.mxu0
    %v4734 = vmax.f32 %v4720, 0.0
    %v4735 = vmax.f32 %v4723, 0.0
    %v4736 = vmax.f32 %v4728, 0.0
    %v4737 = vmax.f32 %v4731, 0.0
    %v4738 = vpack.c.bf16 %v4735, %v4734
    %v4739 = vpack.c.bf16 %v4737, %v4736
    %v4740 = vld [vmem:[#allocation19] sm:$0xff]
    %v4741 = vld [vmem:[#allocation19 + $0x8] sm:$0xff]
    %v4742 = vld [vmem:[#allocation19 + $0x10] sm:$0xff]
    %v4743 = vld [vmem:[#allocation19 + $0x18] sm:$0xff]
    %v4744 = vld [vmem:[#allocation19 + $0x20] sm:$0xff]
    %v4745 = vld [vmem:[#allocation19 + $0x28] sm:$0xff]
    %v4746 = vld [vmem:[#allocation19 + $0x30] sm:$0xff]
    %v4747 = vld [vmem:[#allocation19 + $0x38] sm:$0xff]
    %v4748 = vld [vmem:[#allocation19 + $0x40] sm:$0xff]
    %v4749 = vld [vmem:[#allocation19 + $0x48] sm:$0xff]
    %v4750 = vld [vmem:[#allocation19 + $0x50] sm:$0xff]
    %v4751 = vld [vmem:[#allocation19 + $0x58] sm:$0xff]
    %v4752 = vld [vmem:[#allocation19 + $0x60] sm:$0xff]
    %v4753 = vld [vmem:[#allocation19 + $0x68] sm:$0xff]
    %v4754 = vld [vmem:[#allocation19 + $0x70] sm:$0xff]
    %v4755 = vld [vmem:[#allocation19 + $0x78] sm:$0xff]
    %v4756 = vld [vmem:[#allocation19 + $0x80] sm:$0xff]
    %v4757 = vld [vmem:[#allocation19 + $0x88] sm:$0xff]
    %v4758 = vld [vmem:[#allocation19 + $0x90] sm:$0xff]
    %v4759 = vld [vmem:[#allocation19 + $0x98] sm:$0xff]
    %v4760 = vld [vmem:[#allocation19 + $0xa0] sm:$0xff]
    %v4761 = vld [vmem:[#allocation19 + $0xa8] sm:$0xff]
    %v4762 = vld [vmem:[#allocation19 + $0xb0] sm:$0xff]
    %v4763 = vld [vmem:[#allocation19 + $0xb8] sm:$0xff]
    %v4764 = vld [vmem:[#allocation19 + $0xc0] sm:$0xff]
    %v4765 = vld [vmem:[#allocation19 + $0xc8] sm:$0xff]
    %v4766 = vld [vmem:[#allocation19 + $0xd0] sm:$0xff]
    %v4767 = vld [vmem:[#allocation19 + $0xd8] sm:$0xff]
    %v4768 = vld [vmem:[#allocation19 + $0xe0] sm:$0xff]
    %v4769 = vld [vmem:[#allocation19 + $0xe8] sm:$0xff]
    %v4770 = vld [vmem:[#allocation19 + $0xf0] sm:$0xff]
    %v4771 = vld [vmem:[#allocation19 + $0xf8] sm:$0xff]
    %v4772 = vld [vmem:[%s14] sm:$0xf]
    %v4774 = vlaneseq
    %v4775 = vshrl.u32 %v4774, 7
    %v4776 = vsub.s32 0, %v4775
    %v4777 = vrot.slane %v4772, %v4776
    %v4778 = vlaneseq
    %v4779 = vshrl.u32 %v4778, 7
    %v4780 = vsub.s32 1, %v4779
    %v4781 = vrot.slane %v4772, %v4780
    %v4782 = vlaneseq
    %v4783 = vshrl.u32 %v4782, 7
    %v4784 = vsub.s32 2, %v4783
    %v4785 = vrot.slane %v4772, %v4784
    %v4786 = vlaneseq
    %v4787 = vshrl.u32 %v4786, 7
    %v4788 = vsub.s32 3, %v4787
    %v4789 = vrot.slane %v4772, %v4788
    %v4826 = vunpack.c.l.b16 %v4740
    %v4827 = vunpack.c.h.b16 %v4740
    %v4828 = vunpack.c.l.b16 %v4741
    %v4829 = vunpack.c.h.b16 %v4741
    %v4830 = vunpack.c.l.b16 %v4742
    %v4831 = vunpack.c.h.b16 %v4742
    %v4832 = vunpack.c.l.b16 %v4743
    %v4833 = vunpack.c.h.b16 %v4743
    %v4834 = vunpack.c.l.b16 %v4744
    %v4835 = vunpack.c.h.b16 %v4744
    %v4836 = vunpack.c.l.b16 %v4745
    %v4837 = vunpack.c.h.b16 %v4745
    %v4838 = vunpack.c.l.b16 %v4746
    %v4839 = vunpack.c.h.b16 %v4746
    %v4840 = vunpack.c.l.b16 %v4747
    %v4841 = vunpack.c.h.b16 %v4747
    %v4842 = vunpack.c.l.b16 %v4748
    %v4843 = vunpack.c.h.b16 %v4748
    %v4844 = vunpack.c.l.b16 %v4749
    %v4845 = vunpack.c.h.b16 %v4749
    %v4846 = vunpack.c.l.b16 %v4750
    %v4847 = vunpack.c.h.b16 %v4750
    %v4848 = vunpack.c.l.b16 %v4751
    %v4849 = vunpack.c.h.b16 %v4751
    %v4850 = vunpack.c.l.b16 %v4752
    %v4851 = vunpack.c.h.b16 %v4752
    %v4852 = vunpack.c.l.b16 %v4753
    %v4853 = vunpack.c.h.b16 %v4753
    %v4854 = vunpack.c.l.b16 %v4754
    %v4855 = vunpack.c.h.b16 %v4754
    %v4856 = vunpack.c.l.b16 %v4755
    %v4857 = vunpack.c.h.b16 %v4755
    %v4858 = vunpack.c.l.b16 %v4756
    %v4859 = vunpack.c.h.b16 %v4756
    %v4860 = vunpack.c.l.b16 %v4757
    %v4861 = vunpack.c.h.b16 %v4757
    %v4862 = vunpack.c.l.b16 %v4758
    %v4863 = vunpack.c.h.b16 %v4758
    %v4864 = vunpack.c.l.b16 %v4759
    %v4865 = vunpack.c.h.b16 %v4759
    %v4866 = vunpack.c.l.b16 %v4760
    %v4867 = vunpack.c.h.b16 %v4760
    %v4868 = vunpack.c.l.b16 %v4761
    %v4869 = vunpack.c.h.b16 %v4761
    %v4870 = vunpack.c.l.b16 %v4762
    %v4871 = vunpack.c.h.b16 %v4762
    %v4872 = vunpack.c.l.b16 %v4763
    %v4873 = vunpack.c.h.b16 %v4763
    %v4874 = vunpack.c.l.b16 %v4764
    %v4875 = vunpack.c.h.b16 %v4764
    %v4876 = vunpack.c.l.b16 %v4765
    %v4877 = vunpack.c.h.b16 %v4765
    %v4878 = vunpack.c.l.b16 %v4766
    %v4879 = vunpack.c.h.b16 %v4766
    %v4880 = vunpack.c.l.b16 %v4767
    %v4881 = vunpack.c.h.b16 %v4767
    %v4882 = vunpack.c.l.b16 %v4768
    %v4883 = vunpack.c.h.b16 %v4768
    %v4884 = vunpack.c.l.b16 %v4769
    %v4885 = vunpack.c.h.b16 %v4769
    %v4886 = vunpack.c.l.b16 %v4770
    %v4887 = vunpack.c.h.b16 %v4770
    %v4888 = vunpack.c.l.b16 %v4771
    %v4889 = vunpack.c.h.b16 %v4771
    %v4890 = vpack.c.b16 %v4830, %v4826
    %v4891 = vpack.c.b16 %v4831, %v4827
    %v4892 = vpack.c.b16 %v4832, %v4828
    %v4893 = vpack.c.b16 %v4833, %v4829
    %v4894 = vpack.c.b16 %v4838, %v4834
    %v4895 = vpack.c.b16 %v4839, %v4835
    %v4896 = vpack.c.b16 %v4840, %v4836
    %v4897 = vpack.c.b16 %v4841, %v4837
    %v4898 = vpack.c.b16 %v4846, %v4842
    %v4899 = vpack.c.b16 %v4847, %v4843
    %v4900 = vpack.c.b16 %v4848, %v4844
    %v4901 = vpack.c.b16 %v4849, %v4845
    %v4902 = vpack.c.b16 %v4854, %v4850
    %v4903 = vpack.c.b16 %v4855, %v4851
    %v4904 = vpack.c.b16 %v4856, %v4852
    %v4905 = vpack.c.b16 %v4857, %v4853
    %v4906 = vpack.c.b16 %v4862, %v4858
    %v4907 = vpack.c.b16 %v4863, %v4859
    %v4908 = vpack.c.b16 %v4864, %v4860
    %v4909 = vpack.c.b16 %v4865, %v4861
    %v4910 = vpack.c.b16 %v4870, %v4866
    %v4911 = vpack.c.b16 %v4871, %v4867
    %v4912 = vpack.c.b16 %v4872, %v4868
    %v4913 = vpack.c.b16 %v4873, %v4869
    %v4914 = vpack.c.b16 %v4878, %v4874
    %v4915 = vpack.c.b16 %v4879, %v4875
    %v4916 = vpack.c.b16 %v4880, %v4876
    %v4917 = vpack.c.b16 %v4881, %v4877
    %v4918 = vpack.c.b16 %v4886, %v4882
    %v4919 = vpack.c.b16 %v4887, %v4883
    %v4920 = vpack.c.b16 %v4888, %v4884
    %v4921 = vpack.c.b16 %v4889, %v4885
    %4954 = vmatprep.subr.bf16.mxu0 %v4919
    %4955 = vmatpush1.bf16.msra.mxu0 %v4918
    %4956 = vmatprep.subr.bf16.mxu0 %v4915
    %4957 = vmatpush1.bf16.msra.mxu0 %v4914
    %4958 = vmatprep.subr.bf16.mxu0 %v4911
    %4959 = vmatpush1.bf16.msra.mxu0 %v4910
    %4960 = vmatprep.subr.bf16.mxu0 %v4907
    %4961 = vmatpush1.bf16.msra.mxu0 %v4906
    %4962 = vmatprep.subr.bf16.mxu0 %v4903
    %4963 = vmatpush1.bf16.msra.mxu0 %v4902
    %4964 = vmatprep.subr.bf16.mxu0 %v4899
    %4965 = vmatpush1.bf16.msra.mxu0 %v4898
    %4966 = vmatprep.subr.bf16.mxu0 %v4895
    %4967 = vmatpush1.bf16.msra.mxu0 %v4894
    %4968 = vmatprep.subr.bf16.mxu0 %v4891
    %4969 = vmatpush1.bf16.msra.mxu0 %v4890
    %4970 = vmatprep.subr.bf16.mxu0 0
    %4971 = vmatpush2.bf16.msra.mxu0 0
    %4972 = vmatprep.subr.bf16.mxu0 0
    %4973 = vmatpush2.bf16.msra.mxu0 0
    %4974 = vmatprep.subr.bf16.mxu0 0
    %4975 = vmatpush2.bf16.msra.mxu0 0
    %4976 = vmatprep.subr.bf16.mxu0 0
    %4977 = vmatpush2.bf16.msra.mxu0 0
    %4978 = vmatprep.subr.bf16.mxu0 0
    %4979 = vmatpush2.bf16.msra.mxu0 0
    %4980 = vmatprep.subr.bf16.mxu0 0
    %4981 = vmatpush2.bf16.msra.mxu0 0
    %4982 = vmatprep.subr.bf16.mxu0 0
    %4983 = vmatpush2.bf16.msra.mxu0 0
    %4984 = vmatprep.subr.bf16.mxu0 0
    %4985 = vmatpush2.bf16.msra.mxu0 0
    %4986 = vmatprep.mubr.bf16.mxu0 0
    %4987 = vmatmul.mubr.bf16.gmra.mxu0 %v4738
    %v4988 = vpop.f32.mrf.mxu0
    %v4989 = vadd.f32 %v4777, %v4988
    %v4990 = vpop.f32.mrf.mxu0
    %v4991 = vadd.f32 %v4781, %v4990
    %v4992 = vpop.f32.mrf.mxu0
    %v4993 = vadd.f32 %v4777, %v4992
    %v4994 = vpop.f32.mrf.mxu0
    %v4995 = vadd.f32 %v4781, %v4994
    %4996 = vmatprep.mubr.bf16.mxu0 0
    %4997 = vmatmul.mubr.bf16.gmra.mxu0 %v4739
    %v4998 = vpop.f32.mrf.mxu0
    %v4999 = vadd.f32 %v4777, %v4998
    %v5000 = vpop.f32.mrf.mxu0
    %v5001 = vadd.f32 %v4781, %v5000
    %v5002 = vpop.f32.mrf.mxu0
    %v5003 = vadd.f32 %v4777, %v5002
    %v5004 = vpop.f32.mrf.mxu0
    %v5005 = vadd.f32 %v4781, %v5004
    %5006 = vdwg.mxu0
    %5007 = vmatprep.subr.bf16.mxu0 %v4921
    %5008 = vmatpush1.bf16.msra.mxu0 %v4920
    %5009 = vmatprep.subr.bf16.mxu0 %v4917
    %5010 = vmatpush1.bf16.msra.mxu0 %v4916
    %5011 = vmatprep.subr.bf16.mxu0 %v4913
    %5012 = vmatpush1.bf16.msra.mxu0 %v4912
    %5013 = vmatprep.subr.bf16.mxu0 %v4909
    %5014 = vmatpush1.bf16.msra.mxu0 %v4908
    %5015 = vmatprep.subr.bf16.mxu0 %v4905
    %5016 = vmatpush1.bf16.msra.mxu0 %v4904
    %5017 = vmatprep.subr.bf16.mxu0 %v4901
    %5018 = vmatpush1.bf16.msra.mxu0 %v4900
    %5019 = vmatprep.subr.bf16.mxu0 %v4897
    %5020 = vmatpush1.bf16.msra.mxu0 %v4896
    %5021 = vmatprep.subr.bf16.mxu0 %v4893
    %5022 = vmatpush1.bf16.msra.mxu0 %v4892
    %5023 = vmatprep.subr.bf16.mxu0 0
    %5024 = vmatpush2.bf16.msra.mxu0 0
    %5025 = vmatprep.subr.bf16.mxu0 0
    %5026 = vmatpush2.bf16.msra.mxu0 0
    %5027 = vmatprep.subr.bf16.mxu0 0
    %5028 = vmatpush2.bf16.msra.mxu0 0
    %5029 = vmatprep.subr.bf16.mxu0 0
    %5030 = vmatpush2.bf16.msra.mxu0 0
    %5031 = vmatprep.subr.bf16.mxu0 0
    %5032 = vmatpush2.bf16.msra.mxu0 0
    %5033 = vmatprep.subr.bf16.mxu0 0
    %5034 = vmatpush2.bf16.msra.mxu0 0
    %5035 = vmatprep.subr.bf16.mxu0 0
    %5036 = vmatpush2.bf16.msra.mxu0 0
    %5037 = vmatprep.subr.bf16.mxu0 0
    %5038 = vmatpush2.bf16.msra.mxu0 0
    %5039 = vmatprep.mubr.bf16.mxu0 0
    %5040 = vmatmul.mubr.bf16.gmra.mxu0 %v4738
    %v5041 = vpop.f32.mrf.mxu0
    %v5042 = vadd.f32 %v4785, %v5041
    %v5043 = vpop.f32.mrf.mxu0
    %v5044 = vadd.f32 %v4789, %v5043
    %v5045 = vpop.f32.mrf.mxu0
    %v5046 = vadd.f32 %v4785, %v5045
    %v5047 = vpop.f32.mrf.mxu0
    %v5048 = vadd.f32 %v4789, %v5047
    %5049 = vmatprep.mubr.bf16.mxu0 0
    %5050 = vmatmul.mubr.bf16.gmra.mxu0 %v4739
    %v5051 = vpop.f32.mrf.mxu0
    %v5052 = vadd.f32 %v4785, %v5051
    %v5053 = vpop.f32.mrf.mxu0
    %v5054 = vadd.f32 %v4789, %v5053
    %v5055 = vpop.f32.mrf.mxu0
    %v5056 = vadd.f32 %v4785, %v5055
    %v5057 = vpop.f32.mrf.mxu0
    %v5058 = vadd.f32 %v4789, %v5057
    %5059 = vdwg.mxu0
    %v5060 = vmax.f32 %v4989, 0.0
    %v5061 = vmax.f32 %v4991, 0.0
    %v5062 = vmax.f32 %v5042, 0.0
    %v5063 = vmax.f32 %v5044, 0.0
    %v5064 = vmax.f32 %v4993, 0.0
    %v5065 = vmax.f32 %v4995, 0.0
    %v5066 = vmax.f32 %v5046, 0.0
    %v5067 = vmax.f32 %v5048, 0.0
    %v5068 = vmax.f32 %v4999, 0.0
    %v5069 = vmax.f32 %v5001, 0.0
    %v5070 = vmax.f32 %v5052, 0.0
    %v5071 = vmax.f32 %v5054, 0.0
    %v5072 = vmax.f32 %v5003, 0.0
    %v5073 = vmax.f32 %v5005, 0.0
    %v5074 = vmax.f32 %v5056, 0.0
    %v5075 = vmax.f32 %v5058, 0.0
    %v5076 = vadd.f32 %v1800, %v3380
    %v5077 = vadd.f32 %v1801, %v3381
    %v5078 = vadd.f32 %v1802, %v3382
    %v5079 = vadd.f32 %v1803, %v3383
    %v5080 = vadd.f32 %v1804, %v3384
    %v5081 = vadd.f32 %v1805, %v3385
    %v5082 = vadd.f32 %v1806, %v3386
    %v5083 = vadd.f32 %v1807, %v3387
    %v5084 = vadd.f32 %v1808, %v3388
    %v5085 = vadd.f32 %v1809, %v3389
    %v5086 = vadd.f32 %v1810, %v3390
    %v5087 = vadd.f32 %v1811, %v3391
    %v5088 = vadd.f32 %v1812, %v3392
    %v5089 = vadd.f32 %v1813, %v3393
    %v5090 = vadd.f32 %v1814, %v3394
    %v5091 = vadd.f32 %v1815, %v3395
    %v5092 = vadd.f32 %v5076, %v5060
    %v5093 = vadd.f32 %v5077, %v5061
    %v5094 = vadd.f32 %v5078, %v5062
    %v5095 = vadd.f32 %v5079, %v5063
    %v5096 = vadd.f32 %v5080, %v5064
    %v5097 = vadd.f32 %v5081, %v5065
    %v5098 = vadd.f32 %v5082, %v5066
    %v5099 = vadd.f32 %v5083, %v5067
    %v5100 = vadd.f32 %v5084, %v5068
    %v5101 = vadd.f32 %v5085, %v5069
    %v5102 = vadd.f32 %v5086, %v5070
    %v5103 = vadd.f32 %v5087, %v5071
    %v5104 = vadd.f32 %v5088, %v5072
    %v5105 = vadd.f32 %v5089, %v5073
    %v5106 = vadd.f32 %v5090, %v5074
    %v5107 = vadd.f32 %v5091, %v5075
    %v5108 = vpack.c.bf16 %v5096, %v5092
    %v5109 = vpack.c.bf16 %v5097, %v5093
    %v5110 = vpack.c.bf16 %v5098, %v5094
    %v5111 = vpack.c.bf16 %v5099, %v5095
    %v5112 = vpack.c.bf16 %v5104, %v5100
    %v5113 = vpack.c.bf16 %v5105, %v5101
    %v5114 = vpack.c.bf16 %v5106, %v5102
    %v5115 = vpack.c.bf16 %v5107, %v5103
    %v5116 = vld [vmem:[#allocation20] sm:$0xff]
    %v5117 = vld [vmem:[#allocation20 + $0x8] sm:$0xff]
    %v5118 = vld [vmem:[#allocation20 + $0x10] sm:$0xff]
    %v5119 = vld [vmem:[#allocation20 + $0x18] sm:$0xff]
    %v5120 = vld [vmem:[#allocation20 + $0x20] sm:$0xff]
    %v5121 = vld [vmem:[#allocation20 + $0x28] sm:$0xff]
    %v5122 = vld [vmem:[#allocation20 + $0x30] sm:$0xff]
    %v5123 = vld [vmem:[#allocation20 + $0x38] sm:$0xff]
    %v5124 = vld [vmem:[#allocation20 + $0x40] sm:$0xff]
    %v5125 = vld [vmem:[#allocation20 + $0x48] sm:$0xff]
    %v5126 = vld [vmem:[#allocation20 + $0x50] sm:$0xff]
    %v5127 = vld [vmem:[#allocation20 + $0x58] sm:$0xff]
    %v5128 = vld [vmem:[#allocation20 + $0x60] sm:$0xff]
    %v5129 = vld [vmem:[#allocation20 + $0x68] sm:$0xff]
    %v5130 = vld [vmem:[#allocation20 + $0x70] sm:$0xff]
    %v5131 = vld [vmem:[#allocation20 + $0x78] sm:$0xff]
    %v5132 = vld [vmem:[#allocation20 + $0x80] sm:$0xff]
    %v5133 = vld [vmem:[#allocation20 + $0x88] sm:$0xff]
    %v5134 = vld [vmem:[#allocation20 + $0x90] sm:$0xff]
    %v5135 = vld [vmem:[#allocation20 + $0x98] sm:$0xff]
    %v5136 = vld [vmem:[#allocation20 + $0xa0] sm:$0xff]
    %v5137 = vld [vmem:[#allocation20 + $0xa8] sm:$0xff]
    %v5138 = vld [vmem:[#allocation20 + $0xb0] sm:$0xff]
    %v5139 = vld [vmem:[#allocation20 + $0xb8] sm:$0xff]
    %v5140 = vld [vmem:[#allocation20 + $0xc0] sm:$0xff]
    %v5141 = vld [vmem:[#allocation20 + $0xc8] sm:$0xff]
    %v5142 = vld [vmem:[#allocation20 + $0xd0] sm:$0xff]
    %v5143 = vld [vmem:[#allocation20 + $0xd8] sm:$0xff]
    %v5144 = vld [vmem:[#allocation20 + $0xe0] sm:$0xff]
    %v5145 = vld [vmem:[#allocation20 + $0xe8] sm:$0xff]
    %v5146 = vld [vmem:[#allocation20 + $0xf0] sm:$0xff]
    %v5147 = vld [vmem:[#allocation20 + $0xf8] sm:$0xff]
    %v5148 = vld [vmem:[#allocation20 + $0x100] sm:$0xff]
    %v5149 = vld [vmem:[#allocation20 + $0x108] sm:$0xff]
    %v5150 = vld [vmem:[#allocation20 + $0x110] sm:$0xff]
    %v5151 = vld [vmem:[#allocation20 + $0x118] sm:$0xff]
    %v5152 = vld [vmem:[#allocation20 + $0x120] sm:$0xff]
    %v5153 = vld [vmem:[#allocation20 + $0x128] sm:$0xff]
    %v5154 = vld [vmem:[#allocation20 + $0x130] sm:$0xff]
    %v5155 = vld [vmem:[#allocation20 + $0x138] sm:$0xff]
    %v5156 = vld [vmem:[#allocation20 + $0x140] sm:$0xff]
    %v5157 = vld [vmem:[#allocation20 + $0x148] sm:$0xff]
    %v5158 = vld [vmem:[#allocation20 + $0x150] sm:$0xff]
    %v5159 = vld [vmem:[#allocation20 + $0x158] sm:$0xff]
    %v5160 = vld [vmem:[#allocation20 + $0x160] sm:$0xff]
    %v5161 = vld [vmem:[#allocation20 + $0x168] sm:$0xff]
    %v5162 = vld [vmem:[#allocation20 + $0x170] sm:$0xff]
    %v5163 = vld [vmem:[#allocation20 + $0x178] sm:$0xff]
    %v5164 = vld [vmem:[#allocation20 + $0x180] sm:$0xff]
    %v5165 = vld [vmem:[#allocation20 + $0x188] sm:$0xff]
    %v5166 = vld [vmem:[#allocation20 + $0x190] sm:$0xff]
    %v5167 = vld [vmem:[#allocation20 + $0x198] sm:$0xff]
    %v5168 = vld [vmem:[#allocation20 + $0x1a0] sm:$0xff]
    %v5169 = vld [vmem:[#allocation20 + $0x1a8] sm:$0xff]
    %v5170 = vld [vmem:[#allocation20 + $0x1b0] sm:$0xff]
    %v5171 = vld [vmem:[#allocation20 + $0x1b8] sm:$0xff]
    %v5172 = vld [vmem:[#allocation20 + $0x1c0] sm:$0xff]
    %v5173 = vld [vmem:[#allocation20 + $0x1c8] sm:$0xff]
    %v5174 = vld [vmem:[#allocation20 + $0x1d0] sm:$0xff]
    %v5175 = vld [vmem:[#allocation20 + $0x1d8] sm:$0xff]
    %v5176 = vld [vmem:[#allocation20 + $0x1e0] sm:$0xff]
    %v5177 = vld [vmem:[#allocation20 + $0x1e8] sm:$0xff]
    %v5178 = vld [vmem:[#allocation20 + $0x1f0] sm:$0xff]
    %v5179 = vld [vmem:[#allocation20 + $0x1f8] sm:$0xff]
    %v5180 = vld [vmem:[#allocation20 + $0x200] sm:$0xff]
    %v5181 = vld [vmem:[#allocation20 + $0x208] sm:$0xff]
    %v5182 = vld [vmem:[#allocation20 + $0x210] sm:$0xff]
    %v5183 = vld [vmem:[#allocation20 + $0x218] sm:$0xff]
    %v5184 = vld [vmem:[#allocation20 + $0x220] sm:$0xff]
    %v5185 = vld [vmem:[#allocation20 + $0x228] sm:$0xff]
    %v5186 = vld [vmem:[#allocation20 + $0x230] sm:$0xff]
    %v5187 = vld [vmem:[#allocation20 + $0x238] sm:$0xff]
    %v5188 = vld [vmem:[#allocation20 + $0x240] sm:$0xff]
    %v5189 = vld [vmem:[#allocation20 + $0x248] sm:$0xff]
    %v5190 = vld [vmem:[#allocation20 + $0x250] sm:$0xff]
    %v5191 = vld [vmem:[#allocation20 + $0x258] sm:$0xff]
    %v5192 = vld [vmem:[#allocation20 + $0x260] sm:$0xff]
    %v5193 = vld [vmem:[#allocation20 + $0x268] sm:$0xff]
    %v5194 = vld [vmem:[#allocation20 + $0x270] sm:$0xff]
    %v5195 = vld [vmem:[#allocation20 + $0x278] sm:$0xff]
    %v5196 = vld [vmem:[#allocation20 + $0x280] sm:$0xff]
    %v5197 = vld [vmem:[#allocation20 + $0x288] sm:$0xff]
    %v5198 = vld [vmem:[#allocation20 + $0x290] sm:$0xff]
    %v5199 = vld [vmem:[#allocation20 + $0x298] sm:$0xff]
    %v5200 = vld [vmem:[#allocation20 + $0x2a0] sm:$0xff]
    %v5201 = vld [vmem:[#allocation20 + $0x2a8] sm:$0xff]
    %v5202 = vld [vmem:[#allocation20 + $0x2b0] sm:$0xff]
    %v5203 = vld [vmem:[#allocation20 + $0x2b8] sm:$0xff]
    %v5204 = vld [vmem:[#allocation20 + $0x2c0] sm:$0xff]
    %v5205 = vld [vmem:[#allocation20 + $0x2c8] sm:$0xff]
    %v5206 = vld [vmem:[#allocation20 + $0x2d0] sm:$0xff]
    %v5207 = vld [vmem:[#allocation20 + $0x2d8] sm:$0xff]
    %v5208 = vld [vmem:[#allocation20 + $0x2e0] sm:$0xff]
    %v5209 = vld [vmem:[#allocation20 + $0x2e8] sm:$0xff]
    %v5210 = vld [vmem:[#allocation20 + $0x2f0] sm:$0xff]
    %v5211 = vld [vmem:[#allocation20 + $0x2f8] sm:$0xff]
    %v5212 = vld [vmem:[#allocation20 + $0x300] sm:$0xff]
    %v5213 = vld [vmem:[#allocation20 + $0x308] sm:$0xff]
    %v5214 = vld [vmem:[#allocation20 + $0x310] sm:$0xff]
    %v5215 = vld [vmem:[#allocation20 + $0x318] sm:$0xff]
    %v5216 = vld [vmem:[#allocation20 + $0x320] sm:$0xff]
    %v5217 = vld [vmem:[#allocation20 + $0x328] sm:$0xff]
    %v5218 = vld [vmem:[#allocation20 + $0x330] sm:$0xff]
    %v5219 = vld [vmem:[#allocation20 + $0x338] sm:$0xff]
    %v5220 = vld [vmem:[#allocation20 + $0x340] sm:$0xff]
    %v5221 = vld [vmem:[#allocation20 + $0x348] sm:$0xff]
    %v5222 = vld [vmem:[#allocation20 + $0x350] sm:$0xff]
    %v5223 = vld [vmem:[#allocation20 + $0x358] sm:$0xff]
    %v5224 = vld [vmem:[#allocation20 + $0x360] sm:$0xff]
    %v5225 = vld [vmem:[#allocation20 + $0x368] sm:$0xff]
    %v5226 = vld [vmem:[#allocation20 + $0x370] sm:$0xff]
    %v5227 = vld [vmem:[#allocation20 + $0x378] sm:$0xff]
    %v5228 = vld [vmem:[#allocation20 + $0x380] sm:$0xff]
    %v5229 = vld [vmem:[#allocation20 + $0x388] sm:$0xff]
    %v5230 = vld [vmem:[#allocation20 + $0x390] sm:$0xff]
    %v5231 = vld [vmem:[#allocation20 + $0x398] sm:$0xff]
    %v5232 = vld [vmem:[#allocation20 + $0x3a0] sm:$0xff]
    %v5233 = vld [vmem:[#allocation20 + $0x3a8] sm:$0xff]
    %v5234 = vld [vmem:[#allocation20 + $0x3b0] sm:$0xff]
    %v5235 = vld [vmem:[#allocation20 + $0x3b8] sm:$0xff]
    %v5236 = vld [vmem:[#allocation20 + $0x3c0] sm:$0xff]
    %v5237 = vld [vmem:[#allocation20 + $0x3c8] sm:$0xff]
    %v5238 = vld [vmem:[#allocation20 + $0x3d0] sm:$0xff]
    %v5239 = vld [vmem:[#allocation20 + $0x3d8] sm:$0xff]
    %v5240 = vld [vmem:[#allocation20 + $0x3e0] sm:$0xff]
    %v5241 = vld [vmem:[#allocation20 + $0x3e8] sm:$0xff]
    %v5242 = vld [vmem:[#allocation20 + $0x3f0] sm:$0xff]
    %v5243 = vld [vmem:[#allocation20 + $0x3f8] sm:$0xff]
    %v5244 = vld [vmem:[#allocation20 + $0x400] sm:$0xff]
    %v5245 = vld [vmem:[#allocation20 + $0x408] sm:$0xff]
    %v5246 = vld [vmem:[#allocation20 + $0x410] sm:$0xff]
    %v5247 = vld [vmem:[#allocation20 + $0x418] sm:$0xff]
    %v5248 = vld [vmem:[#allocation20 + $0x420] sm:$0xff]
    %v5249 = vld [vmem:[#allocation20 + $0x428] sm:$0xff]
    %v5250 = vld [vmem:[#allocation20 + $0x430] sm:$0xff]
    %v5251 = vld [vmem:[#allocation20 + $0x438] sm:$0xff]
    %v5252 = vld [vmem:[#allocation20 + $0x440] sm:$0xff]
    %v5253 = vld [vmem:[#allocation20 + $0x448] sm:$0xff]
    %v5254 = vld [vmem:[#allocation20 + $0x450] sm:$0xff]
    %v5255 = vld [vmem:[#allocation20 + $0x458] sm:$0xff]
    %v5256 = vld [vmem:[#allocation20 + $0x460] sm:$0xff]
    %v5257 = vld [vmem:[#allocation20 + $0x468] sm:$0xff]
    %v5258 = vld [vmem:[#allocation20 + $0x470] sm:$0xff]
    %v5259 = vld [vmem:[#allocation20 + $0x478] sm:$0xff]
    %v5260 = vld [vmem:[#allocation20 + $0x480] sm:$0xff]
    %v5261 = vld [vmem:[#allocation20 + $0x488] sm:$0xff]
    %v5262 = vld [vmem:[#allocation20 + $0x490] sm:$0xff]
    %v5263 = vld [vmem:[#allocation20 + $0x498] sm:$0xff]
    %v5264 = vld [vmem:[#allocation20 + $0x4a0] sm:$0xff]
    %v5265 = vld [vmem:[#allocation20 + $0x4a8] sm:$0xff]
    %v5266 = vld [vmem:[#allocation20 + $0x4b0] sm:$0xff]
    %v5267 = vld [vmem:[#allocation20 + $0x4b8] sm:$0xff]
    %v5268 = vld [vmem:[#allocation20 + $0x4c0] sm:$0xff]
    %v5269 = vld [vmem:[#allocation20 + $0x4c8] sm:$0xff]
    %v5270 = vld [vmem:[#allocation20 + $0x4d0] sm:$0xff]
    %v5271 = vld [vmem:[#allocation20 + $0x4d8] sm:$0xff]
    %v5272 = vld [vmem:[#allocation20 + $0x4e0] sm:$0xff]
    %v5273 = vld [vmem:[#allocation20 + $0x4e8] sm:$0xff]
    %v5274 = vld [vmem:[#allocation20 + $0x4f0] sm:$0xff]
    %v5275 = vld [vmem:[#allocation20 + $0x4f8] sm:$0xff]
    %v5276 = vld [vmem:[#allocation20 + $0x500] sm:$0xff]
    %v5277 = vld [vmem:[#allocation20 + $0x508] sm:$0xff]
    %v5278 = vld [vmem:[#allocation20 + $0x510] sm:$0xff]
    %v5279 = vld [vmem:[#allocation20 + $0x518] sm:$0xff]
    %v5280 = vld [vmem:[#allocation20 + $0x520] sm:$0xff]
    %v5281 = vld [vmem:[#allocation20 + $0x528] sm:$0xff]
    %v5282 = vld [vmem:[#allocation20 + $0x530] sm:$0xff]
    %v5283 = vld [vmem:[#allocation20 + $0x538] sm:$0xff]
    %v5284 = vld [vmem:[#allocation20 + $0x540] sm:$0xff]
    %v5285 = vld [vmem:[#allocation20 + $0x548] sm:$0xff]
    %v5286 = vld [vmem:[#allocation20 + $0x550] sm:$0xff]
    %v5287 = vld [vmem:[#allocation20 + $0x558] sm:$0xff]
    %v5288 = vld [vmem:[#allocation20 + $0x560] sm:$0xff]
    %v5289 = vld [vmem:[#allocation20 + $0x568] sm:$0xff]
    %v5290 = vld [vmem:[#allocation20 + $0x570] sm:$0xff]
    %v5291 = vld [vmem:[#allocation20 + $0x578] sm:$0xff]
    %v5292 = vld [vmem:[#allocation20 + $0x580] sm:$0xff]
    %v5293 = vld [vmem:[#allocation20 + $0x588] sm:$0xff]
    %v5294 = vld [vmem:[#allocation20 + $0x590] sm:$0xff]
    %v5295 = vld [vmem:[#allocation20 + $0x598] sm:$0xff]
    %v5296 = vld [vmem:[#allocation20 + $0x5a0] sm:$0xff]
    %v5297 = vld [vmem:[#allocation20 + $0x5a8] sm:$0xff]
    %v5298 = vld [vmem:[#allocation20 + $0x5b0] sm:$0xff]
    %v5299 = vld [vmem:[#allocation20 + $0x5b8] sm:$0xff]
    %v5300 = vld [vmem:[#allocation20 + $0x5c0] sm:$0xff]
    %v5301 = vld [vmem:[#allocation20 + $0x5c8] sm:$0xff]
    %v5302 = vld [vmem:[#allocation20 + $0x5d0] sm:$0xff]
    %v5303 = vld [vmem:[#allocation20 + $0x5d8] sm:$0xff]
    %v5304 = vld [vmem:[#allocation20 + $0x5e0] sm:$0xff]
    %v5305 = vld [vmem:[#allocation20 + $0x5e8] sm:$0xff]
    %v5306 = vld [vmem:[#allocation20 + $0x5f0] sm:$0xff]
    %v5307 = vld [vmem:[#allocation20 + $0x5f8] sm:$0xff]
    %v5308 = vld [vmem:[#allocation20 + $0x600] sm:$0xff]
    %v5309 = vld [vmem:[#allocation20 + $0x608] sm:$0xff]
    %v5310 = vld [vmem:[#allocation20 + $0x610] sm:$0xff]
    %v5311 = vld [vmem:[#allocation20 + $0x618] sm:$0xff]
    %v5312 = vld [vmem:[#allocation20 + $0x620] sm:$0xff]
    %v5313 = vld [vmem:[#allocation20 + $0x628] sm:$0xff]
    %v5314 = vld [vmem:[#allocation20 + $0x630] sm:$0xff]
    %v5315 = vld [vmem:[#allocation20 + $0x638] sm:$0xff]
    %v5316 = vld [vmem:[#allocation20 + $0x640] sm:$0xff]
    %v5317 = vld [vmem:[#allocation20 + $0x648] sm:$0xff]
    %v5318 = vld [vmem:[#allocation20 + $0x650] sm:$0xff]
    %v5319 = vld [vmem:[#allocation20 + $0x658] sm:$0xff]
    %v5320 = vld [vmem:[#allocation20 + $0x660] sm:$0xff]
    %v5321 = vld [vmem:[#allocation20 + $0x668] sm:$0xff]
    %v5322 = vld [vmem:[#allocation20 + $0x670] sm:$0xff]
    %v5323 = vld [vmem:[#allocation20 + $0x678] sm:$0xff]
    %v5324 = vld [vmem:[#allocation20 + $0x680] sm:$0xff]
    %v5325 = vld [vmem:[#allocation20 + $0x688] sm:$0xff]
    %v5326 = vld [vmem:[#allocation20 + $0x690] sm:$0xff]
    %v5327 = vld [vmem:[#allocation20 + $0x698] sm:$0xff]
    %v5328 = vld [vmem:[#allocation20 + $0x6a0] sm:$0xff]
    %v5329 = vld [vmem:[#allocation20 + $0x6a8] sm:$0xff]
    %v5330 = vld [vmem:[#allocation20 + $0x6b0] sm:$0xff]
    %v5331 = vld [vmem:[#allocation20 + $0x6b8] sm:$0xff]
    %v5332 = vld [vmem:[#allocation20 + $0x6c0] sm:$0xff]
    %v5333 = vld [vmem:[#allocation20 + $0x6c8] sm:$0xff]
    %v5334 = vld [vmem:[#allocation20 + $0x6d0] sm:$0xff]
    %v5335 = vld [vmem:[#allocation20 + $0x6d8] sm:$0xff]
    %v5336 = vld [vmem:[#allocation20 + $0x6e0] sm:$0xff]
    %v5337 = vld [vmem:[#allocation20 + $0x6e8] sm:$0xff]
    %v5338 = vld [vmem:[#allocation20 + $0x6f0] sm:$0xff]
    %v5339 = vld [vmem:[#allocation20 + $0x6f8] sm:$0xff]
    %v5340 = vld [vmem:[#allocation20 + $0x700] sm:$0xff]
    %v5341 = vld [vmem:[#allocation20 + $0x708] sm:$0xff]
    %v5342 = vld [vmem:[#allocation20 + $0x710] sm:$0xff]
    %v5343 = vld [vmem:[#allocation20 + $0x718] sm:$0xff]
    %v5344 = vld [vmem:[#allocation20 + $0x720] sm:$0xff]
    %v5345 = vld [vmem:[#allocation20 + $0x728] sm:$0xff]
    %v5346 = vld [vmem:[#allocation20 + $0x730] sm:$0xff]
    %v5347 = vld [vmem:[#allocation20 + $0x738] sm:$0xff]
    %v5348 = vld [vmem:[#allocation20 + $0x740] sm:$0xff]
    %v5349 = vld [vmem:[#allocation20 + $0x748] sm:$0xff]
    %v5350 = vld [vmem:[#allocation20 + $0x750] sm:$0xff]
    %v5351 = vld [vmem:[#allocation20 + $0x758] sm:$0xff]
    %v5352 = vld [vmem:[#allocation20 + $0x760] sm:$0xff]
    %v5353 = vld [vmem:[#allocation20 + $0x768] sm:$0xff]
    %v5354 = vld [vmem:[#allocation20 + $0x770] sm:$0xff]
    %v5355 = vld [vmem:[#allocation20 + $0x778] sm:$0xff]
    %v5356 = vld [vmem:[#allocation20 + $0x780] sm:$0xff]
    %v5357 = vld [vmem:[#allocation20 + $0x788] sm:$0xff]
    %v5358 = vld [vmem:[#allocation20 + $0x790] sm:$0xff]
    %v5359 = vld [vmem:[#allocation20 + $0x798] sm:$0xff]
    %v5360 = vld [vmem:[#allocation20 + $0x7a0] sm:$0xff]
    %v5361 = vld [vmem:[#allocation20 + $0x7a8] sm:$0xff]
    %v5362 = vld [vmem:[#allocation20 + $0x7b0] sm:$0xff]
    %v5363 = vld [vmem:[#allocation20 + $0x7b8] sm:$0xff]
    %v5364 = vld [vmem:[#allocation20 + $0x7c0] sm:$0xff]
    %v5365 = vld [vmem:[#allocation20 + $0x7c8] sm:$0xff]
    %v5366 = vld [vmem:[#allocation20 + $0x7d0] sm:$0xff]
    %v5367 = vld [vmem:[#allocation20 + $0x7d8] sm:$0xff]
    %v5368 = vld [vmem:[#allocation20 + $0x7e0] sm:$0xff]
    %v5369 = vld [vmem:[#allocation20 + $0x7e8] sm:$0xff]
    %v5370 = vld [vmem:[#allocation20 + $0x7f0] sm:$0xff]
    %v5371 = vld [vmem:[#allocation20 + $0x7f8] sm:$0xff]
    %v5372 = vld [vmem:[%s16] sm:$0xff]
    %v5374 = vlaneseq
    %v5375 = vshrl.u32 %v5374, 7
    %v5376 = vsub.s32 0, %v5375
    %v5377 = vrot.slane %v5372, %v5376
    %v5378 = vlaneseq
    %v5379 = vshrl.u32 %v5378, 7
    %v5380 = vsub.s32 1, %v5379
    %v5381 = vrot.slane %v5372, %v5380
    %v5382 = vlaneseq
    %v5383 = vshrl.u32 %v5382, 7
    %v5384 = vsub.s32 2, %v5383
    %v5385 = vrot.slane %v5372, %v5384
    %v5386 = vlaneseq
    %v5387 = vshrl.u32 %v5386, 7
    %v5388 = vsub.s32 3, %v5387
    %v5389 = vrot.slane %v5372, %v5388
    %v5390 = vlaneseq
    %v5391 = vshrl.u32 %v5390, 7
    %v5392 = vsub.s32 4, %v5391
    %v5393 = vrot.slane %v5372, %v5392
    %v5394 = vlaneseq
    %v5395 = vshrl.u32 %v5394, 7
    %v5396 = vsub.s32 5, %v5395
    %v5397 = vrot.slane %v5372, %v5396
    %v5398 = vlaneseq
    %v5399 = vshrl.u32 %v5398, 7
    %v5400 = vsub.s32 6, %v5399
    %v5401 = vrot.slane %v5372, %v5400
    %v5402 = vlaneseq
    %v5403 = vshrl.u32 %v5402, 7
    %v5404 = vsub.s32 7, %v5403
    %v5405 = vrot.slane %v5372, %v5404
    %v5670 = vunpack.c.l.b16 %v5116
    %v5671 = vunpack.c.h.b16 %v5116
    %v5672 = vunpack.c.l.b16 %v5117
    %v5673 = vunpack.c.h.b16 %v5117
    %v5674 = vunpack.c.l.b16 %v5118
    %v5675 = vunpack.c.h.b16 %v5118
    %v5676 = vunpack.c.l.b16 %v5119
    %v5677 = vunpack.c.h.b16 %v5119
    %v5678 = vunpack.c.l.b16 %v5120
    %v5679 = vunpack.c.h.b16 %v5120
    %v5680 = vunpack.c.l.b16 %v5121
    %v5681 = vunpack.c.h.b16 %v5121
    %v5682 = vunpack.c.l.b16 %v5122
    %v5683 = vunpack.c.h.b16 %v5122
    %v5684 = vunpack.c.l.b16 %v5123
    %v5685 = vunpack.c.h.b16 %v5123
    %v5686 = vunpack.c.l.b16 %v5124
    %v5687 = vunpack.c.h.b16 %v5124
    %v5688 = vunpack.c.l.b16 %v5125
    %v5689 = vunpack.c.h.b16 %v5125
    %v5690 = vunpack.c.l.b16 %v5126
    %v5691 = vunpack.c.h.b16 %v5126
    %v5692 = vunpack.c.l.b16 %v5127
    %v5693 = vunpack.c.h.b16 %v5127
    %v5694 = vunpack.c.l.b16 %v5128
    %v5695 = vunpack.c.h.b16 %v5128
    %v5696 = vunpack.c.l.b16 %v5129
    %v5697 = vunpack.c.h.b16 %v5129
    %v5698 = vunpack.c.l.b16 %v5130
    %v5699 = vunpack.c.h.b16 %v5130
    %v5700 = vunpack.c.l.b16 %v5131
    %v5701 = vunpack.c.h.b16 %v5131
    %v5702 = vunpack.c.l.b16 %v5132
    %v5703 = vunpack.c.h.b16 %v5132
    %v5704 = vunpack.c.l.b16 %v5133
    %v5705 = vunpack.c.h.b16 %v5133
    %v5706 = vunpack.c.l.b16 %v5134
    %v5707 = vunpack.c.h.b16 %v5134
    %v5708 = vunpack.c.l.b16 %v5135
    %v5709 = vunpack.c.h.b16 %v5135
    %v5710 = vunpack.c.l.b16 %v5136
    %v5711 = vunpack.c.h.b16 %v5136
    %v5712 = vunpack.c.l.b16 %v5137
    %v5713 = vunpack.c.h.b16 %v5137
    %v5714 = vunpack.c.l.b16 %v5138
    %v5715 = vunpack.c.h.b16 %v5138
    %v5716 = vunpack.c.l.b16 %v5139
    %v5717 = vunpack.c.h.b16 %v5139
    %v5718 = vunpack.c.l.b16 %v5140
    %v5719 = vunpack.c.h.b16 %v5140
    %v5720 = vunpack.c.l.b16 %v5141
    %v5721 = vunpack.c.h.b16 %v5141
    %v5722 = vunpack.c.l.b16 %v5142
    %v5723 = vunpack.c.h.b16 %v5142
    %v5724 = vunpack.c.l.b16 %v5143
    %v5725 = vunpack.c.h.b16 %v5143
    %v5726 = vunpack.c.l.b16 %v5144
    %v5727 = vunpack.c.h.b16 %v5144
    %v5728 = vunpack.c.l.b16 %v5145
    %v5729 = vunpack.c.h.b16 %v5145
    %v5730 = vunpack.c.l.b16 %v5146
    %v5731 = vunpack.c.h.b16 %v5146
    %v5732 = vunpack.c.l.b16 %v5147
    %v5733 = vunpack.c.h.b16 %v5147
    %v5734 = vunpack.c.l.b16 %v5148
    %v5735 = vunpack.c.h.b16 %v5148
    %v5736 = vunpack.c.l.b16 %v5149
    %v5737 = vunpack.c.h.b16 %v5149
    %v5738 = vunpack.c.l.b16 %v5150
    %v5739 = vunpack.c.h.b16 %v5150
    %v5740 = vunpack.c.l.b16 %v5151
    %v5741 = vunpack.c.h.b16 %v5151
    %v5742 = vunpack.c.l.b16 %v5152
    %v5743 = vunpack.c.h.b16 %v5152
    %v5744 = vunpack.c.l.b16 %v5153
    %v5745 = vunpack.c.h.b16 %v5153
    %v5746 = vunpack.c.l.b16 %v5154
    %v5747 = vunpack.c.h.b16 %v5154
    %v5748 = vunpack.c.l.b16 %v5155
    %v5749 = vunpack.c.h.b16 %v5155
    %v5750 = vunpack.c.l.b16 %v5156
    %v5751 = vunpack.c.h.b16 %v5156
    %v5752 = vunpack.c.l.b16 %v5157
    %v5753 = vunpack.c.h.b16 %v5157
    %v5754 = vunpack.c.l.b16 %v5158
    %v5755 = vunpack.c.h.b16 %v5158
    %v5756 = vunpack.c.l.b16 %v5159
    %v5757 = vunpack.c.h.b16 %v5159
    %v5758 = vunpack.c.l.b16 %v5160
    %v5759 = vunpack.c.h.b16 %v5160
    %v5760 = vunpack.c.l.b16 %v5161
    %v5761 = vunpack.c.h.b16 %v5161
    %v5762 = vunpack.c.l.b16 %v5162
    %v5763 = vunpack.c.h.b16 %v5162
    %v5764 = vunpack.c.l.b16 %v5163
    %v5765 = vunpack.c.h.b16 %v5163
    %v5766 = vunpack.c.l.b16 %v5164
    %v5767 = vunpack.c.h.b16 %v5164
    %v5768 = vunpack.c.l.b16 %v5165
    %v5769 = vunpack.c.h.b16 %v5165
    %v5770 = vunpack.c.l.b16 %v5166
    %v5771 = vunpack.c.h.b16 %v5166
    %v5772 = vunpack.c.l.b16 %v5167
    %v5773 = vunpack.c.h.b16 %v5167
    %v5774 = vunpack.c.l.b16 %v5168
    %v5775 = vunpack.c.h.b16 %v5168
    %v5776 = vunpack.c.l.b16 %v5169
    %v5777 = vunpack.c.h.b16 %v5169
    %v5778 = vunpack.c.l.b16 %v5170
    %v5779 = vunpack.c.h.b16 %v5170
    %v5780 = vunpack.c.l.b16 %v5171
    %v5781 = vunpack.c.h.b16 %v5171
    %v5782 = vunpack.c.l.b16 %v5172
    %v5783 = vunpack.c.h.b16 %v5172
    %v5784 = vunpack.c.l.b16 %v5173
    %v5785 = vunpack.c.h.b16 %v5173
    %v5786 = vunpack.c.l.b16 %v5174
    %v5787 = vunpack.c.h.b16 %v5174
    %v5788 = vunpack.c.l.b16 %v5175
    %v5789 = vunpack.c.h.b16 %v5175
    %v5790 = vunpack.c.l.b16 %v5176
    %v5791 = vunpack.c.h.b16 %v5176
    %v5792 = vunpack.c.l.b16 %v5177
    %v5793 = vunpack.c.h.b16 %v5177
    %v5794 = vunpack.c.l.b16 %v5178
    %v5795 = vunpack.c.h.b16 %v5178
    %v5796 = vunpack.c.l.b16 %v5179
    %v5797 = vunpack.c.h.b16 %v5179
    %v5798 = vunpack.c.l.b16 %v5180
    %v5799 = vunpack.c.h.b16 %v5180
    %v5800 = vunpack.c.l.b16 %v5181
    %v5801 = vunpack.c.h.b16 %v5181
    %v5802 = vunpack.c.l.b16 %v5182
    %v5803 = vunpack.c.h.b16 %v5182
    %v5804 = vunpack.c.l.b16 %v5183
    %v5805 = vunpack.c.h.b16 %v5183
    %v5806 = vunpack.c.l.b16 %v5184
    %v5807 = vunpack.c.h.b16 %v5184
    %v5808 = vunpack.c.l.b16 %v5185
    %v5809 = vunpack.c.h.b16 %v5185
    %v5810 = vunpack.c.l.b16 %v5186
    %v5811 = vunpack.c.h.b16 %v5186
    %v5812 = vunpack.c.l.b16 %v5187
    %v5813 = vunpack.c.h.b16 %v5187
    %v5814 = vunpack.c.l.b16 %v5188
    %v5815 = vunpack.c.h.b16 %v5188
    %v5816 = vunpack.c.l.b16 %v5189
    %v5817 = vunpack.c.h.b16 %v5189
    %v5818 = vunpack.c.l.b16 %v5190
    %v5819 = vunpack.c.h.b16 %v5190
    %v5820 = vunpack.c.l.b16 %v5191
    %v5821 = vunpack.c.h.b16 %v5191
    %v5822 = vunpack.c.l.b16 %v5192
    %v5823 = vunpack.c.h.b16 %v5192
    %v5824 = vunpack.c.l.b16 %v5193
    %v5825 = vunpack.c.h.b16 %v5193
    %v5826 = vunpack.c.l.b16 %v5194
    %v5827 = vunpack.c.h.b16 %v5194
    %v5828 = vunpack.c.l.b16 %v5195
    %v5829 = vunpack.c.h.b16 %v5195
    %v5830 = vunpack.c.l.b16 %v5196
    %v5831 = vunpack.c.h.b16 %v5196
    %v5832 = vunpack.c.l.b16 %v5197
    %v5833 = vunpack.c.h.b16 %v5197
    %v5834 = vunpack.c.l.b16 %v5198
    %v5835 = vunpack.c.h.b16 %v5198
    %v5836 = vunpack.c.l.b16 %v5199
    %v5837 = vunpack.c.h.b16 %v5199
    %v5838 = vunpack.c.l.b16 %v5200
    %v5839 = vunpack.c.h.b16 %v5200
    %v5840 = vunpack.c.l.b16 %v5201
    %v5841 = vunpack.c.h.b16 %v5201
    %v5842 = vunpack.c.l.b16 %v5202
    %v5843 = vunpack.c.h.b16 %v5202
    %v5844 = vunpack.c.l.b16 %v5203
    %v5845 = vunpack.c.h.b16 %v5203
    %v5846 = vunpack.c.l.b16 %v5204
    %v5847 = vunpack.c.h.b16 %v5204
    %v5848 = vunpack.c.l.b16 %v5205
    %v5849 = vunpack.c.h.b16 %v5205
    %v5850 = vunpack.c.l.b16 %v5206
    %v5851 = vunpack.c.h.b16 %v5206
    %v5852 = vunpack.c.l.b16 %v5207
    %v5853 = vunpack.c.h.b16 %v5207
    %v5854 = vunpack.c.l.b16 %v5208
    %v5855 = vunpack.c.h.b16 %v5208
    %v5856 = vunpack.c.l.b16 %v5209
    %v5857 = vunpack.c.h.b16 %v5209
    %v5858 = vunpack.c.l.b16 %v5210
    %v5859 = vunpack.c.h.b16 %v5210
    %v5860 = vunpack.c.l.b16 %v5211
    %v5861 = vunpack.c.h.b16 %v5211
    %v5862 = vunpack.c.l.b16 %v5212
    %v5863 = vunpack.c.h.b16 %v5212
    %v5864 = vunpack.c.l.b16 %v5213
    %v5865 = vunpack.c.h.b16 %v5213
    %v5866 = vunpack.c.l.b16 %v5214
    %v5867 = vunpack.c.h.b16 %v5214
    %v5868 = vunpack.c.l.b16 %v5215
    %v5869 = vunpack.c.h.b16 %v5215
    %v5870 = vunpack.c.l.b16 %v5216
    %v5871 = vunpack.c.h.b16 %v5216
    %v5872 = vunpack.c.l.b16 %v5217
    %v5873 = vunpack.c.h.b16 %v5217
    %v5874 = vunpack.c.l.b16 %v5218
    %v5875 = vunpack.c.h.b16 %v5218
    %v5876 = vunpack.c.l.b16 %v5219
    %v5877 = vunpack.c.h.b16 %v5219
    %v5878 = vunpack.c.l.b16 %v5220
    %v5879 = vunpack.c.h.b16 %v5220
    %v5880 = vunpack.c.l.b16 %v5221
    %v5881 = vunpack.c.h.b16 %v5221
    %v5882 = vunpack.c.l.b16 %v5222
    %v5883 = vunpack.c.h.b16 %v5222
    %v5884 = vunpack.c.l.b16 %v5223
    %v5885 = vunpack.c.h.b16 %v5223
    %v5886 = vunpack.c.l.b16 %v5224
    %v5887 = vunpack.c.h.b16 %v5224
    %v5888 = vunpack.c.l.b16 %v5225
    %v5889 = vunpack.c.h.b16 %v5225
    %v5890 = vunpack.c.l.b16 %v5226
    %v5891 = vunpack.c.h.b16 %v5226
    %v5892 = vunpack.c.l.b16 %v5227
    %v5893 = vunpack.c.h.b16 %v5227
    %v5894 = vunpack.c.l.b16 %v5228
    %v5895 = vunpack.c.h.b16 %v5228
    %v5896 = vunpack.c.l.b16 %v5229
    %v5897 = vunpack.c.h.b16 %v5229
    %v5898 = vunpack.c.l.b16 %v5230
    %v5899 = vunpack.c.h.b16 %v5230
    %v5900 = vunpack.c.l.b16 %v5231
    %v5901 = vunpack.c.h.b16 %v5231
    %v5902 = vunpack.c.l.b16 %v5232
    %v5903 = vunpack.c.h.b16 %v5232
    %v5904 = vunpack.c.l.b16 %v5233
    %v5905 = vunpack.c.h.b16 %v5233
    %v5906 = vunpack.c.l.b16 %v5234
    %v5907 = vunpack.c.h.b16 %v5234
    %v5908 = vunpack.c.l.b16 %v5235
    %v5909 = vunpack.c.h.b16 %v5235
    %v5910 = vunpack.c.l.b16 %v5236
    %v5911 = vunpack.c.h.b16 %v5236
    %v5912 = vunpack.c.l.b16 %v5237
    %v5913 = vunpack.c.h.b16 %v5237
    %v5914 = vunpack.c.l.b16 %v5238
    %v5915 = vunpack.c.h.b16 %v5238
    %v5916 = vunpack.c.l.b16 %v5239
    %v5917 = vunpack.c.h.b16 %v5239
    %v5918 = vunpack.c.l.b16 %v5240
    %v5919 = vunpack.c.h.b16 %v5240
    %v5920 = vunpack.c.l.b16 %v5241
    %v5921 = vunpack.c.h.b16 %v5241
    %v5922 = vunpack.c.l.b16 %v5242
    %v5923 = vunpack.c.h.b16 %v5242
    %v5924 = vunpack.c.l.b16 %v5243
    %v5925 = vunpack.c.h.b16 %v5243
    %v5926 = vunpack.c.l.b16 %v5244
    %v5927 = vunpack.c.h.b16 %v5244
    %v5928 = vunpack.c.l.b16 %v5245
    %v5929 = vunpack.c.h.b16 %v5245
    %v5930 = vunpack.c.l.b16 %v5246
    %v5931 = vunpack.c.h.b16 %v5246
    %v5932 = vunpack.c.l.b16 %v5247
    %v5933 = vunpack.c.h.b16 %v5247
    %v5934 = vunpack.c.l.b16 %v5248
    %v5935 = vunpack.c.h.b16 %v5248
    %v5936 = vunpack.c.l.b16 %v5249
    %v5937 = vunpack.c.h.b16 %v5249
    %v5938 = vunpack.c.l.b16 %v5250
    %v5939 = vunpack.c.h.b16 %v5250
    %v5940 = vunpack.c.l.b16 %v5251
    %v5941 = vunpack.c.h.b16 %v5251
    %v5942 = vunpack.c.l.b16 %v5252
    %v5943 = vunpack.c.h.b16 %v5252
    %v5944 = vunpack.c.l.b16 %v5253
    %v5945 = vunpack.c.h.b16 %v5253
    %v5946 = vunpack.c.l.b16 %v5254
    %v5947 = vunpack.c.h.b16 %v5254
    %v5948 = vunpack.c.l.b16 %v5255
    %v5949 = vunpack.c.h.b16 %v5255
    %v5950 = vunpack.c.l.b16 %v5256
    %v5951 = vunpack.c.h.b16 %v5256
    %v5952 = vunpack.c.l.b16 %v5257
    %v5953 = vunpack.c.h.b16 %v5257
    %v5954 = vunpack.c.l.b16 %v5258
    %v5955 = vunpack.c.h.b16 %v5258
    %v5956 = vunpack.c.l.b16 %v5259
    %v5957 = vunpack.c.h.b16 %v5259
    %v5958 = vunpack.c.l.b16 %v5260
    %v5959 = vunpack.c.h.b16 %v5260
    %v5960 = vunpack.c.l.b16 %v5261
    %v5961 = vunpack.c.h.b16 %v5261
    %v5962 = vunpack.c.l.b16 %v5262
    %v5963 = vunpack.c.h.b16 %v5262
    %v5964 = vunpack.c.l.b16 %v5263
    %v5965 = vunpack.c.h.b16 %v5263
    %v5966 = vunpack.c.l.b16 %v5264
    %v5967 = vunpack.c.h.b16 %v5264
    %v5968 = vunpack.c.l.b16 %v5265
    %v5969 = vunpack.c.h.b16 %v5265
    %v5970 = vunpack.c.l.b16 %v5266
    %v5971 = vunpack.c.h.b16 %v5266
    %v5972 = vunpack.c.l.b16 %v5267
    %v5973 = vunpack.c.h.b16 %v5267
    %v5974 = vunpack.c.l.b16 %v5268
    %v5975 = vunpack.c.h.b16 %v5268
    %v5976 = vunpack.c.l.b16 %v5269
    %v5977 = vunpack.c.h.b16 %v5269
    %v5978 = vunpack.c.l.b16 %v5270
    %v5979 = vunpack.c.h.b16 %v5270
    %v5980 = vunpack.c.l.b16 %v5271
    %v5981 = vunpack.c.h.b16 %v5271
    %v5982 = vunpack.c.l.b16 %v5272
    %v5983 = vunpack.c.h.b16 %v5272
    %v5984 = vunpack.c.l.b16 %v5273
    %v5985 = vunpack.c.h.b16 %v5273
    %v5986 = vunpack.c.l.b16 %v5274
    %v5987 = vunpack.c.h.b16 %v5274
    %v5988 = vunpack.c.l.b16 %v5275
    %v5989 = vunpack.c.h.b16 %v5275
    %v5990 = vunpack.c.l.b16 %v5276
    %v5991 = vunpack.c.h.b16 %v5276
    %v5992 = vunpack.c.l.b16 %v5277
    %v5993 = vunpack.c.h.b16 %v5277
    %v5994 = vunpack.c.l.b16 %v5278
    %v5995 = vunpack.c.h.b16 %v5278
    %v5996 = vunpack.c.l.b16 %v5279
    %v5997 = vunpack.c.h.b16 %v5279
    %v5998 = vunpack.c.l.b16 %v5280
    %v5999 = vunpack.c.h.b16 %v5280
    %v6000 = vunpack.c.l.b16 %v5281
    %v6001 = vunpack.c.h.b16 %v5281
    %v6002 = vunpack.c.l.b16 %v5282
    %v6003 = vunpack.c.h.b16 %v5282
    %v6004 = vunpack.c.l.b16 %v5283
    %v6005 = vunpack.c.h.b16 %v5283
    %v6006 = vunpack.c.l.b16 %v5284
    %v6007 = vunpack.c.h.b16 %v5284
    %v6008 = vunpack.c.l.b16 %v5285
    %v6009 = vunpack.c.h.b16 %v5285
    %v6010 = vunpack.c.l.b16 %v5286
    %v6011 = vunpack.c.h.b16 %v5286
    %v6012 = vunpack.c.l.b16 %v5287
    %v6013 = vunpack.c.h.b16 %v5287
    %v6014 = vunpack.c.l.b16 %v5288
    %v6015 = vunpack.c.h.b16 %v5288
    %v6016 = vunpack.c.l.b16 %v5289
    %v6017 = vunpack.c.h.b16 %v5289
    %v6018 = vunpack.c.l.b16 %v5290
    %v6019 = vunpack.c.h.b16 %v5290
    %v6020 = vunpack.c.l.b16 %v5291
    %v6021 = vunpack.c.h.b16 %v5291
    %v6022 = vunpack.c.l.b16 %v5292
    %v6023 = vunpack.c.h.b16 %v5292
    %v6024 = vunpack.c.l.b16 %v5293
    %v6025 = vunpack.c.h.b16 %v5293
    %v6026 = vunpack.c.l.b16 %v5294
    %v6027 = vunpack.c.h.b16 %v5294
    %v6028 = vunpack.c.l.b16 %v5295
    %v6029 = vunpack.c.h.b16 %v5295
    %v6030 = vunpack.c.l.b16 %v5296
    %v6031 = vunpack.c.h.b16 %v5296
    %v6032 = vunpack.c.l.b16 %v5297
    %v6033 = vunpack.c.h.b16 %v5297
    %v6034 = vunpack.c.l.b16 %v5298
    %v6035 = vunpack.c.h.b16 %v5298
    %v6036 = vunpack.c.l.b16 %v5299
    %v6037 = vunpack.c.h.b16 %v5299
    %v6038 = vunpack.c.l.b16 %v5300
    %v6039 = vunpack.c.h.b16 %v5300
    %v6040 = vunpack.c.l.b16 %v5301
    %v6041 = vunpack.c.h.b16 %v5301
    %v6042 = vunpack.c.l.b16 %v5302
    %v6043 = vunpack.c.h.b16 %v5302
    %v6044 = vunpack.c.l.b16 %v5303
    %v6045 = vunpack.c.h.b16 %v5303
    %v6046 = vunpack.c.l.b16 %v5304
    %v6047 = vunpack.c.h.b16 %v5304
    %v6048 = vunpack.c.l.b16 %v5305
    %v6049 = vunpack.c.h.b16 %v5305
    %v6050 = vunpack.c.l.b16 %v5306
    %v6051 = vunpack.c.h.b16 %v5306
    %v6052 = vunpack.c.l.b16 %v5307
    %v6053 = vunpack.c.h.b16 %v5307
    %v6054 = vunpack.c.l.b16 %v5308
    %v6055 = vunpack.c.h.b16 %v5308
    %v6056 = vunpack.c.l.b16 %v5309
    %v6057 = vunpack.c.h.b16 %v5309
    %v6058 = vunpack.c.l.b16 %v5310
    %v6059 = vunpack.c.h.b16 %v5310
    %v6060 = vunpack.c.l.b16 %v5311
    %v6061 = vunpack.c.h.b16 %v5311
    %v6062 = vunpack.c.l.b16 %v5312
    %v6063 = vunpack.c.h.b16 %v5312
    %v6064 = vunpack.c.l.b16 %v5313
    %v6065 = vunpack.c.h.b16 %v5313
    %v6066 = vunpack.c.l.b16 %v5314
    %v6067 = vunpack.c.h.b16 %v5314
    %v6068 = vunpack.c.l.b16 %v5315
    %v6069 = vunpack.c.h.b16 %v5315
    %v6070 = vunpack.c.l.b16 %v5316
    %v6071 = vunpack.c.h.b16 %v5316
    %v6072 = vunpack.c.l.b16 %v5317
    %v6073 = vunpack.c.h.b16 %v5317
    %v6074 = vunpack.c.l.b16 %v5318
    %v6075 = vunpack.c.h.b16 %v5318
    %v6076 = vunpack.c.l.b16 %v5319
    %v6077 = vunpack.c.h.b16 %v5319
    %v6078 = vunpack.c.l.b16 %v5320
    %v6079 = vunpack.c.h.b16 %v5320
    %v6080 = vunpack.c.l.b16 %v5321
    %v6081 = vunpack.c.h.b16 %v5321
    %v6082 = vunpack.c.l.b16 %v5322
    %v6083 = vunpack.c.h.b16 %v5322
    %v6084 = vunpack.c.l.b16 %v5323
    %v6085 = vunpack.c.h.b16 %v5323
    %v6086 = vunpack.c.l.b16 %v5324
    %v6087 = vunpack.c.h.b16 %v5324
    %v6088 = vunpack.c.l.b16 %v5325
    %v6089 = vunpack.c.h.b16 %v5325
    %v6090 = vunpack.c.l.b16 %v5326
    %v6091 = vunpack.c.h.b16 %v5326
    %v6092 = vunpack.c.l.b16 %v5327
    %v6093 = vunpack.c.h.b16 %v5327
    %v6094 = vunpack.c.l.b16 %v5328
    %v6095 = vunpack.c.h.b16 %v5328
    %v6096 = vunpack.c.l.b16 %v5329
    %v6097 = vunpack.c.h.b16 %v5329
    %v6098 = vunpack.c.l.b16 %v5330
    %v6099 = vunpack.c.h.b16 %v5330
    %v6100 = vunpack.c.l.b16 %v5331
    %v6101 = vunpack.c.h.b16 %v5331
    %v6102 = vunpack.c.l.b16 %v5332
    %v6103 = vunpack.c.h.b16 %v5332
    %v6104 = vunpack.c.l.b16 %v5333
    %v6105 = vunpack.c.h.b16 %v5333
    %v6106 = vunpack.c.l.b16 %v5334
    %v6107 = vunpack.c.h.b16 %v5334
    %v6108 = vunpack.c.l.b16 %v5335
    %v6109 = vunpack.c.h.b16 %v5335
    %v6110 = vunpack.c.l.b16 %v5336
    %v6111 = vunpack.c.h.b16 %v5336
    %v6112 = vunpack.c.l.b16 %v5337
    %v6113 = vunpack.c.h.b16 %v5337
    %v6114 = vunpack.c.l.b16 %v5338
    %v6115 = vunpack.c.h.b16 %v5338
    %v6116 = vunpack.c.l.b16 %v5339
    %v6117 = vunpack.c.h.b16 %v5339
    %v6118 = vunpack.c.l.b16 %v5340
    %v6119 = vunpack.c.h.b16 %v5340
    %v6120 = vunpack.c.l.b16 %v5341
    %v6121 = vunpack.c.h.b16 %v5341
    %v6122 = vunpack.c.l.b16 %v5342
    %v6123 = vunpack.c.h.b16 %v5342
    %v6124 = vunpack.c.l.b16 %v5343
    %v6125 = vunpack.c.h.b16 %v5343
    %v6126 = vunpack.c.l.b16 %v5344
    %v6127 = vunpack.c.h.b16 %v5344
    %v6128 = vunpack.c.l.b16 %v5345
    %v6129 = vunpack.c.h.b16 %v5345
    %v6130 = vunpack.c.l.b16 %v5346
    %v6131 = vunpack.c.h.b16 %v5346
    %v6132 = vunpack.c.l.b16 %v5347
    %v6133 = vunpack.c.h.b16 %v5347
    %v6134 = vunpack.c.l.b16 %v5348
    %v6135 = vunpack.c.h.b16 %v5348
    %v6136 = vunpack.c.l.b16 %v5349
    %v6137 = vunpack.c.h.b16 %v5349
    %v6138 = vunpack.c.l.b16 %v5350
    %v6139 = vunpack.c.h.b16 %v5350
    %v6140 = vunpack.c.l.b16 %v5351
    %v6141 = vunpack.c.h.b16 %v5351
    %v6142 = vunpack.c.l.b16 %v5352
    %v6143 = vunpack.c.h.b16 %v5352
    %v6144 = vunpack.c.l.b16 %v5353
    %v6145 = vunpack.c.h.b16 %v5353
    %v6146 = vunpack.c.l.b16 %v5354
    %v6147 = vunpack.c.h.b16 %v5354
    %v6148 = vunpack.c.l.b16 %v5355
    %v6149 = vunpack.c.h.b16 %v5355
    %v6150 = vunpack.c.l.b16 %v5356
    %v6151 = vunpack.c.h.b16 %v5356
    %v6152 = vunpack.c.l.b16 %v5357
    %v6153 = vunpack.c.h.b16 %v5357
    %v6154 = vunpack.c.l.b16 %v5358
    %v6155 = vunpack.c.h.b16 %v5358
    %v6156 = vunpack.c.l.b16 %v5359
    %v6157 = vunpack.c.h.b16 %v5359
    %v6158 = vunpack.c.l.b16 %v5360
    %v6159 = vunpack.c.h.b16 %v5360
    %v6160 = vunpack.c.l.b16 %v5361
    %v6161 = vunpack.c.h.b16 %v5361
    %v6162 = vunpack.c.l.b16 %v5362
    %v6163 = vunpack.c.h.b16 %v5362
    %v6164 = vunpack.c.l.b16 %v5363
    %v6165 = vunpack.c.h.b16 %v5363
    %v6166 = vunpack.c.l.b16 %v5364
    %v6167 = vunpack.c.h.b16 %v5364
    %v6168 = vunpack.c.l.b16 %v5365
    %v6169 = vunpack.c.h.b16 %v5365
    %v6170 = vunpack.c.l.b16 %v5366
    %v6171 = vunpack.c.h.b16 %v5366
    %v6172 = vunpack.c.l.b16 %v5367
    %v6173 = vunpack.c.h.b16 %v5367
    %v6174 = vunpack.c.l.b16 %v5368
    %v6175 = vunpack.c.h.b16 %v5368
    %v6176 = vunpack.c.l.b16 %v5369
    %v6177 = vunpack.c.h.b16 %v5369
    %v6178 = vunpack.c.l.b16 %v5370
    %v6179 = vunpack.c.h.b16 %v5370
    %v6180 = vunpack.c.l.b16 %v5371
    %v6181 = vunpack.c.h.b16 %v5371
    %v6182 = vpack.c.b16 %v5678, %v5670
    %v6183 = vpack.c.b16 %v5679, %v5671
    %v6184 = vpack.c.b16 %v5680, %v5672
    %v6185 = vpack.c.b16 %v5681, %v5673
    %v6186 = vpack.c.b16 %v5682, %v5674
    %v6187 = vpack.c.b16 %v5683, %v5675
    %v6188 = vpack.c.b16 %v5684, %v5676
    %v6189 = vpack.c.b16 %v5685, %v5677
    %v6190 = vpack.c.b16 %v5694, %v5686
    %v6191 = vpack.c.b16 %v5695, %v5687
    %v6192 = vpack.c.b16 %v5696, %v5688
    %v6193 = vpack.c.b16 %v5697, %v5689
    %v6194 = vpack.c.b16 %v5698, %v5690
    %v6195 = vpack.c.b16 %v5699, %v5691
    %v6196 = vpack.c.b16 %v5700, %v5692
    %v6197 = vpack.c.b16 %v5701, %v5693
    %v6198 = vpack.c.b16 %v5710, %v5702
    %v6199 = vpack.c.b16 %v5711, %v5703
    %v6200 = vpack.c.b16 %v5712, %v5704
    %v6201 = vpack.c.b16 %v5713, %v5705
    %v6202 = vpack.c.b16 %v5714, %v5706
    %v6203 = vpack.c.b16 %v5715, %v5707
    %v6204 = vpack.c.b16 %v5716, %v5708
    %v6205 = vpack.c.b16 %v5717, %v5709
    %v6206 = vpack.c.b16 %v5726, %v5718
    %v6207 = vpack.c.b16 %v5727, %v5719
    %v6208 = vpack.c.b16 %v5728, %v5720
    %v6209 = vpack.c.b16 %v5729, %v5721
    %v6210 = vpack.c.b16 %v5730, %v5722
    %v6211 = vpack.c.b16 %v5731, %v5723
    %v6212 = vpack.c.b16 %v5732, %v5724
    %v6213 = vpack.c.b16 %v5733, %v5725
    %v6214 = vpack.c.b16 %v5742, %v5734
    %v6215 = vpack.c.b16 %v5743, %v5735
    %v6216 = vpack.c.b16 %v5744, %v5736
    %v6217 = vpack.c.b16 %v5745, %v5737
    %v6218 = vpack.c.b16 %v5746, %v5738
    %v6219 = vpack.c.b16 %v5747, %v5739
    %v6220 = vpack.c.b16 %v5748, %v5740
    %v6221 = vpack.c.b16 %v5749, %v5741
    %v6222 = vpack.c.b16 %v5758, %v5750
    %v6223 = vpack.c.b16 %v5759, %v5751
    %v6224 = vpack.c.b16 %v5760, %v5752
    %v6225 = vpack.c.b16 %v5761, %v5753
    %v6226 = vpack.c.b16 %v5762, %v5754
    %v6227 = vpack.c.b16 %v5763, %v5755
    %v6228 = vpack.c.b16 %v5764, %v5756
    %v6229 = vpack.c.b16 %v5765, %v5757
    %v6230 = vpack.c.b16 %v5774, %v5766
    %v6231 = vpack.c.b16 %v5775, %v5767
    %v6232 = vpack.c.b16 %v5776, %v5768
    %v6233 = vpack.c.b16 %v5777, %v5769
    %v6234 = vpack.c.b16 %v5778, %v5770
    %v6235 = vpack.c.b16 %v5779, %v5771
    %v6236 = vpack.c.b16 %v5780, %v5772
    %v6237 = vpack.c.b16 %v5781, %v5773
    %v6238 = vpack.c.b16 %v5790, %v5782
    %v6239 = vpack.c.b16 %v5791, %v5783
    %v6240 = vpack.c.b16 %v5792, %v5784
    %v6241 = vpack.c.b16 %v5793, %v5785
    %v6242 = vpack.c.b16 %v5794, %v5786
    %v6243 = vpack.c.b16 %v5795, %v5787
    %v6244 = vpack.c.b16 %v5796, %v5788
    %v6245 = vpack.c.b16 %v5797, %v5789
    %v6246 = vpack.c.b16 %v5806, %v5798
    %v6247 = vpack.c.b16 %v5807, %v5799
    %v6248 = vpack.c.b16 %v5808, %v5800
    %v6249 = vpack.c.b16 %v5809, %v5801
    %v6250 = vpack.c.b16 %v5810, %v5802
    %v6251 = vpack.c.b16 %v5811, %v5803
    %v6252 = vpack.c.b16 %v5812, %v5804
    %v6253 = vpack.c.b16 %v5813, %v5805
    %v6254 = vpack.c.b16 %v5822, %v5814
    %v6255 = vpack.c.b16 %v5823, %v5815
    %v6256 = vpack.c.b16 %v5824, %v5816
    %v6257 = vpack.c.b16 %v5825, %v5817
    %v6258 = vpack.c.b16 %v5826, %v5818
    %v6259 = vpack.c.b16 %v5827, %v5819
    %v6260 = vpack.c.b16 %v5828, %v5820
    %v6261 = vpack.c.b16 %v5829, %v5821
    %v6262 = vpack.c.b16 %v5838, %v5830
    %v6263 = vpack.c.b16 %v5839, %v5831
    %v6264 = vpack.c.b16 %v5840, %v5832
    %v6265 = vpack.c.b16 %v5841, %v5833
    %v6266 = vpack.c.b16 %v5842, %v5834
    %v6267 = vpack.c.b16 %v5843, %v5835
    %v6268 = vpack.c.b16 %v5844, %v5836
    %v6269 = vpack.c.b16 %v5845, %v5837
    %v6270 = vpack.c.b16 %v5854, %v5846
    %v6271 = vpack.c.b16 %v5855, %v5847
    %v6272 = vpack.c.b16 %v5856, %v5848
    %v6273 = vpack.c.b16 %v5857, %v5849
    %v6274 = vpack.c.b16 %v5858, %v5850
    %v6275 = vpack.c.b16 %v5859, %v5851
    %v6276 = vpack.c.b16 %v5860, %v5852
    %v6277 = vpack.c.b16 %v5861, %v5853
    %v6278 = vpack.c.b16 %v5870, %v5862
    %v6279 = vpack.c.b16 %v5871, %v5863
    %v6280 = vpack.c.b16 %v5872, %v5864
    %v6281 = vpack.c.b16 %v5873, %v5865
    %v6282 = vpack.c.b16 %v5874, %v5866
    %v6283 = vpack.c.b16 %v5875, %v5867
    %v6284 = vpack.c.b16 %v5876, %v5868
    %v6285 = vpack.c.b16 %v5877, %v5869
    %v6286 = vpack.c.b16 %v5886, %v5878
    %v6287 = vpack.c.b16 %v5887, %v5879
    %v6288 = vpack.c.b16 %v5888, %v5880
    %v6289 = vpack.c.b16 %v5889, %v5881
    %v6290 = vpack.c.b16 %v5890, %v5882
    %v6291 = vpack.c.b16 %v5891, %v5883
    %v6292 = vpack.c.b16 %v5892, %v5884
    %v6293 = vpack.c.b16 %v5893, %v5885
    %v6294 = vpack.c.b16 %v5902, %v5894
    %v6295 = vpack.c.b16 %v5903, %v5895
    %v6296 = vpack.c.b16 %v5904, %v5896
    %v6297 = vpack.c.b16 %v5905, %v5897
    %v6298 = vpack.c.b16 %v5906, %v5898
    %v6299 = vpack.c.b16 %v5907, %v5899
    %v6300 = vpack.c.b16 %v5908, %v5900
    %v6301 = vpack.c.b16 %v5909, %v5901
    %v6302 = vpack.c.b16 %v5918, %v5910
    %v6303 = vpack.c.b16 %v5919, %v5911
    %v6304 = vpack.c.b16 %v5920, %v5912
    %v6305 = vpack.c.b16 %v5921, %v5913
    %v6306 = vpack.c.b16 %v5922, %v5914
    %v6307 = vpack.c.b16 %v5923, %v5915
    %v6308 = vpack.c.b16 %v5924, %v5916
    %v6309 = vpack.c.b16 %v5925, %v5917
    %v6310 = vpack.c.b16 %v5934, %v5926
    %v6311 = vpack.c.b16 %v5935, %v5927
    %v6312 = vpack.c.b16 %v5936, %v5928
    %v6313 = vpack.c.b16 %v5937, %v5929
    %v6314 = vpack.c.b16 %v5938, %v5930
    %v6315 = vpack.c.b16 %v5939, %v5931
    %v6316 = vpack.c.b16 %v5940, %v5932
    %v6317 = vpack.c.b16 %v5941, %v5933
    %v6318 = vpack.c.b16 %v5950, %v5942
    %v6319 = vpack.c.b16 %v5951, %v5943
    %v6320 = vpack.c.b16 %v5952, %v5944
    %v6321 = vpack.c.b16 %v5953, %v5945
    %v6322 = vpack.c.b16 %v5954, %v5946
    %v6323 = vpack.c.b16 %v5955, %v5947
    %v6324 = vpack.c.b16 %v5956, %v5948
    %v6325 = vpack.c.b16 %v5957, %v5949
    %v6326 = vpack.c.b16 %v5966, %v5958
    %v6327 = vpack.c.b16 %v5967, %v5959
    %v6328 = vpack.c.b16 %v5968, %v5960
    %v6329 = vpack.c.b16 %v5969, %v5961
    %v6330 = vpack.c.b16 %v5970, %v5962
    %v6331 = vpack.c.b16 %v5971, %v5963
    %v6332 = vpack.c.b16 %v5972, %v5964
    %v6333 = vpack.c.b16 %v5973, %v5965
    %v6334 = vpack.c.b16 %v5982, %v5974
    %v6335 = vpack.c.b16 %v5983, %v5975
    %v6336 = vpack.c.b16 %v5984, %v5976
    %v6337 = vpack.c.b16 %v5985, %v5977
    %v6338 = vpack.c.b16 %v5986, %v5978
    %v6339 = vpack.c.b16 %v5987, %v5979
    %v6340 = vpack.c.b16 %v5988, %v5980
    %v6341 = vpack.c.b16 %v5989, %v5981
    %v6342 = vpack.c.b16 %v5998, %v5990
    %v6343 = vpack.c.b16 %v5999, %v5991
    %v6344 = vpack.c.b16 %v6000, %v5992
    %v6345 = vpack.c.b16 %v6001, %v5993
    %v6346 = vpack.c.b16 %v6002, %v5994
    %v6347 = vpack.c.b16 %v6003, %v5995
    %v6348 = vpack.c.b16 %v6004, %v5996
    %v6349 = vpack.c.b16 %v6005, %v5997
    %v6350 = vpack.c.b16 %v6014, %v6006
    %v6351 = vpack.c.b16 %v6015, %v6007
    %v6352 = vpack.c.b16 %v6016, %v6008
    %v6353 = vpack.c.b16 %v6017, %v6009
    %v6354 = vpack.c.b16 %v6018, %v6010
    %v6355 = vpack.c.b16 %v6019, %v6011
    %v6356 = vpack.c.b16 %v6020, %v6012
    %v6357 = vpack.c.b16 %v6021, %v6013
    %v6358 = vpack.c.b16 %v6030, %v6022
    %v6359 = vpack.c.b16 %v6031, %v6023
    %v6360 = vpack.c.b16 %v6032, %v6024
    %v6361 = vpack.c.b16 %v6033, %v6025
    %v6362 = vpack.c.b16 %v6034, %v6026
    %v6363 = vpack.c.b16 %v6035, %v6027
    %v6364 = vpack.c.b16 %v6036, %v6028
    %v6365 = vpack.c.b16 %v6037, %v6029
    %v6366 = vpack.c.b16 %v6046, %v6038
    %v6367 = vpack.c.b16 %v6047, %v6039
    %v6368 = vpack.c.b16 %v6048, %v6040
    %v6369 = vpack.c.b16 %v6049, %v6041
    %v6370 = vpack.c.b16 %v6050, %v6042
    %v6371 = vpack.c.b16 %v6051, %v6043
    %v6372 = vpack.c.b16 %v6052, %v6044
    %v6373 = vpack.c.b16 %v6053, %v6045
    %v6374 = vpack.c.b16 %v6062, %v6054
    %v6375 = vpack.c.b16 %v6063, %v6055
    %v6376 = vpack.c.b16 %v6064, %v6056
    %v6377 = vpack.c.b16 %v6065, %v6057
    %v6378 = vpack.c.b16 %v6066, %v6058
    %v6379 = vpack.c.b16 %v6067, %v6059
    %v6380 = vpack.c.b16 %v6068, %v6060
    %v6381 = vpack.c.b16 %v6069, %v6061
    %v6382 = vpack.c.b16 %v6078, %v6070
    %v6383 = vpack.c.b16 %v6079, %v6071
    %v6384 = vpack.c.b16 %v6080, %v6072
    %v6385 = vpack.c.b16 %v6081, %v6073
    %v6386 = vpack.c.b16 %v6082, %v6074
    %v6387 = vpack.c.b16 %v6083, %v6075
    %v6388 = vpack.c.b16 %v6084, %v6076
    %v6389 = vpack.c.b16 %v6085, %v6077
    %v6390 = vpack.c.b16 %v6094, %v6086
    %v6391 = vpack.c.b16 %v6095, %v6087
    %v6392 = vpack.c.b16 %v6096, %v6088
    %v6393 = vpack.c.b16 %v6097, %v6089
    %v6394 = vpack.c.b16 %v6098, %v6090
    %v6395 = vpack.c.b16 %v6099, %v6091
    %v6396 = vpack.c.b16 %v6100, %v6092
    %v6397 = vpack.c.b16 %v6101, %v6093
    %v6398 = vpack.c.b16 %v6110, %v6102
    %v6399 = vpack.c.b16 %v6111, %v6103
    %v6400 = vpack.c.b16 %v6112, %v6104
    %v6401 = vpack.c.b16 %v6113, %v6105
    %v6402 = vpack.c.b16 %v6114, %v6106
    %v6403 = vpack.c.b16 %v6115, %v6107
    %v6404 = vpack.c.b16 %v6116, %v6108
    %v6405 = vpack.c.b16 %v6117, %v6109
    %v6406 = vpack.c.b16 %v6126, %v6118
    %v6407 = vpack.c.b16 %v6127, %v6119
    %v6408 = vpack.c.b16 %v6128, %v6120
    %v6409 = vpack.c.b16 %v6129, %v6121
    %v6410 = vpack.c.b16 %v6130, %v6122
    %v6411 = vpack.c.b16 %v6131, %v6123
    %v6412 = vpack.c.b16 %v6132, %v6124
    %v6413 = vpack.c.b16 %v6133, %v6125
    %v6414 = vpack.c.b16 %v6142, %v6134
    %v6415 = vpack.c.b16 %v6143, %v6135
    %v6416 = vpack.c.b16 %v6144, %v6136
    %v6417 = vpack.c.b16 %v6145, %v6137
    %v6418 = vpack.c.b16 %v6146, %v6138
    %v6419 = vpack.c.b16 %v6147, %v6139
    %v6420 = vpack.c.b16 %v6148, %v6140
    %v6421 = vpack.c.b16 %v6149, %v6141
    %v6422 = vpack.c.b16 %v6158, %v6150
    %v6423 = vpack.c.b16 %v6159, %v6151
    %v6424 = vpack.c.b16 %v6160, %v6152
    %v6425 = vpack.c.b16 %v6161, %v6153
    %v6426 = vpack.c.b16 %v6162, %v6154
    %v6427 = vpack.c.b16 %v6163, %v6155
    %v6428 = vpack.c.b16 %v6164, %v6156
    %v6429 = vpack.c.b16 %v6165, %v6157
    %v6430 = vpack.c.b16 %v6174, %v6166
    %v6431 = vpack.c.b16 %v6175, %v6167
    %v6432 = vpack.c.b16 %v6176, %v6168
    %v6433 = vpack.c.b16 %v6177, %v6169
    %v6434 = vpack.c.b16 %v6178, %v6170
    %v6435 = vpack.c.b16 %v6179, %v6171
    %v6436 = vpack.c.b16 %v6180, %v6172
    %v6437 = vpack.c.b16 %v6181, %v6173
    %6694 = vmatprep.subr.bf16.mxu0 %v6239
    %6695 = vmatpush1.bf16.msra.mxu0 %v6238
    %6696 = vmatprep.subr.bf16.mxu0 %v6231
    %6697 = vmatpush1.bf16.msra.mxu0 %v6230
    %6698 = vmatprep.subr.bf16.mxu0 %v6223
    %6699 = vmatpush1.bf16.msra.mxu0 %v6222
    %6700 = vmatprep.subr.bf16.mxu0 %v6215
    %6701 = vmatpush1.bf16.msra.mxu0 %v6214
    %6702 = vmatprep.subr.bf16.mxu0 %v6207
    %6703 = vmatpush1.bf16.msra.mxu0 %v6206
    %6704 = vmatprep.subr.bf16.mxu0 %v6199
    %6705 = vmatpush1.bf16.msra.mxu0 %v6198
    %6706 = vmatprep.subr.bf16.mxu0 %v6191
    %6707 = vmatpush1.bf16.msra.mxu0 %v6190
    %6708 = vmatprep.subr.bf16.mxu0 %v6183
    %6709 = vmatpush1.bf16.msra.mxu0 %v6182
    %6710 = vmatprep.subr.bf16.mxu0 %v6303
    %6711 = vmatpush2.bf16.msra.mxu0 %v6302
    %6712 = vmatprep.subr.bf16.mxu0 %v6295
    %6713 = vmatpush2.bf16.msra.mxu0 %v6294
    %6714 = vmatprep.subr.bf16.mxu0 %v6287
    %6715 = vmatpush2.bf16.msra.mxu0 %v6286
    %6716 = vmatprep.subr.bf16.mxu0 %v6279
    %6717 = vmatpush2.bf16.msra.mxu0 %v6278
    %6718 = vmatprep.subr.bf16.mxu0 %v6271
    %6719 = vmatpush2.bf16.msra.mxu0 %v6270
    %6720 = vmatprep.subr.bf16.mxu0 %v6263
    %6721 = vmatpush2.bf16.msra.mxu0 %v6262
    %6722 = vmatprep.subr.bf16.mxu0 %v6255
    %6723 = vmatpush2.bf16.msra.mxu0 %v6254
    %6724 = vmatprep.subr.bf16.mxu0 %v6247
    %6725 = vmatpush2.bf16.msra.mxu0 %v6246
    %6726 = vmatprep.mubr.bf16.mxu0 %v5109
    %6727 = vmatmul.mubr.bf16.gmra.mxu0 %v5108
    %v6728 = vpop.f32.mrf.mxu0
    %v6729 = vadd.f32 %v5377, %v6728
    %v6730 = vpop.f32.mrf.mxu0
    %v6731 = vadd.f32 %v5381, %v6730
    %v6732 = vpop.f32.mrf.mxu0
    %v6733 = vadd.f32 %v5377, %v6732
    %v6734 = vpop.f32.mrf.mxu0
    %v6735 = vadd.f32 %v5381, %v6734
    %6736 = vmatprep.mubr.bf16.mxu0 %v5113
    %6737 = vmatmul.mubr.bf16.gmra.mxu0 %v5112
    %v6738 = vpop.f32.mrf.mxu0
    %v6739 = vadd.f32 %v5377, %v6738
    %v6740 = vpop.f32.mrf.mxu0
    %v6741 = vadd.f32 %v5381, %v6740
    %v6742 = vpop.f32.mrf.mxu0
    %v6743 = vadd.f32 %v5377, %v6742
    %v6744 = vpop.f32.mrf.mxu0
    %v6745 = vadd.f32 %v5381, %v6744
    %6746 = vdwg.mxu0
    %6747 = vmatprep.subr.bf16.mxu0 %v6367
    %6748 = vmatpush1.bf16.msra.mxu0 %v6366
    %6749 = vmatprep.subr.bf16.mxu0 %v6359
    %6750 = vmatpush1.bf16.msra.mxu0 %v6358
    %6751 = vmatprep.subr.bf16.mxu0 %v6351
    %6752 = vmatpush1.bf16.msra.mxu0 %v6350
    %6753 = vmatprep.subr.bf16.mxu0 %v6343
    %6754 = vmatpush1.bf16.msra.mxu0 %v6342
    %6755 = vmatprep.subr.bf16.mxu0 %v6335
    %6756 = vmatpush1.bf16.msra.mxu0 %v6334
    %6757 = vmatprep.subr.bf16.mxu0 %v6327
    %6758 = vmatpush1.bf16.msra.mxu0 %v6326
    %6759 = vmatprep.subr.bf16.mxu0 %v6319
    %6760 = vmatpush1.bf16.msra.mxu0 %v6318
    %6761 = vmatprep.subr.bf16.mxu0 %v6311
    %6762 = vmatpush1.bf16.msra.mxu0 %v6310
    %6763 = vmatprep.subr.bf16.mxu0 %v6431
    %6764 = vmatpush2.bf16.msra.mxu0 %v6430
    %6765 = vmatprep.subr.bf16.mxu0 %v6423
    %6766 = vmatpush2.bf16.msra.mxu0 %v6422
    %6767 = vmatprep.subr.bf16.mxu0 %v6415
    %6768 = vmatpush2.bf16.msra.mxu0 %v6414
    %6769 = vmatprep.subr.bf16.mxu0 %v6407
    %6770 = vmatpush2.bf16.msra.mxu0 %v6406
    %6771 = vmatprep.subr.bf16.mxu0 %v6399
    %6772 = vmatpush2.bf16.msra.mxu0 %v6398
    %6773 = vmatprep.subr.bf16.mxu0 %v6391
    %6774 = vmatpush2.bf16.msra.mxu0 %v6390
    %6775 = vmatprep.subr.bf16.mxu0 %v6383
    %6776 = vmatpush2.bf16.msra.mxu0 %v6382
    %6777 = vmatprep.subr.bf16.mxu0 %v6375
    %6778 = vmatpush2.bf16.msra.mxu0 %v6374
    %6779 = vmatprep.mubr.bf16.mxu0 %v5111
    %6780 = vmatmul.mubr.bf16.gmra.mxu0 %v5110
    %v6781 = vpop.f32.mrf.mxu0
    %v6782 = vadd.f32 %v6729, %v6781
    %v6783 = vpop.f32.mrf.mxu0
    %v6784 = vadd.f32 %v6731, %v6783
    %v6785 = vpop.f32.mrf.mxu0
    %v6786 = vadd.f32 %v6733, %v6785
    %v6787 = vpop.f32.mrf.mxu0
    %v6788 = vadd.f32 %v6735, %v6787
    %6789 = vmatprep.mubr.bf16.mxu0 %v5115
    %6790 = vmatmul.mubr.bf16.gmra.mxu0 %v5114
    %v6791 = vpop.f32.mrf.mxu0
    %v6792 = vadd.f32 %v6739, %v6791
    %v6793 = vpop.f32.mrf.mxu0
    %v6794 = vadd.f32 %v6741, %v6793
    %v6795 = vpop.f32.mrf.mxu0
    %v6796 = vadd.f32 %v6743, %v6795
    %v6797 = vpop.f32.mrf.mxu0
    %v6798 = vadd.f32 %v6745, %v6797
    %6799 = vdwg.mxu0
    %6800 = vmatprep.subr.bf16.mxu0 %v6241
    %6801 = vmatpush1.bf16.msra.mxu0 %v6240
    %6802 = vmatprep.subr.bf16.mxu0 %v6233
    %6803 = vmatpush1.bf16.msra.mxu0 %v6232
    %6804 = vmatprep.subr.bf16.mxu0 %v6225
    %6805 = vmatpush1.bf16.msra.mxu0 %v6224
    %6806 = vmatprep.subr.bf16.mxu0 %v6217
    %6807 = vmatpush1.bf16.msra.mxu0 %v6216
    %6808 = vmatprep.subr.bf16.mxu0 %v6209
    %6809 = vmatpush1.bf16.msra.mxu0 %v6208
    %6810 = vmatprep.subr.bf16.mxu0 %v6201
    %6811 = vmatpush1.bf16.msra.mxu0 %v6200
    %6812 = vmatprep.subr.bf16.mxu0 %v6193
    %6813 = vmatpush1.bf16.msra.mxu0 %v6192
    %6814 = vmatprep.subr.bf16.mxu0 %v6185
    %6815 = vmatpush1.bf16.msra.mxu0 %v6184
    %6816 = vmatprep.subr.bf16.mxu0 %v6305
    %6817 = vmatpush2.bf16.msra.mxu0 %v6304
    %6818 = vmatprep.subr.bf16.mxu0 %v6297
    %6819 = vmatpush2.bf16.msra.mxu0 %v6296
    %6820 = vmatprep.subr.bf16.mxu0 %v6289
    %6821 = vmatpush2.bf16.msra.mxu0 %v6288
    %6822 = vmatprep.subr.bf16.mxu0 %v6281
    %6823 = vmatpush2.bf16.msra.mxu0 %v6280
    %6824 = vmatprep.subr.bf16.mxu0 %v6273
    %6825 = vmatpush2.bf16.msra.mxu0 %v6272
    %6826 = vmatprep.subr.bf16.mxu0 %v6265
    %6827 = vmatpush2.bf16.msra.mxu0 %v6264
    %6828 = vmatprep.subr.bf16.mxu0 %v6257
    %6829 = vmatpush2.bf16.msra.mxu0 %v6256
    %6830 = vmatprep.subr.bf16.mxu0 %v6249
    %6831 = vmatpush2.bf16.msra.mxu0 %v6248
    %6832 = vmatprep.mubr.bf16.mxu0 %v5109
    %6833 = vmatmul.mubr.bf16.gmra.mxu0 %v5108
    %v6834 = vpop.f32.mrf.mxu0
    %v6835 = vadd.f32 %v5385, %v6834
    %v6836 = vpop.f32.mrf.mxu0
    %v6837 = vadd.f32 %v5389, %v6836
    %v6838 = vpop.f32.mrf.mxu0
    %v6839 = vadd.f32 %v5385, %v6838
    %v6840 = vpop.f32.mrf.mxu0
    %v6841 = vadd.f32 %v5389, %v6840
    %6842 = vmatprep.mubr.bf16.mxu0 %v5113
    %6843 = vmatmul.mubr.bf16.gmra.mxu0 %v5112
    %v6844 = vpop.f32.mrf.mxu0
    %v6845 = vadd.f32 %v5385, %v6844
    %v6846 = vpop.f32.mrf.mxu0
    %v6847 = vadd.f32 %v5389, %v6846
    %v6848 = vpop.f32.mrf.mxu0
    %v6849 = vadd.f32 %v5385, %v6848
    %v6850 = vpop.f32.mrf.mxu0
    %v6851 = vadd.f32 %v5389, %v6850
    %6852 = vdwg.mxu0
    %6853 = vmatprep.subr.bf16.mxu0 %v6369
    %6854 = vmatpush1.bf16.msra.mxu0 %v6368
    %6855 = vmatprep.subr.bf16.mxu0 %v6361
    %6856 = vmatpush1.bf16.msra.mxu0 %v6360
    %6857 = vmatprep.subr.bf16.mxu0 %v6353
    %6858 = vmatpush1.bf16.msra.mxu0 %v6352
    %6859 = vmatprep.subr.bf16.mxu0 %v6345
    %6860 = vmatpush1.bf16.msra.mxu0 %v6344
    %6861 = vmatprep.subr.bf16.mxu0 %v6337
    %6862 = vmatpush1.bf16.msra.mxu0 %v6336
    %6863 = vmatprep.subr.bf16.mxu0 %v6329
    %6864 = vmatpush1.bf16.msra.mxu0 %v6328
    %6865 = vmatprep.subr.bf16.mxu0 %v6321
    %6866 = vmatpush1.bf16.msra.mxu0 %v6320
    %6867 = vmatprep.subr.bf16.mxu0 %v6313
    %6868 = vmatpush1.bf16.msra.mxu0 %v6312
    %6869 = vmatprep.subr.bf16.mxu0 %v6433
    %6870 = vmatpush2.bf16.msra.mxu0 %v6432
    %6871 = vmatprep.subr.bf16.mxu0 %v6425
    %6872 = vmatpush2.bf16.msra.mxu0 %v6424
    %6873 = vmatprep.subr.bf16.mxu0 %v6417
    %6874 = vmatpush2.bf16.msra.mxu0 %v6416
    %6875 = vmatprep.subr.bf16.mxu0 %v6409
    %6876 = vmatpush2.bf16.msra.mxu0 %v6408
    %6877 = vmatprep.subr.bf16.mxu0 %v6401
    %6878 = vmatpush2.bf16.msra.mxu0 %v6400
    %6879 = vmatprep.subr.bf16.mxu0 %v6393
    %6880 = vmatpush2.bf16.msra.mxu0 %v6392
    %6881 = vmatprep.subr.bf16.mxu0 %v6385
    %6882 = vmatpush2.bf16.msra.mxu0 %v6384
    %6883 = vmatprep.subr.bf16.mxu0 %v6377
    %6884 = vmatpush2.bf16.msra.mxu0 %v6376
    %6885 = vmatprep.mubr.bf16.mxu0 %v5111
    %6886 = vmatmul.mubr.bf16.gmra.mxu0 %v5110
    %v6887 = vpop.f32.mrf.mxu0
    %v6888 = vadd.f32 %v6835, %v6887
    %v6889 = vpop.f32.mrf.mxu0
    %v6890 = vadd.f32 %v6837, %v6889
    %v6891 = vpop.f32.mrf.mxu0
    %v6892 = vadd.f32 %v6839, %v6891
    %v6893 = vpop.f32.mrf.mxu0
    %v6894 = vadd.f32 %v6841, %v6893
    %6895 = vmatprep.mubr.bf16.mxu0 %v5115
    %6896 = vmatmul.mubr.bf16.gmra.mxu0 %v5114
    %v6897 = vpop.f32.mrf.mxu0
    %v6898 = vadd.f32 %v6845, %v6897
    %v6899 = vpop.f32.mrf.mxu0
    %v6900 = vadd.f32 %v6847, %v6899
    %v6901 = vpop.f32.mrf.mxu0
    %v6902 = vadd.f32 %v6849, %v6901
    %v6903 = vpop.f32.mrf.mxu0
    %v6904 = vadd.f32 %v6851, %v6903
    %6905 = vdwg.mxu0
    %6906 = vmatprep.subr.bf16.mxu0 %v6243
    %6907 = vmatpush1.bf16.msra.mxu0 %v6242
    %6908 = vmatprep.subr.bf16.mxu0 %v6235
    %6909 = vmatpush1.bf16.msra.mxu0 %v6234
    %6910 = vmatprep.subr.bf16.mxu0 %v6227
    %6911 = vmatpush1.bf16.msra.mxu0 %v6226
    %6912 = vmatprep.subr.bf16.mxu0 %v6219
    %6913 = vmatpush1.bf16.msra.mxu0 %v6218
    %6914 = vmatprep.subr.bf16.mxu0 %v6211
    %6915 = vmatpush1.bf16.msra.mxu0 %v6210
    %6916 = vmatprep.subr.bf16.mxu0 %v6203
    %6917 = vmatpush1.bf16.msra.mxu0 %v6202
    %6918 = vmatprep.subr.bf16.mxu0 %v6195
    %6919 = vmatpush1.bf16.msra.mxu0 %v6194
    %6920 = vmatprep.subr.bf16.mxu0 %v6187
    %6921 = vmatpush1.bf16.msra.mxu0 %v6186
    %6922 = vmatprep.subr.bf16.mxu0 %v6307
    %6923 = vmatpush2.bf16.msra.mxu0 %v6306
    %6924 = vmatprep.subr.bf16.mxu0 %v6299
    %6925 = vmatpush2.bf16.msra.mxu0 %v6298
    %6926 = vmatprep.subr.bf16.mxu0 %v6291
    %6927 = vmatpush2.bf16.msra.mxu0 %v6290
    %6928 = vmatprep.subr.bf16.mxu0 %v6283
    %6929 = vmatpush2.bf16.msra.mxu0 %v6282
    %6930 = vmatprep.subr.bf16.mxu0 %v6275
    %6931 = vmatpush2.bf16.msra.mxu0 %v6274
    %6932 = vmatprep.subr.bf16.mxu0 %v6267
    %6933 = vmatpush2.bf16.msra.mxu0 %v6266
    %6934 = vmatprep.subr.bf16.mxu0 %v6259
    %6935 = vmatpush2.bf16.msra.mxu0 %v6258
    %6936 = vmatprep.subr.bf16.mxu0 %v6251
    %6937 = vmatpush2.bf16.msra.mxu0 %v6250
    %6938 = vmatprep.mubr.bf16.mxu0 %v5109
    %6939 = vmatmul.mubr.bf16.gmra.mxu0 %v5108
    %v6940 = vpop.f32.mrf.mxu0
    %v6941 = vadd.f32 %v5393, %v6940
    %v6942 = vpop.f32.mrf.mxu0
    %v6943 = vadd.f32 %v5397, %v6942
    %v6944 = vpop.f32.mrf.mxu0
    %v6945 = vadd.f32 %v5393, %v6944
    %v6946 = vpop.f32.mrf.mxu0
    %v6947 = vadd.f32 %v5397, %v6946
    %6948 = vmatprep.mubr.bf16.mxu0 %v5113
    %6949 = vmatmul.mubr.bf16.gmra.mxu0 %v5112
    %v6950 = vpop.f32.mrf.mxu0
    %v6951 = vadd.f32 %v5393, %v6950
    %v6952 = vpop.f32.mrf.mxu0
    %v6953 = vadd.f32 %v5397, %v6952
    %v6954 = vpop.f32.mrf.mxu0
    %v6955 = vadd.f32 %v5393, %v6954
    %v6956 = vpop.f32.mrf.mxu0
    %v6957 = vadd.f32 %v5397, %v6956
    %6958 = vdwg.mxu0
    %6959 = vmatprep.subr.bf16.mxu0 %v6371
    %6960 = vmatpush1.bf16.msra.mxu0 %v6370
    %6961 = vmatprep.subr.bf16.mxu0 %v6363
    %6962 = vmatpush1.bf16.msra.mxu0 %v6362
    %6963 = vmatprep.subr.bf16.mxu0 %v6355
    %6964 = vmatpush1.bf16.msra.mxu0 %v6354
    %6965 = vmatprep.subr.bf16.mxu0 %v6347
    %6966 = vmatpush1.bf16.msra.mxu0 %v6346
    %6967 = vmatprep.subr.bf16.mxu0 %v6339
    %6968 = vmatpush1.bf16.msra.mxu0 %v6338
    %6969 = vmatprep.subr.bf16.mxu0 %v6331
    %6970 = vmatpush1.bf16.msra.mxu0 %v6330
    %6971 = vmatprep.subr.bf16.mxu0 %v6323
    %6972 = vmatpush1.bf16.msra.mxu0 %v6322
    %6973 = vmatprep.subr.bf16.mxu0 %v6315
    %6974 = vmatpush1.bf16.msra.mxu0 %v6314
    %6975 = vmatprep.subr.bf16.mxu0 %v6435
    %6976 = vmatpush2.bf16.msra.mxu0 %v6434
    %6977 = vmatprep.subr.bf16.mxu0 %v6427
    %6978 = vmatpush2.bf16.msra.mxu0 %v6426
    %6979 = vmatprep.subr.bf16.mxu0 %v6419
    %6980 = vmatpush2.bf16.msra.mxu0 %v6418
    %6981 = vmatprep.subr.bf16.mxu0 %v6411
    %6982 = vmatpush2.bf16.msra.mxu0 %v6410
    %6983 = vmatprep.subr.bf16.mxu0 %v6403
    %6984 = vmatpush2.bf16.msra.mxu0 %v6402
    %6985 = vmatprep.subr.bf16.mxu0 %v6395
    %6986 = vmatpush2.bf16.msra.mxu0 %v6394
    %6987 = vmatprep.subr.bf16.mxu0 %v6387
    %6988 = vmatpush2.bf16.msra.mxu0 %v6386
    %6989 = vmatprep.subr.bf16.mxu0 %v6379
    %6990 = vmatpush2.bf16.msra.mxu0 %v6378
    %6991 = vmatprep.mubr.bf16.mxu0 %v5111
    %6992 = vmatmul.mubr.bf16.gmra.mxu0 %v5110
    %v6993 = vpop.f32.mrf.mxu0
    %v6994 = vadd.f32 %v6941, %v6993
    %v6995 = vpop.f32.mrf.mxu0
    %v6996 = vadd.f32 %v6943, %v6995
    %v6997 = vpop.f32.mrf.mxu0
    %v6998 = vadd.f32 %v6945, %v6997
    %v6999 = vpop.f32.mrf.mxu0
    %v7000 = vadd.f32 %v6947, %v6999
    %7001 = vmatprep.mubr.bf16.mxu0 %v5115
    %7002 = vmatmul.mubr.bf16.gmra.mxu0 %v5114
    %v7003 = vpop.f32.mrf.mxu0
    %v7004 = vadd.f32 %v6951, %v7003
    %v7005 = vpop.f32.mrf.mxu0
    %v7006 = vadd.f32 %v6953, %v7005
    %v7007 = vpop.f32.mrf.mxu0
    %v7008 = vadd.f32 %v6955, %v7007
    %v7009 = vpop.f32.mrf.mxu0
    %v7010 = vadd.f32 %v6957, %v7009
    %7011 = vdwg.mxu0
    %7012 = vmatprep.subr.bf16.mxu0 %v6245
    %7013 = vmatpush1.bf16.msra.mxu0 %v6244
    %7014 = vmatprep.subr.bf16.mxu0 %v6237
    %7015 = vmatpush1.bf16.msra.mxu0 %v6236
    %7016 = vmatprep.subr.bf16.mxu0 %v6229
    %7017 = vmatpush1.bf16.msra.mxu0 %v6228
    %7018 = vmatprep.subr.bf16.mxu0 %v6221
    %7019 = vmatpush1.bf16.msra.mxu0 %v6220
    %7020 = vmatprep.subr.bf16.mxu0 %v6213
    %7021 = vmatpush1.bf16.msra.mxu0 %v6212
    %7022 = vmatprep.subr.bf16.mxu0 %v6205
    %7023 = vmatpush1.bf16.msra.mxu0 %v6204
    %7024 = vmatprep.subr.bf16.mxu0 %v6197
    %7025 = vmatpush1.bf16.msra.mxu0 %v6196
    %7026 = vmatprep.subr.bf16.mxu0 %v6189
    %7027 = vmatpush1.bf16.msra.mxu0 %v6188
    %7028 = vmatprep.subr.bf16.mxu0 %v6309
    %7029 = vmatpush2.bf16.msra.mxu0 %v6308
    %7030 = vmatprep.subr.bf16.mxu0 %v6301
    %7031 = vmatpush2.bf16.msra.mxu0 %v6300
    %7032 = vmatprep.subr.bf16.mxu0 %v6293
    %7033 = vmatpush2.bf16.msra.mxu0 %v6292
    %7034 = vmatprep.subr.bf16.mxu0 %v6285
    %7035 = vmatpush2.bf16.msra.mxu0 %v6284
    %7036 = vmatprep.subr.bf16.mxu0 %v6277
    %7037 = vmatpush2.bf16.msra.mxu0 %v6276
    %7038 = vmatprep.subr.bf16.mxu0 %v6269
    %7039 = vmatpush2.bf16.msra.mxu0 %v6268
    %7040 = vmatprep.subr.bf16.mxu0 %v6261
    %7041 = vmatpush2.bf16.msra.mxu0 %v6260
    %7042 = vmatprep.subr.bf16.mxu0 %v6253
    %7043 = vmatpush2.bf16.msra.mxu0 %v6252
    %7044 = vmatprep.mubr.bf16.mxu0 %v5109
    %7045 = vmatmul.mubr.bf16.gmra.mxu0 %v5108
    %v7046 = vpop.f32.mrf.mxu0
    %v7047 = vadd.f32 %v5401, %v7046
    %v7048 = vpop.f32.mrf.mxu0
    %v7049 = vadd.f32 %v5405, %v7048
    %v7050 = vpop.f32.mrf.mxu0
    %v7051 = vadd.f32 %v5401, %v7050
    %v7052 = vpop.f32.mrf.mxu0
    %v7053 = vadd.f32 %v5405, %v7052
    %7054 = vmatprep.mubr.bf16.mxu0 %v5113
    %7055 = vmatmul.mubr.bf16.gmra.mxu0 %v5112
    %v7056 = vpop.f32.mrf.mxu0
    %v7057 = vadd.f32 %v5401, %v7056
    %v7058 = vpop.f32.mrf.mxu0
    %v7059 = vadd.f32 %v5405, %v7058
    %v7060 = vpop.f32.mrf.mxu0
    %v7061 = vadd.f32 %v5401, %v7060
    %v7062 = vpop.f32.mrf.mxu0
    %v7063 = vadd.f32 %v5405, %v7062
    %7064 = vdwg.mxu0
    %7065 = vmatprep.subr.bf16.mxu0 %v6373
    %7066 = vmatpush1.bf16.msra.mxu0 %v6372
    %7067 = vmatprep.subr.bf16.mxu0 %v6365
    %7068 = vmatpush1.bf16.msra.mxu0 %v6364
    %7069 = vmatprep.subr.bf16.mxu0 %v6357
    %7070 = vmatpush1.bf16.msra.mxu0 %v6356
    %7071 = vmatprep.subr.bf16.mxu0 %v6349
    %7072 = vmatpush1.bf16.msra.mxu0 %v6348
    %7073 = vmatprep.subr.bf16.mxu0 %v6341
    %7074 = vmatpush1.bf16.msra.mxu0 %v6340
    %7075 = vmatprep.subr.bf16.mxu0 %v6333
    %7076 = vmatpush1.bf16.msra.mxu0 %v6332
    %7077 = vmatprep.subr.bf16.mxu0 %v6325
    %7078 = vmatpush1.bf16.msra.mxu0 %v6324
    %7079 = vmatprep.subr.bf16.mxu0 %v6317
    %7080 = vmatpush1.bf16.msra.mxu0 %v6316
    %7081 = vmatprep.subr.bf16.mxu0 %v6437
    %7082 = vmatpush2.bf16.msra.mxu0 %v6436
    %7083 = vmatprep.subr.bf16.mxu0 %v6429
    %7084 = vmatpush2.bf16.msra.mxu0 %v6428
    %7085 = vmatprep.subr.bf16.mxu0 %v6421
    %7086 = vmatpush2.bf16.msra.mxu0 %v6420
    %7087 = vmatprep.subr.bf16.mxu0 %v6413
    %7088 = vmatpush2.bf16.msra.mxu0 %v6412
    %7089 = vmatprep.subr.bf16.mxu0 %v6405
    %7090 = vmatpush2.bf16.msra.mxu0 %v6404
    %7091 = vmatprep.subr.bf16.mxu0 %v6397
    %7092 = vmatpush2.bf16.msra.mxu0 %v6396
    %7093 = vmatprep.subr.bf16.mxu0 %v6389
    %7094 = vmatpush2.bf16.msra.mxu0 %v6388
    %7095 = vmatprep.subr.bf16.mxu0 %v6381
    %7096 = vmatpush2.bf16.msra.mxu0 %v6380
    %7097 = vmatprep.mubr.bf16.mxu0 %v5111
    %7098 = vmatmul.mubr.bf16.gmra.mxu0 %v5110
    %v7099 = vpop.f32.mrf.mxu0
    %v7100 = vadd.f32 %v7047, %v7099
    %v7101 = vpop.f32.mrf.mxu0
    %v7102 = vadd.f32 %v7049, %v7101
    %v7103 = vpop.f32.mrf.mxu0
    %v7104 = vadd.f32 %v7051, %v7103
    %v7105 = vpop.f32.mrf.mxu0
    %v7106 = vadd.f32 %v7053, %v7105
    %7107 = vmatprep.mubr.bf16.mxu0 %v5115
    %7108 = vmatmul.mubr.bf16.gmra.mxu0 %v5114
    %v7109 = vpop.f32.mrf.mxu0
    %v7110 = vadd.f32 %v7057, %v7109
    %v7111 = vpop.f32.mrf.mxu0
    %v7112 = vadd.f32 %v7059, %v7111
    %v7113 = vpop.f32.mrf.mxu0
    %v7114 = vadd.f32 %v7061, %v7113
    %v7115 = vpop.f32.mrf.mxu0
    %v7116 = vadd.f32 %v7063, %v7115
    %7117 = vdwg.mxu0
    %v7118 = vmax.f32 %v6782, 0.0
    %v7119 = vmax.f32 %v6784, 0.0
    %v7120 = vmax.f32 %v6888, 0.0
    %v7121 = vmax.f32 %v6890, 0.0
    %v7122 = vmax.f32 %v6994, 0.0
    %v7123 = vmax.f32 %v6996, 0.0
    %v7124 = vmax.f32 %v7100, 0.0
    %v7125 = vmax.f32 %v7102, 0.0
    %v7126 = vmax.f32 %v6786, 0.0
    %v7127 = vmax.f32 %v6788, 0.0
    %v7128 = vmax.f32 %v6892, 0.0
    %v7129 = vmax.f32 %v6894, 0.0
    %v7130 = vmax.f32 %v6998, 0.0
    %v7131 = vmax.f32 %v7000, 0.0
    %v7132 = vmax.f32 %v7104, 0.0
    %v7133 = vmax.f32 %v7106, 0.0
    %v7134 = vmax.f32 %v6792, 0.0
    %v7135 = vmax.f32 %v6794, 0.0
    %v7136 = vmax.f32 %v6898, 0.0
    %v7137 = vmax.f32 %v6900, 0.0
    %v7138 = vmax.f32 %v7004, 0.0
    %v7139 = vmax.f32 %v7006, 0.0
    %v7140 = vmax.f32 %v7110, 0.0
    %v7141 = vmax.f32 %v7112, 0.0
    %v7142 = vmax.f32 %v6796, 0.0
    %v7143 = vmax.f32 %v6798, 0.0
    %v7144 = vmax.f32 %v6902, 0.0
    %v7145 = vmax.f32 %v6904, 0.0
    %v7146 = vmax.f32 %v7008, 0.0
    %v7147 = vmax.f32 %v7010, 0.0
    %v7148 = vmax.f32 %v7114, 0.0
    %v7149 = vmax.f32 %v7116, 0.0
    %v7150 = vpack.c.bf16 %v7126, %v7118
    %v7151 = vpack.c.bf16 %v7127, %v7119
    %v7152 = vpack.c.bf16 %v7128, %v7120
    %v7153 = vpack.c.bf16 %v7129, %v7121
    %v7154 = vpack.c.bf16 %v7130, %v7122
    %v7155 = vpack.c.bf16 %v7131, %v7123
    %v7156 = vpack.c.bf16 %v7132, %v7124
    %v7157 = vpack.c.bf16 %v7133, %v7125
    %v7158 = vpack.c.bf16 %v7142, %v7134
    %v7159 = vpack.c.bf16 %v7143, %v7135
    %v7160 = vpack.c.bf16 %v7144, %v7136
    %v7161 = vpack.c.bf16 %v7145, %v7137
    %v7162 = vpack.c.bf16 %v7146, %v7138
    %v7163 = vpack.c.bf16 %v7147, %v7139
    %v7164 = vpack.c.bf16 %v7148, %v7140
    %v7165 = vpack.c.bf16 %v7149, %v7141
    %v7166 = vld [vmem:[#allocation22] sm:$0xf]
    %v7167 = vld [vmem:[#allocation22 + $0x4] sm:$0xf]
    %v7168 = vld [vmem:[#allocation22 + $0x8] sm:$0xf]
    %v7169 = vld [vmem:[#allocation22 + $0xc] sm:$0xf]
    %v7170 = vld [vmem:[#allocation22 + $0x10] sm:$0xf]
    %v7171 = vld [vmem:[#allocation22 + $0x14] sm:$0xf]
    %v7172 = vld [vmem:[#allocation22 + $0x18] sm:$0xf]
    %v7173 = vld [vmem:[#allocation22 + $0x1c] sm:$0xf]
    %v7174 = vld [vmem:[#allocation22 + $0x20] sm:$0xf]
    %v7175 = vld [vmem:[#allocation22 + $0x24] sm:$0xf]
    %v7176 = vld [vmem:[#allocation22 + $0x28] sm:$0xf]
    %v7177 = vld [vmem:[#allocation22 + $0x2c] sm:$0xf]
    %v7178 = vld [vmem:[#allocation22 + $0x30] sm:$0xf]
    %v7179 = vld [vmem:[#allocation22 + $0x34] sm:$0xf]
    %v7180 = vld [vmem:[#allocation22 + $0x38] sm:$0xf]
    %v7181 = vld [vmem:[#allocation22 + $0x3c] sm:$0xf]
    %v7182 = vld [vmem:[#allocation22 + $0x40] sm:$0xf]
    %v7183 = vld [vmem:[#allocation22 + $0x44] sm:$0xf]
    %v7184 = vld [vmem:[#allocation22 + $0x48] sm:$0xf]
    %v7185 = vld [vmem:[#allocation22 + $0x4c] sm:$0xf]
    %v7186 = vld [vmem:[#allocation22 + $0x50] sm:$0xf]
    %v7187 = vld [vmem:[#allocation22 + $0x54] sm:$0xf]
    %v7188 = vld [vmem:[#allocation22 + $0x58] sm:$0xf]
    %v7189 = vld [vmem:[#allocation22 + $0x5c] sm:$0xf]
    %v7190 = vld [vmem:[#allocation22 + $0x60] sm:$0xf]
    %v7191 = vld [vmem:[#allocation22 + $0x64] sm:$0xf]
    %v7192 = vld [vmem:[#allocation22 + $0x68] sm:$0xf]
    %v7193 = vld [vmem:[#allocation22 + $0x6c] sm:$0xf]
    %v7194 = vld [vmem:[#allocation22 + $0x70] sm:$0xf]
    %v7195 = vld [vmem:[#allocation22 + $0x74] sm:$0xf]
    %v7196 = vld [vmem:[#allocation22 + $0x78] sm:$0xf]
    %v7197 = vld [vmem:[#allocation22 + $0x7c] sm:$0xf]
    %v7198 = vld [vmem:[#allocation22 + $0x80] sm:$0xf]
    %v7199 = vld [vmem:[#allocation22 + $0x84] sm:$0xf]
    %v7200 = vld [vmem:[#allocation22 + $0x88] sm:$0xf]
    %v7201 = vld [vmem:[#allocation22 + $0x8c] sm:$0xf]
    %v7202 = vld [vmem:[#allocation22 + $0x90] sm:$0xf]
    %v7203 = vld [vmem:[#allocation22 + $0x94] sm:$0xf]
    %v7204 = vld [vmem:[#allocation22 + $0x98] sm:$0xf]
    %v7205 = vld [vmem:[#allocation22 + $0x9c] sm:$0xf]
    %v7206 = vld [vmem:[#allocation22 + $0xa0] sm:$0xf]
    %v7207 = vld [vmem:[#allocation22 + $0xa4] sm:$0xf]
    %v7208 = vld [vmem:[#allocation22 + $0xa8] sm:$0xf]
    %v7209 = vld [vmem:[#allocation22 + $0xac] sm:$0xf]
    %v7210 = vld [vmem:[#allocation22 + $0xb0] sm:$0xf]
    %v7211 = vld [vmem:[#allocation22 + $0xb4] sm:$0xf]
    %v7212 = vld [vmem:[#allocation22 + $0xb8] sm:$0xf]
    %v7213 = vld [vmem:[#allocation22 + $0xbc] sm:$0xf]
    %v7214 = vld [vmem:[#allocation22 + $0xc0] sm:$0xf]
    %v7215 = vld [vmem:[#allocation22 + $0xc4] sm:$0xf]
    %v7216 = vld [vmem:[#allocation22 + $0xc8] sm:$0xf]
    %v7217 = vld [vmem:[#allocation22 + $0xcc] sm:$0xf]
    %v7218 = vld [vmem:[#allocation22 + $0xd0] sm:$0xf]
    %v7219 = vld [vmem:[#allocation22 + $0xd4] sm:$0xf]
    %v7220 = vld [vmem:[#allocation22 + $0xd8] sm:$0xf]
    %v7221 = vld [vmem:[#allocation22 + $0xdc] sm:$0xf]
    %v7222 = vld [vmem:[#allocation22 + $0xe0] sm:$0xf]
    %v7223 = vld [vmem:[#allocation22 + $0xe4] sm:$0xf]
    %v7224 = vld [vmem:[#allocation22 + $0xe8] sm:$0xf]
    %v7225 = vld [vmem:[#allocation22 + $0xec] sm:$0xf]
    %v7226 = vld [vmem:[#allocation22 + $0xf0] sm:$0xf]
    %v7227 = vld [vmem:[#allocation22 + $0xf4] sm:$0xf]
    %v7228 = vld [vmem:[#allocation22 + $0xf8] sm:$0xf]
    %v7229 = vld [vmem:[#allocation22 + $0xfc] sm:$0xf]
    %v7230 = vld [vmem:[#allocation22 + $0x100] sm:$0xf]
    %v7231 = vld [vmem:[#allocation22 + $0x104] sm:$0xf]
    %v7232 = vld [vmem:[#allocation22 + $0x108] sm:$0xf]
    %v7233 = vld [vmem:[#allocation22 + $0x10c] sm:$0xf]
    %v7234 = vld [vmem:[#allocation22 + $0x110] sm:$0xf]
    %v7235 = vld [vmem:[#allocation22 + $0x114] sm:$0xf]
    %v7236 = vld [vmem:[#allocation22 + $0x118] sm:$0xf]
    %v7237 = vld [vmem:[#allocation22 + $0x11c] sm:$0xf]
    %v7238 = vld [vmem:[#allocation22 + $0x120] sm:$0xf]
    %v7239 = vld [vmem:[#allocation22 + $0x124] sm:$0xf]
    %v7240 = vld [vmem:[#allocation22 + $0x128] sm:$0xf]
    %v7241 = vld [vmem:[#allocation22 + $0x12c] sm:$0xf]
    %v7242 = vld [vmem:[#allocation22 + $0x130] sm:$0xf]
    %v7243 = vld [vmem:[#allocation22 + $0x134] sm:$0xf]
    %v7244 = vld [vmem:[#allocation22 + $0x138] sm:$0xf]
    %v7245 = vld [vmem:[#allocation22 + $0x13c] sm:$0xf]
    %v7246 = vld [vmem:[#allocation22 + $0x140] sm:$0xf]
    %v7247 = vld [vmem:[#allocation22 + $0x144] sm:$0xf]
    %v7248 = vld [vmem:[#allocation22 + $0x148] sm:$0xf]
    %v7249 = vld [vmem:[#allocation22 + $0x14c] sm:$0xf]
    %v7250 = vld [vmem:[#allocation22 + $0x150] sm:$0xf]
    %v7251 = vld [vmem:[#allocation22 + $0x154] sm:$0xf]
    %v7252 = vld [vmem:[#allocation22 + $0x158] sm:$0xf]
    %v7253 = vld [vmem:[#allocation22 + $0x15c] sm:$0xf]
    %v7254 = vld [vmem:[#allocation22 + $0x160] sm:$0xf]
    %v7255 = vld [vmem:[#allocation22 + $0x164] sm:$0xf]
    %v7256 = vld [vmem:[#allocation22 + $0x168] sm:$0xf]
    %v7257 = vld [vmem:[#allocation22 + $0x16c] sm:$0xf]
    %v7258 = vld [vmem:[#allocation22 + $0x170] sm:$0xf]
    %v7259 = vld [vmem:[#allocation22 + $0x174] sm:$0xf]
    %v7260 = vld [vmem:[#allocation22 + $0x178] sm:$0xf]
    %v7261 = vld [vmem:[#allocation22 + $0x17c] sm:$0xf]
    %v7262 = vld [vmem:[#allocation22 + $0x180] sm:$0xf]
    %v7263 = vld [vmem:[#allocation22 + $0x184] sm:$0xf]
    %v7264 = vld [vmem:[#allocation22 + $0x188] sm:$0xf]
    %v7265 = vld [vmem:[#allocation22 + $0x18c] sm:$0xf]
    %v7266 = vld [vmem:[#allocation22 + $0x190] sm:$0xf]
    %v7267 = vld [vmem:[#allocation22 + $0x194] sm:$0xf]
    %v7268 = vld [vmem:[#allocation22 + $0x198] sm:$0xf]
    %v7269 = vld [vmem:[#allocation22 + $0x19c] sm:$0xf]
    %v7270 = vld [vmem:[#allocation22 + $0x1a0] sm:$0xf]
    %v7271 = vld [vmem:[#allocation22 + $0x1a4] sm:$0xf]
    %v7272 = vld [vmem:[#allocation22 + $0x1a8] sm:$0xf]
    %v7273 = vld [vmem:[#allocation22 + $0x1ac] sm:$0xf]
    %v7274 = vld [vmem:[#allocation22 + $0x1b0] sm:$0xf]
    %v7275 = vld [vmem:[#allocation22 + $0x1b4] sm:$0xf]
    %v7276 = vld [vmem:[#allocation22 + $0x1b8] sm:$0xf]
    %v7277 = vld [vmem:[#allocation22 + $0x1bc] sm:$0xf]
    %v7278 = vld [vmem:[#allocation22 + $0x1c0] sm:$0xf]
    %v7279 = vld [vmem:[#allocation22 + $0x1c4] sm:$0xf]
    %v7280 = vld [vmem:[#allocation22 + $0x1c8] sm:$0xf]
    %v7281 = vld [vmem:[#allocation22 + $0x1cc] sm:$0xf]
    %v7282 = vld [vmem:[#allocation22 + $0x1d0] sm:$0xf]
    %v7283 = vld [vmem:[#allocation22 + $0x1d4] sm:$0xf]
    %v7284 = vld [vmem:[#allocation22 + $0x1d8] sm:$0xf]
    %v7285 = vld [vmem:[#allocation22 + $0x1dc] sm:$0xf]
    %v7286 = vld [vmem:[#allocation22 + $0x1e0] sm:$0xf]
    %v7287 = vld [vmem:[#allocation22 + $0x1e4] sm:$0xf]
    %v7288 = vld [vmem:[#allocation22 + $0x1e8] sm:$0xf]
    %v7289 = vld [vmem:[#allocation22 + $0x1ec] sm:$0xf]
    %v7290 = vld [vmem:[#allocation22 + $0x1f0] sm:$0xf]
    %v7291 = vld [vmem:[#allocation22 + $0x1f4] sm:$0xf]
    %v7292 = vld [vmem:[#allocation22 + $0x1f8] sm:$0xf]
    %v7293 = vld [vmem:[#allocation22 + $0x1fc] sm:$0xf]
    %v7294 = vld [vmem:[%s18] sm:$0x1]
    %v7296 = vlaneseq
    %v7297 = vshrl.u32 %v7296, 7
    %v7298 = vsub.s32 0, %v7297
    %v7299 = vrot.slane %v7294, %v7298
    %v7429 = vunpack.c.l.b16 %v7166
    %v7430 = vunpack.c.l.b16 %v7167
    %v7431 = vunpack.c.l.b16 %v7168
    %v7432 = vunpack.c.l.b16 %v7169
    %v7433 = vunpack.c.l.b16 %v7170
    %v7434 = vunpack.c.l.b16 %v7171
    %v7435 = vunpack.c.l.b16 %v7172
    %v7436 = vunpack.c.l.b16 %v7173
    %v7437 = vunpack.c.l.b16 %v7174
    %v7438 = vunpack.c.l.b16 %v7175
    %v7439 = vunpack.c.l.b16 %v7176
    %v7440 = vunpack.c.l.b16 %v7177
    %v7441 = vunpack.c.l.b16 %v7178
    %v7442 = vunpack.c.l.b16 %v7179
    %v7443 = vunpack.c.l.b16 %v7180
    %v7444 = vunpack.c.l.b16 %v7181
    %v7445 = vunpack.c.l.b16 %v7182
    %v7446 = vunpack.c.l.b16 %v7183
    %v7447 = vunpack.c.l.b16 %v7184
    %v7448 = vunpack.c.l.b16 %v7185
    %v7449 = vunpack.c.l.b16 %v7186
    %v7450 = vunpack.c.l.b16 %v7187
    %v7451 = vunpack.c.l.b16 %v7188
    %v7452 = vunpack.c.l.b16 %v7189
    %v7453 = vunpack.c.l.b16 %v7190
    %v7454 = vunpack.c.l.b16 %v7191
    %v7455 = vunpack.c.l.b16 %v7192
    %v7456 = vunpack.c.l.b16 %v7193
    %v7457 = vunpack.c.l.b16 %v7194
    %v7458 = vunpack.c.l.b16 %v7195
    %v7459 = vunpack.c.l.b16 %v7196
    %v7460 = vunpack.c.l.b16 %v7197
    %v7461 = vunpack.c.l.b16 %v7198
    %v7462 = vunpack.c.l.b16 %v7199
    %v7463 = vunpack.c.l.b16 %v7200
    %v7464 = vunpack.c.l.b16 %v7201
    %v7465 = vunpack.c.l.b16 %v7202
    %v7466 = vunpack.c.l.b16 %v7203
    %v7467 = vunpack.c.l.b16 %v7204
    %v7468 = vunpack.c.l.b16 %v7205
    %v7469 = vunpack.c.l.b16 %v7206
    %v7470 = vunpack.c.l.b16 %v7207
    %v7471 = vunpack.c.l.b16 %v7208
    %v7472 = vunpack.c.l.b16 %v7209
    %v7473 = vunpack.c.l.b16 %v7210
    %v7474 = vunpack.c.l.b16 %v7211
    %v7475 = vunpack.c.l.b16 %v7212
    %v7476 = vunpack.c.l.b16 %v7213
    %v7477 = vunpack.c.l.b16 %v7214
    %v7478 = vunpack.c.l.b16 %v7215
    %v7479 = vunpack.c.l.b16 %v7216
    %v7480 = vunpack.c.l.b16 %v7217
    %v7481 = vunpack.c.l.b16 %v7218
    %v7482 = vunpack.c.l.b16 %v7219
    %v7483 = vunpack.c.l.b16 %v7220
    %v7484 = vunpack.c.l.b16 %v7221
    %v7485 = vunpack.c.l.b16 %v7222
    %v7486 = vunpack.c.l.b16 %v7223
    %v7487 = vunpack.c.l.b16 %v7224
    %v7488 = vunpack.c.l.b16 %v7225
    %v7489 = vunpack.c.l.b16 %v7226
    %v7490 = vunpack.c.l.b16 %v7227
    %v7491 = vunpack.c.l.b16 %v7228
    %v7492 = vunpack.c.l.b16 %v7229
    %v7493 = vunpack.c.l.b16 %v7230
    %v7494 = vunpack.c.l.b16 %v7231
    %v7495 = vunpack.c.l.b16 %v7232
    %v7496 = vunpack.c.l.b16 %v7233
    %v7497 = vunpack.c.l.b16 %v7234
    %v7498 = vunpack.c.l.b16 %v7235
    %v7499 = vunpack.c.l.b16 %v7236
    %v7500 = vunpack.c.l.b16 %v7237
    %v7501 = vunpack.c.l.b16 %v7238
    %v7502 = vunpack.c.l.b16 %v7239
    %v7503 = vunpack.c.l.b16 %v7240
    %v7504 = vunpack.c.l.b16 %v7241
    %v7505 = vunpack.c.l.b16 %v7242
    %v7506 = vunpack.c.l.b16 %v7243
    %v7507 = vunpack.c.l.b16 %v7244
    %v7508 = vunpack.c.l.b16 %v7245
    %v7509 = vunpack.c.l.b16 %v7246
    %v7510 = vunpack.c.l.b16 %v7247
    %v7511 = vunpack.c.l.b16 %v7248
    %v7512 = vunpack.c.l.b16 %v7249
    %v7513 = vunpack.c.l.b16 %v7250
    %v7514 = vunpack.c.l.b16 %v7251
    %v7515 = vunpack.c.l.b16 %v7252
    %v7516 = vunpack.c.l.b16 %v7253
    %v7517 = vunpack.c.l.b16 %v7254
    %v7518 = vunpack.c.l.b16 %v7255
    %v7519 = vunpack.c.l.b16 %v7256
    %v7520 = vunpack.c.l.b16 %v7257
    %v7521 = vunpack.c.l.b16 %v7258
    %v7522 = vunpack.c.l.b16 %v7259
    %v7523 = vunpack.c.l.b16 %v7260
    %v7524 = vunpack.c.l.b16 %v7261
    %v7525 = vunpack.c.l.b16 %v7262
    %v7526 = vunpack.c.l.b16 %v7263
    %v7527 = vunpack.c.l.b16 %v7264
    %v7528 = vunpack.c.l.b16 %v7265
    %v7529 = vunpack.c.l.b16 %v7266
    %v7530 = vunpack.c.l.b16 %v7267
    %v7531 = vunpack.c.l.b16 %v7268
    %v7532 = vunpack.c.l.b16 %v7269
    %v7533 = vunpack.c.l.b16 %v7270
    %v7534 = vunpack.c.l.b16 %v7271
    %v7535 = vunpack.c.l.b16 %v7272
    %v7536 = vunpack.c.l.b16 %v7273
    %v7537 = vunpack.c.l.b16 %v7274
    %v7538 = vunpack.c.l.b16 %v7275
    %v7539 = vunpack.c.l.b16 %v7276
    %v7540 = vunpack.c.l.b16 %v7277
    %v7541 = vunpack.c.l.b16 %v7278
    %v7542 = vunpack.c.l.b16 %v7279
    %v7543 = vunpack.c.l.b16 %v7280
    %v7544 = vunpack.c.l.b16 %v7281
    %v7545 = vunpack.c.l.b16 %v7282
    %v7546 = vunpack.c.l.b16 %v7283
    %v7547 = vunpack.c.l.b16 %v7284
    %v7548 = vunpack.c.l.b16 %v7285
    %v7549 = vunpack.c.l.b16 %v7286
    %v7550 = vunpack.c.l.b16 %v7287
    %v7551 = vunpack.c.l.b16 %v7288
    %v7552 = vunpack.c.l.b16 %v7289
    %v7553 = vunpack.c.l.b16 %v7290
    %v7554 = vunpack.c.l.b16 %v7291
    %v7555 = vunpack.c.l.b16 %v7292
    %v7556 = vunpack.c.l.b16 %v7293
    %v7557 = vpack.c.b16 %v7430, %v7429
    %v7558 = vpack.c.b16 %v7432, %v7431
    %v7559 = vpack.c.b16 %v7434, %v7433
    %v7560 = vpack.c.b16 %v7436, %v7435
    %v7561 = vpack.c.b16 %v7438, %v7437
    %v7562 = vpack.c.b16 %v7440, %v7439
    %v7563 = vpack.c.b16 %v7442, %v7441
    %v7564 = vpack.c.b16 %v7444, %v7443
    %v7565 = vpack.c.b16 %v7446, %v7445
    %v7566 = vpack.c.b16 %v7448, %v7447
    %v7567 = vpack.c.b16 %v7450, %v7449
    %v7568 = vpack.c.b16 %v7452, %v7451
    %v7569 = vpack.c.b16 %v7454, %v7453
    %v7570 = vpack.c.b16 %v7456, %v7455
    %v7571 = vpack.c.b16 %v7458, %v7457
    %v7572 = vpack.c.b16 %v7460, %v7459
    %v7573 = vpack.c.b16 %v7462, %v7461
    %v7574 = vpack.c.b16 %v7464, %v7463
    %v7575 = vpack.c.b16 %v7466, %v7465
    %v7576 = vpack.c.b16 %v7468, %v7467
    %v7577 = vpack.c.b16 %v7470, %v7469
    %v7578 = vpack.c.b16 %v7472, %v7471
    %v7579 = vpack.c.b16 %v7474, %v7473
    %v7580 = vpack.c.b16 %v7476, %v7475
    %v7581 = vpack.c.b16 %v7478, %v7477
    %v7582 = vpack.c.b16 %v7480, %v7479
    %v7583 = vpack.c.b16 %v7482, %v7481
    %v7584 = vpack.c.b16 %v7484, %v7483
    %v7585 = vpack.c.b16 %v7486, %v7485
    %v7586 = vpack.c.b16 %v7488, %v7487
    %v7587 = vpack.c.b16 %v7490, %v7489
    %v7588 = vpack.c.b16 %v7492, %v7491
    %v7589 = vpack.c.b16 %v7494, %v7493
    %v7590 = vpack.c.b16 %v7496, %v7495
    %v7591 = vpack.c.b16 %v7498, %v7497
    %v7592 = vpack.c.b16 %v7500, %v7499
    %v7593 = vpack.c.b16 %v7502, %v7501
    %v7594 = vpack.c.b16 %v7504, %v7503
    %v7595 = vpack.c.b16 %v7506, %v7505
    %v7596 = vpack.c.b16 %v7508, %v7507
    %v7597 = vpack.c.b16 %v7510, %v7509
    %v7598 = vpack.c.b16 %v7512, %v7511
    %v7599 = vpack.c.b16 %v7514, %v7513
    %v7600 = vpack.c.b16 %v7516, %v7515
    %v7601 = vpack.c.b16 %v7518, %v7517
    %v7602 = vpack.c.b16 %v7520, %v7519
    %v7603 = vpack.c.b16 %v7522, %v7521
    %v7604 = vpack.c.b16 %v7524, %v7523
    %v7605 = vpack.c.b16 %v7526, %v7525
    %v7606 = vpack.c.b16 %v7528, %v7527
    %v7607 = vpack.c.b16 %v7530, %v7529
    %v7608 = vpack.c.b16 %v7532, %v7531
    %v7609 = vpack.c.b16 %v7534, %v7533
    %v7610 = vpack.c.b16 %v7536, %v7535
    %v7611 = vpack.c.b16 %v7538, %v7537
    %v7612 = vpack.c.b16 %v7540, %v7539
    %v7613 = vpack.c.b16 %v7542, %v7541
    %v7614 = vpack.c.b16 %v7544, %v7543
    %v7615 = vpack.c.b16 %v7546, %v7545
    %v7616 = vpack.c.b16 %v7548, %v7547
    %v7617 = vpack.c.b16 %v7550, %v7549
    %v7618 = vpack.c.b16 %v7552, %v7551
    %v7619 = vpack.c.b16 %v7554, %v7553
    %v7620 = vpack.c.b16 %v7556, %v7555
    %7685 = vmatprep.subr.bf16.mxu0 0
    %7686 = vmatpush1.bf16.msra.mxu0 %v7564
    %7687 = vmatprep.subr.bf16.mxu0 0
    %7688 = vmatpush1.bf16.msra.mxu0 %v7563
    %7689 = vmatprep.subr.bf16.mxu0 0
    %7690 = vmatpush1.bf16.msra.mxu0 %v7562
    %7691 = vmatprep.subr.bf16.mxu0 0
    %7692 = vmatpush1.bf16.msra.mxu0 %v7561
    %7693 = vmatprep.subr.bf16.mxu0 0
    %7694 = vmatpush1.bf16.msra.mxu0 %v7560
    %7695 = vmatprep.subr.bf16.mxu0 0
    %7696 = vmatpush1.bf16.msra.mxu0 %v7559
    %7697 = vmatprep.subr.bf16.mxu0 0
    %7698 = vmatpush1.bf16.msra.mxu0 %v7558
    %7699 = vmatprep.subr.bf16.mxu0 0
    %7700 = vmatpush1.bf16.msra.mxu0 %v7557
    %7701 = vmatprep.subr.bf16.mxu0 0
    %7702 = vmatpush2.bf16.msra.mxu0 %v7572
    %7703 = vmatprep.subr.bf16.mxu0 0
    %7704 = vmatpush2.bf16.msra.mxu0 %v7571
    %7705 = vmatprep.subr.bf16.mxu0 0
    %7706 = vmatpush2.bf16.msra.mxu0 %v7570
    %7707 = vmatprep.subr.bf16.mxu0 0
    %7708 = vmatpush2.bf16.msra.mxu0 %v7569
    %7709 = vmatprep.subr.bf16.mxu0 0
    %7710 = vmatpush2.bf16.msra.mxu0 %v7568
    %7711 = vmatprep.subr.bf16.mxu0 0
    %7712 = vmatpush2.bf16.msra.mxu0 %v7567
    %7713 = vmatprep.subr.bf16.mxu0 0
    %7714 = vmatpush2.bf16.msra.mxu0 %v7566
    %7715 = vmatprep.subr.bf16.mxu0 0
    %7716 = vmatpush2.bf16.msra.mxu0 %v7565
    %7717 = vmatprep.mubr.bf16.mxu0 %v7151
    %7718 = vmatmul.mubr.bf16.gmra.mxu0 %v7150
    %v7719 = vpop.f32.mrf.mxu0
    %v7720 = vadd.f32 %v7299, %v7719
    %v7721 = vpop.f32.mrf.mxu0
    %v7722 = vpop.f32.mrf.mxu0
    %v7723 = vadd.f32 %v7299, %v7722
    %v7724 = vpop.f32.mrf.mxu0
    %7725 = vmatprep.mubr.bf16.mxu0 %v7159
    %7726 = vmatmul.mubr.bf16.gmra.mxu0 %v7158
    %v7727 = vpop.f32.mrf.mxu0
    %v7728 = vadd.f32 %v7299, %v7727
    %v7729 = vpop.f32.mrf.mxu0
    %v7730 = vpop.f32.mrf.mxu0
    %v7731 = vadd.f32 %v7299, %v7730
    %v7732 = vpop.f32.mrf.mxu0
    %7733 = vdwg.mxu0
    %7734 = vmatprep.subr.bf16.mxu0 0
    %7735 = vmatpush1.bf16.msra.mxu0 %v7580
    %7736 = vmatprep.subr.bf16.mxu0 0
    %7737 = vmatpush1.bf16.msra.mxu0 %v7579
    %7738 = vmatprep.subr.bf16.mxu0 0
    %7739 = vmatpush1.bf16.msra.mxu0 %v7578
    %7740 = vmatprep.subr.bf16.mxu0 0
    %7741 = vmatpush1.bf16.msra.mxu0 %v7577
    %7742 = vmatprep.subr.bf16.mxu0 0
    %7743 = vmatpush1.bf16.msra.mxu0 %v7576
    %7744 = vmatprep.subr.bf16.mxu0 0
    %7745 = vmatpush1.bf16.msra.mxu0 %v7575
    %7746 = vmatprep.subr.bf16.mxu0 0
    %7747 = vmatpush1.bf16.msra.mxu0 %v7574
    %7748 = vmatprep.subr.bf16.mxu0 0
    %7749 = vmatpush1.bf16.msra.mxu0 %v7573
    %7750 = vmatprep.subr.bf16.mxu0 0
    %7751 = vmatpush2.bf16.msra.mxu0 %v7588
    %7752 = vmatprep.subr.bf16.mxu0 0
    %7753 = vmatpush2.bf16.msra.mxu0 %v7587
    %7754 = vmatprep.subr.bf16.mxu0 0
    %7755 = vmatpush2.bf16.msra.mxu0 %v7586
    %7756 = vmatprep.subr.bf16.mxu0 0
    %7757 = vmatpush2.bf16.msra.mxu0 %v7585
    %7758 = vmatprep.subr.bf16.mxu0 0
    %7759 = vmatpush2.bf16.msra.mxu0 %v7584
    %7760 = vmatprep.subr.bf16.mxu0 0
    %7761 = vmatpush2.bf16.msra.mxu0 %v7583
    %7762 = vmatprep.subr.bf16.mxu0 0
    %7763 = vmatpush2.bf16.msra.mxu0 %v7582
    %7764 = vmatprep.subr.bf16.mxu0 0
    %7765 = vmatpush2.bf16.msra.mxu0 %v7581
    %7766 = vmatprep.mubr.bf16.mxu0 %v7153
    %7767 = vmatmul.mubr.bf16.gmra.mxu0 %v7152
    %v7768 = vpop.f32.mrf.mxu0
    %v7769 = vadd.f32 %v7720, %v7768
    %v7770 = vpop.f32.mrf.mxu0
    %v7771 = vpop.f32.mrf.mxu0
    %v7772 = vadd.f32 %v7723, %v7771
    %v7773 = vpop.f32.mrf.mxu0
    %7774 = vmatprep.mubr.bf16.mxu0 %v7161
    %7775 = vmatmul.mubr.bf16.gmra.mxu0 %v7160
    %v7776 = vpop.f32.mrf.mxu0
    %v7777 = vadd.f32 %v7728, %v7776
    %v7778 = vpop.f32.mrf.mxu0
    %v7779 = vpop.f32.mrf.mxu0
    %v7780 = vadd.f32 %v7731, %v7779
    %v7781 = vpop.f32.mrf.mxu0
    %7782 = vdwg.mxu0
    %7783 = vmatprep.subr.bf16.mxu0 0
    %7784 = vmatpush1.bf16.msra.mxu0 %v7596
    %7785 = vmatprep.subr.bf16.mxu0 0
    %7786 = vmatpush1.bf16.msra.mxu0 %v7595
    %7787 = vmatprep.subr.bf16.mxu0 0
    %7788 = vmatpush1.bf16.msra.mxu0 %v7594
    %7789 = vmatprep.subr.bf16.mxu0 0
    %7790 = vmatpush1.bf16.msra.mxu0 %v7593
    %7791 = vmatprep.subr.bf16.mxu0 0
    %7792 = vmatpush1.bf16.msra.mxu0 %v7592
    %7793 = vmatprep.subr.bf16.mxu0 0
    %7794 = vmatpush1.bf16.msra.mxu0 %v7591
    %7795 = vmatprep.subr.bf16.mxu0 0
    %7796 = vmatpush1.bf16.msra.mxu0 %v7590
    %7797 = vmatprep.subr.bf16.mxu0 0
    %7798 = vmatpush1.bf16.msra.mxu0 %v7589
    %7799 = vmatprep.subr.bf16.mxu0 0
    %7800 = vmatpush2.bf16.msra.mxu0 %v7604
    %7801 = vmatprep.subr.bf16.mxu0 0
    %7802 = vmatpush2.bf16.msra.mxu0 %v7603
    %7803 = vmatprep.subr.bf16.mxu0 0
    %7804 = vmatpush2.bf16.msra.mxu0 %v7602
    %7805 = vmatprep.subr.bf16.mxu0 0
    %7806 = vmatpush2.bf16.msra.mxu0 %v7601
    %7807 = vmatprep.subr.bf16.mxu0 0
    %7808 = vmatpush2.bf16.msra.mxu0 %v7600
    %7809 = vmatprep.subr.bf16.mxu0 0
    %7810 = vmatpush2.bf16.msra.mxu0 %v7599
    %7811 = vmatprep.subr.bf16.mxu0 0
    %7812 = vmatpush2.bf16.msra.mxu0 %v7598
    %7813 = vmatprep.subr.bf16.mxu0 0
    %7814 = vmatpush2.bf16.msra.mxu0 %v7597
    %7815 = vmatprep.mubr.bf16.mxu0 %v7155
    %7816 = vmatmul.mubr.bf16.gmra.mxu0 %v7154
    %v7817 = vpop.f32.mrf.mxu0
    %v7818 = vadd.f32 %v7769, %v7817
    %v7819 = vpop.f32.mrf.mxu0
    %v7820 = vpop.f32.mrf.mxu0
    %v7821 = vadd.f32 %v7772, %v7820
    %v7822 = vpop.f32.mrf.mxu0
    %7823 = vmatprep.mubr.bf16.mxu0 %v7163
    %7824 = vmatmul.mubr.bf16.gmra.mxu0 %v7162
    %v7825 = vpop.f32.mrf.mxu0
    %v7826 = vadd.f32 %v7777, %v7825
    %v7827 = vpop.f32.mrf.mxu0
    %v7828 = vpop.f32.mrf.mxu0
    %v7829 = vadd.f32 %v7780, %v7828
    %v7830 = vpop.f32.mrf.mxu0
    %7831 = vdwg.mxu0
    %7832 = vmatprep.subr.bf16.mxu0 0
    %7833 = vmatpush1.bf16.msra.mxu0 %v7612
    %7834 = vmatprep.subr.bf16.mxu0 0
    %7835 = vmatpush1.bf16.msra.mxu0 %v7611
    %7836 = vmatprep.subr.bf16.mxu0 0
    %7837 = vmatpush1.bf16.msra.mxu0 %v7610
    %7838 = vmatprep.subr.bf16.mxu0 0
    %7839 = vmatpush1.bf16.msra.mxu0 %v7609
    %7840 = vmatprep.subr.bf16.mxu0 0
    %7841 = vmatpush1.bf16.msra.mxu0 %v7608
    %7842 = vmatprep.subr.bf16.mxu0 0
    %7843 = vmatpush1.bf16.msra.mxu0 %v7607
    %7844 = vmatprep.subr.bf16.mxu0 0
    %7845 = vmatpush1.bf16.msra.mxu0 %v7606
    %7846 = vmatprep.subr.bf16.mxu0 0
    %7847 = vmatpush1.bf16.msra.mxu0 %v7605
    %7848 = vmatprep.subr.bf16.mxu0 0
    %7849 = vmatpush2.bf16.msra.mxu0 %v7620
    %7850 = vmatprep.subr.bf16.mxu0 0
    %7851 = vmatpush2.bf16.msra.mxu0 %v7619
    %7852 = vmatprep.subr.bf16.mxu0 0
    %7853 = vmatpush2.bf16.msra.mxu0 %v7618
    %7854 = vmatprep.subr.bf16.mxu0 0
    %7855 = vmatpush2.bf16.msra.mxu0 %v7617
    %7856 = vmatprep.subr.bf16.mxu0 0
    %7857 = vmatpush2.bf16.msra.mxu0 %v7616
    %7858 = vmatprep.subr.bf16.mxu0 0
    %7859 = vmatpush2.bf16.msra.mxu0 %v7615
    %7860 = vmatprep.subr.bf16.mxu0 0
    %7861 = vmatpush2.bf16.msra.mxu0 %v7614
    %7862 = vmatprep.subr.bf16.mxu0 0
    %7863 = vmatpush2.bf16.msra.mxu0 %v7613
    %7864 = vmatprep.mubr.bf16.mxu0 %v7157
    %7865 = vmatmul.mubr.bf16.gmra.mxu0 %v7156
    %v7866 = vpop.f32.mrf.mxu0
    %v7867 = vadd.f32 %v7818, %v7866
    %v7868 = vpop.f32.mrf.mxu0
    %v7869 = vpop.f32.mrf.mxu0
    %v7870 = vadd.f32 %v7821, %v7869
    %v7871 = vpop.f32.mrf.mxu0
    %7872 = vmatprep.mubr.bf16.mxu0 %v7165
    %7873 = vmatmul.mubr.bf16.gmra.mxu0 %v7164
    %v7874 = vpop.f32.mrf.mxu0
    %v7875 = vadd.f32 %v7826, %v7874
    %v7876 = vpop.f32.mrf.mxu0
    %v7877 = vpop.f32.mrf.mxu0
    %v7878 = vadd.f32 %v7829, %v7877
    %v7879 = vpop.f32.mrf.mxu0
    %7880 = vdwg.mxu0
    %7881 = vst [vmem:[#allocation23] sm:$0xff] %v7867
    %7882 = vst [vmem:[#allocation23 + $0x8] sm:$0xff] %v7870
    %7883 = vst [vmem:[#allocation23 + $0x10] sm:$0xff] %v7875
    %7884 = vst [vmem:[#allocation23 + $0x18] sm:$0xff] %v7878
    // Predicated region
    $region130: #{tpu_custom_call.1} parent=1 // pred_check
      _
    $region131: #{tpu_custom_call.1} parent=1 // pred_check_branch
      %7886 = sbr.rel (0) target = $region133
    $region132: #{tpu_custom_call.1} parent=1 // pred_region
      %s7888 = ssub.s32 512, 512
      %7889 = vsyncadd [#allocation4], %s7888
      %s7890 = sshll.u32 [#allocation23], 4
      %s7891 = int_to_ptr.vmem [resolvable:$true] %s7890
      %7896 = dma.vmem_to_hbm [thread:$0]  %s7891, 512, %s19, [#allocation4], 128, 128, 8
    $region133: #{tpu_custom_call.1} parent=1 // pred_fallthru
      _
    // Predicated region
    $region134: #{tpu_custom_call.1} parent=1 // pred_check
      _
    $region135: #{tpu_custom_call.1} parent=1 // pred_check_branch
      %7898 = sbr.rel (0) target = $region137
    $region136: #{tpu_custom_call.1} parent=1 // pred_region
      %7899 = dma.done [#allocation4], 512
    $region137: #{tpu_custom_call.1} parent=1 // pred_fallthru
      _
    %7900 = vsyncpa [#allocation3], 1
    %7901 = vsyncpa [#allocation6], 1
    %7902 = vsyncpa [#allocation9], 1
    %7903 = vsyncpa [#allocation12], 1
    %7904 = vsyncpa [#allocation15], 1
    %7905 = vsyncpa [#allocation18], 1
    %7906 = vsyncpa [#allocation21], 1
    %7907 = vsyncpa [#allocation4], 1

</llo_original>
